<compile_context>
chip_gen: v7x
topology: tpu7x:2x2x1
jax: 0.10.0
libtpu: 0.0.40
codegen_flags: <defaults>
</compile_context>

<pallas_src>
import jax
import jax.numpy as jnp
from jax.experimental import pallas as pl
from jax.experimental.pallas import tpu as pltpu


CONV_CFG = [(1, 32), (32, 64), (64, 128), (128, 256)]
FC_CFG = [(1792, 896), (896, 772), (772, 448), (448, 336),
          (336, 224), (224, 161), (161, 97)]
QUANT_FC = (0, 1, 2)              # fc1..fc3 stored int8 (per-output-channel scale)
POOL_C = CONV_CFG[-1][1]          # 256
LP = 7                            # pooled length for L=12: (12 + 2) // 2
MAX_FOUT = max(f for _, f in FC_CFG)   # 896


def _fc_store_dtype(i):
    return jnp.int8 if i in QUANT_FC else jnp.bfloat16


def _fc_slab_shape(i):
    fin, fout = FC_CFG[i]
    if i == 0:
        return (LP, POOL_C, fout)         # per-position layout for fc1
    return (fin, fout)


# ----------------------------------------------------------------------------- kernel
def fnet_kernel(x_ref, cw1_ref, cw2_ref, cw3_ref, cw4_ref, cbias_ref, fcaux_ref,
                fw1, fw2, fw3, fw4, fw5, fw6, fw7,
                out_ref,
                s1, s2, s3, s4, s5, s6, s7, dma_sem):
    fc_hbm = (fw1, fw2, fw3, fw4, fw5, fw6, fw7)
    fc_slabs = (s1, s2, s3, s4, s5, s6, s7)

    # ---- fire all fc weight DMAs up front (fc1 first); they overlap the conv stack.
    copies = []
    for i in range(7):
        cp = pltpu.make_async_copy(fc_hbm[i], fc_slabs[i], dma_sem.at[i])
        cp.start()
        copies.append(cp)

    x = x_ref[...]                        # (B, L, 1) f32, channels-last
    B, L, _ = x.shape

    # ---- conv1 (Cin=1): three shifted broadcast FMAs on the VPU --------------------
    zero1 = jnp.zeros((B, 1, 1), jnp.float32)
    x_prev = jnp.concatenate([zero1, x[:, :L - 1, :]], axis=1)
    x_next = jnp.concatenate([x[:, 1:, :], zero1], axis=1)
    h = x_prev * cw1_ref[0] + x * cw1_ref[1] + x_next * cw1_ref[2]      # (B, L, 32)
    h = jnp.maximum(h + cbias_ref[0:1, :CONV_CFG[0][1]], 0.0)

    # ---- conv2..4: per-tap matmuls on the MXU (bf16 weights, f32 accumulate) -------
    conv_w_refs = (cw2_ref, cw3_ref, cw4_ref)
    for ci in range(1, 4):
        cin, cout = CONV_CFG[ci]
        w_ref = conv_w_refs[ci - 1]
        zero = jnp.zeros((B, 1, cin), jnp.float32)
        h_prev = jnp.concatenate([zero, h[:, :L - 1, :]], axis=1)       # h[l-1]
        h_next = jnp.concatenate([h[:, 1:, :], zero], axis=1)          # h[l+1]

        def tap(a, k):
            return jnp.dot(a.reshape(B * L, cin).astype(jnp.bfloat16), w_ref[k],
                           preferred_element_type=jnp.float32)

        y = tap(h_prev, 0) + tap(h, 1) + tap(h_next, 2)                 # (B*L, Cout)
        y = jnp.maximum(y + cbias_ref[ci:ci + 1, :cout], 0.0)
        h = y.reshape(B, L, cout)

    # ---- MaxPool1d(kernel=2, stride=2, padding=1): pad one row per side, pair-max --
    # post-ReLU h >= 0, so zero padding is equivalent to PyTorch's -inf padding.
    C = CONV_CFG[-1][1]
    Lp = (L + 2) // 2
    zpad = jnp.zeros((B, 1, C), jnp.float32)
    hpad = jnp.concatenate([zpad, h, zpad], axis=1)                     # (B, L+2, C)
    pooled = jnp.max(hpad.reshape(B * Lp, 2, C), axis=1).reshape(B, Lp, C)

    # ---- fc1: per-position matmuls against int8 weight (dequant to bf16 in VMEM) ---
    fout0 = FC_CFG[0][1]
    copies[0].wait()
    acc = jnp.zeros((B, fout0), jnp.float32)
    for l in range(Lp):
        acc = acc + jnp.dot(pooled[:, l, :].astype(jnp.bfloat16),
                            fc_slabs[0][l].astype(jnp.bfloat16),
                            preferred_element_type=jnp.float32)
    acc = acc * fcaux_ref[0, 1:2, :fout0]                 # per-output-channel scale
    z = jnp.maximum(acc + fcaux_ref[0, 0:1, :fout0], 0.0)

    # ---- fc2..fc7: wait each weight just before use; ReLU after every layer --------
    for i in range(1, 7):
        fout = FC_CFG[i][1]
        copies[i].wait()
        w = fc_slabs[i][...]
        if i in QUANT_FC:
            w = w.astype(jnp.bfloat16)
        acc = jnp.dot(z.astype(jnp.bfloat16), w, preferred_element_type=jnp.float32)
        if i in QUANT_FC:
            acc = acc * fcaux_ref[i, 1:2, :fout]
        z = jnp.maximum(acc + fcaux_ref[i, 0:1, :fout], 0.0)

    out_ref[...] = z


# ----------------------------------------------------------------------------- glue
def init_params(key):
    """Deterministic synthetic params in PyTorch-style layouts (f32)."""
    params = {"conv": [], "fc": []}
    for cin, cout in CONV_CFG:
        key, k1, k2 = jax.random.split(key, 3)
        w = jax.random.normal(k1, (cout, cin, 3), jnp.float32) * (1.0 / (3.0 * cin) ** 0.5)
        b = jax.random.normal(k2, (cout,), jnp.float32) * 0.01
        params["conv"].append((w, b))
    for fin, fout in FC_CFG:
        key, k1, k2 = jax.random.split(key, 3)
        w = jax.random.normal(k1, (fin, fout), jnp.float32) * (1.0 / float(fin) ** 0.5)
        b = jax.random.normal(k2, (fout,), jnp.float32) * 0.01
        params["fc"].append((w, b))
    return params


def _quantize_per_out_channel(w):
    amax = jnp.max(jnp.abs(w), axis=0)
    scale = jnp.where(amax > 0.0, amax / 127.0, 1.0)
    q = jnp.clip(jnp.round(w / scale), -127.0, 127.0).astype(jnp.int8)
    return q, scale.astype(jnp.float32)


def prep_kernel_params(params):
    """Re-layout / quantize params for the channels-last kernel.

    Returns (conv_weight_slabs, conv_bias_slab, fc_aux_slab, fc_weight_slabs)."""
    conv_ws = []
    conv_bias = jnp.zeros((4, 256), jnp.float32)
    for i, (w, b) in enumerate(params["conv"]):
        cout = w.shape[0]
        w_taps = jnp.transpose(w, (2, 1, 0))                  # (3, Cin, Cout)
        conv_ws.append(w_taps.astype(jnp.float32 if i == 0 else jnp.bfloat16))
        conv_bias = conv_bias.at[i, :cout].set(b)

    fc_ws = []
    fc_aux = jnp.zeros((7, 2, MAX_FOUT), jnp.float32)         # [i,0]=bias, [i,1]=scale
    fc_aux = fc_aux.at[:, 1, :].set(1.0)
    for i, (w, b) in enumerate(params["fc"]):
        fout = w.shape[1]
        if i in QUANT_FC:
            q, scale = _quantize_per_out_channel(w)
            fc_aux = fc_aux.at[i, 1, :fout].set(scale)
            w_store = q
        else:
            w_store = w.astype(jnp.bfloat16)
        if i == 0:
            # PyTorch flattens (B, C, Lp) -> feature index c*Lp + l; fold into a
            # per-position (Lp, C, fout) slab so the kernel never has to flatten.
            w_store = w_store.reshape(POOL_C, LP, fout).transpose(1, 0, 2)
        fc_ws.append(w_store)
        fc_aux = fc_aux.at[i, 0, :fout].set(b)
    return conv_ws, conv_bias, fc_aux, fc_ws


def f_net_1d_forward(x_ncw, params):
    B, _, L = x_ncw.shape
    assert POOL_C * (L // 2 + 1) == FC_CFG[0][0], "L must satisfy 256*(L//2+1)==1792"
    x_blc = jnp.transpose(x_ncw, (0, 2, 1)).astype(jnp.float32)   # (B, L, 1)
    conv_ws, conv_bias, fc_aux, fc_ws = prep_kernel_params(params)

    out_dim = FC_CFG[-1][1]
    in_specs = ([pl.BlockSpec(memory_space=pltpu.MemorySpace.VMEM)] * 7 +
                [pl.BlockSpec(memory_space=pl.ANY)] * 7)          # fc weights stay in HBM
    scratch = [pltpu.VMEM(_fc_slab_shape(i), _fc_store_dtype(i)) for i in range(7)]
    scratch.append(pltpu.SemaphoreType.DMA((7,)))

    out = pl.pallas_call(
        fnet_kernel,
        out_shape=jax.ShapeDtypeStruct((B, out_dim), jnp.float32),
        in_specs=in_specs,
        out_specs=pl.BlockSpec(memory_space=pltpu.MemorySpace.VMEM),
        scratch_shapes=scratch,
        compiler_params=pltpu.CompilerParams(vmem_limit_bytes=32 << 20),
    )(x_blc, *conv_ws, conv_bias, fc_aux, *fc_ws)
    return out


# ----------------------------------------------------------------------------- reference
def reference_forward(x_ncw, params):
    h = x_ncw
    for w, b in params["conv"]:
        h = jax.lax.conv_general_dilated(
            h, w, window_strides=(1,), padding=[(1, 1)],
            dimension_numbers=("NCH", "OIH", "NCH"))
        h = jnp.maximum(h + b[None, :, None], 0.0)
    h = jax.lax.reduce_window(
        h, -jnp.inf, jax.lax.max,
        window_dimensions=(1, 1, 2), window_strides=(1, 1, 2),
        padding=((0, 0), (0, 0), (1, 1)))
    z = h.reshape(h.shape[0], -1)
    for w, b in params["fc"]:
        z = jnp.maximum(jnp.dot(z, w) + b, 0.0)   # PyTorch applies ReLU after every fc
    return z


# ----------------------------------------------------------------------------- main
if __name__ == "__main__":
    import numpy as np

    key = jax.random.PRNGKey(0)
    key, kx = jax.random.split(key)
    B, L = 2, 12   # 256 * (L//2 + 1) == 1792, as required by fc1
    x = jax.random.normal(kx, (B, 1, L), jnp.float32)

    params = init_params(key)

    out = jax.block_until_ready(f_net_1d_forward(x, params))
    ref = reference_forward(x, params)

    assert out.shape == (B, FC_CFG[-1][1]), out.shape
    # Kernel uses bf16 conv/fc4-7 weights + int8 (per-output-channel) fc1-3 weights
    # and bf16 matmul inputs vs the f32 reference -> loosened tolerance.
    np.testing.assert_allclose(np.asarray(out), np.asarray(ref), rtol=5e-2, atol=2e-2)

    print("KERNEL_OK")
</pallas_src>

<mosaic_0001>
module attributes {stable_mosaic.version = 11 : i64} {
  func.func @fnet_kernel(%arg0: memref<2x12x1xf32, #tpu.memory_space<vmem>>, %arg1: memref<3x1x32xf32, #tpu.memory_space<vmem>>, %arg2: memref<3x32x64xbf16, #tpu.memory_space<vmem>>, %arg3: memref<3x64x128xbf16, #tpu.memory_space<vmem>>, %arg4: memref<3x128x256xbf16, #tpu.memory_space<vmem>>, %arg5: memref<4x256xf32, #tpu.memory_space<vmem>>, %arg6: memref<7x2x896xf32, #tpu.memory_space<vmem>>, %arg7: memref<7x256x896xi8, #tpu.memory_space<any>>, %arg8: memref<896x772xi8, #tpu.memory_space<any>>, %arg9: memref<772x448xi8, #tpu.memory_space<any>>, %arg10: memref<448x336xbf16, #tpu.memory_space<any>>, %arg11: memref<336x224xbf16, #tpu.memory_space<any>>, %arg12: memref<224x161xbf16, #tpu.memory_space<any>>, %arg13: memref<161x97xbf16, #tpu.memory_space<any>>, %arg14: memref<2x97xf32, #tpu.memory_space<vmem>>, %arg15: memref<7x256x896xi8, #tpu.memory_space<vmem>>, %arg16: memref<896x772xi8, #tpu.memory_space<vmem>>, %arg17: memref<772x448xi8, #tpu.memory_space<vmem>>, %arg18: memref<448x336xbf16, #tpu.memory_space<vmem>>, %arg19: memref<336x224xbf16, #tpu.memory_space<vmem>>, %arg20: memref<224x161xbf16, #tpu.memory_space<vmem>>, %arg21: memref<161x97xbf16, #tpu.memory_space<vmem>>, %arg22: memref<7x!tpu.dma_semaphore, #tpu.memory_space<semaphore_mem>>) attributes {dimension_semantics = [], scalar_prefetch = 0 : i64, scratch_operands = 8 : i64, tpu.core_type = #tpu.core_type<tc>} {
    %c0_i32 = arith.constant 0 : i32
    %0 = tpu.memref_slice %arg22[%c0_i32] : memref<7x!tpu.dma_semaphore, #tpu.memory_space<semaphore_mem>> -> memref<1x!tpu.dma_semaphore, #tpu.memory_space<semaphore_mem>>
    %1 = tpu.memref_squeeze %0 : memref<1x!tpu.dma_semaphore, #tpu.memory_space<semaphore_mem>> -> memref<!tpu.dma_semaphore, #tpu.memory_space<semaphore_mem>>
    tpu.enqueue_dma source(%arg7 : memref<7x256x896xi8, #tpu.memory_space<any>>) target(%arg15 : memref<7x256x896xi8, #tpu.memory_space<vmem>>) target_semaphore(%1 : memref<!tpu.dma_semaphore, #tpu.memory_space<semaphore_mem>>)
    %c1_i32 = arith.constant 1 : i32
    %2 = tpu.memref_slice %arg22[%c1_i32] : memref<7x!tpu.dma_semaphore, #tpu.memory_space<semaphore_mem>> -> memref<1x!tpu.dma_semaphore, #tpu.memory_space<semaphore_mem>>
    %3 = tpu.memref_squeeze %2 : memref<1x!tpu.dma_semaphore, #tpu.memory_space<semaphore_mem>> -> memref<!tpu.dma_semaphore, #tpu.memory_space<semaphore_mem>>
    tpu.enqueue_dma source(%arg8 : memref<896x772xi8, #tpu.memory_space<any>>) target(%arg16 : memref<896x772xi8, #tpu.memory_space<vmem>>) target_semaphore(%3 : memref<!tpu.dma_semaphore, #tpu.memory_space<semaphore_mem>>)
    %c2_i32 = arith.constant 2 : i32
    %4 = tpu.memref_slice %arg22[%c2_i32] : memref<7x!tpu.dma_semaphore, #tpu.memory_space<semaphore_mem>> -> memref<1x!tpu.dma_semaphore, #tpu.memory_space<semaphore_mem>>
    %5 = tpu.memref_squeeze %4 : memref<1x!tpu.dma_semaphore, #tpu.memory_space<semaphore_mem>> -> memref<!tpu.dma_semaphore, #tpu.memory_space<semaphore_mem>>
    tpu.enqueue_dma source(%arg9 : memref<772x448xi8, #tpu.memory_space<any>>) target(%arg17 : memref<772x448xi8, #tpu.memory_space<vmem>>) target_semaphore(%5 : memref<!tpu.dma_semaphore, #tpu.memory_space<semaphore_mem>>)
    %c3_i32 = arith.constant 3 : i32
    %6 = tpu.memref_slice %arg22[%c3_i32] : memref<7x!tpu.dma_semaphore, #tpu.memory_space<semaphore_mem>> -> memref<1x!tpu.dma_semaphore, #tpu.memory_space<semaphore_mem>>
    %7 = tpu.memref_squeeze %6 : memref<1x!tpu.dma_semaphore, #tpu.memory_space<semaphore_mem>> -> memref<!tpu.dma_semaphore, #tpu.memory_space<semaphore_mem>>
    tpu.enqueue_dma source(%arg10 : memref<448x336xbf16, #tpu.memory_space<any>>) target(%arg18 : memref<448x336xbf16, #tpu.memory_space<vmem>>) target_semaphore(%7 : memref<!tpu.dma_semaphore, #tpu.memory_space<semaphore_mem>>)
    %c4_i32 = arith.constant 4 : i32
    %8 = tpu.memref_slice %arg22[%c4_i32] : memref<7x!tpu.dma_semaphore, #tpu.memory_space<semaphore_mem>> -> memref<1x!tpu.dma_semaphore, #tpu.memory_space<semaphore_mem>>
    %9 = tpu.memref_squeeze %8 : memref<1x!tpu.dma_semaphore, #tpu.memory_space<semaphore_mem>> -> memref<!tpu.dma_semaphore, #tpu.memory_space<semaphore_mem>>
    tpu.enqueue_dma source(%arg11 : memref<336x224xbf16, #tpu.memory_space<any>>) target(%arg19 : memref<336x224xbf16, #tpu.memory_space<vmem>>) target_semaphore(%9 : memref<!tpu.dma_semaphore, #tpu.memory_space<semaphore_mem>>)
    %c5_i32 = arith.constant 5 : i32
    %10 = tpu.memref_slice %arg22[%c5_i32] : memref<7x!tpu.dma_semaphore, #tpu.memory_space<semaphore_mem>> -> memref<1x!tpu.dma_semaphore, #tpu.memory_space<semaphore_mem>>
    %11 = tpu.memref_squeeze %10 : memref<1x!tpu.dma_semaphore, #tpu.memory_space<semaphore_mem>> -> memref<!tpu.dma_semaphore, #tpu.memory_space<semaphore_mem>>
    tpu.enqueue_dma source(%arg12 : memref<224x161xbf16, #tpu.memory_space<any>>) target(%arg20 : memref<224x161xbf16, #tpu.memory_space<vmem>>) target_semaphore(%11 : memref<!tpu.dma_semaphore, #tpu.memory_space<semaphore_mem>>)
    %c6_i32 = arith.constant 6 : i32
    %12 = tpu.memref_slice %arg22[%c6_i32] : memref<7x!tpu.dma_semaphore, #tpu.memory_space<semaphore_mem>> -> memref<1x!tpu.dma_semaphore, #tpu.memory_space<semaphore_mem>>
    %13 = tpu.memref_squeeze %12 : memref<1x!tpu.dma_semaphore, #tpu.memory_space<semaphore_mem>> -> memref<!tpu.dma_semaphore, #tpu.memory_space<semaphore_mem>>
    tpu.enqueue_dma source(%arg13 : memref<161x97xbf16, #tpu.memory_space<any>>) target(%arg21 : memref<161x97xbf16, #tpu.memory_space<vmem>>) target_semaphore(%13 : memref<!tpu.dma_semaphore, #tpu.memory_space<semaphore_mem>>)
    %c0 = arith.constant 0 : index
    %c0_0 = arith.constant 0 : index
    %c0_1 = arith.constant 0 : index
    %14 = vector.load %arg0[%c0, %c0_0, %c0_1] : memref<2x12x1xf32, #tpu.memory_space<vmem>>, vector<2x12x1xf32>
    %cst = arith.constant 0.000000e+00 : f32
    %15 = vector.broadcast %cst : f32 to vector<2x1x1xf32>
    %16 = vector.extract_strided_slice %14 {offsets = [0, 0, 0], sizes = [2, 11, 1], strides = [1, 1, 1]} : vector<2x12x1xf32> to vector<2x11x1xf32>
    %17 = tpu.concatenate %15, %16 in 1 : vector<2x1x1xf32>, vector<2x11x1xf32> -> vector<2x12x1xf32>
    %18 = vector.extract_strided_slice %14 {offsets = [0, 1, 0], sizes = [2, 11, 1], strides = [1, 1, 1]} : vector<2x12x1xf32> to vector<2x11x1xf32>
    %19 = tpu.concatenate %18, %15 in 1 : vector<2x11x1xf32>, vector<2x1x1xf32> -> vector<2x12x1xf32>
    %c0_2 = arith.constant 0 : index
    %c0_3 = arith.constant 0 : index
    %c0_4 = arith.constant 0 : index
    %20 = vector.load %arg1[%c0_2, %c0_3, %c0_4] : memref<3x1x32xf32, #tpu.memory_space<vmem>>, vector<1x1x32xf32>
    %21 = vector.shape_cast %20 : vector<1x1x32xf32> to vector<1x32xf32>
    %22 = vector.shape_cast %21 : vector<1x32xf32> to vector<1x1x32xf32>
    %23 = vector.broadcast %17 : vector<2x12x1xf32> to vector<2x12x32xf32>
    %24 = vector.broadcast %22 : vector<1x1x32xf32> to vector<2x12x32xf32>
    %25 = arith.mulf %23, %24 : vector<2x12x32xf32>
    %c1 = arith.constant 1 : index
    %c0_5 = arith.constant 0 : index
    %c0_6 = arith.constant 0 : index
    %26 = vector.load %arg1[%c1, %c0_5, %c0_6] : memref<3x1x32xf32, #tpu.memory_space<vmem>>, vector<1x1x32xf32>
    %27 = vector.shape_cast %26 : vector<1x1x32xf32> to vector<1x32xf32>
    %28 = vector.shape_cast %27 : vector<1x32xf32> to vector<1x1x32xf32>
    %29 = vector.broadcast %14 : vector<2x12x1xf32> to vector<2x12x32xf32>
    %30 = vector.broadcast %28 : vector<1x1x32xf32> to vector<2x12x32xf32>
    %31 = arith.mulf %29, %30 : vector<2x12x32xf32>
    %32 = arith.addf %25, %31 : vector<2x12x32xf32>
    %c2 = arith.constant 2 : index
    %c0_7 = arith.constant 0 : index
    %c0_8 = arith.constant 0 : index
    %33 = vector.load %arg1[%c2, %c0_7, %c0_8] : memref<3x1x32xf32, #tpu.memory_space<vmem>>, vector<1x1x32xf32>
    %34 = vector.shape_cast %33 : vector<1x1x32xf32> to vector<1x32xf32>
    %35 = vector.shape_cast %34 : vector<1x32xf32> to vector<1x1x32xf32>
    %36 = vector.broadcast %19 : vector<2x12x1xf32> to vector<2x12x32xf32>
    %37 = vector.broadcast %35 : vector<1x1x32xf32> to vector<2x12x32xf32>
    %38 = arith.mulf %36, %37 : vector<2x12x32xf32>
    %39 = arith.addf %32, %38 : vector<2x12x32xf32>
    %c0_9 = arith.constant 0 : index
    %c0_10 = arith.constant 0 : index
    %40 = vector.load %arg5[%c0_9, %c0_10] : memref<4x256xf32, #tpu.memory_space<vmem>>, vector<1x32xf32>
    %41 = vector.shape_cast %40 : vector<1x32xf32> to vector<1x1x32xf32>
    %42 = vector.broadcast %41 : vector<1x1x32xf32> to vector<2x12x32xf32>
    %43 = arith.addf %39, %42 : vector<2x12x32xf32>
    %cst_11 = arith.constant 0.000000e+00 : f32
    %44 = vector.broadcast %cst_11 : f32 to vector<2x12x32xf32>
    %45 = arith.maximumf %43, %44 : vector<2x12x32xf32>
    %cst_12 = arith.constant 0.000000e+00 : f32
    %46 = vector.broadcast %cst_12 : f32 to vector<2x1x32xf32>
    %47 = vector.extract_strided_slice %45 {offsets = [0, 0, 0], sizes = [2, 11, 32], strides = [1, 1, 1]} : vector<2x12x32xf32> to vector<2x11x32xf32>
    %48 = tpu.concatenate %46, %47 in 1 : vector<2x1x32xf32>, vector<2x11x32xf32> -> vector<2x12x32xf32>
    %49 = vector.extract_strided_slice %45 {offsets = [0, 1, 0], sizes = [2, 11, 32], strides = [1, 1, 1]} : vector<2x12x32xf32> to vector<2x11x32xf32>
    %50 = tpu.concatenate %49, %46 in 1 : vector<2x11x32xf32>, vector<2x1x32xf32> -> vector<2x12x32xf32>
    %51 = vector.shape_cast %48 : vector<2x12x32xf32> to vector<24x32xf32>
    %52 = arith.truncf %51 : vector<24x32xf32> to vector<24x32xbf16>
    %c0_13 = arith.constant 0 : index
    %c0_14 = arith.constant 0 : index
    %c0_15 = arith.constant 0 : index
    %53 = vector.load %arg2[%c0_13, %c0_14, %c0_15] : memref<3x32x64xbf16, #tpu.memory_space<vmem>>, vector<1x32x64xbf16>
    %54 = vector.shape_cast %53 : vector<1x32x64xbf16> to vector<32x64xbf16>
    %cst_16 = arith.constant dense<0.000000e+00> : vector<24x64xf32>
    %55 = tpu.matmul %52, %54, %cst_16 {dimension_numbers = #tpu.dot_dimension_numbers<[1], [0], [0], [1], [0, 0, 1, 1], [], []>} : vector<24x32xbf16>, vector<32x64xbf16>, vector<24x64xf32> -> vector<24x64xf32>
    %56 = vector.shape_cast %45 : vector<2x12x32xf32> to vector<24x32xf32>
    %57 = arith.truncf %56 : vector<24x32xf32> to vector<24x32xbf16>
    %c1_17 = arith.constant 1 : index
    %c0_18 = arith.constant 0 : index
    %c0_19 = arith.constant 0 : index
    %58 = vector.load %arg2[%c1_17, %c0_18, %c0_19] : memref<3x32x64xbf16, #tpu.memory_space<vmem>>, vector<1x32x64xbf16>
    %59 = vector.shape_cast %58 : vector<1x32x64xbf16> to vector<32x64xbf16>
    %cst_20 = arith.constant dense<0.000000e+00> : vector<24x64xf32>
    %60 = tpu.matmul %57, %59, %cst_20 {dimension_numbers = #tpu.dot_dimension_numbers<[1], [0], [0], [1], [0, 0, 1, 1], [], []>} : vector<24x32xbf16>, vector<32x64xbf16>, vector<24x64xf32> -> vector<24x64xf32>
    %61 = arith.addf %55, %60 : vector<24x64xf32>
    %62 = vector.shape_cast %50 : vector<2x12x32xf32> to vector<24x32xf32>
    %63 = arith.truncf %62 : vector<24x32xf32> to vector<24x32xbf16>
    %c2_21 = arith.constant 2 : index
    %c0_22 = arith.constant 0 : index
    %c0_23 = arith.constant 0 : index
    %64 = vector.load %arg2[%c2_21, %c0_22, %c0_23] : memref<3x32x64xbf16, #tpu.memory_space<vmem>>, vector<1x32x64xbf16>
    %65 = vector.shape_cast %64 : vector<1x32x64xbf16> to vector<32x64xbf16>
    %cst_24 = arith.constant dense<0.000000e+00> : vector<24x64xf32>
    %66 = tpu.matmul %63, %65, %cst_24 {dimension_numbers = #tpu.dot_dimension_numbers<[1], [0], [0], [1], [0, 0, 1, 1], [], []>} : vector<24x32xbf16>, vector<32x64xbf16>, vector<24x64xf32> -> vector<24x64xf32>
    %67 = arith.addf %61, %66 : vector<24x64xf32>
    %c1_25 = arith.constant 1 : index
    %c0_26 = arith.constant 0 : index
    %68 = vector.load %arg5[%c1_25, %c0_26] : memref<4x256xf32, #tpu.memory_space<vmem>>, vector<1x64xf32>
    %69 = vector.broadcast %68 : vector<1x64xf32> to vector<24x64xf32>
    %70 = arith.addf %67, %69 : vector<24x64xf32>
    %cst_27 = arith.constant 0.000000e+00 : f32
    %71 = vector.broadcast %cst_27 : f32 to vector<24x64xf32>
    %72 = arith.maximumf %70, %71 : vector<24x64xf32>
    %73 = vector.shape_cast %72 : vector<24x64xf32> to vector<2x12x64xf32>
    %cst_28 = arith.constant 0.000000e+00 : f32
    %74 = vector.broadcast %cst_28 : f32 to vector<2x1x64xf32>
    %75 = vector.extract_strided_slice %73 {offsets = [0, 0, 0], sizes = [2, 11, 64], strides = [1, 1, 1]} : vector<2x12x64xf32> to vector<2x11x64xf32>
    %76 = tpu.concatenate %74, %75 in 1 : vector<2x1x64xf32>, vector<2x11x64xf32> -> vector<2x12x64xf32>
    %77 = vector.extract_strided_slice %73 {offsets = [0, 1, 0], sizes = [2, 11, 64], strides = [1, 1, 1]} : vector<2x12x64xf32> to vector<2x11x64xf32>
    %78 = tpu.concatenate %77, %74 in 1 : vector<2x11x64xf32>, vector<2x1x64xf32> -> vector<2x12x64xf32>
    %79 = vector.shape_cast %76 : vector<2x12x64xf32> to vector<24x64xf32>
    %80 = arith.truncf %79 : vector<24x64xf32> to vector<24x64xbf16>
    %c0_29 = arith.constant 0 : index
    %c0_30 = arith.constant 0 : index
    %c0_31 = arith.constant 0 : index
    %81 = vector.load %arg3[%c0_29, %c0_30, %c0_31] : memref<3x64x128xbf16, #tpu.memory_space<vmem>>, vector<1x64x128xbf16>
    %82 = vector.shape_cast %81 : vector<1x64x128xbf16> to vector<64x128xbf16>
    %cst_32 = arith.constant dense<0.000000e+00> : vector<24x128xf32>
    %83 = tpu.matmul %80, %82, %cst_32 {dimension_numbers = #tpu.dot_dimension_numbers<[1], [0], [0], [1], [0, 0, 1, 1], [], []>} : vector<24x64xbf16>, vector<64x128xbf16>, vector<24x128xf32> -> vector<24x128xf32>
    %84 = vector.shape_cast %73 : vector<2x12x64xf32> to vector<24x64xf32>
    %85 = arith.truncf %84 : vector<24x64xf32> to vector<24x64xbf16>
    %c1_33 = arith.constant 1 : index
    %c0_34 = arith.constant 0 : index
    %c0_35 = arith.constant 0 : index
    %86 = vector.load %arg3[%c1_33, %c0_34, %c0_35] : memref<3x64x128xbf16, #tpu.memory_space<vmem>>, vector<1x64x128xbf16>
    %87 = vector.shape_cast %86 : vector<1x64x128xbf16> to vector<64x128xbf16>
    %cst_36 = arith.constant dense<0.000000e+00> : vector<24x128xf32>
    %88 = tpu.matmul %85, %87, %cst_36 {dimension_numbers = #tpu.dot_dimension_numbers<[1], [0], [0], [1], [0, 0, 1, 1], [], []>} : vector<24x64xbf16>, vector<64x128xbf16>, vector<24x128xf32> -> vector<24x128xf32>
    %89 = arith.addf %83, %88 : vector<24x128xf32>
    %90 = vector.shape_cast %78 : vector<2x12x64xf32> to vector<24x64xf32>
    %91 = arith.truncf %90 : vector<24x64xf32> to vector<24x64xbf16>
    %c2_37 = arith.constant 2 : index
    %c0_38 = arith.constant 0 : index
    %c0_39 = arith.constant 0 : index
    %92 = vector.load %arg3[%c2_37, %c0_38, %c0_39] : memref<3x64x128xbf16, #tpu.memory_space<vmem>>, vector<1x64x128xbf16>
    %93 = vector.shape_cast %92 : vector<1x64x128xbf16> to vector<64x128xbf16>
    %cst_40 = arith.constant dense<0.000000e+00> : vector<24x128xf32>
    %94 = tpu.matmul %91, %93, %cst_40 {dimension_numbers = #tpu.dot_dimension_numbers<[1], [0], [0], [1], [0, 0, 1, 1], [], []>} : vector<24x64xbf16>, vector<64x128xbf16>, vector<24x128xf32> -> vector<24x128xf32>
    %95 = arith.addf %89, %94 : vector<24x128xf32>
    %c2_41 = arith.constant 2 : index
    %c0_42 = arith.constant 0 : index
    %96 = vector.load %arg5[%c2_41, %c0_42] : memref<4x256xf32, #tpu.memory_space<vmem>>, vector<1x128xf32>
    %97 = vector.broadcast %96 : vector<1x128xf32> to vector<24x128xf32>
    %98 = arith.addf %95, %97 : vector<24x128xf32>
    %cst_43 = arith.constant 0.000000e+00 : f32
    %99 = vector.broadcast %cst_43 : f32 to vector<24x128xf32>
    %100 = arith.maximumf %98, %99 : vector<24x128xf32>
    %101 = vector.shape_cast %100 : vector<24x128xf32> to vector<2x12x128xf32>
    %cst_44 = arith.constant 0.000000e+00 : f32
    %102 = vector.broadcast %cst_44 : f32 to vector<2x1x128xf32>
    %103 = vector.extract_strided_slice %101 {offsets = [0, 0, 0], sizes = [2, 11, 128], strides = [1, 1, 1]} : vector<2x12x128xf32> to vector<2x11x128xf32>
    %104 = tpu.concatenate %102, %103 in 1 : vector<2x1x128xf32>, vector<2x11x128xf32> -> vector<2x12x128xf32>
    %105 = vector.extract_strided_slice %101 {offsets = [0, 1, 0], sizes = [2, 11, 128], strides = [1, 1, 1]} : vector<2x12x128xf32> to vector<2x11x128xf32>
    %106 = tpu.concatenate %105, %102 in 1 : vector<2x11x128xf32>, vector<2x1x128xf32> -> vector<2x12x128xf32>
    %107 = vector.shape_cast %104 : vector<2x12x128xf32> to vector<24x128xf32>
    %108 = arith.truncf %107 : vector<24x128xf32> to vector<24x128xbf16>
    %c0_45 = arith.constant 0 : index
    %c0_46 = arith.constant 0 : index
    %c0_47 = arith.constant 0 : index
    %109 = vector.load %arg4[%c0_45, %c0_46, %c0_47] : memref<3x128x256xbf16, #tpu.memory_space<vmem>>, vector<1x128x256xbf16>
    %110 = vector.shape_cast %109 : vector<1x128x256xbf16> to vector<128x256xbf16>
    %cst_48 = arith.constant dense<0.000000e+00> : vector<24x256xf32>
    %111 = tpu.matmul %108, %110, %cst_48 {dimension_numbers = #tpu.dot_dimension_numbers<[1], [0], [0], [1], [0, 0, 1, 1], [], []>} : vector<24x128xbf16>, vector<128x256xbf16>, vector<24x256xf32> -> vector<24x256xf32>
    %112 = vector.shape_cast %101 : vector<2x12x128xf32> to vector<24x128xf32>
    %113 = arith.truncf %112 : vector<24x128xf32> to vector<24x128xbf16>
    %c1_49 = arith.constant 1 : index
    %c0_50 = arith.constant 0 : index
    %c0_51 = arith.constant 0 : index
    %114 = vector.load %arg4[%c1_49, %c0_50, %c0_51] : memref<3x128x256xbf16, #tpu.memory_space<vmem>>, vector<1x128x256xbf16>
    %115 = vector.shape_cast %114 : vector<1x128x256xbf16> to vector<128x256xbf16>
    %cst_52 = arith.constant dense<0.000000e+00> : vector<24x256xf32>
    %116 = tpu.matmul %113, %115, %cst_52 {dimension_numbers = #tpu.dot_dimension_numbers<[1], [0], [0], [1], [0, 0, 1, 1], [], []>} : vector<24x128xbf16>, vector<128x256xbf16>, vector<24x256xf32> -> vector<24x256xf32>
    %117 = arith.addf %111, %116 : vector<24x256xf32>
    %118 = vector.shape_cast %106 : vector<2x12x128xf32> to vector<24x128xf32>
    %119 = arith.truncf %118 : vector<24x128xf32> to vector<24x128xbf16>
    %c2_53 = arith.constant 2 : index
    %c0_54 = arith.constant 0 : index
    %c0_55 = arith.constant 0 : index
    %120 = vector.load %arg4[%c2_53, %c0_54, %c0_55] : memref<3x128x256xbf16, #tpu.memory_space<vmem>>, vector<1x128x256xbf16>
    %121 = vector.shape_cast %120 : vector<1x128x256xbf16> to vector<128x256xbf16>
    %cst_56 = arith.constant dense<0.000000e+00> : vector<24x256xf32>
    %122 = tpu.matmul %119, %121, %cst_56 {dimension_numbers = #tpu.dot_dimension_numbers<[1], [0], [0], [1], [0, 0, 1, 1], [], []>} : vector<24x128xbf16>, vector<128x256xbf16>, vector<24x256xf32> -> vector<24x256xf32>
    %123 = arith.addf %117, %122 : vector<24x256xf32>
    %c3 = arith.constant 3 : index
    %c0_57 = arith.constant 0 : index
    %124 = vector.load %arg5[%c3, %c0_57] : memref<4x256xf32, #tpu.memory_space<vmem>>, vector<1x256xf32>
    %125 = vector.broadcast %124 : vector<1x256xf32> to vector<24x256xf32>
    %126 = arith.addf %123, %125 : vector<24x256xf32>
    %cst_58 = arith.constant 0.000000e+00 : f32
    %127 = vector.broadcast %cst_58 : f32 to vector<24x256xf32>
    %128 = arith.maximumf %126, %127 : vector<24x256xf32>
    %129 = vector.shape_cast %128 : vector<24x256xf32> to vector<2x12x256xf32>
    %cst_59 = arith.constant 0.000000e+00 : f32
    %130 = vector.broadcast %cst_59 : f32 to vector<2x1x256xf32>
    %131 = tpu.concatenate %130, %129, %130 in 1 : vector<2x1x256xf32>, vector<2x12x256xf32>, vector<2x1x256xf32> -> vector<2x14x256xf32>
    %132 = vector.shape_cast %131 : vector<2x14x256xf32> to vector<14x2x256xf32>
    %cst_60 = arith.constant dense<0xFF800000> : vector<14x256xf32>
    %133 = vector.multi_reduction <maximumf>, %132, %cst_60 [1] : vector<14x2x256xf32> to vector<14x256xf32>
    %134 = vector.shape_cast %133 : vector<14x256xf32> to vector<2x7x256xf32>
    %c0_i32_61 = arith.constant 0 : i32
    %135 = tpu.memref_slice %arg22[%c0_i32_61] : memref<7x!tpu.dma_semaphore, #tpu.memory_space<semaphore_mem>> -> memref<1x!tpu.dma_semaphore, #tpu.memory_space<semaphore_mem>>
    %136 = tpu.memref_squeeze %135 : memref<1x!tpu.dma_semaphore, #tpu.memory_space<semaphore_mem>> -> memref<!tpu.dma_semaphore, #tpu.memory_space<semaphore_mem>>
    tpu.wait_dma2 semaphore(%136 : memref<!tpu.dma_semaphore, #tpu.memory_space<semaphore_mem>>) src(%arg7 : memref<7x256x896xi8, #tpu.memory_space<any>>) dst(%arg15 : memref<7x256x896xi8, #tpu.memory_space<vmem>>)
    %cst_62 = arith.constant 0.000000e+00 : f32
    %137 = vector.broadcast %cst_62 : f32 to vector<2x896xf32>
    %138 = vector.extract_strided_slice %134 {offsets = [0, 0, 0], sizes = [2, 1, 256], strides = [1, 1, 1]} : vector<2x7x256xf32> to vector<2x1x256xf32>
    %139 = vector.shape_cast %138 : vector<2x1x256xf32> to vector<2x256xf32>
    %140 = arith.truncf %139 : vector<2x256xf32> to vector<2x256xbf16>
    %c0_63 = arith.constant 0 : index
    %c0_64 = arith.constant 0 : index
    %c0_65 = arith.constant 0 : index
    %141 = vector.load %arg15[%c0_63, %c0_64, %c0_65] : memref<7x256x896xi8, #tpu.memory_space<vmem>>, vector<1x256x896xi8>
    %142 = vector.shape_cast %141 : vector<1x256x896xi8> to vector<256x896xi8>
    %143 = arith.sitofp %142 : vector<256x896xi8> to vector<256x896xbf16>
    %cst_66 = arith.constant dense<0.000000e+00> : vector<2x896xf32>
    %144 = tpu.matmul %140, %143, %cst_66 {dimension_numbers = #tpu.dot_dimension_numbers<[1], [0], [0], [1], [0, 0, 1, 1], [], []>} : vector<2x256xbf16>, vector<256x896xbf16>, vector<2x896xf32> -> vector<2x896xf32>
    %145 = arith.addf %137, %144 : vector<2x896xf32>
    %146 = vector.extract_strided_slice %134 {offsets = [0, 1, 0], sizes = [2, 1, 256], strides = [1, 1, 1]} : vector<2x7x256xf32> to vector<2x1x256xf32>
    %147 = vector.shape_cast %146 : vector<2x1x256xf32> to vector<2x256xf32>
    %148 = arith.truncf %147 : vector<2x256xf32> to vector<2x256xbf16>
    %c1_67 = arith.constant 1 : index
    %c0_68 = arith.constant 0 : index
    %c0_69 = arith.constant 0 : index
    %149 = vector.load %arg15[%c1_67, %c0_68, %c0_69] : memref<7x256x896xi8, #tpu.memory_space<vmem>>, vector<1x256x896xi8>
    %150 = vector.shape_cast %149 : vector<1x256x896xi8> to vector<256x896xi8>
    %151 = arith.sitofp %150 : vector<256x896xi8> to vector<256x896xbf16>
    %cst_70 = arith.constant dense<0.000000e+00> : vector<2x896xf32>
    %152 = tpu.matmul %148, %151, %cst_70 {dimension_numbers = #tpu.dot_dimension_numbers<[1], [0], [0], [1], [0, 0, 1, 1], [], []>} : vector<2x256xbf16>, vector<256x896xbf16>, vector<2x896xf32> -> vector<2x896xf32>
    %153 = arith.addf %145, %152 : vector<2x896xf32>
    %154 = vector.extract_strided_slice %134 {offsets = [0, 2, 0], sizes = [2, 1, 256], strides = [1, 1, 1]} : vector<2x7x256xf32> to vector<2x1x256xf32>
    %155 = vector.shape_cast %154 : vector<2x1x256xf32> to vector<2x256xf32>
    %156 = arith.truncf %155 : vector<2x256xf32> to vector<2x256xbf16>
    %c2_71 = arith.constant 2 : index
    %c0_72 = arith.constant 0 : index
    %c0_73 = arith.constant 0 : index
    %157 = vector.load %arg15[%c2_71, %c0_72, %c0_73] : memref<7x256x896xi8, #tpu.memory_space<vmem>>, vector<1x256x896xi8>
    %158 = vector.shape_cast %157 : vector<1x256x896xi8> to vector<256x896xi8>
    %159 = arith.sitofp %158 : vector<256x896xi8> to vector<256x896xbf16>
    %cst_74 = arith.constant dense<0.000000e+00> : vector<2x896xf32>
    %160 = tpu.matmul %156, %159, %cst_74 {dimension_numbers = #tpu.dot_dimension_numbers<[1], [0], [0], [1], [0, 0, 1, 1], [], []>} : vector<2x256xbf16>, vector<256x896xbf16>, vector<2x896xf32> -> vector<2x896xf32>
    %161 = arith.addf %153, %160 : vector<2x896xf32>
    %162 = vector.extract_strided_slice %134 {offsets = [0, 3, 0], sizes = [2, 1, 256], strides = [1, 1, 1]} : vector<2x7x256xf32> to vector<2x1x256xf32>
    %163 = vector.shape_cast %162 : vector<2x1x256xf32> to vector<2x256xf32>
    %164 = arith.truncf %163 : vector<2x256xf32> to vector<2x256xbf16>
    %c3_75 = arith.constant 3 : index
    %c0_76 = arith.constant 0 : index
    %c0_77 = arith.constant 0 : index
    %165 = vector.load %arg15[%c3_75, %c0_76, %c0_77] : memref<7x256x896xi8, #tpu.memory_space<vmem>>, vector<1x256x896xi8>
    %166 = vector.shape_cast %165 : vector<1x256x896xi8> to vector<256x896xi8>
    %167 = arith.sitofp %166 : vector<256x896xi8> to vector<256x896xbf16>
    %cst_78 = arith.constant dense<0.000000e+00> : vector<2x896xf32>
    %168 = tpu.matmul %164, %167, %cst_78 {dimension_numbers = #tpu.dot_dimension_numbers<[1], [0], [0], [1], [0, 0, 1, 1], [], []>} : vector<2x256xbf16>, vector<256x896xbf16>, vector<2x896xf32> -> vector<2x896xf32>
    %169 = arith.addf %161, %168 : vector<2x896xf32>
    %170 = vector.extract_strided_slice %134 {offsets = [0, 4, 0], sizes = [2, 1, 256], strides = [1, 1, 1]} : vector<2x7x256xf32> to vector<2x1x256xf32>
    %171 = vector.shape_cast %170 : vector<2x1x256xf32> to vector<2x256xf32>
    %172 = arith.truncf %171 : vector<2x256xf32> to vector<2x256xbf16>
    %c4 = arith.constant 4 : index
    %c0_79 = arith.constant 0 : index
    %c0_80 = arith.constant 0 : index
    %173 = vector.load %arg15[%c4, %c0_79, %c0_80] : memref<7x256x896xi8, #tpu.memory_space<vmem>>, vector<1x256x896xi8>
    %174 = vector.shape_cast %173 : vector<1x256x896xi8> to vector<256x896xi8>
    %175 = arith.sitofp %174 : vector<256x896xi8> to vector<256x896xbf16>
    %cst_81 = arith.constant dense<0.000000e+00> : vector<2x896xf32>
    %176 = tpu.matmul %172, %175, %cst_81 {dimension_numbers = #tpu.dot_dimension_numbers<[1], [0], [0], [1], [0, 0, 1, 1], [], []>} : vector<2x256xbf16>, vector<256x896xbf16>, vector<2x896xf32> -> vector<2x896xf32>
    %177 = arith.addf %169, %176 : vector<2x896xf32>
    %178 = vector.extract_strided_slice %134 {offsets = [0, 5, 0], sizes = [2, 1, 256], strides = [1, 1, 1]} : vector<2x7x256xf32> to vector<2x1x256xf32>
    %179 = vector.shape_cast %178 : vector<2x1x256xf32> to vector<2x256xf32>
    %180 = arith.truncf %179 : vector<2x256xf32> to vector<2x256xbf16>
    %c5 = arith.constant 5 : index
    %c0_82 = arith.constant 0 : index
    %c0_83 = arith.constant 0 : index
    %181 = vector.load %arg15[%c5, %c0_82, %c0_83] : memref<7x256x896xi8, #tpu.memory_space<vmem>>, vector<1x256x896xi8>
    %182 = vector.shape_cast %181 : vector<1x256x896xi8> to vector<256x896xi8>
    %183 = arith.sitofp %182 : vector<256x896xi8> to vector<256x896xbf16>
    %cst_84 = arith.constant dense<0.000000e+00> : vector<2x896xf32>
    %184 = tpu.matmul %180, %183, %cst_84 {dimension_numbers = #tpu.dot_dimension_numbers<[1], [0], [0], [1], [0, 0, 1, 1], [], []>} : vector<2x256xbf16>, vector<256x896xbf16>, vector<2x896xf32> -> vector<2x896xf32>
    %185 = arith.addf %177, %184 : vector<2x896xf32>
    %186 = vector.extract_strided_slice %134 {offsets = [0, 6, 0], sizes = [2, 1, 256], strides = [1, 1, 1]} : vector<2x7x256xf32> to vector<2x1x256xf32>
    %187 = vector.shape_cast %186 : vector<2x1x256xf32> to vector<2x256xf32>
    %188 = arith.truncf %187 : vector<2x256xf32> to vector<2x256xbf16>
    %c6 = arith.constant 6 : index
    %c0_85 = arith.constant 0 : index
    %c0_86 = arith.constant 0 : index
    %189 = vector.load %arg15[%c6, %c0_85, %c0_86] : memref<7x256x896xi8, #tpu.memory_space<vmem>>, vector<1x256x896xi8>
    %190 = vector.shape_cast %189 : vector<1x256x896xi8> to vector<256x896xi8>
    %191 = arith.sitofp %190 : vector<256x896xi8> to vector<256x896xbf16>
    %cst_87 = arith.constant dense<0.000000e+00> : vector<2x896xf32>
    %192 = tpu.matmul %188, %191, %cst_87 {dimension_numbers = #tpu.dot_dimension_numbers<[1], [0], [0], [1], [0, 0, 1, 1], [], []>} : vector<2x256xbf16>, vector<256x896xbf16>, vector<2x896xf32> -> vector<2x896xf32>
    %193 = arith.addf %185, %192 : vector<2x896xf32>
    %c0_88 = arith.constant 0 : index
    %c1_89 = arith.constant 1 : index
    %c0_90 = arith.constant 0 : index
    %194 = vector.load %arg6[%c0_88, %c1_89, %c0_90] : memref<7x2x896xf32, #tpu.memory_space<vmem>>, vector<1x1x896xf32>
    %195 = vector.shape_cast %194 : vector<1x1x896xf32> to vector<1x896xf32>
    %196 = vector.broadcast %195 : vector<1x896xf32> to vector<2x896xf32>
    %197 = arith.mulf %193, %196 : vector<2x896xf32>
    %c0_91 = arith.constant 0 : index
    %c0_92 = arith.constant 0 : index
    %c0_93 = arith.constant 0 : index
    %198 = vector.load %arg6[%c0_91, %c0_92, %c0_93] : memref<7x2x896xf32, #tpu.memory_space<vmem>>, vector<1x1x896xf32>
    %199 = vector.shape_cast %198 : vector<1x1x896xf32> to vector<1x896xf32>
    %200 = vector.broadcast %199 : vector<1x896xf32> to vector<2x896xf32>
    %201 = arith.addf %197, %200 : vector<2x896xf32>
    %cst_94 = arith.constant 0.000000e+00 : f32
    %202 = vector.broadcast %cst_94 : f32 to vector<2x896xf32>
    %203 = arith.maximumf %201, %202 : vector<2x896xf32>
    %c1_i32_95 = arith.constant 1 : i32
    %204 = tpu.memref_slice %arg22[%c1_i32_95] : memref<7x!tpu.dma_semaphore, #tpu.memory_space<semaphore_mem>> -> memref<1x!tpu.dma_semaphore, #tpu.memory_space<semaphore_mem>>
    %205 = tpu.memref_squeeze %204 : memref<1x!tpu.dma_semaphore, #tpu.memory_space<semaphore_mem>> -> memref<!tpu.dma_semaphore, #tpu.memory_space<semaphore_mem>>
    tpu.wait_dma2 semaphore(%205 : memref<!tpu.dma_semaphore, #tpu.memory_space<semaphore_mem>>) src(%arg8 : memref<896x772xi8, #tpu.memory_space<any>>) dst(%arg16 : memref<896x772xi8, #tpu.memory_space<vmem>>)
    %c0_96 = arith.constant 0 : index
    %c0_97 = arith.constant 0 : index
    %206 = vector.load %arg16[%c0_96, %c0_97] : memref<896x772xi8, #tpu.memory_space<vmem>>, vector<896x772xi8>
    %207 = arith.sitofp %206 : vector<896x772xi8> to vector<896x772xbf16>
    %208 = arith.truncf %203 : vector<2x896xf32> to vector<2x896xbf16>
    %cst_98 = arith.constant dense<0.000000e+00> : vector<2x772xf32>
    %209 = tpu.matmul %208, %207, %cst_98 {dimension_numbers = #tpu.dot_dimension_numbers<[1], [0], [0], [1], [0, 0, 1, 1], [], []>} : vector<2x896xbf16>, vector<896x772xbf16>, vector<2x772xf32> -> vector<2x772xf32>
    %c1_99 = arith.constant 1 : index
    %c1_100 = arith.constant 1 : index
    %c0_101 = arith.constant 0 : index
    %210 = vector.load %arg6[%c1_99, %c1_100, %c0_101] : memref<7x2x896xf32, #tpu.memory_space<vmem>>, vector<1x1x772xf32>
    %211 = vector.shape_cast %210 : vector<1x1x772xf32> to vector<1x772xf32>
    %212 = vector.broadcast %211 : vector<1x772xf32> to vector<2x772xf32>
    %213 = arith.mulf %209, %212 : vector<2x772xf32>
    %c1_102 = arith.constant 1 : index
    %c0_103 = arith.constant 0 : index
    %c0_104 = arith.constant 0 : index
    %214 = vector.load %arg6[%c1_102, %c0_103, %c0_104] : memref<7x2x896xf32, #tpu.memory_space<vmem>>, vector<1x1x772xf32>
    %215 = vector.shape_cast %214 : vector<1x1x772xf32> to vector<1x772xf32>
    %216 = vector.broadcast %215 : vector<1x772xf32> to vector<2x772xf32>
    %217 = arith.addf %213, %216 : vector<2x772xf32>
    %cst_105 = arith.constant 0.000000e+00 : f32
    %218 = vector.broadcast %cst_105 : f32 to vector<2x772xf32>
    %219 = arith.maximumf %217, %218 : vector<2x772xf32>
    %c2_i32_106 = arith.constant 2 : i32
    %220 = tpu.memref_slice %arg22[%c2_i32_106] : memref<7x!tpu.dma_semaphore, #tpu.memory_space<semaphore_mem>> -> memref<1x!tpu.dma_semaphore, #tpu.memory_space<semaphore_mem>>
    %221 = tpu.memref_squeeze %220 : memref<1x!tpu.dma_semaphore, #tpu.memory_space<semaphore_mem>> -> memref<!tpu.dma_semaphore, #tpu.memory_space<semaphore_mem>>
    tpu.wait_dma2 semaphore(%221 : memref<!tpu.dma_semaphore, #tpu.memory_space<semaphore_mem>>) src(%arg9 : memref<772x448xi8, #tpu.memory_space<any>>) dst(%arg17 : memref<772x448xi8, #tpu.memory_space<vmem>>)
    %c0_107 = arith.constant 0 : index
    %c0_108 = arith.constant 0 : index
    %222 = vector.load %arg17[%c0_107, %c0_108] : memref<772x448xi8, #tpu.memory_space<vmem>>, vector<772x448xi8>
    %223 = arith.sitofp %222 : vector<772x448xi8> to vector<772x448xbf16>
    %224 = arith.truncf %219 : vector<2x772xf32> to vector<2x772xbf16>
    %cst_109 = arith.constant dense<0.000000e+00> : vector<2x448xf32>
    %225 = tpu.matmul %224, %223, %cst_109 {dimension_numbers = #tpu.dot_dimension_numbers<[1], [0], [0], [1], [0, 0, 1, 1], [], []>} : vector<2x772xbf16>, vector<772x448xbf16>, vector<2x448xf32> -> vector<2x448xf32>
    %c2_110 = arith.constant 2 : index
    %c1_111 = arith.constant 1 : index
    %c0_112 = arith.constant 0 : index
    %226 = vector.load %arg6[%c2_110, %c1_111, %c0_112] : memref<7x2x896xf32, #tpu.memory_space<vmem>>, vector<1x1x448xf32>
    %227 = vector.shape_cast %226 : vector<1x1x448xf32> to vector<1x448xf32>
    %228 = vector.broadcast %227 : vector<1x448xf32> to vector<2x448xf32>
    %229 = arith.mulf %225, %228 : vector<2x448xf32>
    %c2_113 = arith.constant 2 : index
    %c0_114 = arith.constant 0 : index
    %c0_115 = arith.constant 0 : index
    %230 = vector.load %arg6[%c2_113, %c0_114, %c0_115] : memref<7x2x896xf32, #tpu.memory_space<vmem>>, vector<1x1x448xf32>
    %231 = vector.shape_cast %230 : vector<1x1x448xf32> to vector<1x448xf32>
    %232 = vector.broadcast %231 : vector<1x448xf32> to vector<2x448xf32>
    %233 = arith.addf %229, %232 : vector<2x448xf32>
    %cst_116 = arith.constant 0.000000e+00 : f32
    %234 = vector.broadcast %cst_116 : f32 to vector<2x448xf32>
    %235 = arith.maximumf %233, %234 : vector<2x448xf32>
    %c3_i32_117 = arith.constant 3 : i32
    %236 = tpu.memref_slice %arg22[%c3_i32_117] : memref<7x!tpu.dma_semaphore, #tpu.memory_space<semaphore_mem>> -> memref<1x!tpu.dma_semaphore, #tpu.memory_space<semaphore_mem>>
    %237 = tpu.memref_squeeze %236 : memref<1x!tpu.dma_semaphore, #tpu.memory_space<semaphore_mem>> -> memref<!tpu.dma_semaphore, #tpu.memory_space<semaphore_mem>>
    tpu.wait_dma2 semaphore(%237 : memref<!tpu.dma_semaphore, #tpu.memory_space<semaphore_mem>>) src(%arg10 : memref<448x336xbf16, #tpu.memory_space<any>>) dst(%arg18 : memref<448x336xbf16, #tpu.memory_space<vmem>>)
    %c0_118 = arith.constant 0 : index
    %c0_119 = arith.constant 0 : index
    %238 = vector.load %arg18[%c0_118, %c0_119] : memref<448x336xbf16, #tpu.memory_space<vmem>>, vector<448x336xbf16>
    %239 = arith.truncf %235 : vector<2x448xf32> to vector<2x448xbf16>
    %cst_120 = arith.constant dense<0.000000e+00> : vector<2x336xf32>
    %240 = tpu.matmul %239, %238, %cst_120 {dimension_numbers = #tpu.dot_dimension_numbers<[1], [0], [0], [1], [0, 0, 1, 1], [], []>} : vector<2x448xbf16>, vector<448x336xbf16>, vector<2x336xf32> -> vector<2x336xf32>
    %c3_121 = arith.constant 3 : index
    %c0_122 = arith.constant 0 : index
    %c0_123 = arith.constant 0 : index
    %241 = vector.load %arg6[%c3_121, %c0_122, %c0_123] : memref<7x2x896xf32, #tpu.memory_space<vmem>>, vector<1x1x336xf32>
    %242 = vector.shape_cast %241 : vector<1x1x336xf32> to vector<1x336xf32>
    %243 = vector.broadcast %242 : vector<1x336xf32> to vector<2x336xf32>
    %244 = arith.addf %240, %243 : vector<2x336xf32>
    %cst_124 = arith.constant 0.000000e+00 : f32
    %245 = vector.broadcast %cst_124 : f32 to vector<2x336xf32>
    %246 = arith.maximumf %244, %245 : vector<2x336xf32>
    %c4_i32_125 = arith.constant 4 : i32
    %247 = tpu.memref_slice %arg22[%c4_i32_125] : memref<7x!tpu.dma_semaphore, #tpu.memory_space<semaphore_mem>> -> memref<1x!tpu.dma_semaphore, #tpu.memory_space<semaphore_mem>>
    %248 = tpu.memref_squeeze %247 : memref<1x!tpu.dma_semaphore, #tpu.memory_space<semaphore_mem>> -> memref<!tpu.dma_semaphore, #tpu.memory_space<semaphore_mem>>
    tpu.wait_dma2 semaphore(%248 : memref<!tpu.dma_semaphore, #tpu.memory_space<semaphore_mem>>) src(%arg11 : memref<336x224xbf16, #tpu.memory_space<any>>) dst(%arg19 : memref<336x224xbf16, #tpu.memory_space<vmem>>)
    %c0_126 = arith.constant 0 : index
    %c0_127 = arith.constant 0 : index
    %249 = vector.load %arg19[%c0_126, %c0_127] : memref<336x224xbf16, #tpu.memory_space<vmem>>, vector<336x224xbf16>
    %250 = arith.truncf %246 : vector<2x336xf32> to vector<2x336xbf16>
    %cst_128 = arith.constant dense<0.000000e+00> : vector<2x224xf32>
    %251 = tpu.matmul %250, %249, %cst_128 {dimension_numbers = #tpu.dot_dimension_numbers<[1], [0], [0], [1], [0, 0, 1, 1], [], []>} : vector<2x336xbf16>, vector<336x224xbf16>, vector<2x224xf32> -> vector<2x224xf32>
    %c4_129 = arith.constant 4 : index
    %c0_130 = arith.constant 0 : index
    %c0_131 = arith.constant 0 : index
    %252 = vector.load %arg6[%c4_129, %c0_130, %c0_131] : memref<7x2x896xf32, #tpu.memory_space<vmem>>, vector<1x1x224xf32>
    %253 = vector.shape_cast %252 : vector<1x1x224xf32> to vector<1x224xf32>
    %254 = vector.broadcast %253 : vector<1x224xf32> to vector<2x224xf32>
    %255 = arith.addf %251, %254 : vector<2x224xf32>
    %cst_132 = arith.constant 0.000000e+00 : f32
    %256 = vector.broadcast %cst_132 : f32 to vector<2x224xf32>
    %257 = arith.maximumf %255, %256 : vector<2x224xf32>
    %c5_i32_133 = arith.constant 5 : i32
    %258 = tpu.memref_slice %arg22[%c5_i32_133] : memref<7x!tpu.dma_semaphore, #tpu.memory_space<semaphore_mem>> -> memref<1x!tpu.dma_semaphore, #tpu.memory_space<semaphore_mem>>
    %259 = tpu.memref_squeeze %258 : memref<1x!tpu.dma_semaphore, #tpu.memory_space<semaphore_mem>> -> memref<!tpu.dma_semaphore, #tpu.memory_space<semaphore_mem>>
    tpu.wait_dma2 semaphore(%259 : memref<!tpu.dma_semaphore, #tpu.memory_space<semaphore_mem>>) src(%arg12 : memref<224x161xbf16, #tpu.memory_space<any>>) dst(%arg20 : memref<224x161xbf16, #tpu.memory_space<vmem>>)
    %c0_134 = arith.constant 0 : index
    %c0_135 = arith.constant 0 : index
    %260 = vector.load %arg20[%c0_134, %c0_135] : memref<224x161xbf16, #tpu.memory_space<vmem>>, vector<224x161xbf16>
    %261 = arith.truncf %257 : vector<2x224xf32> to vector<2x224xbf16>
    %cst_136 = arith.constant dense<0.000000e+00> : vector<2x161xf32>
    %262 = tpu.matmul %261, %260, %cst_136 {dimension_numbers = #tpu.dot_dimension_numbers<[1], [0], [0], [1], [0, 0, 1, 1], [], []>} : vector<2x224xbf16>, vector<224x161xbf16>, vector<2x161xf32> -> vector<2x161xf32>
    %c5_137 = arith.constant 5 : index
    %c0_138 = arith.constant 0 : index
    %c0_139 = arith.constant 0 : index
    %263 = vector.load %arg6[%c5_137, %c0_138, %c0_139] : memref<7x2x896xf32, #tpu.memory_space<vmem>>, vector<1x1x161xf32>
    %264 = vector.shape_cast %263 : vector<1x1x161xf32> to vector<1x161xf32>
    %265 = vector.broadcast %264 : vector<1x161xf32> to vector<2x161xf32>
    %266 = arith.addf %262, %265 : vector<2x161xf32>
    %cst_140 = arith.constant 0.000000e+00 : f32
    %267 = vector.broadcast %cst_140 : f32 to vector<2x161xf32>
    %268 = arith.maximumf %266, %267 : vector<2x161xf32>
    %c6_i32_141 = arith.constant 6 : i32
    %269 = tpu.memref_slice %arg22[%c6_i32_141] : memref<7x!tpu.dma_semaphore, #tpu.memory_space<semaphore_mem>> -> memref<1x!tpu.dma_semaphore, #tpu.memory_space<semaphore_mem>>
    %270 = tpu.memref_squeeze %269 : memref<1x!tpu.dma_semaphore, #tpu.memory_space<semaphore_mem>> -> memref<!tpu.dma_semaphore, #tpu.memory_space<semaphore_mem>>
    tpu.wait_dma2 semaphore(%270 : memref<!tpu.dma_semaphore, #tpu.memory_space<semaphore_mem>>) src(%arg13 : memref<161x97xbf16, #tpu.memory_space<any>>) dst(%arg21 : memref<161x97xbf16, #tpu.memory_space<vmem>>)
    %c0_142 = arith.constant 0 : index
    %c0_143 = arith.constant 0 : index
    %271 = vector.load %arg21[%c0_142, %c0_143] : memref<161x97xbf16, #tpu.memory_space<vmem>>, vector<161x97xbf16>
    %272 = arith.truncf %268 : vector<2x161xf32> to vector<2x161xbf16>
    %cst_144 = arith.constant dense<0.000000e+00> : vector<2x97xf32>
    %273 = tpu.matmul %272, %271, %cst_144 {dimension_numbers = #tpu.dot_dimension_numbers<[1], [0], [0], [1], [0, 0, 1, 1], [], []>} : vector<2x161xbf16>, vector<161x97xbf16>, vector<2x97xf32> -> vector<2x97xf32>
    %c6_145 = arith.constant 6 : index
    %c0_146 = arith.constant 0 : index
    %c0_147 = arith.constant 0 : index
    %274 = vector.load %arg6[%c6_145, %c0_146, %c0_147] : memref<7x2x896xf32, #tpu.memory_space<vmem>>, vector<1x1x97xf32>
    %275 = vector.shape_cast %274 : vector<1x1x97xf32> to vector<1x97xf32>
    %276 = vector.broadcast %275 : vector<1x97xf32> to vector<2x97xf32>
    %277 = arith.addf %273, %276 : vector<2x97xf32>
    %cst_148 = arith.constant 0.000000e+00 : f32
    %278 = vector.broadcast %cst_148 : f32 to vector<2x97xf32>
    %279 = arith.maximumf %277, %278 : vector<2x97xf32>
    %c0_149 = arith.constant 0 : index
    %c0_150 = arith.constant 0 : index
    %280 = vector.load %arg14[%c0_149, %c0_150] : memref<2x97xf32, #tpu.memory_space<vmem>>, vector<2x97xf32>
    tpu.vector_store %arg14[%c0_149, %c0_150], %279 {strides = array<i32>} : memref<2x97xf32, #tpu.memory_space<vmem>>, vector<2x97xf32>,
    return
  }
}

</mosaic_0001>

<llo_original>
// kernel: tpu_custom_call.1
$region0: #{tpu_custom_call.1}
  #allocation0 [shape = 'u32[]', space=smem, size = 0x4, offset = 0x4, fixed_abs, tag = 'smem constant byte address 0x4 - core index']
  #allocation1 [shape = 'u32[144,128]{1,0:T(1,128)}', space=vmem, size = 0x12000, scoped, tag = 'internal scratch']
  #allocation2 [shape = 's8[7,256,896]{2,1,0:T(32,128)(4,1)}', space=vmem, size = 0x188000, scoped, tag = 'scratch operand']
  #allocation3 [shape = 's8[896,772]{1,0:T(32,128)(4,1)}', space=vmem, size = 0xc4000, scoped, tag = 'scratch operand']
  #allocation4 [shape = 's8[772,448]{1,0:T(8,128)(4,1)}', space=vmem, size = 0x61000, scoped, tag = 'scratch operand']
  #allocation5 [shape = 'bf16[448,336]{1,0:T(16,128)(2,1)}', space=vmem, size = 0x54000, scoped, tag = 'scratch operand']
  #allocation6 [shape = 'bf16[336,224]{1,0:T(16,128)(2,1)}', space=vmem, size = 0x2a000, scoped, tag = 'scratch operand']
  #allocation7 [shape = 'bf16[224,161]{1,0:T(16,128)(2,1)}', space=vmem, size = 0x1c000, scoped, tag = 'scratch operand']
  #allocation8 [shape = 'bf16[161,97]{1,0:T(8,128)(2,1)}', space=vmem, size = 0xa800, scoped, tag = 'scratch operand']
  #allocation9 [shape = 's32[7]{0}', space=sflag, size = 0x1c, scoped, tag = 'scratch operand']
  #allocation17 [shape = 's32[]', space=sflag, size = 0x4, offset = 0, fixed_abs, tag = 'sflag constant byte address 0x0 - dummy sync flag']
  #allocation18 [shape = 's32[]', space=sflag, size = 0x4, offset = 0, fixed_abs, tag = 'sflag constant byte address 0x0 - dummy sync flag']
  #allocation19 [shape = 's32[]', space=sflag, size = 0x4, offset = 0, fixed_abs, tag = 'sflag constant byte address 0x0 - dummy sync flag']
  #allocation20 [shape = 's32[]', space=sflag, size = 0x4, offset = 0, fixed_abs, tag = 'sflag constant byte address 0x0 - dummy sync flag']
  #allocation21 [shape = 'u32[]', space=smem, size = 0x4, offset = 0x44, fixed_abs, tag = 'smem constant byte address 0x44 - assertion arg 0']
  #allocation22 [shape = 'u32[]', space=smem, size = 0x4, offset = 0x48, fixed_abs, tag = 'smem constant byte address 0x48 - assertion arg 1']
  #allocation23 [shape = 's32[]', space=sflag, size = 0x4, offset = 0, fixed_abs, tag = 'sflag constant byte address 0x0 - dummy sync flag']
  #allocation25 [shape = 's32[]', space=sflag, size = 0x4, offset = 0, fixed_abs, tag = 'sflag constant byte address 0x0 - dummy sync flag']
  #allocation27 [shape = 's32[]', space=sflag, size = 0x4, offset = 0, fixed_abs, tag = 'sflag constant byte address 0x0 - dummy sync flag']
  #allocation28 [shape = 's32[]', space=sflag, size = 0x4, offset = 0, fixed_abs, tag = 'sflag constant byte address 0x0 - dummy sync flag']
  #allocation29 [shape = 's32[]', space=sflag, size = 0x4, offset = 0, fixed_abs, tag = 'sflag constant byte address 0x0 - dummy sync flag']
  %s0 = inlined_call_operand.vmem [shape: f32[2,12,1], index: 0, kind: input, shape index: {}]
  %s1 = inlined_call_operand.hbm [shape: f32[3,1,32], index: 1, kind: input, shape index: {}]
  %s2 = inlined_call_operand.vmem [shape: bf16[3,32,64], index: 2, kind: input, shape index: {}]
  %s3 = inlined_call_operand.vmem [shape: bf16[3,64,128], index: 3, kind: input, shape index: {}]
  %s4 = inlined_call_operand.hbm [shape: bf16[3,128,256], index: 4, kind: input, shape index: {}]
  %s5 = inlined_call_operand.hbm [shape: f32[4,256], index: 5, kind: input, shape index: {}]
  %s6 = inlined_call_operand.vmem [shape: f32[7,2,896], index: 6, kind: input, shape index: {}]
  %s7 = inlined_call_operand.vmem [shape: s8[7,256,896], index: 7, kind: input, shape index: {}]
  %s8 = inlined_call_operand.vmem [shape: s8[896,772], index: 8, kind: input, shape index: {}]
  %s9 = inlined_call_operand.hbm [shape: s8[772,448], index: 9, kind: input, shape index: {}]
  %s10 = inlined_call_operand.hbm [shape: bf16[448,336], index: 10, kind: input, shape index: {}]
  %s11 = inlined_call_operand.hbm [shape: bf16[336,224], index: 11, kind: input, shape index: {}]
  %s12 = inlined_call_operand.vmem [shape: bf16[224,161], index: 12, kind: input, shape index: {}]
  %s13 = inlined_call_operand.hbm [shape: bf16[161,97], index: 13, kind: input, shape index: {}]
  %s14 = inlined_call_operand.hbm [shape: f32[2,97], index: 14, kind: output, shape index: {}]
  %s15 = sld [smem:[#allocation0]]
  $region163: #{tpu_custom_call.1} parent=0
    _
  %s17 = ssub.s32 1, %s15
  %s18 = scalar_select 0, %s17, %s15
  $region1: #{tpu_custom_call.1} parent=0
    #allocation10 [shape = 'u8[1536]{0}', space=vmem, size = 0x800, scoped, tag = 'input window, operand 1, single buffered']
    #allocation11 [shape = 's32[1]{0}', space=sflag, size = 0x4, scoped, tag = 'scoped memory for tpu_custom_call.1']
    #allocation12 [shape = 's32[1]{0}', space=sflag, size = 0x4, scoped, tag = 'scoped memory for tpu_custom_call.1']
    #allocation13 [shape = 'u8[196608]{0}', space=vmem, size = 0x30000, scoped, tag = 'input window, operand 4, single buffered']
    #allocation14 [shape = 's32[1]{0}', space=sflag, size = 0x4, scoped, tag = 'scoped memory for tpu_custom_call.1']
    #allocation15 [shape = 'u8[4096]{0}', space=vmem, size = 0x1000, scoped, tag = 'input window, operand 5, single buffered']
    #allocation16 [shape = 'u8[1024]{0}', space=vmem, size = 0x400, scoped, tag = 'output window, operand 0, single buffered']
    #allocation24 [shape = 'u32[9]{0}', space=smem, size = 0x24, scoped, tag = 'DMA stride descriptor']
    #allocation26 [shape = 'u32[9]{0}', space=smem, size = 0x24, scoped, tag = 'DMA stride descriptor']
    %19 = vsyncpa [#allocation11], 0
    %20 = vsyncpa [#allocation14], 0
    %21 = vsyncpa [#allocation12], 0
    // Predicated region
    $region2: #{tpu_custom_call.1} parent=1 // pred_check
      _
    $region3: #{tpu_custom_call.1} parent=1 // pred_check_branch
      %23 = sbr.rel (0) target = $region5
    $region4: #{tpu_custom_call.1} parent=1 // pred_region
      _
    $region5: #{tpu_custom_call.1} parent=1 // pred_fallthru
      _
    // Predicated region
    $region6: #{tpu_custom_call.1} parent=1 // pred_check
      _
    $region7: #{tpu_custom_call.1} parent=1 // pred_check_branch
      %25 = sbr.rel (0) target = $region9
    $region8: #{tpu_custom_call.1} parent=1 // pred_region
      %s27 = ssub.s32 48, 48
      %28 = vsyncadd [#allocation11], %s27
      %s29 = sshll.u32 [#allocation10], 4
      %s30 = int_to_ptr.vmem [resolvable:$true] %s29
      %35 = dma.hbm_to_vmem [thread:$0]  %s1, 48, %s30, [#allocation11], 16, 16, 1
    $region9: #{tpu_custom_call.1} parent=1 // pred_fallthru
      _
    // Predicated region
    $region10: #{tpu_custom_call.1} parent=1 // pred_check
      _
    $region11: #{tpu_custom_call.1} parent=1 // pred_check_branch
      %37 = sbr.rel (0) target = $region13
    $region12: #{tpu_custom_call.1} parent=1 // pred_region
      _
    $region13: #{tpu_custom_call.1} parent=1 // pred_fallthru
      _
    // Predicated region
    $region14: #{tpu_custom_call.1} parent=1 // pred_check
      _
    $region15: #{tpu_custom_call.1} parent=1 // pred_check_branch
      %39 = sbr.rel (0) target = $region17
    $region16: #{tpu_custom_call.1} parent=1 // pred_region
      _
    $region17: #{tpu_custom_call.1} parent=1 // pred_fallthru
      _
    // Predicated region
    $region18: #{tpu_custom_call.1} parent=1 // pred_check
      _
    $region19: #{tpu_custom_call.1} parent=1 // pred_check_branch
      %41 = sbr.rel (0) target = $region21
    $region20: #{tpu_custom_call.1} parent=1 // pred_region
      %s43 = ssub.s32 6144, 6144
      %44 = vsyncadd [#allocation14], %s43
      %s45 = sshll.u32 [#allocation13], 4
      %s46 = int_to_ptr.vmem [resolvable:$true] %s45
      %51 = dma.hbm_to_vmem [thread:$0]  %s4, 6144, %s46, [#allocation14], 128, 128, 8
    $region21: #{tpu_custom_call.1} parent=1 // pred_fallthru
      _
    // Predicated region
    $region22: #{tpu_custom_call.1} parent=1 // pred_check
      _
    $region23: #{tpu_custom_call.1} parent=1 // pred_check_branch
      %53 = sbr.rel (0) target = $region25
    $region24: #{tpu_custom_call.1} parent=1 // pred_region
      %s55 = ssub.s32 128, 128
      %56 = vsyncadd [#allocation14], %s55
      %s58 = sshll.u32 [#allocation15], 4
      %s59 = int_to_ptr.vmem [resolvable:$true] %s58
      %61 = dma.hbm_to_vmem [thread:$0]  %s5, 128, %s59, [#allocation14]
    $region25: #{tpu_custom_call.1} parent=1 // pred_fallthru
      _
    // Predicated region
    $region26: #{tpu_custom_call.1} parent=1 // pred_check
      _
    $region27: #{tpu_custom_call.1} parent=1 // pred_check_branch
      %63 = sbr.rel (0) target = $region29
    $region28: #{tpu_custom_call.1} parent=1 // pred_region
      _
    $region29: #{tpu_custom_call.1} parent=1 // pred_fallthru
      _
    // Predicated region
    $region30: #{tpu_custom_call.1} parent=1 // pred_check
      _
    $region31: #{tpu_custom_call.1} parent=1 // pred_check_branch
      %65 = sbr.rel (0) target = $region33
    $region32: #{tpu_custom_call.1} parent=1 // pred_region
      %66 = dma.done [#allocation11], 48
    $region33: #{tpu_custom_call.1} parent=1 // pred_fallthru
      _
    // Predicated region
    $region34: #{tpu_custom_call.1} parent=1 // pred_check
      _
    $region35: #{tpu_custom_call.1} parent=1 // pred_check_branch
      %68 = sbr.rel (0) target = $region37
    $region36: #{tpu_custom_call.1} parent=1 // pred_region
      %69 = dma.done [#allocation14], 6144
    $region37: #{tpu_custom_call.1} parent=1 // pred_fallthru
      _
    // Predicated region
    $region38: #{tpu_custom_call.1} parent=1 // pred_check
      _
    $region39: #{tpu_custom_call.1} parent=1 // pred_check_branch
      %71 = sbr.rel (0) target = $region41
    $region40: #{tpu_custom_call.1} parent=1 // pred_region
      %72 = dma.done [#allocation14], 128
    $region41: #{tpu_custom_call.1} parent=1 // pred_fallthru
      _
    %p75 = scmp.lt.u32.totalorder 3136, 8
    %p76 = pneg %p75
    // Predicated region
    $region42: #{tpu_custom_call.1} parent=1 // pred_check
      _
    $region43: #{tpu_custom_call.1} parent=1 // pred_check_branch
      %78 = sbr.rel (%p75) target = $region45
    $region44: #{tpu_custom_call.1} parent=1 // pred_region
      %s93 = sand.u32 3136, 7
      %p94 = scmp.eq.s32.totalorder %s93, 0
      // Predicated region
      $region57: #{tpu_custom_call.1} parent=44 // pred_check
        %p95 = pneg %p94
      $region58: #{tpu_custom_call.1} parent=44 // pred_check_branch
        %97 = sbr.rel (%p95) target = $region60
      $region59: #{tpu_custom_call.1} parent=44 // pred_region
        loop: start=0, step=1, limit=1
        $region61: #{tpu_custom_call.1} parent=59 // loop_pre_header
          _
        $region62: #{tpu_custom_call.1} parent=59 // loop_header
          %s99 = sphi 0, %s103
          %p100 = scmp.ge.s32.totalorder %s99, 1
          %s104 = sphi %s7, %s7
          %s105 = sphi [#allocation2], [#allocation2]
        $region63: #{tpu_custom_call.1} parent=59 // loop_header_branch
          %102 = sbr.rel (%p100) target = $region67
        $region64: #{tpu_custom_call.1} parent=59 // loop_body
          %v106 = vld [vmem:[%s104] sm:$0xff]
          %107 = vst [vmem:[%s105] sm:$0xff] %v106
          %v108 = vld [vmem:[%s104 + $0x8] sm:$0xff]
          %109 = vst [vmem:[%s105 + $0x8] sm:$0xff] %v108
          %v110 = vld [vmem:[%s104 + $0x10] sm:$0xff]
          %111 = vst [vmem:[%s105 + $0x10] sm:$0xff] %v110
          %v112 = vld [vmem:[%s104 + $0x18] sm:$0xff]
          %113 = vst [vmem:[%s105 + $0x18] sm:$0xff] %v112
          %v114 = vld [vmem:[%s104 + $0x20] sm:$0xff]
          %115 = vst [vmem:[%s105 + $0x20] sm:$0xff] %v114
          %v116 = vld [vmem:[%s104 + $0x28] sm:$0xff]
          %117 = vst [vmem:[%s105 + $0x28] sm:$0xff] %v116
          %v118 = vld [vmem:[%s104 + $0x30] sm:$0xff]
          %119 = vst [vmem:[%s105 + $0x30] sm:$0xff] %v118
          %v120 = vld [vmem:[%s104 + $0x38] sm:$0xff]
          %121 = vst [vmem:[%s105 + $0x38] sm:$0xff] %v120
          %v122 = vld [vmem:[%s104 + $0x40] sm:$0xff]
          %123 = vst [vmem:[%s105 + $0x40] sm:$0xff] %v122
          %v124 = vld [vmem:[%s104 + $0x48] sm:$0xff]
          %125 = vst [vmem:[%s105 + $0x48] sm:$0xff] %v124
          %v126 = vld [vmem:[%s104 + $0x50] sm:$0xff]
          %127 = vst [vmem:[%s105 + $0x50] sm:$0xff] %v126
          %v128 = vld [vmem:[%s104 + $0x58] sm:$0xff]
          %129 = vst [vmem:[%s105 + $0x58] sm:$0xff] %v128
          %v130 = vld [vmem:[%s104 + $0x60] sm:$0xff]
          %131 = vst [vmem:[%s105 + $0x60] sm:$0xff] %v130
          %v132 = vld [vmem:[%s104 + $0x68] sm:$0xff]
          %133 = vst [vmem:[%s105 + $0x68] sm:$0xff] %v132
          %v134 = vld [vmem:[%s104 + $0x70] sm:$0xff]
          %135 = vst [vmem:[%s105 + $0x70] sm:$0xff] %v134
          %v136 = vld [vmem:[%s104 + $0x78] sm:$0xff]
          %137 = vst [vmem:[%s105 + $0x78] sm:$0xff] %v136
          %v138 = vld [vmem:[%s104 + $0x80] sm:$0xff]
          %139 = vst [vmem:[%s105 + $0x80] sm:$0xff] %v138
          %v140 = vld [vmem:[%s104 + $0x88] sm:$0xff]
          %141 = vst [vmem:[%s105 + $0x88] sm:$0xff] %v140
          %v142 = vld [vmem:[%s104 + $0x90] sm:$0xff]
          %143 = vst [vmem:[%s105 + $0x90] sm:$0xff] %v142
          %v144 = vld [vmem:[%s104 + $0x98] sm:$0xff]
          %145 = vst [vmem:[%s105 + $0x98] sm:$0xff] %v144
          %v146 = vld [vmem:[%s104 + $0xa0] sm:$0xff]
          %147 = vst [vmem:[%s105 + $0xa0] sm:$0xff] %v146
          %v148 = vld [vmem:[%s104 + $0xa8] sm:$0xff]
          %149 = vst [vmem:[%s105 + $0xa8] sm:$0xff] %v148
          %v150 = vld [vmem:[%s104 + $0xb0] sm:$0xff]
          %151 = vst [vmem:[%s105 + $0xb0] sm:$0xff] %v150
          %v152 = vld [vmem:[%s104 + $0xb8] sm:$0xff]
          %153 = vst [vmem:[%s105 + $0xb8] sm:$0xff] %v152
          %v154 = vld [vmem:[%s104 + $0xc0] sm:$0xff]
          %155 = vst [vmem:[%s105 + $0xc0] sm:$0xff] %v154
          %v156 = vld [vmem:[%s104 + $0xc8] sm:$0xff]
          %157 = vst [vmem:[%s105 + $0xc8] sm:$0xff] %v156
          %v158 = vld [vmem:[%s104 + $0xd0] sm:$0xff]
          %159 = vst [vmem:[%s105 + $0xd0] sm:$0xff] %v158
          %v160 = vld [vmem:[%s104 + $0xd8] sm:$0xff]
          %161 = vst [vmem:[%s105 + $0xd8] sm:$0xff] %v160
          %v162 = vld [vmem:[%s104 + $0xe0] sm:$0xff]
          %163 = vst [vmem:[%s105 + $0xe0] sm:$0xff] %v162
          %v164 = vld [vmem:[%s104 + $0xe8] sm:$0xff]
          %165 = vst [vmem:[%s105 + $0xe8] sm:$0xff] %v164
          %v166 = vld [vmem:[%s104 + $0xf0] sm:$0xff]
          %167 = vst [vmem:[%s105 + $0xf0] sm:$0xff] %v166
          %v168 = vld [vmem:[%s104 + $0xf8] sm:$0xff]
          %169 = vst [vmem:[%s105 + $0xf8] sm:$0xff] %v168
          %v170 = vld [vmem:[%s104 + $0x100] sm:$0xff]
          %171 = vst [vmem:[%s105 + $0x100] sm:$0xff] %v170
          %v172 = vld [vmem:[%s104 + $0x108] sm:$0xff]
          %173 = vst [vmem:[%s105 + $0x108] sm:$0xff] %v172
          %v174 = vld [vmem:[%s104 + $0x110] sm:$0xff]
          %175 = vst [vmem:[%s105 + $0x110] sm:$0xff] %v174
          %v176 = vld [vmem:[%s104 + $0x118] sm:$0xff]
          %177 = vst [vmem:[%s105 + $0x118] sm:$0xff] %v176
          %v178 = vld [vmem:[%s104 + $0x120] sm:$0xff]
          %179 = vst [vmem:[%s105 + $0x120] sm:$0xff] %v178
          %v180 = vld [vmem:[%s104 + $0x128] sm:$0xff]
          %181 = vst [vmem:[%s105 + $0x128] sm:$0xff] %v180
          %v182 = vld [vmem:[%s104 + $0x130] sm:$0xff]
          %183 = vst [vmem:[%s105 + $0x130] sm:$0xff] %v182
          %v184 = vld [vmem:[%s104 + $0x138] sm:$0xff]
          %185 = vst [vmem:[%s105 + $0x138] sm:$0xff] %v184
          %v186 = vld [vmem:[%s104 + $0x140] sm:$0xff]
          %187 = vst [vmem:[%s105 + $0x140] sm:$0xff] %v186
          %v188 = vld [vmem:[%s104 + $0x148] sm:$0xff]
          %189 = vst [vmem:[%s105 + $0x148] sm:$0xff] %v188
          %v190 = vld [vmem:[%s104 + $0x150] sm:$0xff]
          %191 = vst [vmem:[%s105 + $0x150] sm:$0xff] %v190
          %v192 = vld [vmem:[%s104 + $0x158] sm:$0xff]
          %193 = vst [vmem:[%s105 + $0x158] sm:$0xff] %v192
          %v194 = vld [vmem:[%s104 + $0x160] sm:$0xff]
          %195 = vst [vmem:[%s105 + $0x160] sm:$0xff] %v194
          %v196 = vld [vmem:[%s104 + $0x168] sm:$0xff]
          %197 = vst [vmem:[%s105 + $0x168] sm:$0xff] %v196
          %v198 = vld [vmem:[%s104 + $0x170] sm:$0xff]
          %199 = vst [vmem:[%s105 + $0x170] sm:$0xff] %v198
          %v200 = vld [vmem:[%s104 + $0x178] sm:$0xff]
          %201 = vst [vmem:[%s105 + $0x178] sm:$0xff] %v200
          %v202 = vld [vmem:[%s104 + $0x180] sm:$0xff]
          %203 = vst [vmem:[%s105 + $0x180] sm:$0xff] %v202
          %v204 = vld [vmem:[%s104 + $0x188] sm:$0xff]
          %205 = vst [vmem:[%s105 + $0x188] sm:$0xff] %v204
          %v206 = vld [vmem:[%s104 + $0x190] sm:$0xff]
          %207 = vst [vmem:[%s105 + $0x190] sm:$0xff] %v206
          %v208 = vld [vmem:[%s104 + $0x198] sm:$0xff]
          %209 = vst [vmem:[%s105 + $0x198] sm:$0xff] %v208
          %v210 = vld [vmem:[%s104 + $0x1a0] sm:$0xff]
          %211 = vst [vmem:[%s105 + $0x1a0] sm:$0xff] %v210
          %v212 = vld [vmem:[%s104 + $0x1a8] sm:$0xff]
          %213 = vst [vmem:[%s105 + $0x1a8] sm:$0xff] %v212
          %v214 = vld [vmem:[%s104 + $0x1b0] sm:$0xff]
          %215 = vst [vmem:[%s105 + $0x1b0] sm:$0xff] %v214
          %v216 = vld [vmem:[%s104 + $0x1b8] sm:$0xff]
          %217 = vst [vmem:[%s105 + $0x1b8] sm:$0xff] %v216
          %v218 = vld [vmem:[%s104 + $0x1c0] sm:$0xff]
          %219 = vst [vmem:[%s105 + $0x1c0] sm:$0xff] %v218
          %v220 = vld [vmem:[%s104 + $0x1c8] sm:$0xff]
          %221 = vst [vmem:[%s105 + $0x1c8] sm:$0xff] %v220
          %v222 = vld [vmem:[%s104 + $0x1d0] sm:$0xff]
          %223 = vst [vmem:[%s105 + $0x1d0] sm:$0xff] %v222
          %v224 = vld [vmem:[%s104 + $0x1d8] sm:$0xff]
          %225 = vst [vmem:[%s105 + $0x1d8] sm:$0xff] %v224
          %v226 = vld [vmem:[%s104 + $0x1e0] sm:$0xff]
          %227 = vst [vmem:[%s105 + $0x1e0] sm:$0xff] %v226
          %v228 = vld [vmem:[%s104 + $0x1e8] sm:$0xff]
          %229 = vst [vmem:[%s105 + $0x1e8] sm:$0xff] %v228
          %v230 = vld [vmem:[%s104 + $0x1f0] sm:$0xff]
          %231 = vst [vmem:[%s105 + $0x1f0] sm:$0xff] %v230
          %v232 = vld [vmem:[%s104 + $0x1f8] sm:$0xff]
          %233 = vst [vmem:[%s105 + $0x1f8] sm:$0xff] %v232
          %v234 = vld [vmem:[%s104 + $0x200] sm:$0xff]
          %235 = vst [vmem:[%s105 + $0x200] sm:$0xff] %v234
          %v236 = vld [vmem:[%s104 + $0x208] sm:$0xff]
          %237 = vst [vmem:[%s105 + $0x208] sm:$0xff] %v236
          %v238 = vld [vmem:[%s104 + $0x210] sm:$0xff]
          %239 = vst [vmem:[%s105 + $0x210] sm:$0xff] %v238
          %v240 = vld [vmem:[%s104 + $0x218] sm:$0xff]
          %241 = vst [vmem:[%s105 + $0x218] sm:$0xff] %v240
          %v242 = vld [vmem:[%s104 + $0x220] sm:$0xff]
          %243 = vst [vmem:[%s105 + $0x220] sm:$0xff] %v242
          %v244 = vld [vmem:[%s104 + $0x228] sm:$0xff]
          %245 = vst [vmem:[%s105 + $0x228] sm:$0xff] %v244
          %v246 = vld [vmem:[%s104 + $0x230] sm:$0xff]
          %247 = vst [vmem:[%s105 + $0x230] sm:$0xff] %v246
          %v248 = vld [vmem:[%s104 + $0x238] sm:$0xff]
          %249 = vst [vmem:[%s105 + $0x238] sm:$0xff] %v248
          %v250 = vld [vmem:[%s104 + $0x240] sm:$0xff]
          %251 = vst [vmem:[%s105 + $0x240] sm:$0xff] %v250
          %v252 = vld [vmem:[%s104 + $0x248] sm:$0xff]
          %253 = vst [vmem:[%s105 + $0x248] sm:$0xff] %v252
          %v254 = vld [vmem:[%s104 + $0x250] sm:$0xff]
          %255 = vst [vmem:[%s105 + $0x250] sm:$0xff] %v254
          %v256 = vld [vmem:[%s104 + $0x258] sm:$0xff]
          %257 = vst [vmem:[%s105 + $0x258] sm:$0xff] %v256
          %v258 = vld [vmem:[%s104 + $0x260] sm:$0xff]
          %259 = vst [vmem:[%s105 + $0x260] sm:$0xff] %v258
          %v260 = vld [vmem:[%s104 + $0x268] sm:$0xff]
          %261 = vst [vmem:[%s105 + $0x268] sm:$0xff] %v260
          %v262 = vld [vmem:[%s104 + $0x270] sm:$0xff]
          %263 = vst [vmem:[%s105 + $0x270] sm:$0xff] %v262
          %v264 = vld [vmem:[%s104 + $0x278] sm:$0xff]
          %265 = vst [vmem:[%s105 + $0x278] sm:$0xff] %v264
          %v266 = vld [vmem:[%s104 + $0x280] sm:$0xff]
          %267 = vst [vmem:[%s105 + $0x280] sm:$0xff] %v266
          %v268 = vld [vmem:[%s104 + $0x288] sm:$0xff]
          %269 = vst [vmem:[%s105 + $0x288] sm:$0xff] %v268
          %v270 = vld [vmem:[%s104 + $0x290] sm:$0xff]
          %271 = vst [vmem:[%s105 + $0x290] sm:$0xff] %v270
          %v272 = vld [vmem:[%s104 + $0x298] sm:$0xff]
          %273 = vst [vmem:[%s105 + $0x298] sm:$0xff] %v272
          %v274 = vld [vmem:[%s104 + $0x2a0] sm:$0xff]
          %275 = vst [vmem:[%s105 + $0x2a0] sm:$0xff] %v274
          %v276 = vld [vmem:[%s104 + $0x2a8] sm:$0xff]
          %277 = vst [vmem:[%s105 + $0x2a8] sm:$0xff] %v276
          %v278 = vld [vmem:[%s104 + $0x2b0] sm:$0xff]
          %279 = vst [vmem:[%s105 + $0x2b0] sm:$0xff] %v278
          %v280 = vld [vmem:[%s104 + $0x2b8] sm:$0xff]
          %281 = vst [vmem:[%s105 + $0x2b8] sm:$0xff] %v280
          %v282 = vld [vmem:[%s104 + $0x2c0] sm:$0xff]
          %283 = vst [vmem:[%s105 + $0x2c0] sm:$0xff] %v282
          %v284 = vld [vmem:[%s104 + $0x2c8] sm:$0xff]
          %285 = vst [vmem:[%s105 + $0x2c8] sm:$0xff] %v284
          %v286 = vld [vmem:[%s104 + $0x2d0] sm:$0xff]
          %287 = vst [vmem:[%s105 + $0x2d0] sm:$0xff] %v286
          %v288 = vld [vmem:[%s104 + $0x2d8] sm:$0xff]
          %289 = vst [vmem:[%s105 + $0x2d8] sm:$0xff] %v288
          %v290 = vld [vmem:[%s104 + $0x2e0] sm:$0xff]
          %291 = vst [vmem:[%s105 + $0x2e0] sm:$0xff] %v290
          %v292 = vld [vmem:[%s104 + $0x2e8] sm:$0xff]
          %293 = vst [vmem:[%s105 + $0x2e8] sm:$0xff] %v292
          %v294 = vld [vmem:[%s104 + $0x2f0] sm:$0xff]
          %295 = vst [vmem:[%s105 + $0x2f0] sm:$0xff] %v294
          %v296 = vld [vmem:[%s104 + $0x2f8] sm:$0xff]
          %297 = vst [vmem:[%s105 + $0x2f8] sm:$0xff] %v296
          %v298 = vld [vmem:[%s104 + $0x300] sm:$0xff]
          %299 = vst [vmem:[%s105 + $0x300] sm:$0xff] %v298
          %v300 = vld [vmem:[%s104 + $0x308] sm:$0xff]
          %301 = vst [vmem:[%s105 + $0x308] sm:$0xff] %v300
          %v302 = vld [vmem:[%s104 + $0x310] sm:$0xff]
          %303 = vst [vmem:[%s105 + $0x310] sm:$0xff] %v302
          %v304 = vld [vmem:[%s104 + $0x318] sm:$0xff]
          %305 = vst [vmem:[%s105 + $0x318] sm:$0xff] %v304
          %v306 = vld [vmem:[%s104 + $0x320] sm:$0xff]
          %307 = vst [vmem:[%s105 + $0x320] sm:$0xff] %v306
          %v308 = vld [vmem:[%s104 + $0x328] sm:$0xff]
          %309 = vst [vmem:[%s105 + $0x328] sm:$0xff] %v308
          %v310 = vld [vmem:[%s104 + $0x330] sm:$0xff]
          %311 = vst [vmem:[%s105 + $0x330] sm:$0xff] %v310
          %v312 = vld [vmem:[%s104 + $0x338] sm:$0xff]
          %313 = vst [vmem:[%s105 + $0x338] sm:$0xff] %v312
          %v314 = vld [vmem:[%s104 + $0x340] sm:$0xff]
          %315 = vst [vmem:[%s105 + $0x340] sm:$0xff] %v314
          %v316 = vld [vmem:[%s104 + $0x348] sm:$0xff]
          %317 = vst [vmem:[%s105 + $0x348] sm:$0xff] %v316
          %v318 = vld [vmem:[%s104 + $0x350] sm:$0xff]
          %319 = vst [vmem:[%s105 + $0x350] sm:$0xff] %v318
          %v320 = vld [vmem:[%s104 + $0x358] sm:$0xff]
          %321 = vst [vmem:[%s105 + $0x358] sm:$0xff] %v320
          %v322 = vld [vmem:[%s104 + $0x360] sm:$0xff]
          %323 = vst [vmem:[%s105 + $0x360] sm:$0xff] %v322
          %v324 = vld [vmem:[%s104 + $0x368] sm:$0xff]
          %325 = vst [vmem:[%s105 + $0x368] sm:$0xff] %v324
          %v326 = vld [vmem:[%s104 + $0x370] sm:$0xff]
          %327 = vst [vmem:[%s105 + $0x370] sm:$0xff] %v326
          %v328 = vld [vmem:[%s104 + $0x378] sm:$0xff]
          %329 = vst [vmem:[%s105 + $0x378] sm:$0xff] %v328
          %v330 = vld [vmem:[%s104 + $0x380] sm:$0xff]
          %331 = vst [vmem:[%s105 + $0x380] sm:$0xff] %v330
          %v332 = vld [vmem:[%s104 + $0x388] sm:$0xff]
          %333 = vst [vmem:[%s105 + $0x388] sm:$0xff] %v332
          %v334 = vld [vmem:[%s104 + $0x390] sm:$0xff]
          %335 = vst [vmem:[%s105 + $0x390] sm:$0xff] %v334
          %v336 = vld [vmem:[%s104 + $0x398] sm:$0xff]
          %337 = vst [vmem:[%s105 + $0x398] sm:$0xff] %v336
          %v338 = vld [vmem:[%s104 + $0x3a0] sm:$0xff]
          %339 = vst [vmem:[%s105 + $0x3a0] sm:$0xff] %v338
          %v340 = vld [vmem:[%s104 + $0x3a8] sm:$0xff]
          %341 = vst [vmem:[%s105 + $0x3a8] sm:$0xff] %v340
          %v342 = vld [vmem:[%s104 + $0x3b0] sm:$0xff]
          %343 = vst [vmem:[%s105 + $0x3b0] sm:$0xff] %v342
          %v344 = vld [vmem:[%s104 + $0x3b8] sm:$0xff]
          %345 = vst [vmem:[%s105 + $0x3b8] sm:$0xff] %v344
          %v346 = vld [vmem:[%s104 + $0x3c0] sm:$0xff]
          %347 = vst [vmem:[%s105 + $0x3c0] sm:$0xff] %v346
          %v348 = vld [vmem:[%s104 + $0x3c8] sm:$0xff]
          %349 = vst [vmem:[%s105 + $0x3c8] sm:$0xff] %v348
          %v350 = vld [vmem:[%s104 + $0x3d0] sm:$0xff]
          %351 = vst [vmem:[%s105 + $0x3d0] sm:$0xff] %v350
          %v352 = vld [vmem:[%s104 + $0x3d8] sm:$0xff]
          %353 = vst [vmem:[%s105 + $0x3d8] sm:$0xff] %v352
          %v354 = vld [vmem:[%s104 + $0x3e0] sm:$0xff]
          %355 = vst [vmem:[%s105 + $0x3e0] sm:$0xff] %v354
          %v356 = vld [vmem:[%s104 + $0x3e8] sm:$0xff]
          %357 = vst [vmem:[%s105 + $0x3e8] sm:$0xff] %v356
          %v358 = vld [vmem:[%s104 + $0x3f0] sm:$0xff]
          %359 = vst [vmem:[%s105 + $0x3f0] sm:$0xff] %v358
          %v360 = vld [vmem:[%s104 + $0x3f8] sm:$0xff]
          %361 = vst [vmem:[%s105 + $0x3f8] sm:$0xff] %v360
          %v362 = vld [vmem:[%s104 + $0x400] sm:$0xff]
          %363 = vst [vmem:[%s105 + $0x400] sm:$0xff] %v362
          %v364 = vld [vmem:[%s104 + $0x408] sm:$0xff]
          %365 = vst [vmem:[%s105 + $0x408] sm:$0xff] %v364
          %v366 = vld [vmem:[%s104 + $0x410] sm:$0xff]
          %367 = vst [vmem:[%s105 + $0x410] sm:$0xff] %v366
          %v368 = vld [vmem:[%s104 + $0x418] sm:$0xff]
          %369 = vst [vmem:[%s105 + $0x418] sm:$0xff] %v368
          %v370 = vld [vmem:[%s104 + $0x420] sm:$0xff]
          %371 = vst [vmem:[%s105 + $0x420] sm:$0xff] %v370
          %v372 = vld [vmem:[%s104 + $0x428] sm:$0xff]
          %373 = vst [vmem:[%s105 + $0x428] sm:$0xff] %v372
          %v374 = vld [vmem:[%s104 + $0x430] sm:$0xff]
          %375 = vst [vmem:[%s105 + $0x430] sm:$0xff] %v374
          %v376 = vld [vmem:[%s104 + $0x438] sm:$0xff]
          %377 = vst [vmem:[%s105 + $0x438] sm:$0xff] %v376
          %v378 = vld [vmem:[%s104 + $0x440] sm:$0xff]
          %379 = vst [vmem:[%s105 + $0x440] sm:$0xff] %v378
          %v380 = vld [vmem:[%s104 + $0x448] sm:$0xff]
          %381 = vst [vmem:[%s105 + $0x448] sm:$0xff] %v380
          %v382 = vld [vmem:[%s104 + $0x450] sm:$0xff]
          %383 = vst [vmem:[%s105 + $0x450] sm:$0xff] %v382
          %v384 = vld [vmem:[%s104 + $0x458] sm:$0xff]
          %385 = vst [vmem:[%s105 + $0x458] sm:$0xff] %v384
          %v386 = vld [vmem:[%s104 + $0x460] sm:$0xff]
          %387 = vst [vmem:[%s105 + $0x460] sm:$0xff] %v386
          %v388 = vld [vmem:[%s104 + $0x468] sm:$0xff]
          %389 = vst [vmem:[%s105 + $0x468] sm:$0xff] %v388
          %v390 = vld [vmem:[%s104 + $0x470] sm:$0xff]
          %391 = vst [vmem:[%s105 + $0x470] sm:$0xff] %v390
          %v392 = vld [vmem:[%s104 + $0x478] sm:$0xff]
          %393 = vst [vmem:[%s105 + $0x478] sm:$0xff] %v392
          %v394 = vld [vmem:[%s104 + $0x480] sm:$0xff]
          %395 = vst [vmem:[%s105 + $0x480] sm:$0xff] %v394
          %v396 = vld [vmem:[%s104 + $0x488] sm:$0xff]
          %397 = vst [vmem:[%s105 + $0x488] sm:$0xff] %v396
          %v398 = vld [vmem:[%s104 + $0x490] sm:$0xff]
          %399 = vst [vmem:[%s105 + $0x490] sm:$0xff] %v398
          %v400 = vld [vmem:[%s104 + $0x498] sm:$0xff]
          %401 = vst [vmem:[%s105 + $0x498] sm:$0xff] %v400
          %v402 = vld [vmem:[%s104 + $0x4a0] sm:$0xff]
          %403 = vst [vmem:[%s105 + $0x4a0] sm:$0xff] %v402
          %v404 = vld [vmem:[%s104 + $0x4a8] sm:$0xff]
          %405 = vst [vmem:[%s105 + $0x4a8] sm:$0xff] %v404
          %v406 = vld [vmem:[%s104 + $0x4b0] sm:$0xff]
          %407 = vst [vmem:[%s105 + $0x4b0] sm:$0xff] %v406
          %v408 = vld [vmem:[%s104 + $0x4b8] sm:$0xff]
          %409 = vst [vmem:[%s105 + $0x4b8] sm:$0xff] %v408
          %v410 = vld [vmem:[%s104 + $0x4c0] sm:$0xff]
          %411 = vst [vmem:[%s105 + $0x4c0] sm:$0xff] %v410
          %v412 = vld [vmem:[%s104 + $0x4c8] sm:$0xff]
          %413 = vst [vmem:[%s105 + $0x4c8] sm:$0xff] %v412
          %v414 = vld [vmem:[%s104 + $0x4d0] sm:$0xff]
          %415 = vst [vmem:[%s105 + $0x4d0] sm:$0xff] %v414
          %v416 = vld [vmem:[%s104 + $0x4d8] sm:$0xff]
          %417 = vst [vmem:[%s105 + $0x4d8] sm:$0xff] %v416
          %v418 = vld [vmem:[%s104 + $0x4e0] sm:$0xff]
          %419 = vst [vmem:[%s105 + $0x4e0] sm:$0xff] %v418
          %v420 = vld [vmem:[%s104 + $0x4e8] sm:$0xff]
          %421 = vst [vmem:[%s105 + $0x4e8] sm:$0xff] %v420
          %v422 = vld [vmem:[%s104 + $0x4f0] sm:$0xff]
          %423 = vst [vmem:[%s105 + $0x4f0] sm:$0xff] %v422
          %v424 = vld [vmem:[%s104 + $0x4f8] sm:$0xff]
          %425 = vst [vmem:[%s105 + $0x4f8] sm:$0xff] %v424
          %v426 = vld [vmem:[%s104 + $0x500] sm:$0xff]
          %427 = vst [vmem:[%s105 + $0x500] sm:$0xff] %v426
          %v428 = vld [vmem:[%s104 + $0x508] sm:$0xff]
          %429 = vst [vmem:[%s105 + $0x508] sm:$0xff] %v428
          %v430 = vld [vmem:[%s104 + $0x510] sm:$0xff]
          %431 = vst [vmem:[%s105 + $0x510] sm:$0xff] %v430
          %v432 = vld [vmem:[%s104 + $0x518] sm:$0xff]
          %433 = vst [vmem:[%s105 + $0x518] sm:$0xff] %v432
          %v434 = vld [vmem:[%s104 + $0x520] sm:$0xff]
          %435 = vst [vmem:[%s105 + $0x520] sm:$0xff] %v434
          %v436 = vld [vmem:[%s104 + $0x528] sm:$0xff]
          %437 = vst [vmem:[%s105 + $0x528] sm:$0xff] %v436
          %v438 = vld [vmem:[%s104 + $0x530] sm:$0xff]
          %439 = vst [vmem:[%s105 + $0x530] sm:$0xff] %v438
          %v440 = vld [vmem:[%s104 + $0x538] sm:$0xff]
          %441 = vst [vmem:[%s105 + $0x538] sm:$0xff] %v440
          %v442 = vld [vmem:[%s104 + $0x540] sm:$0xff]
          %443 = vst [vmem:[%s105 + $0x540] sm:$0xff] %v442
          %v444 = vld [vmem:[%s104 + $0x548] sm:$0xff]
          %445 = vst [vmem:[%s105 + $0x548] sm:$0xff] %v444
          %v446 = vld [vmem:[%s104 + $0x550] sm:$0xff]
          %447 = vst [vmem:[%s105 + $0x550] sm:$0xff] %v446
          %v448 = vld [vmem:[%s104 + $0x558] sm:$0xff]
          %449 = vst [vmem:[%s105 + $0x558] sm:$0xff] %v448
          %v450 = vld [vmem:[%s104 + $0x560] sm:$0xff]
          %451 = vst [vmem:[%s105 + $0x560] sm:$0xff] %v450
          %v452 = vld [vmem:[%s104 + $0x568] sm:$0xff]
          %453 = vst [vmem:[%s105 + $0x568] sm:$0xff] %v452
          %v454 = vld [vmem:[%s104 + $0x570] sm:$0xff]
          %455 = vst [vmem:[%s105 + $0x570] sm:$0xff] %v454
          %v456 = vld [vmem:[%s104 + $0x578] sm:$0xff]
          %457 = vst [vmem:[%s105 + $0x578] sm:$0xff] %v456
          %v458 = vld [vmem:[%s104 + $0x580] sm:$0xff]
          %459 = vst [vmem:[%s105 + $0x580] sm:$0xff] %v458
          %v460 = vld [vmem:[%s104 + $0x588] sm:$0xff]
          %461 = vst [vmem:[%s105 + $0x588] sm:$0xff] %v460
          %v462 = vld [vmem:[%s104 + $0x590] sm:$0xff]
          %463 = vst [vmem:[%s105 + $0x590] sm:$0xff] %v462
          %v464 = vld [vmem:[%s104 + $0x598] sm:$0xff]
          %465 = vst [vmem:[%s105 + $0x598] sm:$0xff] %v464
          %v466 = vld [vmem:[%s104 + $0x5a0] sm:$0xff]
          %467 = vst [vmem:[%s105 + $0x5a0] sm:$0xff] %v466
          %v468 = vld [vmem:[%s104 + $0x5a8] sm:$0xff]
          %469 = vst [vmem:[%s105 + $0x5a8] sm:$0xff] %v468
          %v470 = vld [vmem:[%s104 + $0x5b0] sm:$0xff]
          %471 = vst [vmem:[%s105 + $0x5b0] sm:$0xff] %v470
          %v472 = vld [vmem:[%s104 + $0x5b8] sm:$0xff]
          %473 = vst [vmem:[%s105 + $0x5b8] sm:$0xff] %v472
          %v474 = vld [vmem:[%s104 + $0x5c0] sm:$0xff]
          %475 = vst [vmem:[%s105 + $0x5c0] sm:$0xff] %v474
          %v476 = vld [vmem:[%s104 + $0x5c8] sm:$0xff]
          %477 = vst [vmem:[%s105 + $0x5c8] sm:$0xff] %v476
          %v478 = vld [vmem:[%s104 + $0x5d0] sm:$0xff]
          %479 = vst [vmem:[%s105 + $0x5d0] sm:$0xff] %v478
          %v480 = vld [vmem:[%s104 + $0x5d8] sm:$0xff]
          %481 = vst [vmem:[%s105 + $0x5d8] sm:$0xff] %v480
          %v482 = vld [vmem:[%s104 + $0x5e0] sm:$0xff]
          %483 = vst [vmem:[%s105 + $0x5e0] sm:$0xff] %v482
          %v484 = vld [vmem:[%s104 + $0x5e8] sm:$0xff]
          %485 = vst [vmem:[%s105 + $0x5e8] sm:$0xff] %v484
          %v486 = vld [vmem:[%s104 + $0x5f0] sm:$0xff]
          %487 = vst [vmem:[%s105 + $0x5f0] sm:$0xff] %v486
          %v488 = vld [vmem:[%s104 + $0x5f8] sm:$0xff]
          %489 = vst [vmem:[%s105 + $0x5f8] sm:$0xff] %v488
          %v490 = vld [vmem:[%s104 + $0x600] sm:$0xff]
          %491 = vst [vmem:[%s105 + $0x600] sm:$0xff] %v490
          %v492 = vld [vmem:[%s104 + $0x608] sm:$0xff]
          %493 = vst [vmem:[%s105 + $0x608] sm:$0xff] %v492
          %v494 = vld [vmem:[%s104 + $0x610] sm:$0xff]
          %495 = vst [vmem:[%s105 + $0x610] sm:$0xff] %v494
          %v496 = vld [vmem:[%s104 + $0x618] sm:$0xff]
          %497 = vst [vmem:[%s105 + $0x618] sm:$0xff] %v496
          %v498 = vld [vmem:[%s104 + $0x620] sm:$0xff]
          %499 = vst [vmem:[%s105 + $0x620] sm:$0xff] %v498
          %v500 = vld [vmem:[%s104 + $0x628] sm:$0xff]
          %501 = vst [vmem:[%s105 + $0x628] sm:$0xff] %v500
          %v502 = vld [vmem:[%s104 + $0x630] sm:$0xff]
          %503 = vst [vmem:[%s105 + $0x630] sm:$0xff] %v502
          %v504 = vld [vmem:[%s104 + $0x638] sm:$0xff]
          %505 = vst [vmem:[%s105 + $0x638] sm:$0xff] %v504
          %v506 = vld [vmem:[%s104 + $0x640] sm:$0xff]
          %507 = vst [vmem:[%s105 + $0x640] sm:$0xff] %v506
          %v508 = vld [vmem:[%s104 + $0x648] sm:$0xff]
          %509 = vst [vmem:[%s105 + $0x648] sm:$0xff] %v508
          %v510 = vld [vmem:[%s104 + $0x650] sm:$0xff]
          %511 = vst [vmem:[%s105 + $0x650] sm:$0xff] %v510
          %v512 = vld [vmem:[%s104 + $0x658] sm:$0xff]
          %513 = vst [vmem:[%s105 + $0x658] sm:$0xff] %v512
          %v514 = vld [vmem:[%s104 + $0x660] sm:$0xff]
          %515 = vst [vmem:[%s105 + $0x660] sm:$0xff] %v514
          %v516 = vld [vmem:[%s104 + $0x668] sm:$0xff]
          %517 = vst [vmem:[%s105 + $0x668] sm:$0xff] %v516
          %v518 = vld [vmem:[%s104 + $0x670] sm:$0xff]
          %519 = vst [vmem:[%s105 + $0x670] sm:$0xff] %v518
          %v520 = vld [vmem:[%s104 + $0x678] sm:$0xff]
          %521 = vst [vmem:[%s105 + $0x678] sm:$0xff] %v520
          %v522 = vld [vmem:[%s104 + $0x680] sm:$0xff]
          %523 = vst [vmem:[%s105 + $0x680] sm:$0xff] %v522
          %v524 = vld [vmem:[%s104 + $0x688] sm:$0xff]
          %525 = vst [vmem:[%s105 + $0x688] sm:$0xff] %v524
          %v526 = vld [vmem:[%s104 + $0x690] sm:$0xff]
          %527 = vst [vmem:[%s105 + $0x690] sm:$0xff] %v526
          %v528 = vld [vmem:[%s104 + $0x698] sm:$0xff]
          %529 = vst [vmem:[%s105 + $0x698] sm:$0xff] %v528
          %v530 = vld [vmem:[%s104 + $0x6a0] sm:$0xff]
          %531 = vst [vmem:[%s105 + $0x6a0] sm:$0xff] %v530
          %v532 = vld [vmem:[%s104 + $0x6a8] sm:$0xff]
          %533 = vst [vmem:[%s105 + $0x6a8] sm:$0xff] %v532
          %v534 = vld [vmem:[%s104 + $0x6b0] sm:$0xff]
          %535 = vst [vmem:[%s105 + $0x6b0] sm:$0xff] %v534
          %v536 = vld [vmem:[%s104 + $0x6b8] sm:$0xff]
          %537 = vst [vmem:[%s105 + $0x6b8] sm:$0xff] %v536
          %v538 = vld [vmem:[%s104 + $0x6c0] sm:$0xff]
          %539 = vst [vmem:[%s105 + $0x6c0] sm:$0xff] %v538
          %v540 = vld [vmem:[%s104 + $0x6c8] sm:$0xff]
          %541 = vst [vmem:[%s105 + $0x6c8] sm:$0xff] %v540
          %v542 = vld [vmem:[%s104 + $0x6d0] sm:$0xff]
          %543 = vst [vmem:[%s105 + $0x6d0] sm:$0xff] %v542
          %v544 = vld [vmem:[%s104 + $0x6d8] sm:$0xff]
          %545 = vst [vmem:[%s105 + $0x6d8] sm:$0xff] %v544
          %v546 = vld [vmem:[%s104 + $0x6e0] sm:$0xff]
          %547 = vst [vmem:[%s105 + $0x6e0] sm:$0xff] %v546
          %v548 = vld [vmem:[%s104 + $0x6e8] sm:$0xff]
          %549 = vst [vmem:[%s105 + $0x6e8] sm:$0xff] %v548
          %v550 = vld [vmem:[%s104 + $0x6f0] sm:$0xff]
          %551 = vst [vmem:[%s105 + $0x6f0] sm:$0xff] %v550
          %v552 = vld [vmem:[%s104 + $0x6f8] sm:$0xff]
          %553 = vst [vmem:[%s105 + $0x6f8] sm:$0xff] %v552
          %v554 = vld [vmem:[%s104 + $0x700] sm:$0xff]
          %555 = vst [vmem:[%s105 + $0x700] sm:$0xff] %v554
          %v556 = vld [vmem:[%s104 + $0x708] sm:$0xff]
          %557 = vst [vmem:[%s105 + $0x708] sm:$0xff] %v556
          %v558 = vld [vmem:[%s104 + $0x710] sm:$0xff]
          %559 = vst [vmem:[%s105 + $0x710] sm:$0xff] %v558
          %v560 = vld [vmem:[%s104 + $0x718] sm:$0xff]
          %561 = vst [vmem:[%s105 + $0x718] sm:$0xff] %v560
          %v562 = vld [vmem:[%s104 + $0x720] sm:$0xff]
          %563 = vst [vmem:[%s105 + $0x720] sm:$0xff] %v562
          %v564 = vld [vmem:[%s104 + $0x728] sm:$0xff]
          %565 = vst [vmem:[%s105 + $0x728] sm:$0xff] %v564
          %v566 = vld [vmem:[%s104 + $0x730] sm:$0xff]
          %567 = vst [vmem:[%s105 + $0x730] sm:$0xff] %v566
          %v568 = vld [vmem:[%s104 + $0x738] sm:$0xff]
          %569 = vst [vmem:[%s105 + $0x738] sm:$0xff] %v568
          %v570 = vld [vmem:[%s104 + $0x740] sm:$0xff]
          %571 = vst [vmem:[%s105 + $0x740] sm:$0xff] %v570
          %v572 = vld [vmem:[%s104 + $0x748] sm:$0xff]
          %573 = vst [vmem:[%s105 + $0x748] sm:$0xff] %v572
          %v574 = vld [vmem:[%s104 + $0x750] sm:$0xff]
          %575 = vst [vmem:[%s105 + $0x750] sm:$0xff] %v574
          %v576 = vld [vmem:[%s104 + $0x758] sm:$0xff]
          %577 = vst [vmem:[%s105 + $0x758] sm:$0xff] %v576
          %v578 = vld [vmem:[%s104 + $0x760] sm:$0xff]
          %579 = vst [vmem:[%s105 + $0x760] sm:$0xff] %v578
          %v580 = vld [vmem:[%s104 + $0x768] sm:$0xff]
          %581 = vst [vmem:[%s105 + $0x768] sm:$0xff] %v580
          %v582 = vld [vmem:[%s104 + $0x770] sm:$0xff]
          %583 = vst [vmem:[%s105 + $0x770] sm:$0xff] %v582
          %v584 = vld [vmem:[%s104 + $0x778] sm:$0xff]
          %585 = vst [vmem:[%s105 + $0x778] sm:$0xff] %v584
          %v586 = vld [vmem:[%s104 + $0x780] sm:$0xff]
          %587 = vst [vmem:[%s105 + $0x780] sm:$0xff] %v586
          %v588 = vld [vmem:[%s104 + $0x788] sm:$0xff]
          %589 = vst [vmem:[%s105 + $0x788] sm:$0xff] %v588
          %v590 = vld [vmem:[%s104 + $0x790] sm:$0xff]
          %591 = vst [vmem:[%s105 + $0x790] sm:$0xff] %v590
          %v592 = vld [vmem:[%s104 + $0x798] sm:$0xff]
          %593 = vst [vmem:[%s105 + $0x798] sm:$0xff] %v592
          %v594 = vld [vmem:[%s104 + $0x7a0] sm:$0xff]
          %595 = vst [vmem:[%s105 + $0x7a0] sm:$0xff] %v594
          %v596 = vld [vmem:[%s104 + $0x7a8] sm:$0xff]
          %597 = vst [vmem:[%s105 + $0x7a8] sm:$0xff] %v596
          %v598 = vld [vmem:[%s104 + $0x7b0] sm:$0xff]
          %599 = vst [vmem:[%s105 + $0x7b0] sm:$0xff] %v598
          %v600 = vld [vmem:[%s104 + $0x7b8] sm:$0xff]
          %601 = vst [vmem:[%s105 + $0x7b8] sm:$0xff] %v600
          %v602 = vld [vmem:[%s104 + $0x7c0] sm:$0xff]
          %603 = vst [vmem:[%s105 + $0x7c0] sm:$0xff] %v602
          %v604 = vld [vmem:[%s104 + $0x7c8] sm:$0xff]
          %605 = vst [vmem:[%s105 + $0x7c8] sm:$0xff] %v604
          %v606 = vld [vmem:[%s104 + $0x7d0] sm:$0xff]
          %607 = vst [vmem:[%s105 + $0x7d0] sm:$0xff] %v606
          %v608 = vld [vmem:[%s104 + $0x7d8] sm:$0xff]
          %609 = vst [vmem:[%s105 + $0x7d8] sm:$0xff] %v608
          %v610 = vld [vmem:[%s104 + $0x7e0] sm:$0xff]
          %611 = vst [vmem:[%s105 + $0x7e0] sm:$0xff] %v610
          %v612 = vld [vmem:[%s104 + $0x7e8] sm:$0xff]
          %613 = vst [vmem:[%s105 + $0x7e8] sm:$0xff] %v612
          %v614 = vld [vmem:[%s104 + $0x7f0] sm:$0xff]
          %615 = vst [vmem:[%s105 + $0x7f0] sm:$0xff] %v614
          %v616 = vld [vmem:[%s104 + $0x7f8] sm:$0xff]
          %617 = vst [vmem:[%s105 + $0x7f8] sm:$0xff] %v616
          %v618 = vld [vmem:[%s104 + $0x800] sm:$0xff]
          %619 = vst [vmem:[%s105 + $0x800] sm:$0xff] %v618
          %v620 = vld [vmem:[%s104 + $0x808] sm:$0xff]
          %621 = vst [vmem:[%s105 + $0x808] sm:$0xff] %v620
          %v622 = vld [vmem:[%s104 + $0x810] sm:$0xff]
          %623 = vst [vmem:[%s105 + $0x810] sm:$0xff] %v622
          %v624 = vld [vmem:[%s104 + $0x818] sm:$0xff]
          %625 = vst [vmem:[%s105 + $0x818] sm:$0xff] %v624
          %v626 = vld [vmem:[%s104 + $0x820] sm:$0xff]
          %627 = vst [vmem:[%s105 + $0x820] sm:$0xff] %v626
          %v628 = vld [vmem:[%s104 + $0x828] sm:$0xff]
          %629 = vst [vmem:[%s105 + $0x828] sm:$0xff] %v628
          %v630 = vld [vmem:[%s104 + $0x830] sm:$0xff]
          %631 = vst [vmem:[%s105 + $0x830] sm:$0xff] %v630
          %v632 = vld [vmem:[%s104 + $0x838] sm:$0xff]
          %633 = vst [vmem:[%s105 + $0x838] sm:$0xff] %v632
          %v634 = vld [vmem:[%s104 + $0x840] sm:$0xff]
          %635 = vst [vmem:[%s105 + $0x840] sm:$0xff] %v634
          %v636 = vld [vmem:[%s104 + $0x848] sm:$0xff]
          %637 = vst [vmem:[%s105 + $0x848] sm:$0xff] %v636
          %v638 = vld [vmem:[%s104 + $0x850] sm:$0xff]
          %639 = vst [vmem:[%s105 + $0x850] sm:$0xff] %v638
          %v640 = vld [vmem:[%s104 + $0x858] sm:$0xff]
          %641 = vst [vmem:[%s105 + $0x858] sm:$0xff] %v640
          %v642 = vld [vmem:[%s104 + $0x860] sm:$0xff]
          %643 = vst [vmem:[%s105 + $0x860] sm:$0xff] %v642
          %v644 = vld [vmem:[%s104 + $0x868] sm:$0xff]
          %645 = vst [vmem:[%s105 + $0x868] sm:$0xff] %v644
          %v646 = vld [vmem:[%s104 + $0x870] sm:$0xff]
          %647 = vst [vmem:[%s105 + $0x870] sm:$0xff] %v646
          %v648 = vld [vmem:[%s104 + $0x878] sm:$0xff]
          %649 = vst [vmem:[%s105 + $0x878] sm:$0xff] %v648
          %v650 = vld [vmem:[%s104 + $0x880] sm:$0xff]
          %651 = vst [vmem:[%s105 + $0x880] sm:$0xff] %v650
          %v652 = vld [vmem:[%s104 + $0x888] sm:$0xff]
          %653 = vst [vmem:[%s105 + $0x888] sm:$0xff] %v652
          %v654 = vld [vmem:[%s104 + $0x890] sm:$0xff]
          %655 = vst [vmem:[%s105 + $0x890] sm:$0xff] %v654
          %v656 = vld [vmem:[%s104 + $0x898] sm:$0xff]
          %657 = vst [vmem:[%s105 + $0x898] sm:$0xff] %v656
          %v658 = vld [vmem:[%s104 + $0x8a0] sm:$0xff]
          %659 = vst [vmem:[%s105 + $0x8a0] sm:$0xff] %v658
          %v660 = vld [vmem:[%s104 + $0x8a8] sm:$0xff]
          %661 = vst [vmem:[%s105 + $0x8a8] sm:$0xff] %v660
          %v662 = vld [vmem:[%s104 + $0x8b0] sm:$0xff]
          %663 = vst [vmem:[%s105 + $0x8b0] sm:$0xff] %v662
          %v664 = vld [vmem:[%s104 + $0x8b8] sm:$0xff]
          %665 = vst [vmem:[%s105 + $0x8b8] sm:$0xff] %v664
          %v666 = vld [vmem:[%s104 + $0x8c0] sm:$0xff]
          %667 = vst [vmem:[%s105 + $0x8c0] sm:$0xff] %v666
          %v668 = vld [vmem:[%s104 + $0x8c8] sm:$0xff]
          %669 = vst [vmem:[%s105 + $0x8c8] sm:$0xff] %v668
          %v670 = vld [vmem:[%s104 + $0x8d0] sm:$0xff]
          %671 = vst [vmem:[%s105 + $0x8d0] sm:$0xff] %v670
          %v672 = vld [vmem:[%s104 + $0x8d8] sm:$0xff]
          %673 = vst [vmem:[%s105 + $0x8d8] sm:$0xff] %v672
          %v674 = vld [vmem:[%s104 + $0x8e0] sm:$0xff]
          %675 = vst [vmem:[%s105 + $0x8e0] sm:$0xff] %v674
          %v676 = vld [vmem:[%s104 + $0x8e8] sm:$0xff]
          %677 = vst [vmem:[%s105 + $0x8e8] sm:$0xff] %v676
          %v678 = vld [vmem:[%s104 + $0x8f0] sm:$0xff]
          %679 = vst [vmem:[%s105 + $0x8f0] sm:$0xff] %v678
          %v680 = vld [vmem:[%s104 + $0x8f8] sm:$0xff]
          %681 = vst [vmem:[%s105 + $0x8f8] sm:$0xff] %v680
          %v682 = vld [vmem:[%s104 + $0x900] sm:$0xff]
          %683 = vst [vmem:[%s105 + $0x900] sm:$0xff] %v682
          %v684 = vld [vmem:[%s104 + $0x908] sm:$0xff]
          %685 = vst [vmem:[%s105 + $0x908] sm:$0xff] %v684
          %v686 = vld [vmem:[%s104 + $0x910] sm:$0xff]
          %687 = vst [vmem:[%s105 + $0x910] sm:$0xff] %v686
          %v688 = vld [vmem:[%s104 + $0x918] sm:$0xff]
          %689 = vst [vmem:[%s105 + $0x918] sm:$0xff] %v688
          %v690 = vld [vmem:[%s104 + $0x920] sm:$0xff]
          %691 = vst [vmem:[%s105 + $0x920] sm:$0xff] %v690
          %v692 = vld [vmem:[%s104 + $0x928] sm:$0xff]
          %693 = vst [vmem:[%s105 + $0x928] sm:$0xff] %v692
          %v694 = vld [vmem:[%s104 + $0x930] sm:$0xff]
          %695 = vst [vmem:[%s105 + $0x930] sm:$0xff] %v694
          %v696 = vld [vmem:[%s104 + $0x938] sm:$0xff]
          %697 = vst [vmem:[%s105 + $0x938] sm:$0xff] %v696
          %v698 = vld [vmem:[%s104 + $0x940] sm:$0xff]
          %699 = vst [vmem:[%s105 + $0x940] sm:$0xff] %v698
          %v700 = vld [vmem:[%s104 + $0x948] sm:$0xff]
          %701 = vst [vmem:[%s105 + $0x948] sm:$0xff] %v700
          %v702 = vld [vmem:[%s104 + $0x950] sm:$0xff]
          %703 = vst [vmem:[%s105 + $0x950] sm:$0xff] %v702
          %v704 = vld [vmem:[%s104 + $0x958] sm:$0xff]
          %705 = vst [vmem:[%s105 + $0x958] sm:$0xff] %v704
          %v706 = vld [vmem:[%s104 + $0x960] sm:$0xff]
          %707 = vst [vmem:[%s105 + $0x960] sm:$0xff] %v706
          %v708 = vld [vmem:[%s104 + $0x968] sm:$0xff]
          %709 = vst [vmem:[%s105 + $0x968] sm:$0xff] %v708
          %v710 = vld [vmem:[%s104 + $0x970] sm:$0xff]
          %711 = vst [vmem:[%s105 + $0x970] sm:$0xff] %v710
          %v712 = vld [vmem:[%s104 + $0x978] sm:$0xff]
          %713 = vst [vmem:[%s105 + $0x978] sm:$0xff] %v712
          %v714 = vld [vmem:[%s104 + $0x980] sm:$0xff]
          %715 = vst [vmem:[%s105 + $0x980] sm:$0xff] %v714
          %v716 = vld [vmem:[%s104 + $0x988] sm:$0xff]
          %717 = vst [vmem:[%s105 + $0x988] sm:$0xff] %v716
          %v718 = vld [vmem:[%s104 + $0x990] sm:$0xff]
          %719 = vst [vmem:[%s105 + $0x990] sm:$0xff] %v718
          %v720 = vld [vmem:[%s104 + $0x998] sm:$0xff]
          %721 = vst [vmem:[%s105 + $0x998] sm:$0xff] %v720
          %v722 = vld [vmem:[%s104 + $0x9a0] sm:$0xff]
          %723 = vst [vmem:[%s105 + $0x9a0] sm:$0xff] %v722
          %v724 = vld [vmem:[%s104 + $0x9a8] sm:$0xff]
          %725 = vst [vmem:[%s105 + $0x9a8] sm:$0xff] %v724
          %v726 = vld [vmem:[%s104 + $0x9b0] sm:$0xff]
          %727 = vst [vmem:[%s105 + $0x9b0] sm:$0xff] %v726
          %v728 = vld [vmem:[%s104 + $0x9b8] sm:$0xff]
          %729 = vst [vmem:[%s105 + $0x9b8] sm:$0xff] %v728
          %v730 = vld [vmem:[%s104 + $0x9c0] sm:$0xff]
          %731 = vst [vmem:[%s105 + $0x9c0] sm:$0xff] %v730
          %v732 = vld [vmem:[%s104 + $0x9c8] sm:$0xff]
          %733 = vst [vmem:[%s105 + $0x9c8] sm:$0xff] %v732
          %v734 = vld [vmem:[%s104 + $0x9d0] sm:$0xff]
          %735 = vst [vmem:[%s105 + $0x9d0] sm:$0xff] %v734
          %v736 = vld [vmem:[%s104 + $0x9d8] sm:$0xff]
          %737 = vst [vmem:[%s105 + $0x9d8] sm:$0xff] %v736
          %v738 = vld [vmem:[%s104 + $0x9e0] sm:$0xff]
          %739 = vst [vmem:[%s105 + $0x9e0] sm:$0xff] %v738
          %v740 = vld [vmem:[%s104 + $0x9e8] sm:$0xff]
          %741 = vst [vmem:[%s105 + $0x9e8] sm:$0xff] %v740
          %v742 = vld [vmem:[%s104 + $0x9f0] sm:$0xff]
          %743 = vst [vmem:[%s105 + $0x9f0] sm:$0xff] %v742
          %v744 = vld [vmem:[%s104 + $0x9f8] sm:$0xff]
          %745 = vst [vmem:[%s105 + $0x9f8] sm:$0xff] %v744
          %v746 = vld [vmem:[%s104 + $0xa00] sm:$0xff]
          %747 = vst [vmem:[%s105 + $0xa00] sm:$0xff] %v746
          %v748 = vld [vmem:[%s104 + $0xa08] sm:$0xff]
          %749 = vst [vmem:[%s105 + $0xa08] sm:$0xff] %v748
          %v750 = vld [vmem:[%s104 + $0xa10] sm:$0xff]
          %751 = vst [vmem:[%s105 + $0xa10] sm:$0xff] %v750
          %v752 = vld [vmem:[%s104 + $0xa18] sm:$0xff]
          %753 = vst [vmem:[%s105 + $0xa18] sm:$0xff] %v752
          %v754 = vld [vmem:[%s104 + $0xa20] sm:$0xff]
          %755 = vst [vmem:[%s105 + $0xa20] sm:$0xff] %v754
          %v756 = vld [vmem:[%s104 + $0xa28] sm:$0xff]
          %757 = vst [vmem:[%s105 + $0xa28] sm:$0xff] %v756
          %v758 = vld [vmem:[%s104 + $0xa30] sm:$0xff]
          %759 = vst [vmem:[%s105 + $0xa30] sm:$0xff] %v758
          %v760 = vld [vmem:[%s104 + $0xa38] sm:$0xff]
          %761 = vst [vmem:[%s105 + $0xa38] sm:$0xff] %v760
          %v762 = vld [vmem:[%s104 + $0xa40] sm:$0xff]
          %763 = vst [vmem:[%s105 + $0xa40] sm:$0xff] %v762
          %v764 = vld [vmem:[%s104 + $0xa48] sm:$0xff]
          %765 = vst [vmem:[%s105 + $0xa48] sm:$0xff] %v764
          %v766 = vld [vmem:[%s104 + $0xa50] sm:$0xff]
          %767 = vst [vmem:[%s105 + $0xa50] sm:$0xff] %v766
          %v768 = vld [vmem:[%s104 + $0xa58] sm:$0xff]
          %769 = vst [vmem:[%s105 + $0xa58] sm:$0xff] %v768
          %v770 = vld [vmem:[%s104 + $0xa60] sm:$0xff]
          %771 = vst [vmem:[%s105 + $0xa60] sm:$0xff] %v770
          %v772 = vld [vmem:[%s104 + $0xa68] sm:$0xff]
          %773 = vst [vmem:[%s105 + $0xa68] sm:$0xff] %v772
          %v774 = vld [vmem:[%s104 + $0xa70] sm:$0xff]
          %775 = vst [vmem:[%s105 + $0xa70] sm:$0xff] %v774
          %v776 = vld [vmem:[%s104 + $0xa78] sm:$0xff]
          %777 = vst [vmem:[%s105 + $0xa78] sm:$0xff] %v776
          %v778 = vld [vmem:[%s104 + $0xa80] sm:$0xff]
          %779 = vst [vmem:[%s105 + $0xa80] sm:$0xff] %v778
          %v780 = vld [vmem:[%s104 + $0xa88] sm:$0xff]
          %781 = vst [vmem:[%s105 + $0xa88] sm:$0xff] %v780
          %v782 = vld [vmem:[%s104 + $0xa90] sm:$0xff]
          %783 = vst [vmem:[%s105 + $0xa90] sm:$0xff] %v782
          %v784 = vld [vmem:[%s104 + $0xa98] sm:$0xff]
          %785 = vst [vmem:[%s105 + $0xa98] sm:$0xff] %v784
          %v786 = vld [vmem:[%s104 + $0xaa0] sm:$0xff]
          %787 = vst [vmem:[%s105 + $0xaa0] sm:$0xff] %v786
          %v788 = vld [vmem:[%s104 + $0xaa8] sm:$0xff]
          %789 = vst [vmem:[%s105 + $0xaa8] sm:$0xff] %v788
          %v790 = vld [vmem:[%s104 + $0xab0] sm:$0xff]
          %791 = vst [vmem:[%s105 + $0xab0] sm:$0xff] %v790
          %v792 = vld [vmem:[%s104 + $0xab8] sm:$0xff]
          %793 = vst [vmem:[%s105 + $0xab8] sm:$0xff] %v792
          %v794 = vld [vmem:[%s104 + $0xac0] sm:$0xff]
          %795 = vst [vmem:[%s105 + $0xac0] sm:$0xff] %v794
          %v796 = vld [vmem:[%s104 + $0xac8] sm:$0xff]
          %797 = vst [vmem:[%s105 + $0xac8] sm:$0xff] %v796
          %v798 = vld [vmem:[%s104 + $0xad0] sm:$0xff]
          %799 = vst [vmem:[%s105 + $0xad0] sm:$0xff] %v798
          %v800 = vld [vmem:[%s104 + $0xad8] sm:$0xff]
          %801 = vst [vmem:[%s105 + $0xad8] sm:$0xff] %v800
          %v802 = vld [vmem:[%s104 + $0xae0] sm:$0xff]
          %803 = vst [vmem:[%s105 + $0xae0] sm:$0xff] %v802
          %v804 = vld [vmem:[%s104 + $0xae8] sm:$0xff]
          %805 = vst [vmem:[%s105 + $0xae8] sm:$0xff] %v804
          %v806 = vld [vmem:[%s104 + $0xaf0] sm:$0xff]
          %807 = vst [vmem:[%s105 + $0xaf0] sm:$0xff] %v806
          %v808 = vld [vmem:[%s104 + $0xaf8] sm:$0xff]
          %809 = vst [vmem:[%s105 + $0xaf8] sm:$0xff] %v808
          %v810 = vld [vmem:[%s104 + $0xb00] sm:$0xff]
          %811 = vst [vmem:[%s105 + $0xb00] sm:$0xff] %v810
          %v812 = vld [vmem:[%s104 + $0xb08] sm:$0xff]
          %813 = vst [vmem:[%s105 + $0xb08] sm:$0xff] %v812
          %v814 = vld [vmem:[%s104 + $0xb10] sm:$0xff]
          %815 = vst [vmem:[%s105 + $0xb10] sm:$0xff] %v814
          %v816 = vld [vmem:[%s104 + $0xb18] sm:$0xff]
          %817 = vst [vmem:[%s105 + $0xb18] sm:$0xff] %v816
          %v818 = vld [vmem:[%s104 + $0xb20] sm:$0xff]
          %819 = vst [vmem:[%s105 + $0xb20] sm:$0xff] %v818
          %v820 = vld [vmem:[%s104 + $0xb28] sm:$0xff]
          %821 = vst [vmem:[%s105 + $0xb28] sm:$0xff] %v820
          %v822 = vld [vmem:[%s104 + $0xb30] sm:$0xff]
          %823 = vst [vmem:[%s105 + $0xb30] sm:$0xff] %v822
          %v824 = vld [vmem:[%s104 + $0xb38] sm:$0xff]
          %825 = vst [vmem:[%s105 + $0xb38] sm:$0xff] %v824
          %v826 = vld [vmem:[%s104 + $0xb40] sm:$0xff]
          %827 = vst [vmem:[%s105 + $0xb40] sm:$0xff] %v826
          %v828 = vld [vmem:[%s104 + $0xb48] sm:$0xff]
          %829 = vst [vmem:[%s105 + $0xb48] sm:$0xff] %v828
          %v830 = vld [vmem:[%s104 + $0xb50] sm:$0xff]
          %831 = vst [vmem:[%s105 + $0xb50] sm:$0xff] %v830
          %v832 = vld [vmem:[%s104 + $0xb58] sm:$0xff]
          %833 = vst [vmem:[%s105 + $0xb58] sm:$0xff] %v832
          %v834 = vld [vmem:[%s104 + $0xb60] sm:$0xff]
          %835 = vst [vmem:[%s105 + $0xb60] sm:$0xff] %v834
          %v836 = vld [vmem:[%s104 + $0xb68] sm:$0xff]
          %837 = vst [vmem:[%s105 + $0xb68] sm:$0xff] %v836
          %v838 = vld [vmem:[%s104 + $0xb70] sm:$0xff]
          %839 = vst [vmem:[%s105 + $0xb70] sm:$0xff] %v838
          %v840 = vld [vmem:[%s104 + $0xb78] sm:$0xff]
          %841 = vst [vmem:[%s105 + $0xb78] sm:$0xff] %v840
          %v842 = vld [vmem:[%s104 + $0xb80] sm:$0xff]
          %843 = vst [vmem:[%s105 + $0xb80] sm:$0xff] %v842
          %v844 = vld [vmem:[%s104 + $0xb88] sm:$0xff]
          %845 = vst [vmem:[%s105 + $0xb88] sm:$0xff] %v844
          %v846 = vld [vmem:[%s104 + $0xb90] sm:$0xff]
          %847 = vst [vmem:[%s105 + $0xb90] sm:$0xff] %v846
          %v848 = vld [vmem:[%s104 + $0xb98] sm:$0xff]
          %849 = vst [vmem:[%s105 + $0xb98] sm:$0xff] %v848
          %v850 = vld [vmem:[%s104 + $0xba0] sm:$0xff]
          %851 = vst [vmem:[%s105 + $0xba0] sm:$0xff] %v850
          %v852 = vld [vmem:[%s104 + $0xba8] sm:$0xff]
          %853 = vst [vmem:[%s105 + $0xba8] sm:$0xff] %v852
          %v854 = vld [vmem:[%s104 + $0xbb0] sm:$0xff]
          %855 = vst [vmem:[%s105 + $0xbb0] sm:$0xff] %v854
          %v856 = vld [vmem:[%s104 + $0xbb8] sm:$0xff]
          %857 = vst [vmem:[%s105 + $0xbb8] sm:$0xff] %v856
          %v858 = vld [vmem:[%s104 + $0xbc0] sm:$0xff]
          %859 = vst [vmem:[%s105 + $0xbc0] sm:$0xff] %v858
          %v860 = vld [vmem:[%s104 + $0xbc8] sm:$0xff]
          %861 = vst [vmem:[%s105 + $0xbc8] sm:$0xff] %v860
          %v862 = vld [vmem:[%s104 + $0xbd0] sm:$0xff]
          %863 = vst [vmem:[%s105 + $0xbd0] sm:$0xff] %v862
          %v864 = vld [vmem:[%s104 + $0xbd8] sm:$0xff]
          %865 = vst [vmem:[%s105 + $0xbd8] sm:$0xff] %v864
          %v866 = vld [vmem:[%s104 + $0xbe0] sm:$0xff]
          %867 = vst [vmem:[%s105 + $0xbe0] sm:$0xff] %v866
          %v868 = vld [vmem:[%s104 + $0xbe8] sm:$0xff]
          %869 = vst [vmem:[%s105 + $0xbe8] sm:$0xff] %v868
          %v870 = vld [vmem:[%s104 + $0xbf0] sm:$0xff]
          %871 = vst [vmem:[%s105 + $0xbf0] sm:$0xff] %v870
          %v872 = vld [vmem:[%s104 + $0xbf8] sm:$0xff]
          %873 = vst [vmem:[%s105 + $0xbf8] sm:$0xff] %v872
          %v874 = vld [vmem:[%s104 + $0xc00] sm:$0xff]
          %875 = vst [vmem:[%s105 + $0xc00] sm:$0xff] %v874
          %v876 = vld [vmem:[%s104 + $0xc08] sm:$0xff]
          %877 = vst [vmem:[%s105 + $0xc08] sm:$0xff] %v876
          %v878 = vld [vmem:[%s104 + $0xc10] sm:$0xff]
          %879 = vst [vmem:[%s105 + $0xc10] sm:$0xff] %v878
          %v880 = vld [vmem:[%s104 + $0xc18] sm:$0xff]
          %881 = vst [vmem:[%s105 + $0xc18] sm:$0xff] %v880
          %v882 = vld [vmem:[%s104 + $0xc20] sm:$0xff]
          %883 = vst [vmem:[%s105 + $0xc20] sm:$0xff] %v882
          %v884 = vld [vmem:[%s104 + $0xc28] sm:$0xff]
          %885 = vst [vmem:[%s105 + $0xc28] sm:$0xff] %v884
          %v886 = vld [vmem:[%s104 + $0xc30] sm:$0xff]
          %887 = vst [vmem:[%s105 + $0xc30] sm:$0xff] %v886
          %v888 = vld [vmem:[%s104 + $0xc38] sm:$0xff]
          %889 = vst [vmem:[%s105 + $0xc38] sm:$0xff] %v888
        $region65: #{tpu_custom_call.1} parent=59 // loop_footer
          %s103 = sadd.s32 1, %s99
        $region66: #{tpu_custom_call.1} parent=59 // loop_footer_branch
          %98 = sbr.rel target = $region62
        $region67: #{tpu_custom_call.1} parent=59 // loop_exit
          _
      $region60: #{tpu_custom_call.1} parent=44 // pred_fallthru
        _
      %p890 = pneg %p94
      // Predicated region
      $region68: #{tpu_custom_call.1} parent=44 // pred_check
        _
      $region69: #{tpu_custom_call.1} parent=44 // pred_check_branch
        %892 = sbr.rel (%p94) target = $region71
      $region70: #{tpu_custom_call.1} parent=44 // pred_region
        %s893 = sand.u32 3136, 7
      $region71: #{tpu_custom_call.1} parent=44 // pred_fallthru
        _
    $region45: #{tpu_custom_call.1} parent=1 // pred_fallthru
      _
    // Predicated region
    $region46: #{tpu_custom_call.1} parent=1 // pred_check
      %p79 = pneg %p75
    $region47: #{tpu_custom_call.1} parent=1 // pred_check_branch
      %81 = sbr.rel (%p79) target = $region49
    $region48: #{tpu_custom_call.1} parent=1 // pred_region
      %s82 = sshllo.u32 0, 3136
      loop: start=0, step=1, limit=1
      $region50: #{tpu_custom_call.1} parent=48 // loop_pre_header
        _
      $region51: #{tpu_custom_call.1} parent=48 // loop_header
        %s84 = sphi 0, %s88
        %p85 = scmp.ge.s32.totalorder %s84, 1
        %s89 = sphi %s7, %s7
        %s90 = sphi [#allocation2], [#allocation2]
      $region52: #{tpu_custom_call.1} parent=48 // loop_header_branch
        %87 = sbr.rel (%p85) target = $region56
      $region53: #{tpu_custom_call.1} parent=48 // loop_body
        %v91 = vld [vmem:[%s89] sm:%s82]
        %92 = vst [vmem:[%s90] sm:%s82] %v91
      $region54: #{tpu_custom_call.1} parent=48 // loop_footer
        %s88 = sadd.s32 1, %s84
      $region55: #{tpu_custom_call.1} parent=48 // loop_footer_branch
        %83 = sbr.rel target = $region51
      $region56: #{tpu_custom_call.1} parent=48 // loop_exit
        _
    $region49: #{tpu_custom_call.1} parent=1 // pred_fallthru
      _
    // Predicated region
    $region72: #{tpu_custom_call.1} parent=1 // pred_check
      _
    $region73: #{tpu_custom_call.1} parent=1 // pred_check_branch
      %896 = sbr.rel (0) target = $region75
    $region74: #{tpu_custom_call.1} parent=1 // pred_region
      %897 = vsyncadd [#allocation9], 50176
    $region75: #{tpu_custom_call.1} parent=1 // pred_fallthru
      _
    %s898 = scalar_lea.sflag [#allocation9], 1
    %p900 = scmp.lt.u32.totalorder 1568, 8
    %p901 = pneg %p900
    // Predicated region
    $region76: #{tpu_custom_call.1} parent=1 // pred_check
      _
    $region77: #{tpu_custom_call.1} parent=1 // pred_check_branch
      %903 = sbr.rel (%p900) target = $region79
    $region78: #{tpu_custom_call.1} parent=1 // pred_region
      %s918 = sand.u32 1568, 7
      %p919 = scmp.eq.s32.totalorder %s918, 0
      // Predicated region
      $region91: #{tpu_custom_call.1} parent=78 // pred_check
        %p920 = pneg %p919
      $region92: #{tpu_custom_call.1} parent=78 // pred_check_branch
        %922 = sbr.rel (%p920) target = $region94
      $region93: #{tpu_custom_call.1} parent=78 // pred_region
        loop: start=0, step=1, limit=1
        $region95: #{tpu_custom_call.1} parent=93 // loop_pre_header
          _
        $region96: #{tpu_custom_call.1} parent=93 // loop_header
          %s924 = sphi 0, %s928
          %p925 = scmp.ge.s32.totalorder %s924, 1
          %s929 = sphi %s8, %s8
          %s930 = sphi [#allocation3], [#allocation3]
        $region97: #{tpu_custom_call.1} parent=93 // loop_header_branch
          %927 = sbr.rel (%p925) target = $region101
        $region98: #{tpu_custom_call.1} parent=93 // loop_body
          %v931 = vld [vmem:[%s929] sm:$0xff]
          %932 = vst [vmem:[%s930] sm:$0xff] %v931
          %v933 = vld [vmem:[%s929 + $0x8] sm:$0xff]
          %934 = vst [vmem:[%s930 + $0x8] sm:$0xff] %v933
          %v935 = vld [vmem:[%s929 + $0x10] sm:$0xff]
          %936 = vst [vmem:[%s930 + $0x10] sm:$0xff] %v935
          %v937 = vld [vmem:[%s929 + $0x18] sm:$0xff]
          %938 = vst [vmem:[%s930 + $0x18] sm:$0xff] %v937
          %v939 = vld [vmem:[%s929 + $0x20] sm:$0xff]
          %940 = vst [vmem:[%s930 + $0x20] sm:$0xff] %v939
          %v941 = vld [vmem:[%s929 + $0x28] sm:$0xff]
          %942 = vst [vmem:[%s930 + $0x28] sm:$0xff] %v941
          %v943 = vld [vmem:[%s929 + $0x30] sm:$0xff]
          %944 = vst [vmem:[%s930 + $0x30] sm:$0xff] %v943
          %v945 = vld [vmem:[%s929 + $0x38] sm:$0xff]
          %946 = vst [vmem:[%s930 + $0x38] sm:$0xff] %v945
          %v947 = vld [vmem:[%s929 + $0x40] sm:$0xff]
          %948 = vst [vmem:[%s930 + $0x40] sm:$0xff] %v947
          %v949 = vld [vmem:[%s929 + $0x48] sm:$0xff]
          %950 = vst [vmem:[%s930 + $0x48] sm:$0xff] %v949
          %v951 = vld [vmem:[%s929 + $0x50] sm:$0xff]
          %952 = vst [vmem:[%s930 + $0x50] sm:$0xff] %v951
          %v953 = vld [vmem:[%s929 + $0x58] sm:$0xff]
          %954 = vst [vmem:[%s930 + $0x58] sm:$0xff] %v953
          %v955 = vld [vmem:[%s929 + $0x60] sm:$0xff]
          %956 = vst [vmem:[%s930 + $0x60] sm:$0xff] %v955
          %v957 = vld [vmem:[%s929 + $0x68] sm:$0xff]
          %958 = vst [vmem:[%s930 + $0x68] sm:$0xff] %v957
          %v959 = vld [vmem:[%s929 + $0x70] sm:$0xff]
          %960 = vst [vmem:[%s930 + $0x70] sm:$0xff] %v959
          %v961 = vld [vmem:[%s929 + $0x78] sm:$0xff]
          %962 = vst [vmem:[%s930 + $0x78] sm:$0xff] %v961
          %v963 = vld [vmem:[%s929 + $0x80] sm:$0xff]
          %964 = vst [vmem:[%s930 + $0x80] sm:$0xff] %v963
          %v965 = vld [vmem:[%s929 + $0x88] sm:$0xff]
          %966 = vst [vmem:[%s930 + $0x88] sm:$0xff] %v965
          %v967 = vld [vmem:[%s929 + $0x90] sm:$0xff]
          %968 = vst [vmem:[%s930 + $0x90] sm:$0xff] %v967
          %v969 = vld [vmem:[%s929 + $0x98] sm:$0xff]
          %970 = vst [vmem:[%s930 + $0x98] sm:$0xff] %v969
          %v971 = vld [vmem:[%s929 + $0xa0] sm:$0xff]
          %972 = vst [vmem:[%s930 + $0xa0] sm:$0xff] %v971
          %v973 = vld [vmem:[%s929 + $0xa8] sm:$0xff]
          %974 = vst [vmem:[%s930 + $0xa8] sm:$0xff] %v973
          %v975 = vld [vmem:[%s929 + $0xb0] sm:$0xff]
          %976 = vst [vmem:[%s930 + $0xb0] sm:$0xff] %v975
          %v977 = vld [vmem:[%s929 + $0xb8] sm:$0xff]
          %978 = vst [vmem:[%s930 + $0xb8] sm:$0xff] %v977
          %v979 = vld [vmem:[%s929 + $0xc0] sm:$0xff]
          %980 = vst [vmem:[%s930 + $0xc0] sm:$0xff] %v979
          %v981 = vld [vmem:[%s929 + $0xc8] sm:$0xff]
          %982 = vst [vmem:[%s930 + $0xc8] sm:$0xff] %v981
          %v983 = vld [vmem:[%s929 + $0xd0] sm:$0xff]
          %984 = vst [vmem:[%s930 + $0xd0] sm:$0xff] %v983
          %v985 = vld [vmem:[%s929 + $0xd8] sm:$0xff]
          %986 = vst [vmem:[%s930 + $0xd8] sm:$0xff] %v985
          %v987 = vld [vmem:[%s929 + $0xe0] sm:$0xff]
          %988 = vst [vmem:[%s930 + $0xe0] sm:$0xff] %v987
          %v989 = vld [vmem:[%s929 + $0xe8] sm:$0xff]
          %990 = vst [vmem:[%s930 + $0xe8] sm:$0xff] %v989
          %v991 = vld [vmem:[%s929 + $0xf0] sm:$0xff]
          %992 = vst [vmem:[%s930 + $0xf0] sm:$0xff] %v991
          %v993 = vld [vmem:[%s929 + $0xf8] sm:$0xff]
          %994 = vst [vmem:[%s930 + $0xf8] sm:$0xff] %v993
          %v995 = vld [vmem:[%s929 + $0x100] sm:$0xff]
          %996 = vst [vmem:[%s930 + $0x100] sm:$0xff] %v995
          %v997 = vld [vmem:[%s929 + $0x108] sm:$0xff]
          %998 = vst [vmem:[%s930 + $0x108] sm:$0xff] %v997
          %v999 = vld [vmem:[%s929 + $0x110] sm:$0xff]
          %1000 = vst [vmem:[%s930 + $0x110] sm:$0xff] %v999
          %v1001 = vld [vmem:[%s929 + $0x118] sm:$0xff]
          %1002 = vst [vmem:[%s930 + $0x118] sm:$0xff] %v1001
          %v1003 = vld [vmem:[%s929 + $0x120] sm:$0xff]
          %1004 = vst [vmem:[%s930 + $0x120] sm:$0xff] %v1003
          %v1005 = vld [vmem:[%s929 + $0x128] sm:$0xff]
          %1006 = vst [vmem:[%s930 + $0x128] sm:$0xff] %v1005
          %v1007 = vld [vmem:[%s929 + $0x130] sm:$0xff]
          %1008 = vst [vmem:[%s930 + $0x130] sm:$0xff] %v1007
          %v1009 = vld [vmem:[%s929 + $0x138] sm:$0xff]
          %1010 = vst [vmem:[%s930 + $0x138] sm:$0xff] %v1009
          %v1011 = vld [vmem:[%s929 + $0x140] sm:$0xff]
          %1012 = vst [vmem:[%s930 + $0x140] sm:$0xff] %v1011
          %v1013 = vld [vmem:[%s929 + $0x148] sm:$0xff]
          %1014 = vst [vmem:[%s930 + $0x148] sm:$0xff] %v1013
          %v1015 = vld [vmem:[%s929 + $0x150] sm:$0xff]
          %1016 = vst [vmem:[%s930 + $0x150] sm:$0xff] %v1015
          %v1017 = vld [vmem:[%s929 + $0x158] sm:$0xff]
          %1018 = vst [vmem:[%s930 + $0x158] sm:$0xff] %v1017
          %v1019 = vld [vmem:[%s929 + $0x160] sm:$0xff]
          %1020 = vst [vmem:[%s930 + $0x160] sm:$0xff] %v1019
          %v1021 = vld [vmem:[%s929 + $0x168] sm:$0xff]
          %1022 = vst [vmem:[%s930 + $0x168] sm:$0xff] %v1021
          %v1023 = vld [vmem:[%s929 + $0x170] sm:$0xff]
          %1024 = vst [vmem:[%s930 + $0x170] sm:$0xff] %v1023
          %v1025 = vld [vmem:[%s929 + $0x178] sm:$0xff]
          %1026 = vst [vmem:[%s930 + $0x178] sm:$0xff] %v1025
          %v1027 = vld [vmem:[%s929 + $0x180] sm:$0xff]
          %1028 = vst [vmem:[%s930 + $0x180] sm:$0xff] %v1027
          %v1029 = vld [vmem:[%s929 + $0x188] sm:$0xff]
          %1030 = vst [vmem:[%s930 + $0x188] sm:$0xff] %v1029
          %v1031 = vld [vmem:[%s929 + $0x190] sm:$0xff]
          %1032 = vst [vmem:[%s930 + $0x190] sm:$0xff] %v1031
          %v1033 = vld [vmem:[%s929 + $0x198] sm:$0xff]
          %1034 = vst [vmem:[%s930 + $0x198] sm:$0xff] %v1033
          %v1035 = vld [vmem:[%s929 + $0x1a0] sm:$0xff]
          %1036 = vst [vmem:[%s930 + $0x1a0] sm:$0xff] %v1035
          %v1037 = vld [vmem:[%s929 + $0x1a8] sm:$0xff]
          %1038 = vst [vmem:[%s930 + $0x1a8] sm:$0xff] %v1037
          %v1039 = vld [vmem:[%s929 + $0x1b0] sm:$0xff]
          %1040 = vst [vmem:[%s930 + $0x1b0] sm:$0xff] %v1039
          %v1041 = vld [vmem:[%s929 + $0x1b8] sm:$0xff]
          %1042 = vst [vmem:[%s930 + $0x1b8] sm:$0xff] %v1041
          %v1043 = vld [vmem:[%s929 + $0x1c0] sm:$0xff]
          %1044 = vst [vmem:[%s930 + $0x1c0] sm:$0xff] %v1043
          %v1045 = vld [vmem:[%s929 + $0x1c8] sm:$0xff]
          %1046 = vst [vmem:[%s930 + $0x1c8] sm:$0xff] %v1045
          %v1047 = vld [vmem:[%s929 + $0x1d0] sm:$0xff]
          %1048 = vst [vmem:[%s930 + $0x1d0] sm:$0xff] %v1047
          %v1049 = vld [vmem:[%s929 + $0x1d8] sm:$0xff]
          %1050 = vst [vmem:[%s930 + $0x1d8] sm:$0xff] %v1049
          %v1051 = vld [vmem:[%s929 + $0x1e0] sm:$0xff]
          %1052 = vst [vmem:[%s930 + $0x1e0] sm:$0xff] %v1051
          %v1053 = vld [vmem:[%s929 + $0x1e8] sm:$0xff]
          %1054 = vst [vmem:[%s930 + $0x1e8] sm:$0xff] %v1053
          %v1055 = vld [vmem:[%s929 + $0x1f0] sm:$0xff]
          %1056 = vst [vmem:[%s930 + $0x1f0] sm:$0xff] %v1055
          %v1057 = vld [vmem:[%s929 + $0x1f8] sm:$0xff]
          %1058 = vst [vmem:[%s930 + $0x1f8] sm:$0xff] %v1057
          %v1059 = vld [vmem:[%s929 + $0x200] sm:$0xff]
          %1060 = vst [vmem:[%s930 + $0x200] sm:$0xff] %v1059
          %v1061 = vld [vmem:[%s929 + $0x208] sm:$0xff]
          %1062 = vst [vmem:[%s930 + $0x208] sm:$0xff] %v1061
          %v1063 = vld [vmem:[%s929 + $0x210] sm:$0xff]
          %1064 = vst [vmem:[%s930 + $0x210] sm:$0xff] %v1063
          %v1065 = vld [vmem:[%s929 + $0x218] sm:$0xff]
          %1066 = vst [vmem:[%s930 + $0x218] sm:$0xff] %v1065
          %v1067 = vld [vmem:[%s929 + $0x220] sm:$0xff]
          %1068 = vst [vmem:[%s930 + $0x220] sm:$0xff] %v1067
          %v1069 = vld [vmem:[%s929 + $0x228] sm:$0xff]
          %1070 = vst [vmem:[%s930 + $0x228] sm:$0xff] %v1069
          %v1071 = vld [vmem:[%s929 + $0x230] sm:$0xff]
          %1072 = vst [vmem:[%s930 + $0x230] sm:$0xff] %v1071
          %v1073 = vld [vmem:[%s929 + $0x238] sm:$0xff]
          %1074 = vst [vmem:[%s930 + $0x238] sm:$0xff] %v1073
          %v1075 = vld [vmem:[%s929 + $0x240] sm:$0xff]
          %1076 = vst [vmem:[%s930 + $0x240] sm:$0xff] %v1075
          %v1077 = vld [vmem:[%s929 + $0x248] sm:$0xff]
          %1078 = vst [vmem:[%s930 + $0x248] sm:$0xff] %v1077
          %v1079 = vld [vmem:[%s929 + $0x250] sm:$0xff]
          %1080 = vst [vmem:[%s930 + $0x250] sm:$0xff] %v1079
          %v1081 = vld [vmem:[%s929 + $0x258] sm:$0xff]
          %1082 = vst [vmem:[%s930 + $0x258] sm:$0xff] %v1081
          %v1083 = vld [vmem:[%s929 + $0x260] sm:$0xff]
          %1084 = vst [vmem:[%s930 + $0x260] sm:$0xff] %v1083
          %v1085 = vld [vmem:[%s929 + $0x268] sm:$0xff]
          %1086 = vst [vmem:[%s930 + $0x268] sm:$0xff] %v1085
          %v1087 = vld [vmem:[%s929 + $0x270] sm:$0xff]
          %1088 = vst [vmem:[%s930 + $0x270] sm:$0xff] %v1087
          %v1089 = vld [vmem:[%s929 + $0x278] sm:$0xff]
          %1090 = vst [vmem:[%s930 + $0x278] sm:$0xff] %v1089
          %v1091 = vld [vmem:[%s929 + $0x280] sm:$0xff]
          %1092 = vst [vmem:[%s930 + $0x280] sm:$0xff] %v1091
          %v1093 = vld [vmem:[%s929 + $0x288] sm:$0xff]
          %1094 = vst [vmem:[%s930 + $0x288] sm:$0xff] %v1093
          %v1095 = vld [vmem:[%s929 + $0x290] sm:$0xff]
          %1096 = vst [vmem:[%s930 + $0x290] sm:$0xff] %v1095
          %v1097 = vld [vmem:[%s929 + $0x298] sm:$0xff]
          %1098 = vst [vmem:[%s930 + $0x298] sm:$0xff] %v1097
          %v1099 = vld [vmem:[%s929 + $0x2a0] sm:$0xff]
          %1100 = vst [vmem:[%s930 + $0x2a0] sm:$0xff] %v1099
          %v1101 = vld [vmem:[%s929 + $0x2a8] sm:$0xff]
          %1102 = vst [vmem:[%s930 + $0x2a8] sm:$0xff] %v1101
          %v1103 = vld [vmem:[%s929 + $0x2b0] sm:$0xff]
          %1104 = vst [vmem:[%s930 + $0x2b0] sm:$0xff] %v1103
          %v1105 = vld [vmem:[%s929 + $0x2b8] sm:$0xff]
          %1106 = vst [vmem:[%s930 + $0x2b8] sm:$0xff] %v1105
          %v1107 = vld [vmem:[%s929 + $0x2c0] sm:$0xff]
          %1108 = vst [vmem:[%s930 + $0x2c0] sm:$0xff] %v1107
          %v1109 = vld [vmem:[%s929 + $0x2c8] sm:$0xff]
          %1110 = vst [vmem:[%s930 + $0x2c8] sm:$0xff] %v1109
          %v1111 = vld [vmem:[%s929 + $0x2d0] sm:$0xff]
          %1112 = vst [vmem:[%s930 + $0x2d0] sm:$0xff] %v1111
          %v1113 = vld [vmem:[%s929 + $0x2d8] sm:$0xff]
          %1114 = vst [vmem:[%s930 + $0x2d8] sm:$0xff] %v1113
          %v1115 = vld [vmem:[%s929 + $0x2e0] sm:$0xff]
          %1116 = vst [vmem:[%s930 + $0x2e0] sm:$0xff] %v1115
          %v1117 = vld [vmem:[%s929 + $0x2e8] sm:$0xff]
          %1118 = vst [vmem:[%s930 + $0x2e8] sm:$0xff] %v1117
          %v1119 = vld [vmem:[%s929 + $0x2f0] sm:$0xff]
          %1120 = vst [vmem:[%s930 + $0x2f0] sm:$0xff] %v1119
          %v1121 = vld [vmem:[%s929 + $0x2f8] sm:$0xff]
          %1122 = vst [vmem:[%s930 + $0x2f8] sm:$0xff] %v1121
          %v1123 = vld [vmem:[%s929 + $0x300] sm:$0xff]
          %1124 = vst [vmem:[%s930 + $0x300] sm:$0xff] %v1123
          %v1125 = vld [vmem:[%s929 + $0x308] sm:$0xff]
          %1126 = vst [vmem:[%s930 + $0x308] sm:$0xff] %v1125
          %v1127 = vld [vmem:[%s929 + $0x310] sm:$0xff]
          %1128 = vst [vmem:[%s930 + $0x310] sm:$0xff] %v1127
          %v1129 = vld [vmem:[%s929 + $0x318] sm:$0xff]
          %1130 = vst [vmem:[%s930 + $0x318] sm:$0xff] %v1129
          %v1131 = vld [vmem:[%s929 + $0x320] sm:$0xff]
          %1132 = vst [vmem:[%s930 + $0x320] sm:$0xff] %v1131
          %v1133 = vld [vmem:[%s929 + $0x328] sm:$0xff]
          %1134 = vst [vmem:[%s930 + $0x328] sm:$0xff] %v1133
          %v1135 = vld [vmem:[%s929 + $0x330] sm:$0xff]
          %1136 = vst [vmem:[%s930 + $0x330] sm:$0xff] %v1135
          %v1137 = vld [vmem:[%s929 + $0x338] sm:$0xff]
          %1138 = vst [vmem:[%s930 + $0x338] sm:$0xff] %v1137
          %v1139 = vld [vmem:[%s929 + $0x340] sm:$0xff]
          %1140 = vst [vmem:[%s930 + $0x340] sm:$0xff] %v1139
          %v1141 = vld [vmem:[%s929 + $0x348] sm:$0xff]
          %1142 = vst [vmem:[%s930 + $0x348] sm:$0xff] %v1141
          %v1143 = vld [vmem:[%s929 + $0x350] sm:$0xff]
          %1144 = vst [vmem:[%s930 + $0x350] sm:$0xff] %v1143
          %v1145 = vld [vmem:[%s929 + $0x358] sm:$0xff]
          %1146 = vst [vmem:[%s930 + $0x358] sm:$0xff] %v1145
          %v1147 = vld [vmem:[%s929 + $0x360] sm:$0xff]
          %1148 = vst [vmem:[%s930 + $0x360] sm:$0xff] %v1147
          %v1149 = vld [vmem:[%s929 + $0x368] sm:$0xff]
          %1150 = vst [vmem:[%s930 + $0x368] sm:$0xff] %v1149
          %v1151 = vld [vmem:[%s929 + $0x370] sm:$0xff]
          %1152 = vst [vmem:[%s930 + $0x370] sm:$0xff] %v1151
          %v1153 = vld [vmem:[%s929 + $0x378] sm:$0xff]
          %1154 = vst [vmem:[%s930 + $0x378] sm:$0xff] %v1153
          %v1155 = vld [vmem:[%s929 + $0x380] sm:$0xff]
          %1156 = vst [vmem:[%s930 + $0x380] sm:$0xff] %v1155
          %v1157 = vld [vmem:[%s929 + $0x388] sm:$0xff]
          %1158 = vst [vmem:[%s930 + $0x388] sm:$0xff] %v1157
          %v1159 = vld [vmem:[%s929 + $0x390] sm:$0xff]
          %1160 = vst [vmem:[%s930 + $0x390] sm:$0xff] %v1159
          %v1161 = vld [vmem:[%s929 + $0x398] sm:$0xff]
          %1162 = vst [vmem:[%s930 + $0x398] sm:$0xff] %v1161
          %v1163 = vld [vmem:[%s929 + $0x3a0] sm:$0xff]
          %1164 = vst [vmem:[%s930 + $0x3a0] sm:$0xff] %v1163
          %v1165 = vld [vmem:[%s929 + $0x3a8] sm:$0xff]
          %1166 = vst [vmem:[%s930 + $0x3a8] sm:$0xff] %v1165
          %v1167 = vld [vmem:[%s929 + $0x3b0] sm:$0xff]
          %1168 = vst [vmem:[%s930 + $0x3b0] sm:$0xff] %v1167
          %v1169 = vld [vmem:[%s929 + $0x3b8] sm:$0xff]
          %1170 = vst [vmem:[%s930 + $0x3b8] sm:$0xff] %v1169
          %v1171 = vld [vmem:[%s929 + $0x3c0] sm:$0xff]
          %1172 = vst [vmem:[%s930 + $0x3c0] sm:$0xff] %v1171
          %v1173 = vld [vmem:[%s929 + $0x3c8] sm:$0xff]
          %1174 = vst [vmem:[%s930 + $0x3c8] sm:$0xff] %v1173
          %v1175 = vld [vmem:[%s929 + $0x3d0] sm:$0xff]
          %1176 = vst [vmem:[%s930 + $0x3d0] sm:$0xff] %v1175
          %v1177 = vld [vmem:[%s929 + $0x3d8] sm:$0xff]
          %1178 = vst [vmem:[%s930 + $0x3d8] sm:$0xff] %v1177
          %v1179 = vld [vmem:[%s929 + $0x3e0] sm:$0xff]
          %1180 = vst [vmem:[%s930 + $0x3e0] sm:$0xff] %v1179
          %v1181 = vld [vmem:[%s929 + $0x3e8] sm:$0xff]
          %1182 = vst [vmem:[%s930 + $0x3e8] sm:$0xff] %v1181
          %v1183 = vld [vmem:[%s929 + $0x3f0] sm:$0xff]
          %1184 = vst [vmem:[%s930 + $0x3f0] sm:$0xff] %v1183
          %v1185 = vld [vmem:[%s929 + $0x3f8] sm:$0xff]
          %1186 = vst [vmem:[%s930 + $0x3f8] sm:$0xff] %v1185
          %v1187 = vld [vmem:[%s929 + $0x400] sm:$0xff]
          %1188 = vst [vmem:[%s930 + $0x400] sm:$0xff] %v1187
          %v1189 = vld [vmem:[%s929 + $0x408] sm:$0xff]
          %1190 = vst [vmem:[%s930 + $0x408] sm:$0xff] %v1189
          %v1191 = vld [vmem:[%s929 + $0x410] sm:$0xff]
          %1192 = vst [vmem:[%s930 + $0x410] sm:$0xff] %v1191
          %v1193 = vld [vmem:[%s929 + $0x418] sm:$0xff]
          %1194 = vst [vmem:[%s930 + $0x418] sm:$0xff] %v1193
          %v1195 = vld [vmem:[%s929 + $0x420] sm:$0xff]
          %1196 = vst [vmem:[%s930 + $0x420] sm:$0xff] %v1195
          %v1197 = vld [vmem:[%s929 + $0x428] sm:$0xff]
          %1198 = vst [vmem:[%s930 + $0x428] sm:$0xff] %v1197
          %v1199 = vld [vmem:[%s929 + $0x430] sm:$0xff]
          %1200 = vst [vmem:[%s930 + $0x430] sm:$0xff] %v1199
          %v1201 = vld [vmem:[%s929 + $0x438] sm:$0xff]
          %1202 = vst [vmem:[%s930 + $0x438] sm:$0xff] %v1201
          %v1203 = vld [vmem:[%s929 + $0x440] sm:$0xff]
          %1204 = vst [vmem:[%s930 + $0x440] sm:$0xff] %v1203
          %v1205 = vld [vmem:[%s929 + $0x448] sm:$0xff]
          %1206 = vst [vmem:[%s930 + $0x448] sm:$0xff] %v1205
          %v1207 = vld [vmem:[%s929 + $0x450] sm:$0xff]
          %1208 = vst [vmem:[%s930 + $0x450] sm:$0xff] %v1207
          %v1209 = vld [vmem:[%s929 + $0x458] sm:$0xff]
          %1210 = vst [vmem:[%s930 + $0x458] sm:$0xff] %v1209
          %v1211 = vld [vmem:[%s929 + $0x460] sm:$0xff]
          %1212 = vst [vmem:[%s930 + $0x460] sm:$0xff] %v1211
          %v1213 = vld [vmem:[%s929 + $0x468] sm:$0xff]
          %1214 = vst [vmem:[%s930 + $0x468] sm:$0xff] %v1213
          %v1215 = vld [vmem:[%s929 + $0x470] sm:$0xff]
          %1216 = vst [vmem:[%s930 + $0x470] sm:$0xff] %v1215
          %v1217 = vld [vmem:[%s929 + $0x478] sm:$0xff]
          %1218 = vst [vmem:[%s930 + $0x478] sm:$0xff] %v1217
          %v1219 = vld [vmem:[%s929 + $0x480] sm:$0xff]
          %1220 = vst [vmem:[%s930 + $0x480] sm:$0xff] %v1219
          %v1221 = vld [vmem:[%s929 + $0x488] sm:$0xff]
          %1222 = vst [vmem:[%s930 + $0x488] sm:$0xff] %v1221
          %v1223 = vld [vmem:[%s929 + $0x490] sm:$0xff]
          %1224 = vst [vmem:[%s930 + $0x490] sm:$0xff] %v1223
          %v1225 = vld [vmem:[%s929 + $0x498] sm:$0xff]
          %1226 = vst [vmem:[%s930 + $0x498] sm:$0xff] %v1225
          %v1227 = vld [vmem:[%s929 + $0x4a0] sm:$0xff]
          %1228 = vst [vmem:[%s930 + $0x4a0] sm:$0xff] %v1227
          %v1229 = vld [vmem:[%s929 + $0x4a8] sm:$0xff]
          %1230 = vst [vmem:[%s930 + $0x4a8] sm:$0xff] %v1229
          %v1231 = vld [vmem:[%s929 + $0x4b0] sm:$0xff]
          %1232 = vst [vmem:[%s930 + $0x4b0] sm:$0xff] %v1231
          %v1233 = vld [vmem:[%s929 + $0x4b8] sm:$0xff]
          %1234 = vst [vmem:[%s930 + $0x4b8] sm:$0xff] %v1233
          %v1235 = vld [vmem:[%s929 + $0x4c0] sm:$0xff]
          %1236 = vst [vmem:[%s930 + $0x4c0] sm:$0xff] %v1235
          %v1237 = vld [vmem:[%s929 + $0x4c8] sm:$0xff]
          %1238 = vst [vmem:[%s930 + $0x4c8] sm:$0xff] %v1237
          %v1239 = vld [vmem:[%s929 + $0x4d0] sm:$0xff]
          %1240 = vst [vmem:[%s930 + $0x4d0] sm:$0xff] %v1239
          %v1241 = vld [vmem:[%s929 + $0x4d8] sm:$0xff]
          %1242 = vst [vmem:[%s930 + $0x4d8] sm:$0xff] %v1241
          %v1243 = vld [vmem:[%s929 + $0x4e0] sm:$0xff]
          %1244 = vst [vmem:[%s930 + $0x4e0] sm:$0xff] %v1243
          %v1245 = vld [vmem:[%s929 + $0x4e8] sm:$0xff]
          %1246 = vst [vmem:[%s930 + $0x4e8] sm:$0xff] %v1245
          %v1247 = vld [vmem:[%s929 + $0x4f0] sm:$0xff]
          %1248 = vst [vmem:[%s930 + $0x4f0] sm:$0xff] %v1247
          %v1249 = vld [vmem:[%s929 + $0x4f8] sm:$0xff]
          %1250 = vst [vmem:[%s930 + $0x4f8] sm:$0xff] %v1249
          %v1251 = vld [vmem:[%s929 + $0x500] sm:$0xff]
          %1252 = vst [vmem:[%s930 + $0x500] sm:$0xff] %v1251
          %v1253 = vld [vmem:[%s929 + $0x508] sm:$0xff]
          %1254 = vst [vmem:[%s930 + $0x508] sm:$0xff] %v1253
          %v1255 = vld [vmem:[%s929 + $0x510] sm:$0xff]
          %1256 = vst [vmem:[%s930 + $0x510] sm:$0xff] %v1255
          %v1257 = vld [vmem:[%s929 + $0x518] sm:$0xff]
          %1258 = vst [vmem:[%s930 + $0x518] sm:$0xff] %v1257
          %v1259 = vld [vmem:[%s929 + $0x520] sm:$0xff]
          %1260 = vst [vmem:[%s930 + $0x520] sm:$0xff] %v1259
          %v1261 = vld [vmem:[%s929 + $0x528] sm:$0xff]
          %1262 = vst [vmem:[%s930 + $0x528] sm:$0xff] %v1261
          %v1263 = vld [vmem:[%s929 + $0x530] sm:$0xff]
          %1264 = vst [vmem:[%s930 + $0x530] sm:$0xff] %v1263
          %v1265 = vld [vmem:[%s929 + $0x538] sm:$0xff]
          %1266 = vst [vmem:[%s930 + $0x538] sm:$0xff] %v1265
          %v1267 = vld [vmem:[%s929 + $0x540] sm:$0xff]
          %1268 = vst [vmem:[%s930 + $0x540] sm:$0xff] %v1267
          %v1269 = vld [vmem:[%s929 + $0x548] sm:$0xff]
          %1270 = vst [vmem:[%s930 + $0x548] sm:$0xff] %v1269
          %v1271 = vld [vmem:[%s929 + $0x550] sm:$0xff]
          %1272 = vst [vmem:[%s930 + $0x550] sm:$0xff] %v1271
          %v1273 = vld [vmem:[%s929 + $0x558] sm:$0xff]
          %1274 = vst [vmem:[%s930 + $0x558] sm:$0xff] %v1273
          %v1275 = vld [vmem:[%s929 + $0x560] sm:$0xff]
          %1276 = vst [vmem:[%s930 + $0x560] sm:$0xff] %v1275
          %v1277 = vld [vmem:[%s929 + $0x568] sm:$0xff]
          %1278 = vst [vmem:[%s930 + $0x568] sm:$0xff] %v1277
          %v1279 = vld [vmem:[%s929 + $0x570] sm:$0xff]
          %1280 = vst [vmem:[%s930 + $0x570] sm:$0xff] %v1279
          %v1281 = vld [vmem:[%s929 + $0x578] sm:$0xff]
          %1282 = vst [vmem:[%s930 + $0x578] sm:$0xff] %v1281
          %v1283 = vld [vmem:[%s929 + $0x580] sm:$0xff]
          %1284 = vst [vmem:[%s930 + $0x580] sm:$0xff] %v1283
          %v1285 = vld [vmem:[%s929 + $0x588] sm:$0xff]
          %1286 = vst [vmem:[%s930 + $0x588] sm:$0xff] %v1285
          %v1287 = vld [vmem:[%s929 + $0x590] sm:$0xff]
          %1288 = vst [vmem:[%s930 + $0x590] sm:$0xff] %v1287
          %v1289 = vld [vmem:[%s929 + $0x598] sm:$0xff]
          %1290 = vst [vmem:[%s930 + $0x598] sm:$0xff] %v1289
          %v1291 = vld [vmem:[%s929 + $0x5a0] sm:$0xff]
          %1292 = vst [vmem:[%s930 + $0x5a0] sm:$0xff] %v1291
          %v1293 = vld [vmem:[%s929 + $0x5a8] sm:$0xff]
          %1294 = vst [vmem:[%s930 + $0x5a8] sm:$0xff] %v1293
          %v1295 = vld [vmem:[%s929 + $0x5b0] sm:$0xff]
          %1296 = vst [vmem:[%s930 + $0x5b0] sm:$0xff] %v1295
          %v1297 = vld [vmem:[%s929 + $0x5b8] sm:$0xff]
          %1298 = vst [vmem:[%s930 + $0x5b8] sm:$0xff] %v1297
          %v1299 = vld [vmem:[%s929 + $0x5c0] sm:$0xff]
          %1300 = vst [vmem:[%s930 + $0x5c0] sm:$0xff] %v1299
          %v1301 = vld [vmem:[%s929 + $0x5c8] sm:$0xff]
          %1302 = vst [vmem:[%s930 + $0x5c8] sm:$0xff] %v1301
          %v1303 = vld [vmem:[%s929 + $0x5d0] sm:$0xff]
          %1304 = vst [vmem:[%s930 + $0x5d0] sm:$0xff] %v1303
          %v1305 = vld [vmem:[%s929 + $0x5d8] sm:$0xff]
          %1306 = vst [vmem:[%s930 + $0x5d8] sm:$0xff] %v1305
          %v1307 = vld [vmem:[%s929 + $0x5e0] sm:$0xff]
          %1308 = vst [vmem:[%s930 + $0x5e0] sm:$0xff] %v1307
          %v1309 = vld [vmem:[%s929 + $0x5e8] sm:$0xff]
          %1310 = vst [vmem:[%s930 + $0x5e8] sm:$0xff] %v1309
          %v1311 = vld [vmem:[%s929 + $0x5f0] sm:$0xff]
          %1312 = vst [vmem:[%s930 + $0x5f0] sm:$0xff] %v1311
          %v1313 = vld [vmem:[%s929 + $0x5f8] sm:$0xff]
          %1314 = vst [vmem:[%s930 + $0x5f8] sm:$0xff] %v1313
          %v1315 = vld [vmem:[%s929 + $0x600] sm:$0xff]
          %1316 = vst [vmem:[%s930 + $0x600] sm:$0xff] %v1315
          %v1317 = vld [vmem:[%s929 + $0x608] sm:$0xff]
          %1318 = vst [vmem:[%s930 + $0x608] sm:$0xff] %v1317
          %v1319 = vld [vmem:[%s929 + $0x610] sm:$0xff]
          %1320 = vst [vmem:[%s930 + $0x610] sm:$0xff] %v1319
          %v1321 = vld [vmem:[%s929 + $0x618] sm:$0xff]
          %1322 = vst [vmem:[%s930 + $0x618] sm:$0xff] %v1321
        $region99: #{tpu_custom_call.1} parent=93 // loop_footer
          %s928 = sadd.s32 1, %s924
        $region100: #{tpu_custom_call.1} parent=93 // loop_footer_branch
          %923 = sbr.rel target = $region96
        $region101: #{tpu_custom_call.1} parent=93 // loop_exit
          _
      $region94: #{tpu_custom_call.1} parent=78 // pred_fallthru
        _
      %p1323 = pneg %p919
      // Predicated region
      $region102: #{tpu_custom_call.1} parent=78 // pred_check
        _
      $region103: #{tpu_custom_call.1} parent=78 // pred_check_branch
        %1325 = sbr.rel (%p919) target = $region105
      $region104: #{tpu_custom_call.1} parent=78 // pred_region
        %s1326 = sand.u32 1568, 7
      $region105: #{tpu_custom_call.1} parent=78 // pred_fallthru
        _
    $region79: #{tpu_custom_call.1} parent=1 // pred_fallthru
      _
    // Predicated region
    $region80: #{tpu_custom_call.1} parent=1 // pred_check
      %p904 = pneg %p900
    $region81: #{tpu_custom_call.1} parent=1 // pred_check_branch
      %906 = sbr.rel (%p904) target = $region83
    $region82: #{tpu_custom_call.1} parent=1 // pred_region
      %s907 = sshllo.u32 0, 1568
      loop: start=0, step=1, limit=1
      $region84: #{tpu_custom_call.1} parent=82 // loop_pre_header
        _
      $region85: #{tpu_custom_call.1} parent=82 // loop_header
        %s909 = sphi 0, %s913
        %p910 = scmp.ge.s32.totalorder %s909, 1
        %s914 = sphi %s8, %s8
        %s915 = sphi [#allocation3], [#allocation3]
      $region86: #{tpu_custom_call.1} parent=82 // loop_header_branch
        %912 = sbr.rel (%p910) target = $region90
      $region87: #{tpu_custom_call.1} parent=82 // loop_body
        %v916 = vld [vmem:[%s914] sm:%s907]
        %917 = vst [vmem:[%s915] sm:%s907] %v916
      $region88: #{tpu_custom_call.1} parent=82 // loop_footer
        %s913 = sadd.s32 1, %s909
      $region89: #{tpu_custom_call.1} parent=82 // loop_footer_branch
        %908 = sbr.rel target = $region85
      $region90: #{tpu_custom_call.1} parent=82 // loop_exit
        _
    $region83: #{tpu_custom_call.1} parent=1 // pred_fallthru
      _
    // Predicated region
    $region106: #{tpu_custom_call.1} parent=1 // pred_check
      _
    $region107: #{tpu_custom_call.1} parent=1 // pred_check_branch
      %1329 = sbr.rel (0) target = $region109
    $region108: #{tpu_custom_call.1} parent=1 // pred_region
      %1330 = vsyncadd %s898, 25088
    $region109: #{tpu_custom_call.1} parent=1 // pred_fallthru
      _
    %s1331 = scalar_lea.sflag [#allocation9], 2
    // Predicated region
    $region110: #{tpu_custom_call.1} parent=1 // pred_check
      _
    $region111: #{tpu_custom_call.1} parent=1 // pred_check_branch
      %1333 = sbr.rel target = $region113
    $region112: #{tpu_custom_call.1} parent=1 // pred_region
      %1334 = sst [smem:[#allocation21]] [#allocation20]
      %1335 = sst [smem:[#allocation22]] [#allocation19]
    $region113: #{tpu_custom_call.1} parent=1 // pred_fallthru
      _
    %1337 = shalt.err (0)
    %s1339 = sshll.u32 [#allocation4], 4
    %s1340 = int_to_ptr.vmem [resolvable:$true] %s1339
    %1342 = dma.hbm_to_vmem [thread:$0]  %s9, 12416, %s1340, %s1331
    %s1343 = scalar_lea.sflag [#allocation9], 3
    %s1345 = sshll.u32 1, 14
    %s1346 = sxor.u32 4294967295, %s1345
    %s1348 = sld [smem:[#allocation0]]
    %s1349 = sadd.s32 2, %s1348
    %s1351 = sshll.u32 7, 26
    %s1352 = sxor.u32 4294967295, %s1351
    %s1353 = sand.u32 0, %s1352
    %s1354 = sshll.u32 %s1349, 26
    %s1355 = sor.u32 %s1353, %s1354
    %s1356 = sshll.u32 [#allocation5], 4
    %s1357 = int_to_ptr.vmem [resolvable:$true] %s1356
    %1360 = sst [smem:[#allocation24]] 384
    %s1361 = scalar_lea.smem [#allocation24], 1
    %1362 = sst [smem:[%s1361]] 384
    %s1363 = scalar_lea.smem [#allocation24], 2
    %1364 = sst [smem:[%s1363]] 3
    %s1365 = scalar_lea.smem [#allocation24], 3
    %1366 = sst [smem:[%s1365]] 64
    %s1367 = scalar_lea.smem [#allocation24], 4
    %1368 = sst [smem:[%s1367]] 128
    %s1369 = scalar_lea.smem [#allocation24], 5
    %1370 = sst [smem:[%s1369]] 2
    %s1371 = scalar_lea.smem [#allocation24], 6
    %1372 = sst [smem:[%s1371]] 192
    %s1373 = scalar_lea.smem [#allocation24], 7
    %1374 = sst [smem:[%s1373]] 64
    %s1375 = scalar_lea.smem [#allocation24], 8
    %1376 = sst [smem:[%s1375]] 4
    %1378 = dma.general %s10, 10752, %s1357, %s1343, [#allocation23], [#allocation24], %s1355, 0
    %s1379 = scalar_lea.sflag [#allocation9], 4
    %s1381 = sshll.u32 1, 14
    %s1382 = sxor.u32 4294967295, %s1381
    %s1384 = sadd.s32 2, %s1348
    %s1386 = sshll.u32 7, 26
    %s1387 = sxor.u32 4294967295, %s1386
    %s1388 = sand.u32 0, %s1387
    %s1389 = sshll.u32 %s1384, 26
    %s1390 = sor.u32 %s1388, %s1389
    %s1391 = sshll.u32 [#allocation6], 4
    %s1392 = int_to_ptr.vmem [resolvable:$true] %s1391
    %1395 = sst [smem:[#allocation26]] 256
    %s1396 = scalar_lea.smem [#allocation26], 1
    %1397 = sst [smem:[%s1396]] 256
    %s1398 = scalar_lea.smem [#allocation26], 2
    %1399 = sst [smem:[%s1398]] 2
    %s1400 = scalar_lea.smem [#allocation26], 3
    %1401 = sst [smem:[%s1400]] 64
    %s1402 = scalar_lea.smem [#allocation26], 4
    %1403 = sst [smem:[%s1402]] 128
    %s1404 = scalar_lea.smem [#allocation26], 5
    %1405 = sst [smem:[%s1404]] 2
    %s1406 = scalar_lea.smem [#allocation26], 6
    %1407 = sst [smem:[%s1406]] 128
    %s1408 = scalar_lea.smem [#allocation26], 7
    %1409 = sst [smem:[%s1408]] 64
    %s1410 = scalar_lea.smem [#allocation26], 8
    %1411 = sst [smem:[%s1410]] 4
    %1413 = dma.general %s11, 5376, %s1392, %s1379, [#allocation25], [#allocation26], %s1390, 0
    %s1414 = scalar_lea.sflag [#allocation9], 5
    %p1416 = scmp.lt.u32.totalorder 4, 8
    %p1417 = pneg %p1416
    // Predicated region
    $region114: #{tpu_custom_call.1} parent=1 // pred_check
      _
    $region115: #{tpu_custom_call.1} parent=1 // pred_check_branch
      %1419 = sbr.rel (%p1416) target = $region117
    $region116: #{tpu_custom_call.1} parent=1 // pred_region
      %s1544 = sand.u32 4, 7
      %p1545 = scmp.eq.s32.totalorder %s1544, 0
      %p1546 = pneg %p1545
      // Predicated region
      $region129: #{tpu_custom_call.1} parent=116 // pred_check
        _
      $region130: #{tpu_custom_call.1} parent=116 // pred_check_branch
        %1548 = sbr.rel (%p1545) target = $region132
      $region131: #{tpu_custom_call.1} parent=116 // pred_region
        %s1549 = sand.u32 4, 7
        %s1550 = ssub.s32 4, %s1549
        %s1551 = scalar_lea.vmem %s12, %s1550
        %s1552 = ssub.s32 4, %s1549
        %s1553 = scalar_lea.vmem [#allocation7], %s1552
        loop: start=0, step=1, limit=1
        $region133: #{tpu_custom_call.1} parent=131 // loop_pre_header
          _
        $region134: #{tpu_custom_call.1} parent=131 // loop_header
          %s1555 = sphi 0, %s1559
          %p1556 = scmp.ge.s32.totalorder %s1555, 1
          %s1560 = sphi %s12, %s12
          %s1561 = sphi [#allocation7], [#allocation7]
        $region135: #{tpu_custom_call.1} parent=131 // loop_header_branch
          %1558 = sbr.rel (%p1556) target = $region139
        $region136: #{tpu_custom_call.1} parent=131 // loop_body
          _
        $region137: #{tpu_custom_call.1} parent=131 // loop_footer
          %s1559 = sadd.s32 1, %s1555
        $region138: #{tpu_custom_call.1} parent=131 // loop_footer_branch
          %1554 = sbr.rel target = $region134
        $region139: #{tpu_custom_call.1} parent=131 // loop_exit
          _
        %s1562 = sshllo.u32 0, %s1549
        loop: start=0, step=1, limit=1
        $region140: #{tpu_custom_call.1} parent=131 // loop_pre_header
          _
        $region141: #{tpu_custom_call.1} parent=131 // loop_header
          %s1564 = sphi 0, %s1568
          %p1565 = scmp.ge.s32.totalorder %s1564, 1
          %s1569 = sphi %s1551, %s1551
          %s1570 = sphi %s1553, %s1553
        $region142: #{tpu_custom_call.1} parent=131 // loop_header_branch
          %1567 = sbr.rel (%p1565) target = $region146
        $region143: #{tpu_custom_call.1} parent=131 // loop_body
          %v1571 = vld [vmem:[%s1569] sm:%s1562]
          %1572 = vst [vmem:[%s1570] sm:%s1562] %v1571
          %v1573 = vld [vmem:[%s1569 + $0x8] sm:%s1562]
          %1574 = vst [vmem:[%s1570 + $0x4] sm:%s1562] %v1573
          %v1575 = vld [vmem:[%s1569 + $0x4] sm:%s1562]
          %1576 = vst [vmem:[%s1570 + $0x8] sm:%s1562] %v1575
          %v1577 = vld [vmem:[%s1569 + $0xc] sm:%s1562]
          %1578 = vst [vmem:[%s1570 + $0xc] sm:%s1562] %v1577
          %v1579 = vld [vmem:[%s1569 + $0x10] sm:%s1562]
          %1580 = vst [vmem:[%s1570 + $0x10] sm:%s1562] %v1579
          %v1581 = vld [vmem:[%s1569 + $0x18] sm:%s1562]
          %1582 = vst [vmem:[%s1570 + $0x14] sm:%s1562] %v1581
          %v1583 = vld [vmem:[%s1569 + $0x14] sm:%s1562]
          %1584 = vst [vmem:[%s1570 + $0x18] sm:%s1562] %v1583
          %v1585 = vld [vmem:[%s1569 + $0x1c] sm:%s1562]
          %1586 = vst [vmem:[%s1570 + $0x1c] sm:%s1562] %v1585
          %v1587 = vld [vmem:[%s1569 + $0x20] sm:%s1562]
          %1588 = vst [vmem:[%s1570 + $0x20] sm:%s1562] %v1587
          %v1589 = vld [vmem:[%s1569 + $0x28] sm:%s1562]
          %1590 = vst [vmem:[%s1570 + $0x24] sm:%s1562] %v1589
          %v1591 = vld [vmem:[%s1569 + $0x24] sm:%s1562]
          %1592 = vst [vmem:[%s1570 + $0x28] sm:%s1562] %v1591
          %v1593 = vld [vmem:[%s1569 + $0x2c] sm:%s1562]
          %1594 = vst [vmem:[%s1570 + $0x2c] sm:%s1562] %v1593
          %v1595 = vld [vmem:[%s1569 + $0x30] sm:%s1562]
          %1596 = vst [vmem:[%s1570 + $0x30] sm:%s1562] %v1595
          %v1597 = vld [vmem:[%s1569 + $0x38] sm:%s1562]
          %1598 = vst [vmem:[%s1570 + $0x34] sm:%s1562] %v1597
          %v1599 = vld [vmem:[%s1569 + $0x34] sm:%s1562]
          %1600 = vst [vmem:[%s1570 + $0x38] sm:%s1562] %v1599
          %v1601 = vld [vmem:[%s1569 + $0x3c] sm:%s1562]
          %1602 = vst [vmem:[%s1570 + $0x3c] sm:%s1562] %v1601
          %v1603 = vld [vmem:[%s1569 + $0x40] sm:%s1562]
          %1604 = vst [vmem:[%s1570 + $0x40] sm:%s1562] %v1603
          %v1605 = vld [vmem:[%s1569 + $0x48] sm:%s1562]
          %1606 = vst [vmem:[%s1570 + $0x44] sm:%s1562] %v1605
          %v1607 = vld [vmem:[%s1569 + $0x44] sm:%s1562]
          %1608 = vst [vmem:[%s1570 + $0x48] sm:%s1562] %v1607
          %v1609 = vld [vmem:[%s1569 + $0x4c] sm:%s1562]
          %1610 = vst [vmem:[%s1570 + $0x4c] sm:%s1562] %v1609
          %v1611 = vld [vmem:[%s1569 + $0x50] sm:%s1562]
          %1612 = vst [vmem:[%s1570 + $0x50] sm:%s1562] %v1611
          %v1613 = vld [vmem:[%s1569 + $0x58] sm:%s1562]
          %1614 = vst [vmem:[%s1570 + $0x54] sm:%s1562] %v1613
          %v1615 = vld [vmem:[%s1569 + $0x54] sm:%s1562]
          %1616 = vst [vmem:[%s1570 + $0x58] sm:%s1562] %v1615
          %v1617 = vld [vmem:[%s1569 + $0x5c] sm:%s1562]
          %1618 = vst [vmem:[%s1570 + $0x5c] sm:%s1562] %v1617
          %v1619 = vld [vmem:[%s1569 + $0x60] sm:%s1562]
          %1620 = vst [vmem:[%s1570 + $0x60] sm:%s1562] %v1619
          %v1621 = vld [vmem:[%s1569 + $0x68] sm:%s1562]
          %1622 = vst [vmem:[%s1570 + $0x64] sm:%s1562] %v1621
          %v1623 = vld [vmem:[%s1569 + $0x64] sm:%s1562]
          %1624 = vst [vmem:[%s1570 + $0x68] sm:%s1562] %v1623
          %v1625 = vld [vmem:[%s1569 + $0x6c] sm:%s1562]
          %1626 = vst [vmem:[%s1570 + $0x6c] sm:%s1562] %v1625
          %v1627 = vld [vmem:[%s1569 + $0x70] sm:%s1562]
          %1628 = vst [vmem:[%s1570 + $0x70] sm:%s1562] %v1627
          %v1629 = vld [vmem:[%s1569 + $0x78] sm:%s1562]
          %1630 = vst [vmem:[%s1570 + $0x74] sm:%s1562] %v1629
          %v1631 = vld [vmem:[%s1569 + $0x74] sm:%s1562]
          %1632 = vst [vmem:[%s1570 + $0x78] sm:%s1562] %v1631
          %v1633 = vld [vmem:[%s1569 + $0x7c] sm:%s1562]
          %1634 = vst [vmem:[%s1570 + $0x7c] sm:%s1562] %v1633
          %v1635 = vld [vmem:[%s1569 + $0x80] sm:%s1562]
          %1636 = vst [vmem:[%s1570 + $0x80] sm:%s1562] %v1635
          %v1637 = vld [vmem:[%s1569 + $0x88] sm:%s1562]
          %1638 = vst [vmem:[%s1570 + $0x84] sm:%s1562] %v1637
          %v1639 = vld [vmem:[%s1569 + $0x84] sm:%s1562]
          %1640 = vst [vmem:[%s1570 + $0x88] sm:%s1562] %v1639
          %v1641 = vld [vmem:[%s1569 + $0x8c] sm:%s1562]
          %1642 = vst [vmem:[%s1570 + $0x8c] sm:%s1562] %v1641
          %v1643 = vld [vmem:[%s1569 + $0x90] sm:%s1562]
          %1644 = vst [vmem:[%s1570 + $0x90] sm:%s1562] %v1643
          %v1645 = vld [vmem:[%s1569 + $0x98] sm:%s1562]
          %1646 = vst [vmem:[%s1570 + $0x94] sm:%s1562] %v1645
          %v1647 = vld [vmem:[%s1569 + $0x94] sm:%s1562]
          %1648 = vst [vmem:[%s1570 + $0x98] sm:%s1562] %v1647
          %v1649 = vld [vmem:[%s1569 + $0x9c] sm:%s1562]
          %1650 = vst [vmem:[%s1570 + $0x9c] sm:%s1562] %v1649
          %v1651 = vld [vmem:[%s1569 + $0xa0] sm:%s1562]
          %1652 = vst [vmem:[%s1570 + $0xa0] sm:%s1562] %v1651
          %v1653 = vld [vmem:[%s1569 + $0xa8] sm:%s1562]
          %1654 = vst [vmem:[%s1570 + $0xa4] sm:%s1562] %v1653
          %v1655 = vld [vmem:[%s1569 + $0xa4] sm:%s1562]
          %1656 = vst [vmem:[%s1570 + $0xa8] sm:%s1562] %v1655
          %v1657 = vld [vmem:[%s1569 + $0xac] sm:%s1562]
          %1658 = vst [vmem:[%s1570 + $0xac] sm:%s1562] %v1657
          %v1659 = vld [vmem:[%s1569 + $0xb0] sm:%s1562]
          %1660 = vst [vmem:[%s1570 + $0xb0] sm:%s1562] %v1659
          %v1661 = vld [vmem:[%s1569 + $0xb8] sm:%s1562]
          %1662 = vst [vmem:[%s1570 + $0xb4] sm:%s1562] %v1661
          %v1663 = vld [vmem:[%s1569 + $0xb4] sm:%s1562]
          %1664 = vst [vmem:[%s1570 + $0xb8] sm:%s1562] %v1663
          %v1665 = vld [vmem:[%s1569 + $0xbc] sm:%s1562]
          %1666 = vst [vmem:[%s1570 + $0xbc] sm:%s1562] %v1665
          %v1667 = vld [vmem:[%s1569 + $0xc0] sm:%s1562]
          %1668 = vst [vmem:[%s1570 + $0xc0] sm:%s1562] %v1667
          %v1669 = vld [vmem:[%s1569 + $0xc8] sm:%s1562]
          %1670 = vst [vmem:[%s1570 + $0xc4] sm:%s1562] %v1669
          %v1671 = vld [vmem:[%s1569 + $0xc4] sm:%s1562]
          %1672 = vst [vmem:[%s1570 + $0xc8] sm:%s1562] %v1671
          %v1673 = vld [vmem:[%s1569 + $0xcc] sm:%s1562]
          %1674 = vst [vmem:[%s1570 + $0xcc] sm:%s1562] %v1673
          %v1675 = vld [vmem:[%s1569 + $0xd0] sm:%s1562]
          %1676 = vst [vmem:[%s1570 + $0xd0] sm:%s1562] %v1675
          %v1677 = vld [vmem:[%s1569 + $0xd8] sm:%s1562]
          %1678 = vst [vmem:[%s1570 + $0xd4] sm:%s1562] %v1677
          %v1679 = vld [vmem:[%s1569 + $0xd4] sm:%s1562]
          %1680 = vst [vmem:[%s1570 + $0xd8] sm:%s1562] %v1679
          %v1681 = vld [vmem:[%s1569 + $0xdc] sm:%s1562]
          %1682 = vst [vmem:[%s1570 + $0xdc] sm:%s1562] %v1681
        $region144: #{tpu_custom_call.1} parent=131 // loop_footer
          %s1568 = sadd.s32 1, %s1564
        $region145: #{tpu_custom_call.1} parent=131 // loop_footer_branch
          %1563 = sbr.rel target = $region141
        $region146: #{tpu_custom_call.1} parent=131 // loop_exit
          _
      $region132: #{tpu_custom_call.1} parent=116 // pred_fallthru
        _
    $region117: #{tpu_custom_call.1} parent=1 // pred_fallthru
      _
    // Predicated region
    $region118: #{tpu_custom_call.1} parent=1 // pred_check
      %p1420 = pneg %p1416
    $region119: #{tpu_custom_call.1} parent=1 // pred_check_branch
      %1422 = sbr.rel (%p1420) target = $region121
    $region120: #{tpu_custom_call.1} parent=1 // pred_region
      %s1423 = sshllo.u32 0, 4
      loop: start=0, step=1, limit=1
      $region122: #{tpu_custom_call.1} parent=120 // loop_pre_header
        _
      $region123: #{tpu_custom_call.1} parent=120 // loop_header
        %s1425 = sphi 0, %s1429
        %p1426 = scmp.ge.s32.totalorder %s1425, 1
        %s1430 = sphi %s12, %s12
        %s1431 = sphi [#allocation7], [#allocation7]
      $region124: #{tpu_custom_call.1} parent=120 // loop_header_branch
        %1428 = sbr.rel (%p1426) target = $region128
      $region125: #{tpu_custom_call.1} parent=120 // loop_body
        %v1432 = vld [vmem:[%s1430] sm:%s1423]
        %1433 = vst [vmem:[%s1431] sm:%s1423] %v1432
        %v1434 = vld [vmem:[%s1430 + $0x8] sm:%s1423]
        %1435 = vst [vmem:[%s1431 + $0x4] sm:%s1423] %v1434
        %v1436 = vld [vmem:[%s1430 + $0x4] sm:%s1423]
        %1437 = vst [vmem:[%s1431 + $0x8] sm:%s1423] %v1436
        %v1438 = vld [vmem:[%s1430 + $0xc] sm:%s1423]
        %1439 = vst [vmem:[%s1431 + $0xc] sm:%s1423] %v1438
        %v1440 = vld [vmem:[%s1430 + $0x10] sm:%s1423]
        %1441 = vst [vmem:[%s1431 + $0x10] sm:%s1423] %v1440
        %v1442 = vld [vmem:[%s1430 + $0x18] sm:%s1423]
        %1443 = vst [vmem:[%s1431 + $0x14] sm:%s1423] %v1442
        %v1444 = vld [vmem:[%s1430 + $0x14] sm:%s1423]
        %1445 = vst [vmem:[%s1431 + $0x18] sm:%s1423] %v1444
        %v1446 = vld [vmem:[%s1430 + $0x1c] sm:%s1423]
        %1447 = vst [vmem:[%s1431 + $0x1c] sm:%s1423] %v1446
        %v1448 = vld [vmem:[%s1430 + $0x20] sm:%s1423]
        %1449 = vst [vmem:[%s1431 + $0x20] sm:%s1423] %v1448
        %v1450 = vld [vmem:[%s1430 + $0x28] sm:%s1423]
        %1451 = vst [vmem:[%s1431 + $0x24] sm:%s1423] %v1450
        %v1452 = vld [vmem:[%s1430 + $0x24] sm:%s1423]
        %1453 = vst [vmem:[%s1431 + $0x28] sm:%s1423] %v1452
        %v1454 = vld [vmem:[%s1430 + $0x2c] sm:%s1423]
        %1455 = vst [vmem:[%s1431 + $0x2c] sm:%s1423] %v1454
        %v1456 = vld [vmem:[%s1430 + $0x30] sm:%s1423]
        %1457 = vst [vmem:[%s1431 + $0x30] sm:%s1423] %v1456
        %v1458 = vld [vmem:[%s1430 + $0x38] sm:%s1423]
        %1459 = vst [vmem:[%s1431 + $0x34] sm:%s1423] %v1458
        %v1460 = vld [vmem:[%s1430 + $0x34] sm:%s1423]
        %1461 = vst [vmem:[%s1431 + $0x38] sm:%s1423] %v1460
        %v1462 = vld [vmem:[%s1430 + $0x3c] sm:%s1423]
        %1463 = vst [vmem:[%s1431 + $0x3c] sm:%s1423] %v1462
        %v1464 = vld [vmem:[%s1430 + $0x40] sm:%s1423]
        %1465 = vst [vmem:[%s1431 + $0x40] sm:%s1423] %v1464
        %v1466 = vld [vmem:[%s1430 + $0x48] sm:%s1423]
        %1467 = vst [vmem:[%s1431 + $0x44] sm:%s1423] %v1466
        %v1468 = vld [vmem:[%s1430 + $0x44] sm:%s1423]
        %1469 = vst [vmem:[%s1431 + $0x48] sm:%s1423] %v1468
        %v1470 = vld [vmem:[%s1430 + $0x4c] sm:%s1423]
        %1471 = vst [vmem:[%s1431 + $0x4c] sm:%s1423] %v1470
        %v1472 = vld [vmem:[%s1430 + $0x50] sm:%s1423]
        %1473 = vst [vmem:[%s1431 + $0x50] sm:%s1423] %v1472
        %v1474 = vld [vmem:[%s1430 + $0x58] sm:%s1423]
        %1475 = vst [vmem:[%s1431 + $0x54] sm:%s1423] %v1474
        %v1476 = vld [vmem:[%s1430 + $0x54] sm:%s1423]
        %1477 = vst [vmem:[%s1431 + $0x58] sm:%s1423] %v1476
        %v1478 = vld [vmem:[%s1430 + $0x5c] sm:%s1423]
        %1479 = vst [vmem:[%s1431 + $0x5c] sm:%s1423] %v1478
        %v1480 = vld [vmem:[%s1430 + $0x60] sm:%s1423]
        %1481 = vst [vmem:[%s1431 + $0x60] sm:%s1423] %v1480
        %v1482 = vld [vmem:[%s1430 + $0x68] sm:%s1423]
        %1483 = vst [vmem:[%s1431 + $0x64] sm:%s1423] %v1482
        %v1484 = vld [vmem:[%s1430 + $0x64] sm:%s1423]
        %1485 = vst [vmem:[%s1431 + $0x68] sm:%s1423] %v1484
        %v1486 = vld [vmem:[%s1430 + $0x6c] sm:%s1423]
        %1487 = vst [vmem:[%s1431 + $0x6c] sm:%s1423] %v1486
        %v1488 = vld [vmem:[%s1430 + $0x70] sm:%s1423]
        %1489 = vst [vmem:[%s1431 + $0x70] sm:%s1423] %v1488
        %v1490 = vld [vmem:[%s1430 + $0x78] sm:%s1423]
        %1491 = vst [vmem:[%s1431 + $0x74] sm:%s1423] %v1490
        %v1492 = vld [vmem:[%s1430 + $0x74] sm:%s1423]
        %1493 = vst [vmem:[%s1431 + $0x78] sm:%s1423] %v1492
        %v1494 = vld [vmem:[%s1430 + $0x7c] sm:%s1423]
        %1495 = vst [vmem:[%s1431 + $0x7c] sm:%s1423] %v1494
        %v1496 = vld [vmem:[%s1430 + $0x80] sm:%s1423]
        %1497 = vst [vmem:[%s1431 + $0x80] sm:%s1423] %v1496
        %v1498 = vld [vmem:[%s1430 + $0x88] sm:%s1423]
        %1499 = vst [vmem:[%s1431 + $0x84] sm:%s1423] %v1498
        %v1500 = vld [vmem:[%s1430 + $0x84] sm:%s1423]
        %1501 = vst [vmem:[%s1431 + $0x88] sm:%s1423] %v1500
        %v1502 = vld [vmem:[%s1430 + $0x8c] sm:%s1423]
        %1503 = vst [vmem:[%s1431 + $0x8c] sm:%s1423] %v1502
        %v1504 = vld [vmem:[%s1430 + $0x90] sm:%s1423]
        %1505 = vst [vmem:[%s1431 + $0x90] sm:%s1423] %v1504
        %v1506 = vld [vmem:[%s1430 + $0x98] sm:%s1423]
        %1507 = vst [vmem:[%s1431 + $0x94] sm:%s1423] %v1506
        %v1508 = vld [vmem:[%s1430 + $0x94] sm:%s1423]
        %1509 = vst [vmem:[%s1431 + $0x98] sm:%s1423] %v1508
        %v1510 = vld [vmem:[%s1430 + $0x9c] sm:%s1423]
        %1511 = vst [vmem:[%s1431 + $0x9c] sm:%s1423] %v1510
        %v1512 = vld [vmem:[%s1430 + $0xa0] sm:%s1423]
        %1513 = vst [vmem:[%s1431 + $0xa0] sm:%s1423] %v1512
        %v1514 = vld [vmem:[%s1430 + $0xa8] sm:%s1423]
        %1515 = vst [vmem:[%s1431 + $0xa4] sm:%s1423] %v1514
        %v1516 = vld [vmem:[%s1430 + $0xa4] sm:%s1423]
        %1517 = vst [vmem:[%s1431 + $0xa8] sm:%s1423] %v1516
        %v1518 = vld [vmem:[%s1430 + $0xac] sm:%s1423]
        %1519 = vst [vmem:[%s1431 + $0xac] sm:%s1423] %v1518
        %v1520 = vld [vmem:[%s1430 + $0xb0] sm:%s1423]
        %1521 = vst [vmem:[%s1431 + $0xb0] sm:%s1423] %v1520
        %v1522 = vld [vmem:[%s1430 + $0xb8] sm:%s1423]
        %1523 = vst [vmem:[%s1431 + $0xb4] sm:%s1423] %v1522
        %v1524 = vld [vmem:[%s1430 + $0xb4] sm:%s1423]
        %1525 = vst [vmem:[%s1431 + $0xb8] sm:%s1423] %v1524
        %v1526 = vld [vmem:[%s1430 + $0xbc] sm:%s1423]
        %1527 = vst [vmem:[%s1431 + $0xbc] sm:%s1423] %v1526
        %v1528 = vld [vmem:[%s1430 + $0xc0] sm:%s1423]
        %1529 = vst [vmem:[%s1431 + $0xc0] sm:%s1423] %v1528
        %v1530 = vld [vmem:[%s1430 + $0xc8] sm:%s1423]
        %1531 = vst [vmem:[%s1431 + $0xc4] sm:%s1423] %v1530
        %v1532 = vld [vmem:[%s1430 + $0xc4] sm:%s1423]
        %1533 = vst [vmem:[%s1431 + $0xc8] sm:%s1423] %v1532
        %v1534 = vld [vmem:[%s1430 + $0xcc] sm:%s1423]
        %1535 = vst [vmem:[%s1431 + $0xcc] sm:%s1423] %v1534
        %v1536 = vld [vmem:[%s1430 + $0xd0] sm:%s1423]
        %1537 = vst [vmem:[%s1431 + $0xd0] sm:%s1423] %v1536
        %v1538 = vld [vmem:[%s1430 + $0xd8] sm:%s1423]
        %1539 = vst [vmem:[%s1431 + $0xd4] sm:%s1423] %v1538
        %v1540 = vld [vmem:[%s1430 + $0xd4] sm:%s1423]
        %1541 = vst [vmem:[%s1431 + $0xd8] sm:%s1423] %v1540
        %v1542 = vld [vmem:[%s1430 + $0xdc] sm:%s1423]
        %1543 = vst [vmem:[%s1431 + $0xdc] sm:%s1423] %v1542
      $region126: #{tpu_custom_call.1} parent=120 // loop_footer
        %s1429 = sadd.s32 1, %s1425
      $region127: #{tpu_custom_call.1} parent=120 // loop_footer_branch
        %1424 = sbr.rel target = $region123
      $region128: #{tpu_custom_call.1} parent=120 // loop_exit
        _
    $region121: #{tpu_custom_call.1} parent=1 // pred_fallthru
      _
    // Predicated region
    $region147: #{tpu_custom_call.1} parent=1 // pred_check
      _
    $region148: #{tpu_custom_call.1} parent=1 // pred_check_branch
      %1685 = sbr.rel (0) target = $region150
    $region149: #{tpu_custom_call.1} parent=1 // pred_region
      %1686 = vsyncadd %s1414, 3584
    $region150: #{tpu_custom_call.1} parent=1 // pred_fallthru
      _
    %s1687 = scalar_lea.sflag [#allocation9], 6
    // Predicated region
    $region151: #{tpu_custom_call.1} parent=1 // pred_check
      _
    $region152: #{tpu_custom_call.1} parent=1 // pred_check_branch
      %1689 = sbr.rel target = $region154
    $region153: #{tpu_custom_call.1} parent=1 // pred_region
      %1690 = sst [smem:[#allocation21]] [#allocation29]
      %1691 = sst [smem:[#allocation22]] [#allocation28]
    $region154: #{tpu_custom_call.1} parent=1 // pred_fallthru
      _
    %1693 = shalt.err (0)
    %s1695 = sshll.u32 [#allocation8], 4
    %s1696 = int_to_ptr.vmem [resolvable:$true] %s1695
    %1698 = dma.hbm_to_vmem [thread:$0]  %s13, 1344, %s1696, %s1687
    %v1699 = vld [vmem:[%s0] sm:$0xff]
    %v1700 = vld [vmem:[%s0 + $0x8] sm:$0xf]
    %v1701 = vld [vmem:[%s0 + $0x10] sm:$0xff]
    %v1702 = vld [vmem:[%s0 + $0x18] sm:$0xf]
    %vm1707 = vcmask 1040384
    %v1708 = vrot.slane %v1699, 7
    %v1709 = vrot.slane %v1700, 7
    %v1710 = vsel %vm1707, %v1708, %v1709
    %v1711 = vrot.slane %v1701, 7
    %v1712 = vrot.slane %v1702, 7
    %v1713 = vsel %vm1707, %v1711, %v1712
    %v1716 = vsel %vm1707, 0.0, %v1708
    %v1717 = vsel %vm1707, 0.0, %v1711
    %vm1718 = vcmask 1046528
    %v1719 = vrot.slane %v1699, 1
    %v1720 = vrot.slane %v1700, 1
    %v1721 = vsel %vm1718, %v1719, %v1720
    %v1722 = vrot.slane %v1701, 1
    %v1723 = vrot.slane %v1702, 1
    %v1724 = vsel %vm1718, %v1722, %v1723
    %vm1727 = vcmask 1042432
    %v1728 = vsel %vm1727, %v1720, 0.0
    %v1729 = vsel %vm1727, %v1723, 0.0
    %v1730 = vld [vmem:[#allocation10] sm:$0x1]
    %1732 = vset.pattern.permute.xlu0 0
    %1733 = vperm.xlu0 %1732, %v1716
    %v1734 = vpop.permute.xlu0 %1733
    %1736 = vset.pattern.permute.xlu0 0
    %1737 = vperm.xlu0 %1736, %v1710
    %v1738 = vpop.permute.xlu0 %1737
    %1741 = vset.pattern.permute.xlu0 0
    %1742 = vperm.xlu0 %1741, %v1717
    %v1743 = vpop.permute.xlu0 %1742
    %1745 = vset.pattern.permute.xlu0 0
    %1746 = vperm.xlu0 %1745, %v1713
    %v1747 = vpop.permute.xlu0 %1746
    %v1750 = vlaneseq
    %v1751 = vshrl.u32 %v1750, 7
    %v1752 = vsub.s32 0, %v1751
    %v1753 = vrot.slane %v1730, %v1752
    %v1755 = vmul.f32 %v1734, %v1753
    %v1756 = vmul.f32 %v1738, %v1753
    %v1757 = vmul.f32 %v1743, %v1753
    %v1758 = vmul.f32 %v1747, %v1753
    %s1759 = scalar_lea.vmem [#allocation10], 1
    %v1760 = vld [vmem:[%s1759] sm:$0x1]
    %1761 = vset.pattern.permute.xlu0 0
    %1762 = vperm.xlu0 %1761, %v1699
    %v1763 = vpop.permute.xlu0 %1762
    %1765 = vset.pattern.permute.xlu0 0
    %1766 = vperm.xlu0 %1765, %v1700
    %v1767 = vpop.permute.xlu0 %1766
    %1769 = vset.pattern.permute.xlu0 0
    %1770 = vperm.xlu0 %1769, %v1701
    %v1771 = vpop.permute.xlu0 %1770
    %1773 = vset.pattern.permute.xlu0 0
    %1774 = vperm.xlu0 %1773, %v1702
    %v1775 = vpop.permute.xlu0 %1774
    %v1778 = vlaneseq
    %v1779 = vshrl.u32 %v1778, 7
    %v1780 = vsub.s32 0, %v1779
    %v1781 = vrot.slane %v1760, %v1780
    %v1783 = vmul.f32 %v1763, %v1781
    %v1784 = vmul.f32 %v1767, %v1781
    %v1785 = vmul.f32 %v1771, %v1781
    %v1786 = vmul.f32 %v1775, %v1781
    %v1787 = vadd.f32 %v1755, %v1783
    %v1788 = vadd.f32 %v1756, %v1784
    %v1789 = vadd.f32 %v1757, %v1785
    %v1790 = vadd.f32 %v1758, %v1786
    %s1791 = scalar_lea.vmem [#allocation10], 2
    %v1792 = vld [vmem:[%s1791] sm:$0x1]
    %1793 = vset.pattern.permute.xlu0 0
    %1794 = vperm.xlu0 %1793, %v1721
    %v1795 = vpop.permute.xlu0 %1794
    %1798 = vset.pattern.permute.xlu0 0
    %1799 = vperm.xlu0 %1798, %v1728
    %v1800 = vpop.permute.xlu0 %1799
    %1802 = vset.pattern.permute.xlu0 0
    %1803 = vperm.xlu0 %1802, %v1724
    %v1804 = vpop.permute.xlu0 %1803
    %1807 = vset.pattern.permute.xlu0 0
    %1808 = vperm.xlu0 %1807, %v1729
    %v1809 = vpop.permute.xlu0 %1808
    %v1812 = vlaneseq
    %v1813 = vshrl.u32 %v1812, 7
    %v1814 = vsub.s32 0, %v1813
    %v1815 = vrot.slane %v1792, %v1814
    %v1817 = vmul.f32 %v1795, %v1815
    %v1818 = vmul.f32 %v1800, %v1815
    %v1819 = vmul.f32 %v1804, %v1815
    %v1820 = vmul.f32 %v1809, %v1815
    %v1821 = vadd.f32 %v1787, %v1817
    %v1822 = vadd.f32 %v1788, %v1818
    %v1823 = vadd.f32 %v1789, %v1819
    %v1824 = vadd.f32 %v1790, %v1820
    %v1825 = vld [vmem:[#allocation15] sm:$0x1]
    %v1826 = vlaneseq
    %v1827 = vshrl.u32 %v1826, 7
    %v1828 = vsub.s32 0, %v1827
    %v1829 = vrot.slane %v1825, %v1828
    %v1830 = vadd.f32 %v1821, %v1829
    %v1831 = vadd.f32 %v1822, %v1829
    %v1832 = vadd.f32 %v1823, %v1829
    %v1833 = vadd.f32 %v1824, %v1829
    %v1834 = vmax.f32 %v1830, 0.0
    %v1835 = vmax.f32 %v1831, 0.0
    %v1836 = vmax.f32 %v1832, 0.0
    %v1837 = vmax.f32 %v1833, 0.0
    %v1842 = vrot.slane %v1834, 7
    %v1843 = vrot.slane %v1835, 7
    %v1844 = vsel %vm1707, %v1842, %v1843
    %v1845 = vrot.slane %v1836, 7
    %v1846 = vrot.slane %v1837, 7
    %v1847 = vsel %vm1707, %v1845, %v1846
    %v1850 = vsel %vm1707, 0.0, %v1842
    %v1851 = vsel %vm1707, 0.0, %v1845
    %v1852 = vrot.slane %v1834, 1
    %v1853 = vrot.slane %v1835, 1
    %v1854 = vsel %vm1718, %v1852, %v1853
    %v1855 = vrot.slane %v1836, 1
    %v1856 = vrot.slane %v1837, 1
    %v1857 = vsel %vm1718, %v1855, %v1856
    %v1860 = vsel %vm1727, %v1853, 0.0
    %v1861 = vsel %vm1727, %v1856, 0.0
    %v1864 = vcombine.high %v1850, %v1850
    %v1865 = vcombine.high %v1851, %v1851
    %v1866 = vcombine.low %v1850, %v1864
    %v1867 = vcombine.low %v1844, %v1851
    %v1868 = vcombine.low %v1865, %v1847
    %v1872 = vpack.c.bf16 %v1867, %v1866
    %v1873 = vpack.c.bf16 %v1868, %v1868
    %v1874 = vld [vmem:[%s2] sm:$0xf]
    %v1875 = vld [vmem:[%s2 + $0x4] sm:$0xf]
    %v1876 = vld [vmem:[%s2 + $0x8] sm:$0xf]
    %v1877 = vld [vmem:[%s2 + $0xc] sm:$0xf]
    %v1878 = vcombine.high %v1834, %v1834
    %v1879 = vcombine.high %v1836, %v1836
    %v1880 = vcombine.low %v1834, %v1878
    %v1881 = vcombine.low %v1835, %v1836
    %v1882 = vcombine.low %v1879, %v1837
    %v1886 = vpack.c.bf16 %v1881, %v1880
    %v1887 = vpack.c.bf16 %v1882, %v1882
    %s1888 = scalar_lea.vmem %s2, 16
    %v1889 = vld [vmem:[%s1888] sm:$0xf]
    %v1890 = vld [vmem:[%s1888 + $0x4] sm:$0xf]
    %v1891 = vld [vmem:[%s1888 + $0x8] sm:$0xf]
    %v1892 = vld [vmem:[%s1888 + $0xc] sm:$0xf]
    %v1897 = vunpack.c.l.b16 %v1889
    %v1898 = vunpack.c.l.b16 %v1890
    %v1899 = vunpack.c.l.b16 %v1891
    %v1900 = vunpack.c.l.b16 %v1892
    %v1901 = vpack.c.b16 %v1898, %v1897
    %v1902 = vpack.c.b16 %v1900, %v1899
    %vm1905 = vcmask 261120
    %v1907 = vsel %vm1905, %v1886, 0
    %v1910 = vsel %vm1905, %v1887, 0
    %1912 = vmatprep.subr.bf16.mxu0 0
    %1913 = vmatpush1.bf16.msra.mxu0 %v1901
    %1914 = vmatprep.subr.bf16.mxu0 0
    %1915 = vmatpush1.bf16.msra.mxu0 %v1902
    %1916 = vmatprep.subr.bf16.mxu0 0
    %1917 = vmatpush1.bf16.msra.mxu0 0
    %1918 = vmatprep.subr.bf16.mxu0 0
    %1919 = vmatpush1.bf16.msra.mxu0 0
    %1920 = vmatprep.subr.bf16.mxu0 0
    %1921 = vmatpush1.bf16.msra.mxu0 0
    %1922 = vmatprep.subr.bf16.mxu0 0
    %1923 = vmatpush1.bf16.msra.mxu0 0
    %1924 = vmatprep.subr.bf16.mxu0 0
    %1925 = vmatpush1.bf16.msra.mxu0 0
    %1926 = vmatprep.subr.bf16.mxu0 0
    %1927 = vmatpush1.bf16.msra.mxu0 0
    %1928 = vmatprep.subr.bf16.mxu0 0
    %1929 = vmatpush1.bf16.msra.mxu0 0
    %1930 = vmatprep.subr.bf16.mxu0 0
    %1931 = vmatpush1.bf16.msra.mxu0 0
    %1932 = vmatprep.subr.bf16.mxu0 0
    %1933 = vmatpush1.bf16.msra.mxu0 0
    %1934 = vmatprep.subr.bf16.mxu0 0
    %1935 = vmatpush1.bf16.msra.mxu0 0
    %1936 = vmatprep.subr.bf16.mxu0 0
    %1937 = vmatpush1.bf16.msra.mxu0 0
    %1938 = vmatprep.subr.bf16.mxu0 0
    %1939 = vmatpush1.bf16.msra.mxu0 0
    %1940 = vmatprep.subr.bf16.mxu0 0
    %1941 = vmatpush1.bf16.msra.mxu0 0
    %1942 = vmatprep.subr.bf16.mxu0 0
    %1943 = vmatpush1.bf16.msra.mxu0 0
    %1944 = vmatprep.mubr.bf16.mxu0 0
    %1945 = vmatmul.mubr.bf16.gmra.mrb[0].mxu0 %v1907
    %v1946 = vpop.f32.mrb[0].mxu0
    %v1947 = vadd.f32 0.0, %v1946
    %v1948 = vpop.f32.mrb[0].mxu0
    %v1949 = vpop.f32.mrb[0].mxu0
    %v1950 = vadd.f32 0.0, %v1949
    %v1951 = vpop.f32.mrb[0].mxu0
    %1952 = vmatprep.mubr.bf16.mxu0 0
    %1953 = vmatmul.mubr.bf16.gmra.mrb[0].mxu0 %v1910
    %v1954 = vpop.f32.mrb[0].mxu0
    %v1955 = vadd.f32 0.0, %v1954
    %v1956 = vpop.f32.mrb[0].mxu0
    %v1957 = vpop.f32.mrb[0].mxu0
    %v1958 = vpop.f32.mrb[0].mxu0
    %1959 = vdwg.mxu0
    %v1964 = vunpack.c.l.b16 %v1874
    %v1965 = vunpack.c.l.b16 %v1875
    %v1966 = vunpack.c.l.b16 %v1876
    %v1967 = vunpack.c.l.b16 %v1877
    %v1968 = vpack.c.b16 %v1965, %v1964
    %v1969 = vpack.c.b16 %v1967, %v1966
    %v1973 = vsel %vm1905, %v1872, 0
    %v1976 = vsel %vm1905, %v1873, 0
    %1978 = vmatprep.subr.bf16.mxu0 0
    %1979 = vmatpush1.bf16.msra.mxu0 %v1968
    %1980 = vmatprep.subr.bf16.mxu0 0
    %1981 = vmatpush1.bf16.msra.mxu0 %v1969
    %1982 = vmatprep.subr.bf16.mxu0 0
    %1983 = vmatpush1.bf16.msra.mxu0 0
    %1984 = vmatprep.subr.bf16.mxu0 0
    %1985 = vmatpush1.bf16.msra.mxu0 0
    %1986 = vmatprep.subr.bf16.mxu0 0
    %1987 = vmatpush1.bf16.msra.mxu0 0
    %1988 = vmatprep.subr.bf16.mxu0 0
    %1989 = vmatpush1.bf16.msra.mxu0 0
    %1990 = vmatprep.subr.bf16.mxu0 0
    %1991 = vmatpush1.bf16.msra.mxu0 0
    %1992 = vmatprep.subr.bf16.mxu0 0
    %1993 = vmatpush1.bf16.msra.mxu0 0
    %1994 = vmatprep.subr.bf16.mxu0 0
    %1995 = vmatpush1.bf16.msra.mxu0 0
    %1996 = vmatprep.subr.bf16.mxu0 0
    %1997 = vmatpush1.bf16.msra.mxu0 0
    %1998 = vmatprep.subr.bf16.mxu0 0
    %1999 = vmatpush1.bf16.msra.mxu0 0
    %2000 = vmatprep.subr.bf16.mxu0 0
    %2001 = vmatpush1.bf16.msra.mxu0 0
    %2002 = vmatprep.subr.bf16.mxu0 0
    %2003 = vmatpush1.bf16.msra.mxu0 0
    %2004 = vmatprep.subr.bf16.mxu0 0
    %2005 = vmatpush1.bf16.msra.mxu0 0
    %2006 = vmatprep.subr.bf16.mxu0 0
    %2007 = vmatpush1.bf16.msra.mxu0 0
    %2008 = vmatprep.subr.bf16.mxu0 0
    %2009 = vmatpush1.bf16.msra.mxu0 0
    %2010 = vmatprep.mubr.bf16.mxu0 0
    %2011 = vmatmul.mubr.bf16.gmra.mrb[0].mxu0 %v1973
    %v2012 = vpop.f32.mrb[0].mxu0
    %v2013 = vadd.f32 %v1947, %v2012
    %v2014 = vpop.f32.mrb[0].mxu0
    %v2015 = vpop.f32.mrb[0].mxu0
    %v2016 = vadd.f32 %v1950, %v2015
    %v2017 = vpop.f32.mrb[0].mxu0
    %2018 = vmatprep.mubr.bf16.mxu0 0
    %2019 = vmatmul.mubr.bf16.gmra.mrb[0].mxu0 %v1976
    %v2020 = vpop.f32.mrb[0].mxu0
    %v2021 = vadd.f32 %v1955, %v2020
    %v2022 = vpop.f32.mrb[0].mxu0
    %v2023 = vpop.f32.mrb[0].mxu0
    %v2024 = vpop.f32.mrb[0].mxu0
    %2025 = vdwg.mxu0
    %v2028 = vcombine.high %v1854, %v1854
    %v2029 = vcombine.high %v1857, %v1857
    %v2030 = vcombine.low %v1854, %v2028
    %v2031 = vcombine.low %v1860, %v1857
    %v2032 = vcombine.low %v2029, %v1861
    %v2036 = vpack.c.bf16 %v2031, %v2030
    %v2037 = vpack.c.bf16 %v2032, %v2032
    %s2038 = scalar_lea.vmem %s2, 32
    %v2039 = vld [vmem:[%s2038] sm:$0xf]
    %v2040 = vld [vmem:[%s2038 + $0x4] sm:$0xf]
    %v2041 = vld [vmem:[%s2038 + $0x8] sm:$0xf]
    %v2042 = vld [vmem:[%s2038 + $0xc] sm:$0xf]
    %v2047 = vunpack.c.l.b16 %v2039
    %v2048 = vunpack.c.l.b16 %v2040
    %v2049 = vunpack.c.l.b16 %v2041
    %v2050 = vunpack.c.l.b16 %v2042
    %v2051 = vpack.c.b16 %v2048, %v2047
    %v2052 = vpack.c.b16 %v2050, %v2049
    %v2056 = vsel %vm1905, %v2036, 0
    %v2059 = vsel %vm1905, %v2037, 0
    %2061 = vmatprep.subr.bf16.mxu0 0
    %2062 = vmatpush1.bf16.msra.mxu0 %v2051
    %2063 = vmatprep.subr.bf16.mxu0 0
    %2064 = vmatpush1.bf16.msra.mxu0 %v2052
    %2065 = vmatprep.subr.bf16.mxu0 0
    %2066 = vmatpush1.bf16.msra.mxu0 0
    %2067 = vmatprep.subr.bf16.mxu0 0
    %2068 = vmatpush1.bf16.msra.mxu0 0
    %2069 = vmatprep.subr.bf16.mxu0 0
    %2070 = vmatpush1.bf16.msra.mxu0 0
    %2071 = vmatprep.subr.bf16.mxu0 0
    %2072 = vmatpush1.bf16.msra.mxu0 0
    %2073 = vmatprep.subr.bf16.mxu0 0
    %2074 = vmatpush1.bf16.msra.mxu0 0
    %2075 = vmatprep.subr.bf16.mxu0 0
    %2076 = vmatpush1.bf16.msra.mxu0 0
    %2077 = vmatprep.subr.bf16.mxu0 0
    %2078 = vmatpush1.bf16.msra.mxu0 0
    %2079 = vmatprep.subr.bf16.mxu0 0
    %2080 = vmatpush1.bf16.msra.mxu0 0
    %2081 = vmatprep.subr.bf16.mxu0 0
    %2082 = vmatpush1.bf16.msra.mxu0 0
    %2083 = vmatprep.subr.bf16.mxu0 0
    %2084 = vmatpush1.bf16.msra.mxu0 0
    %2085 = vmatprep.subr.bf16.mxu0 0
    %2086 = vmatpush1.bf16.msra.mxu0 0
    %2087 = vmatprep.subr.bf16.mxu0 0
    %2088 = vmatpush1.bf16.msra.mxu0 0
    %2089 = vmatprep.subr.bf16.mxu0 0
    %2090 = vmatpush1.bf16.msra.mxu0 0
    %2091 = vmatprep.subr.bf16.mxu0 0
    %2092 = vmatpush1.bf16.msra.mxu0 0
    %2093 = vmatprep.mubr.bf16.mxu0 0
    %2094 = vmatmul.mubr.bf16.gmra.mrb[0].mxu0 %v2056
    %v2095 = vpop.f32.mrb[0].mxu0
    %v2096 = vadd.f32 0.0, %v2095
    %v2097 = vpop.f32.mrb[0].mxu0
    %v2098 = vpop.f32.mrb[0].mxu0
    %v2099 = vadd.f32 0.0, %v2098
    %v2100 = vpop.f32.mrb[0].mxu0
    %2101 = vmatprep.mubr.bf16.mxu0 0
    %2102 = vmatmul.mubr.bf16.gmra.mrb[0].mxu0 %v2059
    %v2103 = vpop.f32.mrb[0].mxu0
    %v2104 = vadd.f32 0.0, %v2103
    %v2105 = vpop.f32.mrb[0].mxu0
    %v2106 = vpop.f32.mrb[0].mxu0
    %v2107 = vpop.f32.mrb[0].mxu0
    %2108 = vdwg.mxu0
    %v2109 = vadd.f32 %v2013, %v2096
    %v2110 = vadd.f32 %v2016, %v2099
    %v2111 = vadd.f32 %v2021, %v2104
    %v2112 = vld [vmem:[#allocation15 + $0x1] sm:$0x1]
    %v2113 = vlaneseq
    %v2114 = vshrl.u32 %v2113, 7
    %v2115 = vsub.s32 0, %v2114
    %v2116 = vrot.slane %v2112, %v2115
    %v2117 = vadd.f32 %v2109, %v2116
    %v2118 = vadd.f32 %v2110, %v2116
    %v2119 = vadd.f32 %v2111, %v2116
    %v2120 = vmax.f32 %v2117, 0.0
    %v2121 = vmax.f32 %v2118, 0.0
    %v2122 = vmax.f32 %v2119, 0.0
    %v2126 = vcombine.high %v2120, %v2120
    %v2127 = vcombine.high %v2121, %v2121
    %v2128 = vcombine.high %v2122, %v2122
    %v2129 = vcombine.low %v2120, %v2126
    %v2130 = vcombine.low %v2127, %v2122
    %v2131 = vrot.slane %v2129, 7
    %v2132 = vrot.slane %v2121, 7
    %v2133 = vsel %vm1707, %v2131, %v2132
    %v2134 = vrot.slane %v2130, 7
    %v2135 = vrot.slane %v2128, 7
    %v2136 = vsel %vm1707, %v2134, %v2135
    %v2139 = vsel %vm1707, 0.0, %v2131
    %v2140 = vsel %vm1707, 0.0, %v2134
    %v2141 = vrot.slane %v2129, 1
    %v2142 = vrot.slane %v2121, 1
    %v2143 = vsel %vm1718, %v2141, %v2142
    %v2144 = vrot.slane %v2130, 1
    %v2145 = vrot.slane %v2128, 1
    %v2146 = vsel %vm1718, %v2144, %v2145
    %v2149 = vsel %vm1727, %v2142, 0.0
    %v2150 = vsel %vm1727, %v2145, 0.0
    %v2153 = vcombine.high %v2139, %v2139
    %v2154 = vcombine.high %v2140, %v2140
    %v2155 = vcombine.low %v2139, %v2153
    %v2156 = vcombine.low %v2133, %v2140
    %v2157 = vcombine.low %v2154, %v2136
    %v2161 = vpack.c.bf16 %v2156, %v2155
    %v2162 = vpack.c.bf16 %v2157, %v2157
    %v2163 = vld [vmem:[%s3] sm:$0xf]
    %v2164 = vld [vmem:[%s3 + $0x4] sm:$0xf]
    %v2165 = vld [vmem:[%s3 + $0x8] sm:$0xf]
    %v2166 = vld [vmem:[%s3 + $0xc] sm:$0xf]
    %v2167 = vld [vmem:[%s3 + $0x10] sm:$0xf]
    %v2168 = vld [vmem:[%s3 + $0x14] sm:$0xf]
    %v2169 = vld [vmem:[%s3 + $0x18] sm:$0xf]
    %v2170 = vld [vmem:[%s3 + $0x1c] sm:$0xf]
    %v2171 = vpack.c.bf16 %v2121, %v2120
    %v2172 = vpack.c.bf16 %v2122, %v2122
    %s2173 = scalar_lea.vmem %s3, 32
    %v2174 = vld [vmem:[%s2173] sm:$0xf]
    %v2175 = vld [vmem:[%s2173 + $0x4] sm:$0xf]
    %v2176 = vld [vmem:[%s2173 + $0x8] sm:$0xf]
    %v2177 = vld [vmem:[%s2173 + $0xc] sm:$0xf]
    %v2178 = vld [vmem:[%s2173 + $0x10] sm:$0xf]
    %v2179 = vld [vmem:[%s2173 + $0x14] sm:$0xf]
    %v2180 = vld [vmem:[%s2173 + $0x18] sm:$0xf]
    %v2181 = vld [vmem:[%s2173 + $0x1c] sm:$0xf]
    %v2190 = vunpack.c.l.b16 %v2174
    %v2191 = vunpack.c.l.b16 %v2175
    %v2192 = vunpack.c.l.b16 %v2176
    %v2193 = vunpack.c.l.b16 %v2177
    %v2194 = vunpack.c.l.b16 %v2178
    %v2195 = vunpack.c.l.b16 %v2179
    %v2196 = vunpack.c.l.b16 %v2180
    %v2197 = vunpack.c.l.b16 %v2181
    %v2198 = vpack.c.b16 %v2191, %v2190
    %v2199 = vpack.c.b16 %v2193, %v2192
    %v2200 = vpack.c.b16 %v2195, %v2194
    %v2201 = vpack.c.b16 %v2197, %v2196
    %vm2206 = vcmask 523264
    %v2208 = vsel %vm2206, %v2171, 0
    %v2211 = vsel %vm2206, %v2172, 0
    %2213 = vmatprep.subr.bf16.mxu0 0
    %2214 = vmatpush1.bf16.msra.mxu0 %v2198
    %2215 = vmatprep.subr.bf16.mxu0 0
    %2216 = vmatpush1.bf16.msra.mxu0 %v2199
    %2217 = vmatprep.subr.bf16.mxu0 0
    %2218 = vmatpush1.bf16.msra.mxu0 %v2200
    %2219 = vmatprep.subr.bf16.mxu0 0
    %2220 = vmatpush1.bf16.msra.mxu0 %v2201
    %2221 = vmatprep.subr.bf16.mxu0 0
    %2222 = vmatpush1.bf16.msra.mxu0 0
    %2223 = vmatprep.subr.bf16.mxu0 0
    %2224 = vmatpush1.bf16.msra.mxu0 0
    %2225 = vmatprep.subr.bf16.mxu0 0
    %2226 = vmatpush1.bf16.msra.mxu0 0
    %2227 = vmatprep.subr.bf16.mxu0 0
    %2228 = vmatpush1.bf16.msra.mxu0 0
    %2229 = vmatprep.subr.bf16.mxu0 0
    %2230 = vmatpush1.bf16.msra.mxu0 0
    %2231 = vmatprep.subr.bf16.mxu0 0
    %2232 = vmatpush1.bf16.msra.mxu0 0
    %2233 = vmatprep.subr.bf16.mxu0 0
    %2234 = vmatpush1.bf16.msra.mxu0 0
    %2235 = vmatprep.subr.bf16.mxu0 0
    %2236 = vmatpush1.bf16.msra.mxu0 0
    %2237 = vmatprep.subr.bf16.mxu0 0
    %2238 = vmatpush1.bf16.msra.mxu0 0
    %2239 = vmatprep.subr.bf16.mxu0 0
    %2240 = vmatpush1.bf16.msra.mxu0 0
    %2241 = vmatprep.subr.bf16.mxu0 0
    %2242 = vmatpush1.bf16.msra.mxu0 0
    %2243 = vmatprep.subr.bf16.mxu0 0
    %2244 = vmatpush1.bf16.msra.mxu0 0
    %2245 = vmatprep.mubr.bf16.mxu0 0
    %2246 = vmatmul.mubr.bf16.gmra.mrb[0].mxu0 %v2208
    %v2247 = vpop.f32.mrb[0].mxu0
    %v2248 = vadd.f32 0.0, %v2247
    %v2249 = vpop.f32.mrb[0].mxu0
    %v2250 = vpop.f32.mrb[0].mxu0
    %v2251 = vadd.f32 0.0, %v2250
    %v2252 = vpop.f32.mrb[0].mxu0
    %2253 = vmatprep.mubr.bf16.mxu0 0
    %2254 = vmatmul.mubr.bf16.gmra.mrb[0].mxu0 %v2211
    %v2255 = vpop.f32.mrb[0].mxu0
    %v2256 = vadd.f32 0.0, %v2255
    %v2257 = vpop.f32.mrb[0].mxu0
    %v2258 = vpop.f32.mrb[0].mxu0
    %v2259 = vpop.f32.mrb[0].mxu0
    %2260 = vdwg.mxu0
    %v2269 = vunpack.c.l.b16 %v2163
    %v2270 = vunpack.c.l.b16 %v2164
    %v2271 = vunpack.c.l.b16 %v2165
    %v2272 = vunpack.c.l.b16 %v2166
    %v2273 = vunpack.c.l.b16 %v2167
    %v2274 = vunpack.c.l.b16 %v2168
    %v2275 = vunpack.c.l.b16 %v2169
    %v2276 = vunpack.c.l.b16 %v2170
    %v2277 = vpack.c.b16 %v2270, %v2269
    %v2278 = vpack.c.b16 %v2272, %v2271
    %v2279 = vpack.c.b16 %v2274, %v2273
    %v2280 = vpack.c.b16 %v2276, %v2275
    %v2286 = vsel %vm2206, %v2161, 0
    %v2289 = vsel %vm2206, %v2162, 0
    %2291 = vmatprep.subr.bf16.mxu0 0
    %2292 = vmatpush1.bf16.msra.mxu0 %v2277
    %2293 = vmatprep.subr.bf16.mxu0 0
    %2294 = vmatpush1.bf16.msra.mxu0 %v2278
    %2295 = vmatprep.subr.bf16.mxu0 0
    %2296 = vmatpush1.bf16.msra.mxu0 %v2279
    %2297 = vmatprep.subr.bf16.mxu0 0
    %2298 = vmatpush1.bf16.msra.mxu0 %v2280
    %2299 = vmatprep.subr.bf16.mxu0 0
    %2300 = vmatpush1.bf16.msra.mxu0 0
    %2301 = vmatprep.subr.bf16.mxu0 0
    %2302 = vmatpush1.bf16.msra.mxu0 0
    %2303 = vmatprep.subr.bf16.mxu0 0
    %2304 = vmatpush1.bf16.msra.mxu0 0
    %2305 = vmatprep.subr.bf16.mxu0 0
    %2306 = vmatpush1.bf16.msra.mxu0 0
    %2307 = vmatprep.subr.bf16.mxu0 0
    %2308 = vmatpush1.bf16.msra.mxu0 0
    %2309 = vmatprep.subr.bf16.mxu0 0
    %2310 = vmatpush1.bf16.msra.mxu0 0
    %2311 = vmatprep.subr.bf16.mxu0 0
    %2312 = vmatpush1.bf16.msra.mxu0 0
    %2313 = vmatprep.subr.bf16.mxu0 0
    %2314 = vmatpush1.bf16.msra.mxu0 0
    %2315 = vmatprep.subr.bf16.mxu0 0
    %2316 = vmatpush1.bf16.msra.mxu0 0
    %2317 = vmatprep.subr.bf16.mxu0 0
    %2318 = vmatpush1.bf16.msra.mxu0 0
    %2319 = vmatprep.subr.bf16.mxu0 0
    %2320 = vmatpush1.bf16.msra.mxu0 0
    %2321 = vmatprep.subr.bf16.mxu0 0
    %2322 = vmatpush1.bf16.msra.mxu0 0
    %2323 = vmatprep.mubr.bf16.mxu0 0
    %2324 = vmatmul.mubr.bf16.gmra.mrb[0].mxu0 %v2286
    %v2325 = vpop.f32.mrb[0].mxu0
    %v2326 = vadd.f32 %v2248, %v2325
    %v2327 = vpop.f32.mrb[0].mxu0
    %v2328 = vpop.f32.mrb[0].mxu0
    %v2329 = vadd.f32 %v2251, %v2328
    %v2330 = vpop.f32.mrb[0].mxu0
    %2331 = vmatprep.mubr.bf16.mxu0 0
    %2332 = vmatmul.mubr.bf16.gmra.mrb[0].mxu0 %v2289
    %v2333 = vpop.f32.mrb[0].mxu0
    %v2334 = vadd.f32 %v2256, %v2333
    %v2335 = vpop.f32.mrb[0].mxu0
    %v2336 = vpop.f32.mrb[0].mxu0
    %v2337 = vpop.f32.mrb[0].mxu0
    %2338 = vdwg.mxu0
    %v2341 = vcombine.high %v2143, %v2143
    %v2342 = vcombine.high %v2146, %v2146
    %v2343 = vcombine.low %v2143, %v2341
    %v2344 = vcombine.low %v2149, %v2146
    %v2345 = vcombine.low %v2342, %v2150
    %v2349 = vpack.c.bf16 %v2344, %v2343
    %v2350 = vpack.c.bf16 %v2345, %v2345
    %s2351 = scalar_lea.vmem %s3, 64
    %v2352 = vld [vmem:[%s2351] sm:$0xf]
    %v2353 = vld [vmem:[%s2351 + $0x4] sm:$0xf]
    %v2354 = vld [vmem:[%s2351 + $0x8] sm:$0xf]
    %v2355 = vld [vmem:[%s2351 + $0xc] sm:$0xf]
    %v2356 = vld [vmem:[%s2351 + $0x10] sm:$0xf]
    %v2357 = vld [vmem:[%s2351 + $0x14] sm:$0xf]
    %v2358 = vld [vmem:[%s2351 + $0x18] sm:$0xf]
    %v2359 = vld [vmem:[%s2351 + $0x1c] sm:$0xf]
    %v2368 = vunpack.c.l.b16 %v2352
    %v2369 = vunpack.c.l.b16 %v2353
    %v2370 = vunpack.c.l.b16 %v2354
    %v2371 = vunpack.c.l.b16 %v2355
    %v2372 = vunpack.c.l.b16 %v2356
    %v2373 = vunpack.c.l.b16 %v2357
    %v2374 = vunpack.c.l.b16 %v2358
    %v2375 = vunpack.c.l.b16 %v2359
    %v2376 = vpack.c.b16 %v2369, %v2368
    %v2377 = vpack.c.b16 %v2371, %v2370
    %v2378 = vpack.c.b16 %v2373, %v2372
    %v2379 = vpack.c.b16 %v2375, %v2374
    %v2385 = vsel %vm2206, %v2349, 0
    %v2388 = vsel %vm2206, %v2350, 0
    %2390 = vmatprep.subr.bf16.mxu0 0
    %2391 = vmatpush1.bf16.msra.mxu0 %v2376
    %2392 = vmatprep.subr.bf16.mxu0 0
    %2393 = vmatpush1.bf16.msra.mxu0 %v2377
    %2394 = vmatprep.subr.bf16.mxu0 0
    %2395 = vmatpush1.bf16.msra.mxu0 %v2378
    %2396 = vmatprep.subr.bf16.mxu0 0
    %2397 = vmatpush1.bf16.msra.mxu0 %v2379
    %2398 = vmatprep.subr.bf16.mxu0 0
    %2399 = vmatpush1.bf16.msra.mxu0 0
    %2400 = vmatprep.subr.bf16.mxu0 0
    %2401 = vmatpush1.bf16.msra.mxu0 0
    %2402 = vmatprep.subr.bf16.mxu0 0
    %2403 = vmatpush1.bf16.msra.mxu0 0
    %2404 = vmatprep.subr.bf16.mxu0 0
    %2405 = vmatpush1.bf16.msra.mxu0 0
    %2406 = vmatprep.subr.bf16.mxu0 0
    %2407 = vmatpush1.bf16.msra.mxu0 0
    %2408 = vmatprep.subr.bf16.mxu0 0
    %2409 = vmatpush1.bf16.msra.mxu0 0
    %2410 = vmatprep.subr.bf16.mxu0 0
    %2411 = vmatpush1.bf16.msra.mxu0 0
    %2412 = vmatprep.subr.bf16.mxu0 0
    %2413 = vmatpush1.bf16.msra.mxu0 0
    %2414 = vmatprep.subr.bf16.mxu0 0
    %2415 = vmatpush1.bf16.msra.mxu0 0
    %2416 = vmatprep.subr.bf16.mxu0 0
    %2417 = vmatpush1.bf16.msra.mxu0 0
    %2418 = vmatprep.subr.bf16.mxu0 0
    %2419 = vmatpush1.bf16.msra.mxu0 0
    %2420 = vmatprep.subr.bf16.mxu0 0
    %2421 = vmatpush1.bf16.msra.mxu0 0
    %2422 = vmatprep.mubr.bf16.mxu0 0
    %2423 = vmatmul.mubr.bf16.gmra.mrb[0].mxu0 %v2385
    %v2424 = vpop.f32.mrb[0].mxu0
    %v2425 = vadd.f32 0.0, %v2424
    %v2426 = vpop.f32.mrb[0].mxu0
    %v2427 = vpop.f32.mrb[0].mxu0
    %v2428 = vadd.f32 0.0, %v2427
    %v2429 = vpop.f32.mrb[0].mxu0
    %2430 = vmatprep.mubr.bf16.mxu0 0
    %2431 = vmatmul.mubr.bf16.gmra.mrb[0].mxu0 %v2388
    %v2432 = vpop.f32.mrb[0].mxu0
    %v2433 = vadd.f32 0.0, %v2432
    %v2434 = vpop.f32.mrb[0].mxu0
    %v2435 = vpop.f32.mrb[0].mxu0
    %v2436 = vpop.f32.mrb[0].mxu0
    %2437 = vdwg.mxu0
    %v2438 = vadd.f32 %v2326, %v2425
    %v2439 = vadd.f32 %v2329, %v2428
    %v2440 = vadd.f32 %v2334, %v2433
    %v2441 = vld [vmem:[#allocation15 + $0x2] sm:$0x1]
    %v2442 = vlaneseq
    %v2443 = vshrl.u32 %v2442, 7
    %v2444 = vsub.s32 0, %v2443
    %v2445 = vrot.slane %v2441, %v2444
    %v2446 = vadd.f32 %v2438, %v2445
    %v2447 = vadd.f32 %v2439, %v2445
    %v2448 = vadd.f32 %v2440, %v2445
    %v2449 = vmax.f32 %v2446, 0.0
    %v2450 = vmax.f32 %v2447, 0.0
    %v2451 = vmax.f32 %v2448, 0.0
    %v2455 = vcombine.high %v2449, %v2449
    %v2456 = vcombine.high %v2450, %v2450
    %v2457 = vcombine.high %v2451, %v2451
    %v2458 = vcombine.low %v2449, %v2455
    %v2459 = vcombine.low %v2456, %v2451
    %v2460 = vrot.slane %v2458, 7
    %v2461 = vrot.slane %v2450, 7
    %v2462 = vsel %vm1707, %v2460, %v2461
    %v2463 = vrot.slane %v2459, 7
    %v2464 = vrot.slane %v2457, 7
    %v2465 = vsel %vm1707, %v2463, %v2464
    %v2468 = vsel %vm1707, 0.0, %v2460
    %v2469 = vsel %vm1707, 0.0, %v2463
    %v2470 = vrot.slane %v2458, 1
    %v2471 = vrot.slane %v2450, 1
    %v2472 = vsel %vm1718, %v2470, %v2471
    %v2473 = vrot.slane %v2459, 1
    %v2474 = vrot.slane %v2457, 1
    %v2475 = vsel %vm1718, %v2473, %v2474
    %v2478 = vsel %vm1727, %v2471, 0.0
    %v2479 = vsel %vm1727, %v2474, 0.0
    %v2482 = vcombine.high %v2468, %v2468
    %v2483 = vcombine.high %v2469, %v2469
    %v2484 = vcombine.low %v2468, %v2482
    %v2485 = vcombine.low %v2462, %v2469
    %v2486 = vcombine.low %v2483, %v2465
    %v2490 = vpack.c.bf16 %v2485, %v2484
    %v2491 = vpack.c.bf16 %v2486, %v2486
    %v2492 = vld [vmem:[#allocation13] sm:$0xff]
    %v2493 = vld [vmem:[#allocation13 + $0x8] sm:$0xff]
    %v2494 = vld [vmem:[#allocation13 + $0x10] sm:$0xff]
    %v2495 = vld [vmem:[#allocation13 + $0x18] sm:$0xff]
    %v2496 = vld [vmem:[#allocation13 + $0x20] sm:$0xff]
    %v2497 = vld [vmem:[#allocation13 + $0x28] sm:$0xff]
    %v2498 = vld [vmem:[#allocation13 + $0x30] sm:$0xff]
    %v2499 = vld [vmem:[#allocation13 + $0x38] sm:$0xff]
    %v2500 = vld [vmem:[#allocation13 + $0x40] sm:$0xff]
    %v2501 = vld [vmem:[#allocation13 + $0x48] sm:$0xff]
    %v2502 = vld [vmem:[#allocation13 + $0x50] sm:$0xff]
    %v2503 = vld [vmem:[#allocation13 + $0x58] sm:$0xff]
    %v2504 = vld [vmem:[#allocation13 + $0x60] sm:$0xff]
    %v2505 = vld [vmem:[#allocation13 + $0x68] sm:$0xff]
    %v2506 = vld [vmem:[#allocation13 + $0x70] sm:$0xff]
    %v2507 = vld [vmem:[#allocation13 + $0x78] sm:$0xff]
    %v2508 = vpack.c.bf16 %v2450, %v2449
    %v2509 = vpack.c.bf16 %v2451, %v2451
    %s2510 = scalar_lea.vmem [#allocation13], 128
    %v2511 = vld [vmem:[%s2510] sm:$0xff]
    %v2512 = vld [vmem:[%s2510 + $0x8] sm:$0xff]
    %v2513 = vld [vmem:[%s2510 + $0x10] sm:$0xff]
    %v2514 = vld [vmem:[%s2510 + $0x18] sm:$0xff]
    %v2515 = vld [vmem:[%s2510 + $0x20] sm:$0xff]
    %v2516 = vld [vmem:[%s2510 + $0x28] sm:$0xff]
    %v2517 = vld [vmem:[%s2510 + $0x30] sm:$0xff]
    %v2518 = vld [vmem:[%s2510 + $0x38] sm:$0xff]
    %v2519 = vld [vmem:[%s2510 + $0x40] sm:$0xff]
    %v2520 = vld [vmem:[%s2510 + $0x48] sm:$0xff]
    %v2521 = vld [vmem:[%s2510 + $0x50] sm:$0xff]
    %v2522 = vld [vmem:[%s2510 + $0x58] sm:$0xff]
    %v2523 = vld [vmem:[%s2510 + $0x60] sm:$0xff]
    %v2524 = vld [vmem:[%s2510 + $0x68] sm:$0xff]
    %v2525 = vld [vmem:[%s2510 + $0x70] sm:$0xff]
    %v2526 = vld [vmem:[%s2510 + $0x78] sm:$0xff]
    %v2543 = vunpack.c.l.b16 %v2511
    %v2544 = vunpack.c.h.b16 %v2511
    %v2545 = vunpack.c.l.b16 %v2512
    %v2546 = vunpack.c.h.b16 %v2512
    %v2547 = vunpack.c.l.b16 %v2513
    %v2548 = vunpack.c.h.b16 %v2513
    %v2549 = vunpack.c.l.b16 %v2514
    %v2550 = vunpack.c.h.b16 %v2514
    %v2551 = vunpack.c.l.b16 %v2515
    %v2552 = vunpack.c.h.b16 %v2515
    %v2553 = vunpack.c.l.b16 %v2516
    %v2554 = vunpack.c.h.b16 %v2516
    %v2555 = vunpack.c.l.b16 %v2517
    %v2556 = vunpack.c.h.b16 %v2517
    %v2557 = vunpack.c.l.b16 %v2518
    %v2558 = vunpack.c.h.b16 %v2518
    %v2559 = vunpack.c.l.b16 %v2519
    %v2560 = vunpack.c.h.b16 %v2519
    %v2561 = vunpack.c.l.b16 %v2520
    %v2562 = vunpack.c.h.b16 %v2520
    %v2563 = vunpack.c.l.b16 %v2521
    %v2564 = vunpack.c.h.b16 %v2521
    %v2565 = vunpack.c.l.b16 %v2522
    %v2566 = vunpack.c.h.b16 %v2522
    %v2567 = vunpack.c.l.b16 %v2523
    %v2568 = vunpack.c.h.b16 %v2523
    %v2569 = vunpack.c.l.b16 %v2524
    %v2570 = vunpack.c.h.b16 %v2524
    %v2571 = vunpack.c.l.b16 %v2525
    %v2572 = vunpack.c.h.b16 %v2525
    %v2573 = vunpack.c.l.b16 %v2526
    %v2574 = vunpack.c.h.b16 %v2526
    %v2575 = vpack.c.b16 %v2545, %v2543
    %v2576 = vpack.c.b16 %v2546, %v2544
    %v2577 = vpack.c.b16 %v2549, %v2547
    %v2578 = vpack.c.b16 %v2550, %v2548
    %v2579 = vpack.c.b16 %v2553, %v2551
    %v2580 = vpack.c.b16 %v2554, %v2552
    %v2581 = vpack.c.b16 %v2557, %v2555
    %v2582 = vpack.c.b16 %v2558, %v2556
    %v2583 = vpack.c.b16 %v2561, %v2559
    %v2584 = vpack.c.b16 %v2562, %v2560
    %v2585 = vpack.c.b16 %v2565, %v2563
    %v2586 = vpack.c.b16 %v2566, %v2564
    %v2587 = vpack.c.b16 %v2569, %v2567
    %v2588 = vpack.c.b16 %v2570, %v2568
    %v2589 = vpack.c.b16 %v2573, %v2571
    %v2590 = vpack.c.b16 %v2574, %v2572
    %2607 = vmatprep.subr.bf16.mxu0 %v2576
    %2608 = vmatpush1.bf16.msra.mxu0 %v2575
    %2609 = vmatprep.subr.bf16.mxu0 %v2578
    %2610 = vmatpush1.bf16.msra.mxu0 %v2577
    %2611 = vmatprep.subr.bf16.mxu0 %v2580
    %2612 = vmatpush1.bf16.msra.mxu0 %v2579
    %2613 = vmatprep.subr.bf16.mxu0 %v2582
    %2614 = vmatpush1.bf16.msra.mxu0 %v2581
    %2615 = vmatprep.subr.bf16.mxu0 %v2584
    %2616 = vmatpush1.bf16.msra.mxu0 %v2583
    %2617 = vmatprep.subr.bf16.mxu0 %v2586
    %2618 = vmatpush1.bf16.msra.mxu0 %v2585
    %2619 = vmatprep.subr.bf16.mxu0 %v2588
    %2620 = vmatpush1.bf16.msra.mxu0 %v2587
    %2621 = vmatprep.subr.bf16.mxu0 %v2590
    %2622 = vmatpush1.bf16.msra.mxu0 %v2589
    %2623 = vmatprep.subr.bf16.mxu0 0
    %2624 = vmatpush1.bf16.msra.mxu0 0
    %2625 = vmatprep.subr.bf16.mxu0 0
    %2626 = vmatpush1.bf16.msra.mxu0 0
    %2627 = vmatprep.subr.bf16.mxu0 0
    %2628 = vmatpush1.bf16.msra.mxu0 0
    %2629 = vmatprep.subr.bf16.mxu0 0
    %2630 = vmatpush1.bf16.msra.mxu0 0
    %2631 = vmatprep.subr.bf16.mxu0 0
    %2632 = vmatpush1.bf16.msra.mxu0 0
    %2633 = vmatprep.subr.bf16.mxu0 0
    %2634 = vmatpush1.bf16.msra.mxu0 0
    %2635 = vmatprep.subr.bf16.mxu0 0
    %2636 = vmatpush1.bf16.msra.mxu0 0
    %2637 = vmatprep.subr.bf16.mxu0 0
    %2638 = vmatpush1.bf16.msra.mxu0 0
    %2639 = vmatprep.mubr.bf16.mxu0 0
    %2640 = vmatmul.mubr.bf16.gmra.mrb[0].mxu0 %v2508
    %v2641 = vpop.f32.mrb[0].mxu0
    %v2642 = vadd.f32 0.0, %v2641
    %v2643 = vpop.f32.mrb[0].mxu0
    %v2644 = vadd.f32 0.0, %v2643
    %v2645 = vpop.f32.mrb[0].mxu0
    %v2646 = vadd.f32 0.0, %v2645
    %v2647 = vpop.f32.mrb[0].mxu0
    %v2648 = vadd.f32 0.0, %v2647
    %2649 = vmatprep.mubr.bf16.mxu0 0
    %2650 = vmatmul.mubr.bf16.gmra.mrb[0].mxu0 %v2509
    %v2651 = vpop.f32.mrb[0].mxu0
    %v2652 = vadd.f32 0.0, %v2651
    %v2653 = vpop.f32.mrb[0].mxu0
    %v2654 = vadd.f32 0.0, %v2653
    %v2655 = vpop.f32.mrb[0].mxu0
    %v2656 = vpop.f32.mrb[0].mxu0
    %2657 = vdwg.mxu0
    %v2674 = vunpack.c.l.b16 %v2492
    %v2675 = vunpack.c.h.b16 %v2492
    %v2676 = vunpack.c.l.b16 %v2493
    %v2677 = vunpack.c.h.b16 %v2493
    %v2678 = vunpack.c.l.b16 %v2494
    %v2679 = vunpack.c.h.b16 %v2494
    %v2680 = vunpack.c.l.b16 %v2495
    %v2681 = vunpack.c.h.b16 %v2495
    %v2682 = vunpack.c.l.b16 %v2496
    %v2683 = vunpack.c.h.b16 %v2496
    %v2684 = vunpack.c.l.b16 %v2497
    %v2685 = vunpack.c.h.b16 %v2497
    %v2686 = vunpack.c.l.b16 %v2498
    %v2687 = vunpack.c.h.b16 %v2498
    %v2688 = vunpack.c.l.b16 %v2499
    %v2689 = vunpack.c.h.b16 %v2499
    %v2690 = vunpack.c.l.b16 %v2500
    %v2691 = vunpack.c.h.b16 %v2500
    %v2692 = vunpack.c.l.b16 %v2501
    %v2693 = vunpack.c.h.b16 %v2501
    %v2694 = vunpack.c.l.b16 %v2502
    %v2695 = vunpack.c.h.b16 %v2502
    %v2696 = vunpack.c.l.b16 %v2503
    %v2697 = vunpack.c.h.b16 %v2503
    %v2698 = vunpack.c.l.b16 %v2504
    %v2699 = vunpack.c.h.b16 %v2504
    %v2700 = vunpack.c.l.b16 %v2505
    %v2701 = vunpack.c.h.b16 %v2505
    %v2702 = vunpack.c.l.b16 %v2506
    %v2703 = vunpack.c.h.b16 %v2506
    %v2704 = vunpack.c.l.b16 %v2507
    %v2705 = vunpack.c.h.b16 %v2507
    %v2706 = vpack.c.b16 %v2676, %v2674
    %v2707 = vpack.c.b16 %v2677, %v2675
    %v2708 = vpack.c.b16 %v2680, %v2678
    %v2709 = vpack.c.b16 %v2681, %v2679
    %v2710 = vpack.c.b16 %v2684, %v2682
    %v2711 = vpack.c.b16 %v2685, %v2683
    %v2712 = vpack.c.b16 %v2688, %v2686
    %v2713 = vpack.c.b16 %v2689, %v2687
    %v2714 = vpack.c.b16 %v2692, %v2690
    %v2715 = vpack.c.b16 %v2693, %v2691
    %v2716 = vpack.c.b16 %v2696, %v2694
    %v2717 = vpack.c.b16 %v2697, %v2695
    %v2718 = vpack.c.b16 %v2700, %v2698
    %v2719 = vpack.c.b16 %v2701, %v2699
    %v2720 = vpack.c.b16 %v2704, %v2702
    %v2721 = vpack.c.b16 %v2705, %v2703
    %2738 = vmatprep.subr.bf16.mxu0 %v2707
    %2739 = vmatpush1.bf16.msra.mxu0 %v2706
    %2740 = vmatprep.subr.bf16.mxu0 %v2709
    %2741 = vmatpush1.bf16.msra.mxu0 %v2708
    %2742 = vmatprep.subr.bf16.mxu0 %v2711
    %2743 = vmatpush1.bf16.msra.mxu0 %v2710
    %2744 = vmatprep.subr.bf16.mxu0 %v2713
    %2745 = vmatpush1.bf16.msra.mxu0 %v2712
    %2746 = vmatprep.subr.bf16.mxu0 %v2715
    %2747 = vmatpush1.bf16.msra.mxu0 %v2714
    %2748 = vmatprep.subr.bf16.mxu0 %v2717
    %2749 = vmatpush1.bf16.msra.mxu0 %v2716
    %2750 = vmatprep.subr.bf16.mxu0 %v2719
    %2751 = vmatpush1.bf16.msra.mxu0 %v2718
    %2752 = vmatprep.subr.bf16.mxu0 %v2721
    %2753 = vmatpush1.bf16.msra.mxu0 %v2720
    %2754 = vmatprep.subr.bf16.mxu0 0
    %2755 = vmatpush1.bf16.msra.mxu0 0
    %2756 = vmatprep.subr.bf16.mxu0 0
    %2757 = vmatpush1.bf16.msra.mxu0 0
    %2758 = vmatprep.subr.bf16.mxu0 0
    %2759 = vmatpush1.bf16.msra.mxu0 0
    %2760 = vmatprep.subr.bf16.mxu0 0
    %2761 = vmatpush1.bf16.msra.mxu0 0
    %2762 = vmatprep.subr.bf16.mxu0 0
    %2763 = vmatpush1.bf16.msra.mxu0 0
    %2764 = vmatprep.subr.bf16.mxu0 0
    %2765 = vmatpush1.bf16.msra.mxu0 0
    %2766 = vmatprep.subr.bf16.mxu0 0
    %2767 = vmatpush1.bf16.msra.mxu0 0
    %2768 = vmatprep.subr.bf16.mxu0 0
    %2769 = vmatpush1.bf16.msra.mxu0 0
    %2770 = vmatprep.mubr.bf16.mxu0 0
    %2771 = vmatmul.mubr.bf16.gmra.mrb[0].mxu0 %v2490
    %v2772 = vpop.f32.mrb[0].mxu0
    %v2773 = vadd.f32 %v2642, %v2772
    %v2774 = vpop.f32.mrb[0].mxu0
    %v2775 = vadd.f32 %v2644, %v2774
    %v2776 = vpop.f32.mrb[0].mxu0
    %v2777 = vadd.f32 %v2646, %v2776
    %v2778 = vpop.f32.mrb[0].mxu0
    %v2779 = vadd.f32 %v2648, %v2778
    %2780 = vmatprep.mubr.bf16.mxu0 0
    %2781 = vmatmul.mubr.bf16.gmra.mrb[0].mxu0 %v2491
    %v2782 = vpop.f32.mrb[0].mxu0
    %v2783 = vadd.f32 %v2652, %v2782
    %v2784 = vpop.f32.mrb[0].mxu0
    %v2785 = vadd.f32 %v2654, %v2784
    %v2786 = vpop.f32.mrb[0].mxu0
    %v2787 = vpop.f32.mrb[0].mxu0
    %2788 = vdwg.mxu0
    %v2791 = vcombine.high %v2472, %v2472
    %v2792 = vcombine.high %v2475, %v2475
    %v2793 = vcombine.low %v2472, %v2791
    %v2794 = vcombine.low %v2478, %v2475
    %v2795 = vcombine.low %v2792, %v2479
    %v2799 = vpack.c.bf16 %v2794, %v2793
    %v2800 = vpack.c.bf16 %v2795, %v2795
    %s2801 = scalar_lea.vmem [#allocation13], 256
    %v2802 = vld [vmem:[%s2801] sm:$0xff]
    %v2803 = vld [vmem:[%s2801 + $0x8] sm:$0xff]
    %v2804 = vld [vmem:[%s2801 + $0x10] sm:$0xff]
    %v2805 = vld [vmem:[%s2801 + $0x18] sm:$0xff]
    %v2806 = vld [vmem:[%s2801 + $0x20] sm:$0xff]
    %v2807 = vld [vmem:[%s2801 + $0x28] sm:$0xff]
    %v2808 = vld [vmem:[%s2801 + $0x30] sm:$0xff]
    %v2809 = vld [vmem:[%s2801 + $0x38] sm:$0xff]
    %v2810 = vld [vmem:[%s2801 + $0x40] sm:$0xff]
    %v2811 = vld [vmem:[%s2801 + $0x48] sm:$0xff]
    %v2812 = vld [vmem:[%s2801 + $0x50] sm:$0xff]
    %v2813 = vld [vmem:[%s2801 + $0x58] sm:$0xff]
    %v2814 = vld [vmem:[%s2801 + $0x60] sm:$0xff]
    %v2815 = vld [vmem:[%s2801 + $0x68] sm:$0xff]
    %v2816 = vld [vmem:[%s2801 + $0x70] sm:$0xff]
    %v2817 = vld [vmem:[%s2801 + $0x78] sm:$0xff]
    %v2834 = vunpack.c.l.b16 %v2802
    %v2835 = vunpack.c.h.b16 %v2802
    %v2836 = vunpack.c.l.b16 %v2803
    %v2837 = vunpack.c.h.b16 %v2803
    %v2838 = vunpack.c.l.b16 %v2804
    %v2839 = vunpack.c.h.b16 %v2804
    %v2840 = vunpack.c.l.b16 %v2805
    %v2841 = vunpack.c.h.b16 %v2805
    %v2842 = vunpack.c.l.b16 %v2806
    %v2843 = vunpack.c.h.b16 %v2806
    %v2844 = vunpack.c.l.b16 %v2807
    %v2845 = vunpack.c.h.b16 %v2807
    %v2846 = vunpack.c.l.b16 %v2808
    %v2847 = vunpack.c.h.b16 %v2808
    %v2848 = vunpack.c.l.b16 %v2809
    %v2849 = vunpack.c.h.b16 %v2809
    %v2850 = vunpack.c.l.b16 %v2810
    %v2851 = vunpack.c.h.b16 %v2810
    %v2852 = vunpack.c.l.b16 %v2811
    %v2853 = vunpack.c.h.b16 %v2811
    %v2854 = vunpack.c.l.b16 %v2812
    %v2855 = vunpack.c.h.b16 %v2812
    %v2856 = vunpack.c.l.b16 %v2813
    %v2857 = vunpack.c.h.b16 %v2813
    %v2858 = vunpack.c.l.b16 %v2814
    %v2859 = vunpack.c.h.b16 %v2814
    %v2860 = vunpack.c.l.b16 %v2815
    %v2861 = vunpack.c.h.b16 %v2815
    %v2862 = vunpack.c.l.b16 %v2816
    %v2863 = vunpack.c.h.b16 %v2816
    %v2864 = vunpack.c.l.b16 %v2817
    %v2865 = vunpack.c.h.b16 %v2817
    %v2866 = vpack.c.b16 %v2836, %v2834
    %v2867 = vpack.c.b16 %v2837, %v2835
    %v2868 = vpack.c.b16 %v2840, %v2838
    %v2869 = vpack.c.b16 %v2841, %v2839
    %v2870 = vpack.c.b16 %v2844, %v2842
    %v2871 = vpack.c.b16 %v2845, %v2843
    %v2872 = vpack.c.b16 %v2848, %v2846
    %v2873 = vpack.c.b16 %v2849, %v2847
    %v2874 = vpack.c.b16 %v2852, %v2850
    %v2875 = vpack.c.b16 %v2853, %v2851
    %v2876 = vpack.c.b16 %v2856, %v2854
    %v2877 = vpack.c.b16 %v2857, %v2855
    %v2878 = vpack.c.b16 %v2860, %v2858
    %v2879 = vpack.c.b16 %v2861, %v2859
    %v2880 = vpack.c.b16 %v2864, %v2862
    %v2881 = vpack.c.b16 %v2865, %v2863
    %2898 = vmatprep.subr.bf16.mxu0 %v2867
    %2899 = vmatpush1.bf16.msra.mxu0 %v2866
    %2900 = vmatprep.subr.bf16.mxu0 %v2869
    %2901 = vmatpush1.bf16.msra.mxu0 %v2868
    %2902 = vmatprep.subr.bf16.mxu0 %v2871
    %2903 = vmatpush1.bf16.msra.mxu0 %v2870
    %2904 = vmatprep.subr.bf16.mxu0 %v2873
    %2905 = vmatpush1.bf16.msra.mxu0 %v2872
    %2906 = vmatprep.subr.bf16.mxu0 %v2875
    %2907 = vmatpush1.bf16.msra.mxu0 %v2874
    %2908 = vmatprep.subr.bf16.mxu0 %v2877
    %2909 = vmatpush1.bf16.msra.mxu0 %v2876
    %2910 = vmatprep.subr.bf16.mxu0 %v2879
    %2911 = vmatpush1.bf16.msra.mxu0 %v2878
    %2912 = vmatprep.subr.bf16.mxu0 %v2881
    %2913 = vmatpush1.bf16.msra.mxu0 %v2880
    %2914 = vmatprep.subr.bf16.mxu0 0
    %2915 = vmatpush1.bf16.msra.mxu0 0
    %2916 = vmatprep.subr.bf16.mxu0 0
    %2917 = vmatpush1.bf16.msra.mxu0 0
    %2918 = vmatprep.subr.bf16.mxu0 0
    %2919 = vmatpush1.bf16.msra.mxu0 0
    %2920 = vmatprep.subr.bf16.mxu0 0
    %2921 = vmatpush1.bf16.msra.mxu0 0
    %2922 = vmatprep.subr.bf16.mxu0 0
    %2923 = vmatpush1.bf16.msra.mxu0 0
    %2924 = vmatprep.subr.bf16.mxu0 0
    %2925 = vmatpush1.bf16.msra.mxu0 0
    %2926 = vmatprep.subr.bf16.mxu0 0
    %2927 = vmatpush1.bf16.msra.mxu0 0
    %2928 = vmatprep.subr.bf16.mxu0 0
    %2929 = vmatpush1.bf16.msra.mxu0 0
    %2930 = vmatprep.mubr.bf16.mxu0 0
    %2931 = vmatmul.mubr.bf16.gmra.mrb[0].mxu0 %v2799
    %v2932 = vpop.f32.mrb[0].mxu0
    %v2933 = vadd.f32 0.0, %v2932
    %v2934 = vpop.f32.mrb[0].mxu0
    %v2935 = vadd.f32 0.0, %v2934
    %v2936 = vpop.f32.mrb[0].mxu0
    %v2937 = vadd.f32 0.0, %v2936
    %v2938 = vpop.f32.mrb[0].mxu0
    %v2939 = vadd.f32 0.0, %v2938
    %2940 = vmatprep.mubr.bf16.mxu0 0
    %2941 = vmatmul.mubr.bf16.gmra.mrb[0].mxu0 %v2800
    %v2942 = vpop.f32.mrb[0].mxu0
    %v2943 = vadd.f32 0.0, %v2942
    %v2944 = vpop.f32.mrb[0].mxu0
    %v2945 = vadd.f32 0.0, %v2944
    %v2946 = vpop.f32.mrb[0].mxu0
    %v2947 = vpop.f32.mrb[0].mxu0
    %2948 = vdwg.mxu0
    %v2949 = vadd.f32 %v2773, %v2933
    %v2950 = vadd.f32 %v2775, %v2935
    %v2951 = vadd.f32 %v2777, %v2937
    %v2952 = vadd.f32 %v2779, %v2939
    %v2953 = vadd.f32 %v2783, %v2943
    %v2954 = vadd.f32 %v2785, %v2945
    %s2955 = scalar_lea.vmem [#allocation15], 3
    %v2956 = vld [vmem:[%s2955] ss:$4 sm:$0x3]
    %v2958 = vlaneseq
    %v2959 = vshrl.u32 %v2958, 7
    %v2960 = vsub.s32 0, %v2959
    %v2961 = vrot.slane %v2956, %v2960
    %v2962 = vlaneseq
    %v2963 = vshrl.u32 %v2962, 7
    %v2964 = vsub.s32 1, %v2963
    %v2965 = vrot.slane %v2956, %v2964
    %v2968 = vadd.f32 %v2949, %v2961
    %v2969 = vadd.f32 %v2950, %v2965
    %v2970 = vadd.f32 %v2951, %v2961
    %v2971 = vadd.f32 %v2952, %v2965
    %v2972 = vadd.f32 %v2953, %v2961
    %v2973 = vadd.f32 %v2954, %v2965
    %v2974 = vmax.f32 %v2968, 0.0
    %v2975 = vmax.f32 %v2969, 0.0
    %v2976 = vmax.f32 %v2970, 0.0
    %v2977 = vmax.f32 %v2971, 0.0
    %v2978 = vmax.f32 %v2972, 0.0
    %v2979 = vmax.f32 %v2973, 0.0
    %v2986 = vcombine.low %v2974, %v2975
    %v2987 = vcombine.high %v2974, %v2975
    %v2988 = vcombine.low %v2976, %v2977
    %v2989 = vcombine.high %v2976, %v2977
    %v2990 = vcombine.low %v2978, %v2979
    %v2991 = vcombine.high %v2978, %v2979
    %v2992 = vcombine.low %v2986, %v2987
    %v2993 = vcombine.high %v2986, %v2987
    %v2994 = vcombine.high %v2988, %v2988
    %v2995 = vcombine.low %v2989, %v2990
    %v2996 = vcombine.high %v2989, %v2990
    %v2997 = vcombine.high %v2991, %v2991
    %v2998 = vrot.slane %v2992, 7
    %v2999 = vrot.slane %v2993, 7
    %v3000 = vrot.slane %v2988, 7
    %v3001 = vsel %vm1707, %v2998, %v3000
    %v3002 = vrot.slane %v2994, 7
    %v3003 = vsel %vm1707, %v2999, %v3002
    %v3004 = vrot.slane %v2995, 7
    %v3005 = vrot.slane %v2996, 7
    %v3006 = vrot.slane %v2991, 7
    %v3007 = vsel %vm1707, %v3004, %v3006
    %v3008 = vrot.slane %v2997, 7
    %v3009 = vsel %vm1707, %v3005, %v3008
    %v3018 = vsel %vm1707, 0.0, %v2998
    %v3019 = vsel %vm1707, 0.0, %v2999
    %v3020 = vsel %vm1707, 0.0, %v3004
    %v3021 = vsel %vm1707, 0.0, %v3005
    %vm3022 = vcmask 1044480
    %v3023 = vsel %vm3022, %v3001, 0.0
    %v3024 = vsel %vm3022, %v3003, 0.0
    %v3025 = vsel %vm3022, %v3007, 0.0
    %v3026 = vsel %vm3022, %v3009, 0.0
    %v3035 = vcombine.low %v3018, %v3019
    %v3036 = vcombine.high %v3018, %v3019
    %v3038 = vunpack.c.l.s4 1983009808
    %v3039 = vunpack.c.0.s8 %v3038
    %v3040 = vlaneseq
    %v3041 = vshrl.u32 %v3040, 7
    %v3042 = vsub.s32 %v3039, %v3041
    %v3043 = vrot.slane %v3035, %v3042
    %v3045 = vunpack.c.l.s4 1983009808
    %v3046 = vunpack.c.0.s8 %v3045
    %v3047 = vlaneseq
    %v3048 = vshrl.u32 %v3047, 7
    %v3049 = vsub.s32 %v3046, %v3048
    %v3050 = vrot.slane %v3036, %v3049
    %v3051 = vcombine.high %v3043, %v3043
    %v3052 = vcombine.high %v3050, %v3050
    %v3053 = vcombine.low %v3023, %v3024
    %v3054 = vcombine.high %v3023, %v3024
    %v3056 = vunpack.c.l.s4 1983009808
    %v3057 = vunpack.c.0.s8 %v3056
    %v3058 = vlaneseq
    %v3059 = vshrl.u32 %v3058, 7
    %v3060 = vsub.s32 %v3057, %v3059
    %v3061 = vrot.slane %v3053, %v3060
    %v3063 = vunpack.c.l.s4 1983009808
    %v3064 = vunpack.c.0.s8 %v3063
    %v3065 = vlaneseq
    %v3066 = vshrl.u32 %v3065, 7
    %v3067 = vsub.s32 %v3064, %v3066
    %v3068 = vrot.slane %v3054, %v3067
    %v3069 = vcombine.high %v3061, %v3061
    %v3070 = vcombine.low %v3020, %v3021
    %v3071 = vcombine.high %v3020, %v3021
    %v3073 = vunpack.c.l.s4 1983009808
    %v3074 = vunpack.c.0.s8 %v3073
    %v3075 = vlaneseq
    %v3076 = vshrl.u32 %v3075, 7
    %v3077 = vsub.s32 %v3074, %v3076
    %v3078 = vrot.slane %v3070, %v3077
    %v3080 = vunpack.c.l.s4 1983009808
    %v3081 = vunpack.c.0.s8 %v3080
    %v3082 = vlaneseq
    %v3083 = vshrl.u32 %v3082, 7
    %v3084 = vsub.s32 %v3081, %v3083
    %v3085 = vrot.slane %v3071, %v3084
    %v3086 = vcombine.high %v3078, %v3078
    %v3087 = vcombine.high %v3085, %v3085
    %v3088 = vcombine.low %v3025, %v3026
    %v3089 = vcombine.high %v3025, %v3026
    %v3091 = vunpack.c.l.s4 1983009808
    %v3092 = vunpack.c.0.s8 %v3091
    %v3093 = vlaneseq
    %v3094 = vshrl.u32 %v3093, 7
    %v3095 = vsub.s32 %v3092, %v3094
    %v3096 = vrot.slane %v3088, %v3095
    %v3098 = vunpack.c.l.s4 1983009808
    %v3099 = vunpack.c.0.s8 %v3098
    %v3100 = vlaneseq
    %v3101 = vshrl.u32 %v3100, 7
    %v3102 = vsub.s32 %v3099, %v3101
    %v3103 = vrot.slane %v3089, %v3102
    %v3104 = vcombine.high %v3096, %v3096
    %v3106 = vunpack.c.l.s4 1983009808
    %v3107 = vunpack.c.0.s8 %v3106
    %v3108 = vlaneseq
    %v3109 = vshrl.u32 %v3108, 7
    %v3110 = vsub.s32 %v3107, %v3109
    %v3111 = vrot.slane %v3043, %v3110
    %v3112 = vcombine.high %v3111, %v3111
    %v3114 = vunpack.c.l.s4 1983009808
    %v3115 = vunpack.c.0.s8 %v3114
    %v3116 = vlaneseq
    %v3117 = vshrl.u32 %v3116, 7
    %v3118 = vsub.s32 %v3115, %v3117
    %v3119 = vrot.slane %v3051, %v3118
    %v3120 = vcombine.high %v3119, %v3119
    %v3122 = vunpack.c.l.s4 1983009808
    %v3123 = vunpack.c.0.s8 %v3122
    %v3124 = vlaneseq
    %v3125 = vshrl.u32 %v3124, 7
    %v3126 = vsub.s32 %v3123, %v3125
    %v3127 = vrot.slane %v3050, %v3126
    %v3128 = vcombine.high %v3127, %v3127
    %v3130 = vunpack.c.l.s4 1983009808
    %v3131 = vunpack.c.0.s8 %v3130
    %v3132 = vlaneseq
    %v3133 = vshrl.u32 %v3132, 7
    %v3134 = vsub.s32 %v3131, %v3133
    %v3135 = vrot.slane %v3052, %v3134
    %v3136 = vcombine.high %v3135, %v3135
    %v3138 = vunpack.c.l.s4 1983009808
    %v3139 = vunpack.c.0.s8 %v3138
    %v3140 = vlaneseq
    %v3141 = vshrl.u32 %v3140, 7
    %v3142 = vsub.s32 %v3139, %v3141
    %v3143 = vrot.slane %v3061, %v3142
    %v3144 = vcombine.high %v3143, %v3143
    %v3146 = vunpack.c.l.s4 1983009808
    %v3147 = vunpack.c.0.s8 %v3146
    %v3148 = vlaneseq
    %v3149 = vshrl.u32 %v3148, 7
    %v3150 = vsub.s32 %v3147, %v3149
    %v3151 = vrot.slane %v3069, %v3150
    %v3152 = vcombine.high %v3151, %v3151
    %v3154 = vunpack.c.l.s4 1983009808
    %v3155 = vunpack.c.0.s8 %v3154
    %v3156 = vlaneseq
    %v3157 = vshrl.u32 %v3156, 7
    %v3158 = vsub.s32 %v3155, %v3157
    %v3159 = vrot.slane %v3068, %v3158
    %v3160 = vcombine.high %v3159, %v3159
    %v3162 = vunpack.c.l.s4 1983009808
    %v3163 = vunpack.c.0.s8 %v3162
    %v3164 = vlaneseq
    %v3165 = vshrl.u32 %v3164, 7
    %v3166 = vsub.s32 %v3163, %v3165
    %v3167 = vrot.slane %v3078, %v3166
    %v3168 = vcombine.high %v3167, %v3167
    %v3170 = vunpack.c.l.s4 1983009808
    %v3171 = vunpack.c.0.s8 %v3170
    %v3172 = vlaneseq
    %v3173 = vshrl.u32 %v3172, 7
    %v3174 = vsub.s32 %v3171, %v3173
    %v3175 = vrot.slane %v3086, %v3174
    %v3176 = vcombine.high %v3175, %v3175
    %v3178 = vunpack.c.l.s4 1983009808
    %v3179 = vunpack.c.0.s8 %v3178
    %v3180 = vlaneseq
    %v3181 = vshrl.u32 %v3180, 7
    %v3182 = vsub.s32 %v3179, %v3181
    %v3183 = vrot.slane %v3085, %v3182
    %v3184 = vcombine.high %v3183, %v3183
    %v3186 = vunpack.c.l.s4 1983009808
    %v3187 = vunpack.c.0.s8 %v3186
    %v3188 = vlaneseq
    %v3189 = vshrl.u32 %v3188, 7
    %v3190 = vsub.s32 %v3187, %v3189
    %v3191 = vrot.slane %v3087, %v3190
    %v3192 = vcombine.high %v3191, %v3191
    %v3194 = vunpack.c.l.s4 1983009808
    %v3195 = vunpack.c.0.s8 %v3194
    %v3196 = vlaneseq
    %v3197 = vshrl.u32 %v3196, 7
    %v3198 = vsub.s32 %v3195, %v3197
    %v3199 = vrot.slane %v3096, %v3198
    %v3200 = vcombine.high %v3199, %v3199
    %v3202 = vunpack.c.l.s4 1983009808
    %v3203 = vunpack.c.0.s8 %v3202
    %v3204 = vlaneseq
    %v3205 = vshrl.u32 %v3204, 7
    %v3206 = vsub.s32 %v3203, %v3205
    %v3207 = vrot.slane %v3104, %v3206
    %v3208 = vcombine.high %v3207, %v3207
    %v3210 = vunpack.c.l.s4 1983009808
    %v3211 = vunpack.c.0.s8 %v3210
    %v3212 = vlaneseq
    %v3213 = vshrl.u32 %v3212, 7
    %v3214 = vsub.s32 %v3211, %v3213
    %v3215 = vrot.slane %v3103, %v3214
    %v3216 = vcombine.high %v3215, %v3215
    %vm3245 = vcmask 1041408
    %v3246 = vsel %vm3245, %v3111, -inf
    %v3247 = vrot.slane %v3246, 4
    %v3248 = vmax.f32 %v3246, %v3247
    %v3249 = vrot.slane %v3248, 2
    %v3250 = vmax.f32 %v3248, %v3249
    %v3251 = vrot.slane %v3250, 1
    %v3252 = vmax.f32 %v3250, %v3251
    %v3253 = vsel %vm3245, %v3112, -inf
    %v3254 = vrot.slane %v3253, 4
    %v3255 = vmax.f32 %v3253, %v3254
    %v3256 = vrot.slane %v3255, 2
    %v3257 = vmax.f32 %v3255, %v3256
    %v3258 = vrot.slane %v3257, 1
    %v3259 = vmax.f32 %v3257, %v3258
    %v3260 = vsel %vm3245, %v3119, -inf
    %v3261 = vrot.slane %v3260, 4
    %v3262 = vmax.f32 %v3260, %v3261
    %v3263 = vrot.slane %v3262, 2
    %v3264 = vmax.f32 %v3262, %v3263
    %v3265 = vrot.slane %v3264, 1
    %v3266 = vmax.f32 %v3264, %v3265
    %v3267 = vsel %vm3245, %v3120, -inf
    %v3268 = vrot.slane %v3267, 4
    %v3269 = vmax.f32 %v3267, %v3268
    %v3270 = vrot.slane %v3269, 2
    %v3271 = vmax.f32 %v3269, %v3270
    %v3272 = vrot.slane %v3271, 1
    %v3273 = vmax.f32 %v3271, %v3272
    %v3274 = vsel %vm3245, %v3127, -inf
    %v3275 = vrot.slane %v3274, 4
    %v3276 = vmax.f32 %v3274, %v3275
    %v3277 = vrot.slane %v3276, 2
    %v3278 = vmax.f32 %v3276, %v3277
    %v3279 = vrot.slane %v3278, 1
    %v3280 = vmax.f32 %v3278, %v3279
    %v3281 = vsel %vm3245, %v3128, -inf
    %v3282 = vrot.slane %v3281, 4
    %v3283 = vmax.f32 %v3281, %v3282
    %v3284 = vrot.slane %v3283, 2
    %v3285 = vmax.f32 %v3283, %v3284
    %v3286 = vrot.slane %v3285, 1
    %v3287 = vmax.f32 %v3285, %v3286
    %v3288 = vsel %vm3245, %v3135, -inf
    %v3289 = vrot.slane %v3288, 4
    %v3290 = vmax.f32 %v3288, %v3289
    %v3291 = vrot.slane %v3290, 2
    %v3292 = vmax.f32 %v3290, %v3291
    %v3293 = vrot.slane %v3292, 1
    %v3294 = vmax.f32 %v3292, %v3293
    %v3295 = vsel %vm3245, %v3136, -inf
    %v3296 = vrot.slane %v3295, 4
    %v3297 = vmax.f32 %v3295, %v3296
    %v3298 = vrot.slane %v3297, 2
    %v3299 = vmax.f32 %v3297, %v3298
    %v3300 = vrot.slane %v3299, 1
    %v3301 = vmax.f32 %v3299, %v3300
    %v3302 = vsel %vm3245, %v3143, -inf
    %v3303 = vrot.slane %v3302, 4
    %v3304 = vmax.f32 %v3302, %v3303
    %v3305 = vrot.slane %v3304, 2
    %v3306 = vmax.f32 %v3304, %v3305
    %v3307 = vrot.slane %v3306, 1
    %v3308 = vmax.f32 %v3306, %v3307
    %v3309 = vsel %vm3245, %v3144, -inf
    %v3310 = vrot.slane %v3309, 4
    %v3311 = vmax.f32 %v3309, %v3310
    %v3312 = vrot.slane %v3311, 2
    %v3313 = vmax.f32 %v3311, %v3312
    %v3314 = vrot.slane %v3313, 1
    %v3315 = vmax.f32 %v3313, %v3314
    %v3316 = vsel %vm3245, %v3151, -inf
    %v3317 = vrot.slane %v3316, 4
    %v3318 = vmax.f32 %v3316, %v3317
    %v3319 = vrot.slane %v3318, 2
    %v3320 = vmax.f32 %v3318, %v3319
    %v3321 = vrot.slane %v3320, 1
    %v3322 = vmax.f32 %v3320, %v3321
    %v3323 = vsel %vm3245, %v3152, -inf
    %v3324 = vrot.slane %v3323, 4
    %v3325 = vmax.f32 %v3323, %v3324
    %v3326 = vrot.slane %v3325, 2
    %v3327 = vmax.f32 %v3325, %v3326
    %v3328 = vrot.slane %v3327, 1
    %v3329 = vmax.f32 %v3327, %v3328
    %v3330 = vsel %vm3245, %v3159, -inf
    %v3331 = vrot.slane %v3330, 4
    %v3332 = vmax.f32 %v3330, %v3331
    %v3333 = vrot.slane %v3332, 2
    %v3334 = vmax.f32 %v3332, %v3333
    %v3335 = vrot.slane %v3334, 1
    %v3336 = vmax.f32 %v3334, %v3335
    %v3337 = vsel %vm3245, %v3160, -inf
    %v3338 = vrot.slane %v3337, 4
    %v3339 = vmax.f32 %v3337, %v3338
    %v3340 = vrot.slane %v3339, 2
    %v3341 = vmax.f32 %v3339, %v3340
    %v3342 = vrot.slane %v3341, 1
    %v3343 = vmax.f32 %v3341, %v3342
    %v3344 = vsel %vm3245, %v3167, -inf
    %v3345 = vrot.slane %v3344, 4
    %v3346 = vmax.f32 %v3344, %v3345
    %v3347 = vrot.slane %v3346, 2
    %v3348 = vmax.f32 %v3346, %v3347
    %v3349 = vrot.slane %v3348, 1
    %v3350 = vmax.f32 %v3348, %v3349
    %v3351 = vsel %vm3245, %v3168, -inf
    %v3352 = vrot.slane %v3351, 4
    %v3353 = vmax.f32 %v3351, %v3352
    %v3354 = vrot.slane %v3353, 2
    %v3355 = vmax.f32 %v3353, %v3354
    %v3356 = vrot.slane %v3355, 1
    %v3357 = vmax.f32 %v3355, %v3356
    %v3358 = vsel %vm3245, %v3175, -inf
    %v3359 = vrot.slane %v3358, 4
    %v3360 = vmax.f32 %v3358, %v3359
    %v3361 = vrot.slane %v3360, 2
    %v3362 = vmax.f32 %v3360, %v3361
    %v3363 = vrot.slane %v3362, 1
    %v3364 = vmax.f32 %v3362, %v3363
    %v3365 = vsel %vm3245, %v3176, -inf
    %v3366 = vrot.slane %v3365, 4
    %v3367 = vmax.f32 %v3365, %v3366
    %v3368 = vrot.slane %v3367, 2
    %v3369 = vmax.f32 %v3367, %v3368
    %v3370 = vrot.slane %v3369, 1
    %v3371 = vmax.f32 %v3369, %v3370
    %v3372 = vsel %vm3245, %v3183, -inf
    %v3373 = vrot.slane %v3372, 4
    %v3374 = vmax.f32 %v3372, %v3373
    %v3375 = vrot.slane %v3374, 2
    %v3376 = vmax.f32 %v3374, %v3375
    %v3377 = vrot.slane %v3376, 1
    %v3378 = vmax.f32 %v3376, %v3377
    %v3379 = vsel %vm3245, %v3184, -inf
    %v3380 = vrot.slane %v3379, 4
    %v3381 = vmax.f32 %v3379, %v3380
    %v3382 = vrot.slane %v3381, 2
    %v3383 = vmax.f32 %v3381, %v3382
    %v3384 = vrot.slane %v3383, 1
    %v3385 = vmax.f32 %v3383, %v3384
    %v3386 = vsel %vm3245, %v3191, -inf
    %v3387 = vrot.slane %v3386, 4
    %v3388 = vmax.f32 %v3386, %v3387
    %v3389 = vrot.slane %v3388, 2
    %v3390 = vmax.f32 %v3388, %v3389
    %v3391 = vrot.slane %v3390, 1
    %v3392 = vmax.f32 %v3390, %v3391
    %v3393 = vsel %vm3245, %v3192, -inf
    %v3394 = vrot.slane %v3393, 4
    %v3395 = vmax.f32 %v3393, %v3394
    %v3396 = vrot.slane %v3395, 2
    %v3397 = vmax.f32 %v3395, %v3396
    %v3398 = vrot.slane %v3397, 1
    %v3399 = vmax.f32 %v3397, %v3398
    %v3400 = vsel %vm3245, %v3199, -inf
    %v3401 = vrot.slane %v3400, 4
    %v3402 = vmax.f32 %v3400, %v3401
    %v3403 = vrot.slane %v3402, 2
    %v3404 = vmax.f32 %v3402, %v3403
    %v3405 = vrot.slane %v3404, 1
    %v3406 = vmax.f32 %v3404, %v3405
    %v3407 = vsel %vm3245, %v3200, -inf
    %v3408 = vrot.slane %v3407, 4
    %v3409 = vmax.f32 %v3407, %v3408
    %v3410 = vrot.slane %v3409, 2
    %v3411 = vmax.f32 %v3409, %v3410
    %v3412 = vrot.slane %v3411, 1
    %v3413 = vmax.f32 %v3411, %v3412
    %v3414 = vsel %vm3245, %v3207, -inf
    %v3415 = vrot.slane %v3414, 4
    %v3416 = vmax.f32 %v3414, %v3415
    %v3417 = vrot.slane %v3416, 2
    %v3418 = vmax.f32 %v3416, %v3417
    %v3419 = vrot.slane %v3418, 1
    %v3420 = vmax.f32 %v3418, %v3419
    %v3421 = vsel %vm3245, %v3208, -inf
    %v3422 = vrot.slane %v3421, 4
    %v3423 = vmax.f32 %v3421, %v3422
    %v3424 = vrot.slane %v3423, 2
    %v3425 = vmax.f32 %v3423, %v3424
    %v3426 = vrot.slane %v3425, 1
    %v3427 = vmax.f32 %v3425, %v3426
    %v3428 = vsel %vm3245, %v3215, -inf
    %v3429 = vrot.slane %v3428, 4
    %v3430 = vmax.f32 %v3428, %v3429
    %v3431 = vrot.slane %v3430, 2
    %v3432 = vmax.f32 %v3430, %v3431
    %v3433 = vrot.slane %v3432, 1
    %v3434 = vmax.f32 %v3432, %v3433
    %v3435 = vsel %vm3245, %v3216, -inf
    %v3436 = vrot.slane %v3435, 4
    %v3437 = vmax.f32 %v3435, %v3436
    %v3438 = vrot.slane %v3437, 2
    %v3439 = vmax.f32 %v3437, %v3438
    %v3440 = vrot.slane %v3439, 1
    %v3441 = vmax.f32 %v3439, %v3440
    %s3442 = smul.u32 2, 7
    %s3443 = smul.u32 %s3442, 32
    %s3444 = smul.u32 %s3443, 7
    %s3445 = sshll.u32 %s3444, 4
    %3446 = dma.done [#allocation9], %s3445
    %v3447 = vpack.c.bf16 %v3252, %v3252
    %v3448 = vpack.c.bf16 %v3259, %v3259
    %v3449 = vpack.c.bf16 %v3350, %v3350
    %v3450 = vpack.c.bf16 %v3357, %v3357
    %v3451 = vld [vmem:[#allocation2] sm:$0xff]
    %v3452 = vld [vmem:[#allocation2 + $0x8] sm:$0xff]
    %v3453 = vld [vmem:[#allocation2 + $0x10] sm:$0xff]
    %v3454 = vld [vmem:[#allocation2 + $0x18] sm:$0xff]
    %v3455 = vld [vmem:[#allocation2 + $0x20] sm:$0xff]
    %v3456 = vld [vmem:[#allocation2 + $0x28] sm:$0xff]
    %v3457 = vld [vmem:[#allocation2 + $0x30] sm:$0xff]
    %v3458 = vld [vmem:[#allocation2 + $0x38] sm:$0xff]
    %v3459 = vld [vmem:[#allocation2 + $0x40] sm:$0xff]
    %v3460 = vld [vmem:[#allocation2 + $0x48] sm:$0xff]
    %v3461 = vld [vmem:[#allocation2 + $0x50] sm:$0xff]
    %v3462 = vld [vmem:[#allocation2 + $0x58] sm:$0xff]
    %v3463 = vld [vmem:[#allocation2 + $0x60] sm:$0xff]
    %v3464 = vld [vmem:[#allocation2 + $0x68] sm:$0xff]
    %v3465 = vld [vmem:[#allocation2 + $0x70] sm:$0xff]
    %v3466 = vld [vmem:[#allocation2 + $0x78] sm:$0xff]
    %v3467 = vld [vmem:[#allocation2 + $0x80] sm:$0xff]
    %v3468 = vld [vmem:[#allocation2 + $0x88] sm:$0xff]
    %v3469 = vld [vmem:[#allocation2 + $0x90] sm:$0xff]
    %v3470 = vld [vmem:[#allocation2 + $0x98] sm:$0xff]
    %v3471 = vld [vmem:[#allocation2 + $0xa0] sm:$0xff]
    %v3472 = vld [vmem:[#allocation2 + $0xa8] sm:$0xff]
    %v3473 = vld [vmem:[#allocation2 + $0xb0] sm:$0xff]
    %v3474 = vld [vmem:[#allocation2 + $0xb8] sm:$0xff]
    %v3475 = vld [vmem:[#allocation2 + $0xc0] sm:$0xff]
    %v3476 = vld [vmem:[#allocation2 + $0xc8] sm:$0xff]
    %v3477 = vld [vmem:[#allocation2 + $0xd0] sm:$0xff]
    %v3478 = vld [vmem:[#allocation2 + $0xd8] sm:$0xff]
    %v3479 = vld [vmem:[#allocation2 + $0xe0] sm:$0xff]
    %v3480 = vld [vmem:[#allocation2 + $0xe8] sm:$0xff]
    %v3481 = vld [vmem:[#allocation2 + $0xf0] sm:$0xff]
    %v3482 = vld [vmem:[#allocation2 + $0xf8] sm:$0xff]
    %v3483 = vld [vmem:[#allocation2 + $0x100] sm:$0xff]
    %v3484 = vld [vmem:[#allocation2 + $0x108] sm:$0xff]
    %v3485 = vld [vmem:[#allocation2 + $0x110] sm:$0xff]
    %v3486 = vld [vmem:[#allocation2 + $0x118] sm:$0xff]
    %v3487 = vld [vmem:[#allocation2 + $0x120] sm:$0xff]
    %v3488 = vld [vmem:[#allocation2 + $0x128] sm:$0xff]
    %v3489 = vld [vmem:[#allocation2 + $0x130] sm:$0xff]
    %v3490 = vld [vmem:[#allocation2 + $0x138] sm:$0xff]
    %v3491 = vld [vmem:[#allocation2 + $0x140] sm:$0xff]
    %v3492 = vld [vmem:[#allocation2 + $0x148] sm:$0xff]
    %v3493 = vld [vmem:[#allocation2 + $0x150] sm:$0xff]
    %v3494 = vld [vmem:[#allocation2 + $0x158] sm:$0xff]
    %v3495 = vld [vmem:[#allocation2 + $0x160] sm:$0xff]
    %v3496 = vld [vmem:[#allocation2 + $0x168] sm:$0xff]
    %v3497 = vld [vmem:[#allocation2 + $0x170] sm:$0xff]
    %v3498 = vld [vmem:[#allocation2 + $0x178] sm:$0xff]
    %v3499 = vld [vmem:[#allocation2 + $0x180] sm:$0xff]
    %v3500 = vld [vmem:[#allocation2 + $0x188] sm:$0xff]
    %v3501 = vld [vmem:[#allocation2 + $0x190] sm:$0xff]
    %v3502 = vld [vmem:[#allocation2 + $0x198] sm:$0xff]
    %v3503 = vld [vmem:[#allocation2 + $0x1a0] sm:$0xff]
    %v3504 = vld [vmem:[#allocation2 + $0x1a8] sm:$0xff]
    %v3505 = vld [vmem:[#allocation2 + $0x1b0] sm:$0xff]
    %v3506 = vld [vmem:[#allocation2 + $0x1b8] sm:$0xff]
    %v3507 = vunpack.c.l.s8.bf16 %v3451
    %v3508 = vunpack.c.l.s8.bf16 %v3452
    %v3509 = vunpack.c.l.s8.bf16 %v3453
    %v3510 = vunpack.c.l.s8.bf16 %v3454
    %v3511 = vunpack.c.l.s8.bf16 %v3455
    %v3512 = vunpack.c.l.s8.bf16 %v3456
    %v3513 = vunpack.c.l.s8.bf16 %v3457
    %v3514 = vunpack.c.h.s8.bf16 %v3451
    %v3515 = vunpack.c.h.s8.bf16 %v3452
    %v3516 = vunpack.c.h.s8.bf16 %v3453
    %v3517 = vunpack.c.h.s8.bf16 %v3454
    %v3518 = vunpack.c.h.s8.bf16 %v3455
    %v3519 = vunpack.c.h.s8.bf16 %v3456
    %v3520 = vunpack.c.h.s8.bf16 %v3457
    %v3521 = vunpack.c.l.s8.bf16 %v3458
    %v3522 = vunpack.c.l.s8.bf16 %v3459
    %v3523 = vunpack.c.l.s8.bf16 %v3460
    %v3524 = vunpack.c.l.s8.bf16 %v3461
    %v3525 = vunpack.c.l.s8.bf16 %v3462
    %v3526 = vunpack.c.l.s8.bf16 %v3463
    %v3527 = vunpack.c.l.s8.bf16 %v3464
    %v3528 = vunpack.c.h.s8.bf16 %v3458
    %v3529 = vunpack.c.h.s8.bf16 %v3459
    %v3530 = vunpack.c.h.s8.bf16 %v3460
    %v3531 = vunpack.c.h.s8.bf16 %v3461
    %v3532 = vunpack.c.h.s8.bf16 %v3462
    %v3533 = vunpack.c.h.s8.bf16 %v3463
    %v3534 = vunpack.c.h.s8.bf16 %v3464
    %v3535 = vunpack.c.l.s8.bf16 %v3465
    %v3536 = vunpack.c.l.s8.bf16 %v3466
    %v3537 = vunpack.c.l.s8.bf16 %v3467
    %v3538 = vunpack.c.l.s8.bf16 %v3468
    %v3539 = vunpack.c.l.s8.bf16 %v3469
    %v3540 = vunpack.c.l.s8.bf16 %v3470
    %v3541 = vunpack.c.l.s8.bf16 %v3471
    %v3542 = vunpack.c.h.s8.bf16 %v3465
    %v3543 = vunpack.c.h.s8.bf16 %v3466
    %v3544 = vunpack.c.h.s8.bf16 %v3467
    %v3545 = vunpack.c.h.s8.bf16 %v3468
    %v3546 = vunpack.c.h.s8.bf16 %v3469
    %v3547 = vunpack.c.h.s8.bf16 %v3470
    %v3548 = vunpack.c.h.s8.bf16 %v3471
    %v3549 = vunpack.c.l.s8.bf16 %v3472
    %v3550 = vunpack.c.l.s8.bf16 %v3473
    %v3551 = vunpack.c.l.s8.bf16 %v3474
    %v3552 = vunpack.c.l.s8.bf16 %v3475
    %v3553 = vunpack.c.l.s8.bf16 %v3476
    %v3554 = vunpack.c.l.s8.bf16 %v3477
    %v3555 = vunpack.c.l.s8.bf16 %v3478
    %v3556 = vunpack.c.h.s8.bf16 %v3472
    %v3557 = vunpack.c.h.s8.bf16 %v3473
    %v3558 = vunpack.c.h.s8.bf16 %v3474
    %v3559 = vunpack.c.h.s8.bf16 %v3475
    %v3560 = vunpack.c.h.s8.bf16 %v3476
    %v3561 = vunpack.c.h.s8.bf16 %v3477
    %v3562 = vunpack.c.h.s8.bf16 %v3478
    %v3563 = vunpack.c.l.s8.bf16 %v3479
    %v3564 = vunpack.c.l.s8.bf16 %v3480
    %v3565 = vunpack.c.l.s8.bf16 %v3481
    %v3566 = vunpack.c.l.s8.bf16 %v3482
    %v3567 = vunpack.c.l.s8.bf16 %v3483
    %v3568 = vunpack.c.l.s8.bf16 %v3484
    %v3569 = vunpack.c.l.s8.bf16 %v3485
    %v3570 = vunpack.c.h.s8.bf16 %v3479
    %v3571 = vunpack.c.h.s8.bf16 %v3480
    %v3572 = vunpack.c.h.s8.bf16 %v3481
    %v3573 = vunpack.c.h.s8.bf16 %v3482
    %v3574 = vunpack.c.h.s8.bf16 %v3483
    %v3575 = vunpack.c.h.s8.bf16 %v3484
    %v3576 = vunpack.c.h.s8.bf16 %v3485
    %v3577 = vunpack.c.l.s8.bf16 %v3486
    %v3578 = vunpack.c.l.s8.bf16 %v3487
    %v3579 = vunpack.c.l.s8.bf16 %v3488
    %v3580 = vunpack.c.l.s8.bf16 %v3489
    %v3581 = vunpack.c.l.s8.bf16 %v3490
    %v3582 = vunpack.c.l.s8.bf16 %v3491
    %v3583 = vunpack.c.l.s8.bf16 %v3492
    %v3584 = vunpack.c.h.s8.bf16 %v3486
    %v3585 = vunpack.c.h.s8.bf16 %v3487
    %v3586 = vunpack.c.h.s8.bf16 %v3488
    %v3587 = vunpack.c.h.s8.bf16 %v3489
    %v3588 = vunpack.c.h.s8.bf16 %v3490
    %v3589 = vunpack.c.h.s8.bf16 %v3491
    %v3590 = vunpack.c.h.s8.bf16 %v3492
    %v3591 = vunpack.c.l.s8.bf16 %v3493
    %v3592 = vunpack.c.l.s8.bf16 %v3494
    %v3593 = vunpack.c.l.s8.bf16 %v3495
    %v3594 = vunpack.c.l.s8.bf16 %v3496
    %v3595 = vunpack.c.l.s8.bf16 %v3497
    %v3596 = vunpack.c.l.s8.bf16 %v3498
    %v3597 = vunpack.c.l.s8.bf16 %v3499
    %v3598 = vunpack.c.h.s8.bf16 %v3493
    %v3599 = vunpack.c.h.s8.bf16 %v3494
    %v3600 = vunpack.c.h.s8.bf16 %v3495
    %v3601 = vunpack.c.h.s8.bf16 %v3496
    %v3602 = vunpack.c.h.s8.bf16 %v3497
    %v3603 = vunpack.c.h.s8.bf16 %v3498
    %v3604 = vunpack.c.h.s8.bf16 %v3499
    %v3605 = vunpack.c.l.s8.bf16 %v3500
    %v3606 = vunpack.c.l.s8.bf16 %v3501
    %v3607 = vunpack.c.l.s8.bf16 %v3502
    %v3608 = vunpack.c.l.s8.bf16 %v3503
    %v3609 = vunpack.c.l.s8.bf16 %v3504
    %v3610 = vunpack.c.l.s8.bf16 %v3505
    %v3611 = vunpack.c.l.s8.bf16 %v3506
    %v3612 = vunpack.c.h.s8.bf16 %v3500
    %v3613 = vunpack.c.h.s8.bf16 %v3501
    %v3614 = vunpack.c.h.s8.bf16 %v3502
    %v3615 = vunpack.c.h.s8.bf16 %v3503
    %v3616 = vunpack.c.h.s8.bf16 %v3504
    %v3617 = vunpack.c.h.s8.bf16 %v3505
    %v3618 = vunpack.c.h.s8.bf16 %v3506
    %v3619 = vpack.c.bf16 %v3266, %v3266
    %v3620 = vpack.c.bf16 %v3273, %v3273
    %v3621 = vpack.c.bf16 %v3364, %v3364
    %v3622 = vpack.c.bf16 %v3371, %v3371
    %s3623 = scalar_lea.vmem [#allocation2], 448
    %v3624 = vld [vmem:[%s3623] sm:$0xff]
    %v3625 = vld [vmem:[%s3623 + $0x8] sm:$0xff]
    %v3626 = vld [vmem:[%s3623 + $0x10] sm:$0xff]
    %v3627 = vld [vmem:[%s3623 + $0x18] sm:$0xff]
    %v3628 = vld [vmem:[%s3623 + $0x20] sm:$0xff]
    %v3629 = vld [vmem:[%s3623 + $0x28] sm:$0xff]
    %v3630 = vld [vmem:[%s3623 + $0x30] sm:$0xff]
    %v3631 = vld [vmem:[%s3623 + $0x38] sm:$0xff]
    %v3632 = vld [vmem:[%s3623 + $0x40] sm:$0xff]
    %v3633 = vld [vmem:[%s3623 + $0x48] sm:$0xff]
    %v3634 = vld [vmem:[%s3623 + $0x50] sm:$0xff]
    %v3635 = vld [vmem:[%s3623 + $0x58] sm:$0xff]
    %v3636 = vld [vmem:[%s3623 + $0x60] sm:$0xff]
    %v3637 = vld [vmem:[%s3623 + $0x68] sm:$0xff]
    %v3638 = vld [vmem:[%s3623 + $0x70] sm:$0xff]
    %v3639 = vld [vmem:[%s3623 + $0x78] sm:$0xff]
    %v3640 = vld [vmem:[%s3623 + $0x80] sm:$0xff]
    %v3641 = vld [vmem:[%s3623 + $0x88] sm:$0xff]
    %v3642 = vld [vmem:[%s3623 + $0x90] sm:$0xff]
    %v3643 = vld [vmem:[%s3623 + $0x98] sm:$0xff]
    %v3644 = vld [vmem:[%s3623 + $0xa0] sm:$0xff]
    %v3645 = vld [vmem:[%s3623 + $0xa8] sm:$0xff]
    %v3646 = vld [vmem:[%s3623 + $0xb0] sm:$0xff]
    %v3647 = vld [vmem:[%s3623 + $0xb8] sm:$0xff]
    %v3648 = vld [vmem:[%s3623 + $0xc0] sm:$0xff]
    %v3649 = vld [vmem:[%s3623 + $0xc8] sm:$0xff]
    %v3650 = vld [vmem:[%s3623 + $0xd0] sm:$0xff]
    %v3651 = vld [vmem:[%s3623 + $0xd8] sm:$0xff]
    %v3652 = vld [vmem:[%s3623 + $0xe0] sm:$0xff]
    %v3653 = vld [vmem:[%s3623 + $0xe8] sm:$0xff]
    %v3654 = vld [vmem:[%s3623 + $0xf0] sm:$0xff]
    %v3655 = vld [vmem:[%s3623 + $0xf8] sm:$0xff]
    %v3656 = vld [vmem:[%s3623 + $0x100] sm:$0xff]
    %v3657 = vld [vmem:[%s3623 + $0x108] sm:$0xff]
    %v3658 = vld [vmem:[%s3623 + $0x110] sm:$0xff]
    %v3659 = vld [vmem:[%s3623 + $0x118] sm:$0xff]
    %v3660 = vld [vmem:[%s3623 + $0x120] sm:$0xff]
    %v3661 = vld [vmem:[%s3623 + $0x128] sm:$0xff]
    %v3662 = vld [vmem:[%s3623 + $0x130] sm:$0xff]
    %v3663 = vld [vmem:[%s3623 + $0x138] sm:$0xff]
    %v3664 = vld [vmem:[%s3623 + $0x140] sm:$0xff]
    %v3665 = vld [vmem:[%s3623 + $0x148] sm:$0xff]
    %v3666 = vld [vmem:[%s3623 + $0x150] sm:$0xff]
    %v3667 = vld [vmem:[%s3623 + $0x158] sm:$0xff]
    %v3668 = vld [vmem:[%s3623 + $0x160] sm:$0xff]
    %v3669 = vld [vmem:[%s3623 + $0x168] sm:$0xff]
    %v3670 = vld [vmem:[%s3623 + $0x170] sm:$0xff]
    %v3671 = vld [vmem:[%s3623 + $0x178] sm:$0xff]
    %v3672 = vld [vmem:[%s3623 + $0x180] sm:$0xff]
    %v3673 = vld [vmem:[%s3623 + $0x188] sm:$0xff]
    %v3674 = vld [vmem:[%s3623 + $0x190] sm:$0xff]
    %v3675 = vld [vmem:[%s3623 + $0x198] sm:$0xff]
    %v3676 = vld [vmem:[%s3623 + $0x1a0] sm:$0xff]
    %v3677 = vld [vmem:[%s3623 + $0x1a8] sm:$0xff]
    %v3678 = vld [vmem:[%s3623 + $0x1b0] sm:$0xff]
    %v3679 = vld [vmem:[%s3623 + $0x1b8] sm:$0xff]
    %v3680 = vunpack.c.l.s8.bf16 %v3624
    %v3681 = vunpack.c.l.s8.bf16 %v3625
    %v3682 = vunpack.c.l.s8.bf16 %v3626
    %v3683 = vunpack.c.l.s8.bf16 %v3627
    %v3684 = vunpack.c.l.s8.bf16 %v3628
    %v3685 = vunpack.c.l.s8.bf16 %v3629
    %v3686 = vunpack.c.l.s8.bf16 %v3630
    %v3687 = vunpack.c.h.s8.bf16 %v3624
    %v3688 = vunpack.c.h.s8.bf16 %v3625
    %v3689 = vunpack.c.h.s8.bf16 %v3626
    %v3690 = vunpack.c.h.s8.bf16 %v3627
    %v3691 = vunpack.c.h.s8.bf16 %v3628
    %v3692 = vunpack.c.h.s8.bf16 %v3629
    %v3693 = vunpack.c.h.s8.bf16 %v3630
    %v3694 = vunpack.c.l.s8.bf16 %v3631
    %v3695 = vunpack.c.l.s8.bf16 %v3632
    %v3696 = vunpack.c.l.s8.bf16 %v3633
    %v3697 = vunpack.c.l.s8.bf16 %v3634
    %v3698 = vunpack.c.l.s8.bf16 %v3635
    %v3699 = vunpack.c.l.s8.bf16 %v3636
    %v3700 = vunpack.c.l.s8.bf16 %v3637
    %v3701 = vunpack.c.h.s8.bf16 %v3631
    %v3702 = vunpack.c.h.s8.bf16 %v3632
    %v3703 = vunpack.c.h.s8.bf16 %v3633
    %v3704 = vunpack.c.h.s8.bf16 %v3634
    %v3705 = vunpack.c.h.s8.bf16 %v3635
    %v3706 = vunpack.c.h.s8.bf16 %v3636
    %v3707 = vunpack.c.h.s8.bf16 %v3637
    %v3708 = vunpack.c.l.s8.bf16 %v3638
    %v3709 = vunpack.c.l.s8.bf16 %v3639
    %v3710 = vunpack.c.l.s8.bf16 %v3640
    %v3711 = vunpack.c.l.s8.bf16 %v3641
    %v3712 = vunpack.c.l.s8.bf16 %v3642
    %v3713 = vunpack.c.l.s8.bf16 %v3643
    %v3714 = vunpack.c.l.s8.bf16 %v3644
    %v3715 = vunpack.c.h.s8.bf16 %v3638
    %v3716 = vunpack.c.h.s8.bf16 %v3639
    %v3717 = vunpack.c.h.s8.bf16 %v3640
    %v3718 = vunpack.c.h.s8.bf16 %v3641
    %v3719 = vunpack.c.h.s8.bf16 %v3642
    %v3720 = vunpack.c.h.s8.bf16 %v3643
    %v3721 = vunpack.c.h.s8.bf16 %v3644
    %v3722 = vunpack.c.l.s8.bf16 %v3645
    %v3723 = vunpack.c.l.s8.bf16 %v3646
    %v3724 = vunpack.c.l.s8.bf16 %v3647
    %v3725 = vunpack.c.l.s8.bf16 %v3648
    %v3726 = vunpack.c.l.s8.bf16 %v3649
    %v3727 = vunpack.c.l.s8.bf16 %v3650
    %v3728 = vunpack.c.l.s8.bf16 %v3651
    %v3729 = vunpack.c.h.s8.bf16 %v3645
    %v3730 = vunpack.c.h.s8.bf16 %v3646
    %v3731 = vunpack.c.h.s8.bf16 %v3647
    %v3732 = vunpack.c.h.s8.bf16 %v3648
    %v3733 = vunpack.c.h.s8.bf16 %v3649
    %v3734 = vunpack.c.h.s8.bf16 %v3650
    %v3735 = vunpack.c.h.s8.bf16 %v3651
    %v3736 = vunpack.c.l.s8.bf16 %v3652
    %v3737 = vunpack.c.l.s8.bf16 %v3653
    %v3738 = vunpack.c.l.s8.bf16 %v3654
    %v3739 = vunpack.c.l.s8.bf16 %v3655
    %v3740 = vunpack.c.l.s8.bf16 %v3656
    %v3741 = vunpack.c.l.s8.bf16 %v3657
    %v3742 = vunpack.c.l.s8.bf16 %v3658
    %v3743 = vunpack.c.h.s8.bf16 %v3652
    %v3744 = vunpack.c.h.s8.bf16 %v3653
    %v3745 = vunpack.c.h.s8.bf16 %v3654
    %v3746 = vunpack.c.h.s8.bf16 %v3655
    %v3747 = vunpack.c.h.s8.bf16 %v3656
    %v3748 = vunpack.c.h.s8.bf16 %v3657
    %v3749 = vunpack.c.h.s8.bf16 %v3658
    %v3750 = vunpack.c.l.s8.bf16 %v3659
    %v3751 = vunpack.c.l.s8.bf16 %v3660
    %v3752 = vunpack.c.l.s8.bf16 %v3661
    %v3753 = vunpack.c.l.s8.bf16 %v3662
    %v3754 = vunpack.c.l.s8.bf16 %v3663
    %v3755 = vunpack.c.l.s8.bf16 %v3664
    %v3756 = vunpack.c.l.s8.bf16 %v3665
    %v3757 = vunpack.c.h.s8.bf16 %v3659
    %v3758 = vunpack.c.h.s8.bf16 %v3660
    %v3759 = vunpack.c.h.s8.bf16 %v3661
    %v3760 = vunpack.c.h.s8.bf16 %v3662
    %v3761 = vunpack.c.h.s8.bf16 %v3663
    %v3762 = vunpack.c.h.s8.bf16 %v3664
    %v3763 = vunpack.c.h.s8.bf16 %v3665
    %v3764 = vunpack.c.l.s8.bf16 %v3666
    %v3765 = vunpack.c.l.s8.bf16 %v3667
    %v3766 = vunpack.c.l.s8.bf16 %v3668
    %v3767 = vunpack.c.l.s8.bf16 %v3669
    %v3768 = vunpack.c.l.s8.bf16 %v3670
    %v3769 = vunpack.c.l.s8.bf16 %v3671
    %v3770 = vunpack.c.l.s8.bf16 %v3672
    %v3771 = vunpack.c.h.s8.bf16 %v3666
    %v3772 = vunpack.c.h.s8.bf16 %v3667
    %v3773 = vunpack.c.h.s8.bf16 %v3668
    %v3774 = vunpack.c.h.s8.bf16 %v3669
    %v3775 = vunpack.c.h.s8.bf16 %v3670
    %v3776 = vunpack.c.h.s8.bf16 %v3671
    %v3777 = vunpack.c.h.s8.bf16 %v3672
    %v3778 = vunpack.c.l.s8.bf16 %v3673
    %v3779 = vunpack.c.l.s8.bf16 %v3674
    %v3780 = vunpack.c.l.s8.bf16 %v3675
    %v3781 = vunpack.c.l.s8.bf16 %v3676
    %v3782 = vunpack.c.l.s8.bf16 %v3677
    %v3783 = vunpack.c.l.s8.bf16 %v3678
    %v3784 = vunpack.c.l.s8.bf16 %v3679
    %v3785 = vunpack.c.h.s8.bf16 %v3673
    %v3786 = vunpack.c.h.s8.bf16 %v3674
    %v3787 = vunpack.c.h.s8.bf16 %v3675
    %v3788 = vunpack.c.h.s8.bf16 %v3676
    %v3789 = vunpack.c.h.s8.bf16 %v3677
    %v3790 = vunpack.c.h.s8.bf16 %v3678
    %v3791 = vunpack.c.h.s8.bf16 %v3679
    %v3796 = vunpack.c.l.b16 %v3619
    %v3797 = vunpack.c.l.b16 %v3620
    %v3798 = vunpack.c.l.b16 %v3621
    %v3799 = vunpack.c.l.b16 %v3622
    %vm3800 = vcmask 1041409
    %v3801 = vsel %vm3800, %v3798, %v3796
    %v3802 = vsel %vm3800, %v3799, %v3797
    %v3803 = vpack.c.b16 %v3801, %v3801
    %v3804 = vpack.c.b16 %v3802, %v3802
    %3807 = vmatprep.subr.bf16.mxu0 %v3681
    %3808 = vmatpush1.bf16.msra.mxu0 %v3680
    %3809 = vmatprep.subr.bf16.mxu0 %v3688
    %3810 = vmatpush1.bf16.msra.mxu0 %v3687
    %3811 = vmatprep.subr.bf16.mxu0 %v3695
    %3812 = vmatpush1.bf16.msra.mxu0 %v3694
    %3813 = vmatprep.subr.bf16.mxu0 %v3702
    %3814 = vmatpush1.bf16.msra.mxu0 %v3701
    %3815 = vmatprep.subr.bf16.mxu0 %v3709
    %3816 = vmatpush1.bf16.msra.mxu0 %v3708
    %3817 = vmatprep.subr.bf16.mxu0 %v3716
    %3818 = vmatpush1.bf16.msra.mxu0 %v3715
    %3819 = vmatprep.subr.bf16.mxu0 %v3723
    %3820 = vmatpush1.bf16.msra.mxu0 %v3722
    %3821 = vmatprep.subr.bf16.mxu0 %v3730
    %3822 = vmatpush1.bf16.msra.mxu0 %v3729
    %3823 = vmatprep.subr.bf16.mxu0 %v3737
    %3824 = vmatpush1.bf16.msra.mxu0 %v3736
    %3825 = vmatprep.subr.bf16.mxu0 %v3744
    %3826 = vmatpush1.bf16.msra.mxu0 %v3743
    %3827 = vmatprep.subr.bf16.mxu0 %v3751
    %3828 = vmatpush1.bf16.msra.mxu0 %v3750
    %3829 = vmatprep.subr.bf16.mxu0 %v3758
    %3830 = vmatpush1.bf16.msra.mxu0 %v3757
    %3831 = vmatprep.subr.bf16.mxu0 %v3765
    %3832 = vmatpush1.bf16.msra.mxu0 %v3764
    %3833 = vmatprep.subr.bf16.mxu0 %v3772
    %3834 = vmatpush1.bf16.msra.mxu0 %v3771
    %3835 = vmatprep.subr.bf16.mxu0 %v3779
    %3836 = vmatpush1.bf16.msra.mxu0 %v3778
    %3837 = vmatprep.subr.bf16.mxu0 %v3786
    %3838 = vmatpush1.bf16.msra.mxu0 %v3785
    %3839 = vmatprep.mubr.bf16.mxu0 %v3804
    %3840 = vmatmul.mubr.bf16.gmra.mrb[0].mxu0 %v3803
    %v3841 = vpop.f32.mrb[0].mxu0
    %v3842 = vadd.f32 0.0, %v3841
    %v3843 = vpop.f32.mrb[0].mxu0
    %v3844 = vadd.f32 0.0, %v3843
    %v3845 = vpop.f32.mrb[0].mxu0
    %v3846 = vpop.f32.mrb[0].mxu0
    %3847 = vdwg.mxu0
    %3848 = vmatprep.subr.bf16.mxu0 %v3683
    %3849 = vmatpush1.bf16.msra.mxu0 %v3682
    %3850 = vmatprep.subr.bf16.mxu0 %v3690
    %3851 = vmatpush1.bf16.msra.mxu0 %v3689
    %3852 = vmatprep.subr.bf16.mxu0 %v3697
    %3853 = vmatpush1.bf16.msra.mxu0 %v3696
    %3854 = vmatprep.subr.bf16.mxu0 %v3704
    %3855 = vmatpush1.bf16.msra.mxu0 %v3703
    %3856 = vmatprep.subr.bf16.mxu0 %v3711
    %3857 = vmatpush1.bf16.msra.mxu0 %v3710
    %3858 = vmatprep.subr.bf16.mxu0 %v3718
    %3859 = vmatpush1.bf16.msra.mxu0 %v3717
    %3860 = vmatprep.subr.bf16.mxu0 %v3725
    %3861 = vmatpush1.bf16.msra.mxu0 %v3724
    %3862 = vmatprep.subr.bf16.mxu0 %v3732
    %3863 = vmatpush1.bf16.msra.mxu0 %v3731
    %3864 = vmatprep.subr.bf16.mxu0 %v3739
    %3865 = vmatpush1.bf16.msra.mxu0 %v3738
    %3866 = vmatprep.subr.bf16.mxu0 %v3746
    %3867 = vmatpush1.bf16.msra.mxu0 %v3745
    %3868 = vmatprep.subr.bf16.mxu0 %v3753
    %3869 = vmatpush1.bf16.msra.mxu0 %v3752
    %3870 = vmatprep.subr.bf16.mxu0 %v3760
    %3871 = vmatpush1.bf16.msra.mxu0 %v3759
    %3872 = vmatprep.subr.bf16.mxu0 %v3767
    %3873 = vmatpush1.bf16.msra.mxu0 %v3766
    %3874 = vmatprep.subr.bf16.mxu0 %v3774
    %3875 = vmatpush1.bf16.msra.mxu0 %v3773
    %3876 = vmatprep.subr.bf16.mxu0 %v3781
    %3877 = vmatpush1.bf16.msra.mxu0 %v3780
    %3878 = vmatprep.subr.bf16.mxu0 %v3788
    %3879 = vmatpush1.bf16.msra.mxu0 %v3787
    %3880 = vmatprep.mubr.bf16.mxu0 %v3804
    %3881 = vmatmul.mubr.bf16.gmra.mrb[0].mxu0 %v3803
    %v3882 = vpop.f32.mrb[0].mxu0
    %v3883 = vadd.f32 0.0, %v3882
    %v3884 = vpop.f32.mrb[0].mxu0
    %v3885 = vadd.f32 0.0, %v3884
    %v3886 = vpop.f32.mrb[0].mxu0
    %v3887 = vpop.f32.mrb[0].mxu0
    %3888 = vdwg.mxu0
    %3889 = vmatprep.subr.bf16.mxu0 %v3685
    %3890 = vmatpush1.bf16.msra.mxu0 %v3684
    %3891 = vmatprep.subr.bf16.mxu0 %v3692
    %3892 = vmatpush1.bf16.msra.mxu0 %v3691
    %3893 = vmatprep.subr.bf16.mxu0 %v3699
    %3894 = vmatpush1.bf16.msra.mxu0 %v3698
    %3895 = vmatprep.subr.bf16.mxu0 %v3706
    %3896 = vmatpush1.bf16.msra.mxu0 %v3705
    %3897 = vmatprep.subr.bf16.mxu0 %v3713
    %3898 = vmatpush1.bf16.msra.mxu0 %v3712
    %3899 = vmatprep.subr.bf16.mxu0 %v3720
    %3900 = vmatpush1.bf16.msra.mxu0 %v3719
    %3901 = vmatprep.subr.bf16.mxu0 %v3727
    %3902 = vmatpush1.bf16.msra.mxu0 %v3726
    %3903 = vmatprep.subr.bf16.mxu0 %v3734
    %3904 = vmatpush1.bf16.msra.mxu0 %v3733
    %3905 = vmatprep.subr.bf16.mxu0 %v3741
    %3906 = vmatpush1.bf16.msra.mxu0 %v3740
    %3907 = vmatprep.subr.bf16.mxu0 %v3748
    %3908 = vmatpush1.bf16.msra.mxu0 %v3747
    %3909 = vmatprep.subr.bf16.mxu0 %v3755
    %3910 = vmatpush1.bf16.msra.mxu0 %v3754
    %3911 = vmatprep.subr.bf16.mxu0 %v3762
    %3912 = vmatpush1.bf16.msra.mxu0 %v3761
    %3913 = vmatprep.subr.bf16.mxu0 %v3769
    %3914 = vmatpush1.bf16.msra.mxu0 %v3768
    %3915 = vmatprep.subr.bf16.mxu0 %v3776
    %3916 = vmatpush1.bf16.msra.mxu0 %v3775
    %3917 = vmatprep.subr.bf16.mxu0 %v3783
    %3918 = vmatpush1.bf16.msra.mxu0 %v3782
    %3919 = vmatprep.subr.bf16.mxu0 %v3790
    %3920 = vmatpush1.bf16.msra.mxu0 %v3789
    %3921 = vmatprep.mubr.bf16.mxu0 %v3804
    %3922 = vmatmul.mubr.bf16.gmra.mrb[0].mxu0 %v3803
    %v3923 = vpop.f32.mrb[0].mxu0
    %v3924 = vadd.f32 0.0, %v3923
    %v3925 = vpop.f32.mrb[0].mxu0
    %v3926 = vadd.f32 0.0, %v3925
    %v3927 = vpop.f32.mrb[0].mxu0
    %v3928 = vpop.f32.mrb[0].mxu0
    %3929 = vdwg.mxu0
    %3930 = vmatprep.subr.bf16.mxu0 0
    %3931 = vmatpush1.bf16.msra.mxu0 %v3686
    %3932 = vmatprep.subr.bf16.mxu0 0
    %3933 = vmatpush1.bf16.msra.mxu0 %v3693
    %3934 = vmatprep.subr.bf16.mxu0 0
    %3935 = vmatpush1.bf16.msra.mxu0 %v3700
    %3936 = vmatprep.subr.bf16.mxu0 0
    %3937 = vmatpush1.bf16.msra.mxu0 %v3707
    %3938 = vmatprep.subr.bf16.mxu0 0
    %3939 = vmatpush1.bf16.msra.mxu0 %v3714
    %3940 = vmatprep.subr.bf16.mxu0 0
    %3941 = vmatpush1.bf16.msra.mxu0 %v3721
    %3942 = vmatprep.subr.bf16.mxu0 0
    %3943 = vmatpush1.bf16.msra.mxu0 %v3728
    %3944 = vmatprep.subr.bf16.mxu0 0
    %3945 = vmatpush1.bf16.msra.mxu0 %v3735
    %3946 = vmatprep.subr.bf16.mxu0 0
    %3947 = vmatpush1.bf16.msra.mxu0 %v3742
    %3948 = vmatprep.subr.bf16.mxu0 0
    %3949 = vmatpush1.bf16.msra.mxu0 %v3749
    %3950 = vmatprep.subr.bf16.mxu0 0
    %3951 = vmatpush1.bf16.msra.mxu0 %v3756
    %3952 = vmatprep.subr.bf16.mxu0 0
    %3953 = vmatpush1.bf16.msra.mxu0 %v3763
    %3954 = vmatprep.subr.bf16.mxu0 0
    %3955 = vmatpush1.bf16.msra.mxu0 %v3770
    %3956 = vmatprep.subr.bf16.mxu0 0
    %3957 = vmatpush1.bf16.msra.mxu0 %v3777
    %3958 = vmatprep.subr.bf16.mxu0 0
    %3959 = vmatpush1.bf16.msra.mxu0 %v3784
    %3960 = vmatprep.subr.bf16.mxu0 0
    %3961 = vmatpush1.bf16.msra.mxu0 %v3791
    %3962 = vmatprep.mubr.bf16.mxu0 %v3804
    %3963 = vmatmul.mubr.bf16.gmra.mrb[0].mxu0 %v3803
    %v3964 = vpop.f32.mrb[0].mxu0
    %v3965 = vadd.f32 0.0, %v3964
    %v3966 = vpop.f32.mrb[0].mxu0
    %v3967 = vpop.f32.mrb[0].mxu0
    %v3968 = vpop.f32.mrb[0].mxu0
    %3969 = vdwg.mxu0
    %v3974 = vunpack.c.l.b16 %v3447
    %v3975 = vunpack.c.l.b16 %v3448
    %v3976 = vunpack.c.l.b16 %v3449
    %v3977 = vunpack.c.l.b16 %v3450
    %v3978 = vsel %vm3800, %v3976, %v3974
    %v3979 = vsel %vm3800, %v3977, %v3975
    %v3980 = vpack.c.b16 %v3978, %v3978
    %v3981 = vpack.c.b16 %v3979, %v3979
    %3984 = vmatprep.subr.bf16.mxu0 %v3508
    %3985 = vmatpush1.bf16.msra.mxu0 %v3507
    %3986 = vmatprep.subr.bf16.mxu0 %v3515
    %3987 = vmatpush1.bf16.msra.mxu0 %v3514
    %3988 = vmatprep.subr.bf16.mxu0 %v3522
    %3989 = vmatpush1.bf16.msra.mxu0 %v3521
    %3990 = vmatprep.subr.bf16.mxu0 %v3529
    %3991 = vmatpush1.bf16.msra.mxu0 %v3528
    %3992 = vmatprep.subr.bf16.mxu0 %v3536
    %3993 = vmatpush1.bf16.msra.mxu0 %v3535
    %3994 = vmatprep.subr.bf16.mxu0 %v3543
    %3995 = vmatpush1.bf16.msra.mxu0 %v3542
    %3996 = vmatprep.subr.bf16.mxu0 %v3550
    %3997 = vmatpush1.bf16.msra.mxu0 %v3549
    %3998 = vmatprep.subr.bf16.mxu0 %v3557
    %3999 = vmatpush1.bf16.msra.mxu0 %v3556
    %4000 = vmatprep.subr.bf16.mxu0 %v3564
    %4001 = vmatpush1.bf16.msra.mxu0 %v3563
    %4002 = vmatprep.subr.bf16.mxu0 %v3571
    %4003 = vmatpush1.bf16.msra.mxu0 %v3570
    %4004 = vmatprep.subr.bf16.mxu0 %v3578
    %4005 = vmatpush1.bf16.msra.mxu0 %v3577
    %4006 = vmatprep.subr.bf16.mxu0 %v3585
    %4007 = vmatpush1.bf16.msra.mxu0 %v3584
    %4008 = vmatprep.subr.bf16.mxu0 %v3592
    %4009 = vmatpush1.bf16.msra.mxu0 %v3591
    %4010 = vmatprep.subr.bf16.mxu0 %v3599
    %4011 = vmatpush1.bf16.msra.mxu0 %v3598
    %4012 = vmatprep.subr.bf16.mxu0 %v3606
    %4013 = vmatpush1.bf16.msra.mxu0 %v3605
    %4014 = vmatprep.subr.bf16.mxu0 %v3613
    %4015 = vmatpush1.bf16.msra.mxu0 %v3612
    %4016 = vmatprep.mubr.bf16.mxu0 %v3981
    %4017 = vmatmul.mubr.bf16.gmra.mrb[0].mxu0 %v3980
    %v4018 = vpop.f32.mrb[0].mxu0
    %v4019 = vadd.f32 %v3842, %v4018
    %v4020 = vpop.f32.mrb[0].mxu0
    %v4021 = vadd.f32 %v3844, %v4020
    %v4022 = vpop.f32.mrb[0].mxu0
    %v4023 = vpop.f32.mrb[0].mxu0
    %4024 = vdwg.mxu0
    %4025 = vmatprep.subr.bf16.mxu0 %v3510
    %4026 = vmatpush1.bf16.msra.mxu0 %v3509
    %4027 = vmatprep.subr.bf16.mxu0 %v3517
    %4028 = vmatpush1.bf16.msra.mxu0 %v3516
    %4029 = vmatprep.subr.bf16.mxu0 %v3524
    %4030 = vmatpush1.bf16.msra.mxu0 %v3523
    %4031 = vmatprep.subr.bf16.mxu0 %v3531
    %4032 = vmatpush1.bf16.msra.mxu0 %v3530
    %4033 = vmatprep.subr.bf16.mxu0 %v3538
    %4034 = vmatpush1.bf16.msra.mxu0 %v3537
    %4035 = vmatprep.subr.bf16.mxu0 %v3545
    %4036 = vmatpush1.bf16.msra.mxu0 %v3544
    %4037 = vmatprep.subr.bf16.mxu0 %v3552
    %4038 = vmatpush1.bf16.msra.mxu0 %v3551
    %4039 = vmatprep.subr.bf16.mxu0 %v3559
    %4040 = vmatpush1.bf16.msra.mxu0 %v3558
    %4041 = vmatprep.subr.bf16.mxu0 %v3566
    %4042 = vmatpush1.bf16.msra.mxu0 %v3565
    %4043 = vmatprep.subr.bf16.mxu0 %v3573
    %4044 = vmatpush1.bf16.msra.mxu0 %v3572
    %4045 = vmatprep.subr.bf16.mxu0 %v3580
    %4046 = vmatpush1.bf16.msra.mxu0 %v3579
    %4047 = vmatprep.subr.bf16.mxu0 %v3587
    %4048 = vmatpush1.bf16.msra.mxu0 %v3586
    %4049 = vmatprep.subr.bf16.mxu0 %v3594
    %4050 = vmatpush1.bf16.msra.mxu0 %v3593
    %4051 = vmatprep.subr.bf16.mxu0 %v3601
    %4052 = vmatpush1.bf16.msra.mxu0 %v3600
    %4053 = vmatprep.subr.bf16.mxu0 %v3608
    %4054 = vmatpush1.bf16.msra.mxu0 %v3607
    %4055 = vmatprep.subr.bf16.mxu0 %v3615
    %4056 = vmatpush1.bf16.msra.mxu0 %v3614
    %4057 = vmatprep.mubr.bf16.mxu0 %v3981
    %4058 = vmatmul.mubr.bf16.gmra.mrb[0].mxu0 %v3980
    %v4059 = vpop.f32.mrb[0].mxu0
    %v4060 = vadd.f32 %v3883, %v4059
    %v4061 = vpop.f32.mrb[0].mxu0
    %v4062 = vadd.f32 %v3885, %v4061
    %v4063 = vpop.f32.mrb[0].mxu0
    %v4064 = vpop.f32.mrb[0].mxu0
    %4065 = vdwg.mxu0
    %4066 = vmatprep.subr.bf16.mxu0 %v3512
    %4067 = vmatpush1.bf16.msra.mxu0 %v3511
    %4068 = vmatprep.subr.bf16.mxu0 %v3519
    %4069 = vmatpush1.bf16.msra.mxu0 %v3518
    %4070 = vmatprep.subr.bf16.mxu0 %v3526
    %4071 = vmatpush1.bf16.msra.mxu0 %v3525
    %4072 = vmatprep.subr.bf16.mxu0 %v3533
    %4073 = vmatpush1.bf16.msra.mxu0 %v3532
    %4074 = vmatprep.subr.bf16.mxu0 %v3540
    %4075 = vmatpush1.bf16.msra.mxu0 %v3539
    %4076 = vmatprep.subr.bf16.mxu0 %v3547
    %4077 = vmatpush1.bf16.msra.mxu0 %v3546
    %4078 = vmatprep.subr.bf16.mxu0 %v3554
    %4079 = vmatpush1.bf16.msra.mxu0 %v3553
    %4080 = vmatprep.subr.bf16.mxu0 %v3561
    %4081 = vmatpush1.bf16.msra.mxu0 %v3560
    %4082 = vmatprep.subr.bf16.mxu0 %v3568
    %4083 = vmatpush1.bf16.msra.mxu0 %v3567
    %4084 = vmatprep.subr.bf16.mxu0 %v3575
    %4085 = vmatpush1.bf16.msra.mxu0 %v3574
    %4086 = vmatprep.subr.bf16.mxu0 %v3582
    %4087 = vmatpush1.bf16.msra.mxu0 %v3581
    %4088 = vmatprep.subr.bf16.mxu0 %v3589
    %4089 = vmatpush1.bf16.msra.mxu0 %v3588
    %4090 = vmatprep.subr.bf16.mxu0 %v3596
    %4091 = vmatpush1.bf16.msra.mxu0 %v3595
    %4092 = vmatprep.subr.bf16.mxu0 %v3603
    %4093 = vmatpush1.bf16.msra.mxu0 %v3602
    %4094 = vmatprep.subr.bf16.mxu0 %v3610
    %4095 = vmatpush1.bf16.msra.mxu0 %v3609
    %4096 = vmatprep.subr.bf16.mxu0 %v3617
    %4097 = vmatpush1.bf16.msra.mxu0 %v3616
    %4098 = vmatprep.mubr.bf16.mxu0 %v3981
    %4099 = vmatmul.mubr.bf16.gmra.mrb[0].mxu0 %v3980
    %v4100 = vpop.f32.mrb[0].mxu0
    %v4101 = vadd.f32 %v3924, %v4100
    %v4102 = vpop.f32.mrb[0].mxu0
    %v4103 = vadd.f32 %v3926, %v4102
    %v4104 = vpop.f32.mrb[0].mxu0
    %v4105 = vpop.f32.mrb[0].mxu0
    %4106 = vdwg.mxu0
    %4107 = vmatprep.subr.bf16.mxu0 0
    %4108 = vmatpush1.bf16.msra.mxu0 %v3513
    %4109 = vmatprep.subr.bf16.mxu0 0
    %4110 = vmatpush1.bf16.msra.mxu0 %v3520
    %4111 = vmatprep.subr.bf16.mxu0 0
    %4112 = vmatpush1.bf16.msra.mxu0 %v3527
    %4113 = vmatprep.subr.bf16.mxu0 0
    %4114 = vmatpush1.bf16.msra.mxu0 %v3534
    %4115 = vmatprep.subr.bf16.mxu0 0
    %4116 = vmatpush1.bf16.msra.mxu0 %v3541
    %4117 = vmatprep.subr.bf16.mxu0 0
    %4118 = vmatpush1.bf16.msra.mxu0 %v3548
    %4119 = vmatprep.subr.bf16.mxu0 0
    %4120 = vmatpush1.bf16.msra.mxu0 %v3555
    %4121 = vmatprep.subr.bf16.mxu0 0
    %4122 = vmatpush1.bf16.msra.mxu0 %v3562
    %4123 = vmatprep.subr.bf16.mxu0 0
    %4124 = vmatpush1.bf16.msra.mxu0 %v3569
    %4125 = vmatprep.subr.bf16.mxu0 0
    %4126 = vmatpush1.bf16.msra.mxu0 %v3576
    %4127 = vmatprep.subr.bf16.mxu0 0
    %4128 = vmatpush1.bf16.msra.mxu0 %v3583
    %4129 = vmatprep.subr.bf16.mxu0 0
    %4130 = vmatpush1.bf16.msra.mxu0 %v3590
    %4131 = vmatprep.subr.bf16.mxu0 0
    %4132 = vmatpush1.bf16.msra.mxu0 %v3597
    %4133 = vmatprep.subr.bf16.mxu0 0
    %4134 = vmatpush1.bf16.msra.mxu0 %v3604
    %4135 = vmatprep.subr.bf16.mxu0 0
    %4136 = vmatpush1.bf16.msra.mxu0 %v3611
    %4137 = vmatprep.subr.bf16.mxu0 0
    %4138 = vmatpush1.bf16.msra.mxu0 %v3618
    %4139 = vmatprep.mubr.bf16.mxu0 %v3981
    %4140 = vmatmul.mubr.bf16.gmra.mrb[0].mxu0 %v3980
    %v4141 = vpop.f32.mrb[0].mxu0
    %v4142 = vadd.f32 %v3965, %v4141
    %v4143 = vpop.f32.mrb[0].mxu0
    %v4144 = vpop.f32.mrb[0].mxu0
    %v4145 = vpop.f32.mrb[0].mxu0
    %4146 = vdwg.mxu0
    %v4147 = vpack.c.bf16 %v3280, %v3280
    %v4148 = vpack.c.bf16 %v3287, %v3287
    %v4149 = vpack.c.bf16 %v3378, %v3378
    %v4150 = vpack.c.bf16 %v3385, %v3385
    %s4151 = scalar_lea.vmem [#allocation2], 896
    %v4152 = vld [vmem:[%s4151] sm:$0xff]
    %v4153 = vld [vmem:[%s4151 + $0x8] sm:$0xff]
    %v4154 = vld [vmem:[%s4151 + $0x10] sm:$0xff]
    %v4155 = vld [vmem:[%s4151 + $0x18] sm:$0xff]
    %v4156 = vld [vmem:[%s4151 + $0x20] sm:$0xff]
    %v4157 = vld [vmem:[%s4151 + $0x28] sm:$0xff]
    %v4158 = vld [vmem:[%s4151 + $0x30] sm:$0xff]
    %v4159 = vld [vmem:[%s4151 + $0x38] sm:$0xff]
    %v4160 = vld [vmem:[%s4151 + $0x40] sm:$0xff]
    %v4161 = vld [vmem:[%s4151 + $0x48] sm:$0xff]
    %v4162 = vld [vmem:[%s4151 + $0x50] sm:$0xff]
    %v4163 = vld [vmem:[%s4151 + $0x58] sm:$0xff]
    %v4164 = vld [vmem:[%s4151 + $0x60] sm:$0xff]
    %v4165 = vld [vmem:[%s4151 + $0x68] sm:$0xff]
    %v4166 = vld [vmem:[%s4151 + $0x70] sm:$0xff]
    %v4167 = vld [vmem:[%s4151 + $0x78] sm:$0xff]
    %v4168 = vld [vmem:[%s4151 + $0x80] sm:$0xff]
    %v4169 = vld [vmem:[%s4151 + $0x88] sm:$0xff]
    %v4170 = vld [vmem:[%s4151 + $0x90] sm:$0xff]
    %v4171 = vld [vmem:[%s4151 + $0x98] sm:$0xff]
    %v4172 = vld [vmem:[%s4151 + $0xa0] sm:$0xff]
    %v4173 = vld [vmem:[%s4151 + $0xa8] sm:$0xff]
    %v4174 = vld [vmem:[%s4151 + $0xb0] sm:$0xff]
    %v4175 = vld [vmem:[%s4151 + $0xb8] sm:$0xff]
    %v4176 = vld [vmem:[%s4151 + $0xc0] sm:$0xff]
    %v4177 = vld [vmem:[%s4151 + $0xc8] sm:$0xff]
    %v4178 = vld [vmem:[%s4151 + $0xd0] sm:$0xff]
    %v4179 = vld [vmem:[%s4151 + $0xd8] sm:$0xff]
    %v4180 = vld [vmem:[%s4151 + $0xe0] sm:$0xff]
    %v4181 = vld [vmem:[%s4151 + $0xe8] sm:$0xff]
    %v4182 = vld [vmem:[%s4151 + $0xf0] sm:$0xff]
    %v4183 = vld [vmem:[%s4151 + $0xf8] sm:$0xff]
    %v4184 = vld [vmem:[%s4151 + $0x100] sm:$0xff]
    %v4185 = vld [vmem:[%s4151 + $0x108] sm:$0xff]
    %v4186 = vld [vmem:[%s4151 + $0x110] sm:$0xff]
    %v4187 = vld [vmem:[%s4151 + $0x118] sm:$0xff]
    %v4188 = vld [vmem:[%s4151 + $0x120] sm:$0xff]
    %v4189 = vld [vmem:[%s4151 + $0x128] sm:$0xff]
    %v4190 = vld [vmem:[%s4151 + $0x130] sm:$0xff]
    %v4191 = vld [vmem:[%s4151 + $0x138] sm:$0xff]
    %v4192 = vld [vmem:[%s4151 + $0x140] sm:$0xff]
    %v4193 = vld [vmem:[%s4151 + $0x148] sm:$0xff]
    %v4194 = vld [vmem:[%s4151 + $0x150] sm:$0xff]
    %v4195 = vld [vmem:[%s4151 + $0x158] sm:$0xff]
    %v4196 = vld [vmem:[%s4151 + $0x160] sm:$0xff]
    %v4197 = vld [vmem:[%s4151 + $0x168] sm:$0xff]
    %v4198 = vld [vmem:[%s4151 + $0x170] sm:$0xff]
    %v4199 = vld [vmem:[%s4151 + $0x178] sm:$0xff]
    %v4200 = vld [vmem:[%s4151 + $0x180] sm:$0xff]
    %v4201 = vld [vmem:[%s4151 + $0x188] sm:$0xff]
    %v4202 = vld [vmem:[%s4151 + $0x190] sm:$0xff]
    %v4203 = vld [vmem:[%s4151 + $0x198] sm:$0xff]
    %v4204 = vld [vmem:[%s4151 + $0x1a0] sm:$0xff]
    %v4205 = vld [vmem:[%s4151 + $0x1a8] sm:$0xff]
    %v4206 = vld [vmem:[%s4151 + $0x1b0] sm:$0xff]
    %v4207 = vld [vmem:[%s4151 + $0x1b8] sm:$0xff]
    %v4208 = vunpack.c.l.s8.bf16 %v4152
    %v4209 = vunpack.c.l.s8.bf16 %v4153
    %v4210 = vunpack.c.l.s8.bf16 %v4154
    %v4211 = vunpack.c.l.s8.bf16 %v4155
    %v4212 = vunpack.c.l.s8.bf16 %v4156
    %v4213 = vunpack.c.l.s8.bf16 %v4157
    %v4214 = vunpack.c.l.s8.bf16 %v4158
    %v4215 = vunpack.c.h.s8.bf16 %v4152
    %v4216 = vunpack.c.h.s8.bf16 %v4153
    %v4217 = vunpack.c.h.s8.bf16 %v4154
    %v4218 = vunpack.c.h.s8.bf16 %v4155
    %v4219 = vunpack.c.h.s8.bf16 %v4156
    %v4220 = vunpack.c.h.s8.bf16 %v4157
    %v4221 = vunpack.c.h.s8.bf16 %v4158
    %v4222 = vunpack.c.l.s8.bf16 %v4159
    %v4223 = vunpack.c.l.s8.bf16 %v4160
    %v4224 = vunpack.c.l.s8.bf16 %v4161
    %v4225 = vunpack.c.l.s8.bf16 %v4162
    %v4226 = vunpack.c.l.s8.bf16 %v4163
    %v4227 = vunpack.c.l.s8.bf16 %v4164
    %v4228 = vunpack.c.l.s8.bf16 %v4165
    %v4229 = vunpack.c.h.s8.bf16 %v4159
    %v4230 = vunpack.c.h.s8.bf16 %v4160
    %v4231 = vunpack.c.h.s8.bf16 %v4161
    %v4232 = vunpack.c.h.s8.bf16 %v4162
    %v4233 = vunpack.c.h.s8.bf16 %v4163
    %v4234 = vunpack.c.h.s8.bf16 %v4164
    %v4235 = vunpack.c.h.s8.bf16 %v4165
    %v4236 = vunpack.c.l.s8.bf16 %v4166
    %v4237 = vunpack.c.l.s8.bf16 %v4167
    %v4238 = vunpack.c.l.s8.bf16 %v4168
    %v4239 = vunpack.c.l.s8.bf16 %v4169
    %v4240 = vunpack.c.l.s8.bf16 %v4170
    %v4241 = vunpack.c.l.s8.bf16 %v4171
    %v4242 = vunpack.c.l.s8.bf16 %v4172
    %v4243 = vunpack.c.h.s8.bf16 %v4166
    %v4244 = vunpack.c.h.s8.bf16 %v4167
    %v4245 = vunpack.c.h.s8.bf16 %v4168
    %v4246 = vunpack.c.h.s8.bf16 %v4169
    %v4247 = vunpack.c.h.s8.bf16 %v4170
    %v4248 = vunpack.c.h.s8.bf16 %v4171
    %v4249 = vunpack.c.h.s8.bf16 %v4172
    %v4250 = vunpack.c.l.s8.bf16 %v4173
    %v4251 = vunpack.c.l.s8.bf16 %v4174
    %v4252 = vunpack.c.l.s8.bf16 %v4175
    %v4253 = vunpack.c.l.s8.bf16 %v4176
    %v4254 = vunpack.c.l.s8.bf16 %v4177
    %v4255 = vunpack.c.l.s8.bf16 %v4178
    %v4256 = vunpack.c.l.s8.bf16 %v4179
    %v4257 = vunpack.c.h.s8.bf16 %v4173
    %v4258 = vunpack.c.h.s8.bf16 %v4174
    %v4259 = vunpack.c.h.s8.bf16 %v4175
    %v4260 = vunpack.c.h.s8.bf16 %v4176
    %v4261 = vunpack.c.h.s8.bf16 %v4177
    %v4262 = vunpack.c.h.s8.bf16 %v4178
    %v4263 = vunpack.c.h.s8.bf16 %v4179
    %v4264 = vunpack.c.l.s8.bf16 %v4180
    %v4265 = vunpack.c.l.s8.bf16 %v4181
    %v4266 = vunpack.c.l.s8.bf16 %v4182
    %v4267 = vunpack.c.l.s8.bf16 %v4183
    %v4268 = vunpack.c.l.s8.bf16 %v4184
    %v4269 = vunpack.c.l.s8.bf16 %v4185
    %v4270 = vunpack.c.l.s8.bf16 %v4186
    %v4271 = vunpack.c.h.s8.bf16 %v4180
    %v4272 = vunpack.c.h.s8.bf16 %v4181
    %v4273 = vunpack.c.h.s8.bf16 %v4182
    %v4274 = vunpack.c.h.s8.bf16 %v4183
    %v4275 = vunpack.c.h.s8.bf16 %v4184
    %v4276 = vunpack.c.h.s8.bf16 %v4185
    %v4277 = vunpack.c.h.s8.bf16 %v4186
    %v4278 = vunpack.c.l.s8.bf16 %v4187
    %v4279 = vunpack.c.l.s8.bf16 %v4188
    %v4280 = vunpack.c.l.s8.bf16 %v4189
    %v4281 = vunpack.c.l.s8.bf16 %v4190
    %v4282 = vunpack.c.l.s8.bf16 %v4191
    %v4283 = vunpack.c.l.s8.bf16 %v4192
    %v4284 = vunpack.c.l.s8.bf16 %v4193
    %v4285 = vunpack.c.h.s8.bf16 %v4187
    %v4286 = vunpack.c.h.s8.bf16 %v4188
    %v4287 = vunpack.c.h.s8.bf16 %v4189
    %v4288 = vunpack.c.h.s8.bf16 %v4190
    %v4289 = vunpack.c.h.s8.bf16 %v4191
    %v4290 = vunpack.c.h.s8.bf16 %v4192
    %v4291 = vunpack.c.h.s8.bf16 %v4193
    %v4292 = vunpack.c.l.s8.bf16 %v4194
    %v4293 = vunpack.c.l.s8.bf16 %v4195
    %v4294 = vunpack.c.l.s8.bf16 %v4196
    %v4295 = vunpack.c.l.s8.bf16 %v4197
    %v4296 = vunpack.c.l.s8.bf16 %v4198
    %v4297 = vunpack.c.l.s8.bf16 %v4199
    %v4298 = vunpack.c.l.s8.bf16 %v4200
    %v4299 = vunpack.c.h.s8.bf16 %v4194
    %v4300 = vunpack.c.h.s8.bf16 %v4195
    %v4301 = vunpack.c.h.s8.bf16 %v4196
    %v4302 = vunpack.c.h.s8.bf16 %v4197
    %v4303 = vunpack.c.h.s8.bf16 %v4198
    %v4304 = vunpack.c.h.s8.bf16 %v4199
    %v4305 = vunpack.c.h.s8.bf16 %v4200
    %v4306 = vunpack.c.l.s8.bf16 %v4201
    %v4307 = vunpack.c.l.s8.bf16 %v4202
    %v4308 = vunpack.c.l.s8.bf16 %v4203
    %v4309 = vunpack.c.l.s8.bf16 %v4204
    %v4310 = vunpack.c.l.s8.bf16 %v4205
    %v4311 = vunpack.c.l.s8.bf16 %v4206
    %v4312 = vunpack.c.l.s8.bf16 %v4207
    %v4313 = vunpack.c.h.s8.bf16 %v4201
    %v4314 = vunpack.c.h.s8.bf16 %v4202
    %v4315 = vunpack.c.h.s8.bf16 %v4203
    %v4316 = vunpack.c.h.s8.bf16 %v4204
    %v4317 = vunpack.c.h.s8.bf16 %v4205
    %v4318 = vunpack.c.h.s8.bf16 %v4206
    %v4319 = vunpack.c.h.s8.bf16 %v4207
    %v4324 = vunpack.c.l.b16 %v4147
    %v4325 = vunpack.c.l.b16 %v4148
    %v4326 = vunpack.c.l.b16 %v4149
    %v4327 = vunpack.c.l.b16 %v4150
    %v4328 = vsel %vm3800, %v4326, %v4324
    %v4329 = vsel %vm3800, %v4327, %v4325
    %v4330 = vpack.c.b16 %v4328, %v4328
    %v4331 = vpack.c.b16 %v4329, %v4329
    %4334 = vmatprep.subr.bf16.mxu0 %v4209
    %4335 = vmatpush1.bf16.msra.mxu0 %v4208
    %4336 = vmatprep.subr.bf16.mxu0 %v4216
    %4337 = vmatpush1.bf16.msra.mxu0 %v4215
    %4338 = vmatprep.subr.bf16.mxu0 %v4223
    %4339 = vmatpush1.bf16.msra.mxu0 %v4222
    %4340 = vmatprep.subr.bf16.mxu0 %v4230
    %4341 = vmatpush1.bf16.msra.mxu0 %v4229
    %4342 = vmatprep.subr.bf16.mxu0 %v4237
    %4343 = vmatpush1.bf16.msra.mxu0 %v4236
    %4344 = vmatprep.subr.bf16.mxu0 %v4244
    %4345 = vmatpush1.bf16.msra.mxu0 %v4243
    %4346 = vmatprep.subr.bf16.mxu0 %v4251
    %4347 = vmatpush1.bf16.msra.mxu0 %v4250
    %4348 = vmatprep.subr.bf16.mxu0 %v4258
    %4349 = vmatpush1.bf16.msra.mxu0 %v4257
    %4350 = vmatprep.subr.bf16.mxu0 %v4265
    %4351 = vmatpush1.bf16.msra.mxu0 %v4264
    %4352 = vmatprep.subr.bf16.mxu0 %v4272
    %4353 = vmatpush1.bf16.msra.mxu0 %v4271
    %4354 = vmatprep.subr.bf16.mxu0 %v4279
    %4355 = vmatpush1.bf16.msra.mxu0 %v4278
    %4356 = vmatprep.subr.bf16.mxu0 %v4286
    %4357 = vmatpush1.bf16.msra.mxu0 %v4285
    %4358 = vmatprep.subr.bf16.mxu0 %v4293
    %4359 = vmatpush1.bf16.msra.mxu0 %v4292
    %4360 = vmatprep.subr.bf16.mxu0 %v4300
    %4361 = vmatpush1.bf16.msra.mxu0 %v4299
    %4362 = vmatprep.subr.bf16.mxu0 %v4307
    %4363 = vmatpush1.bf16.msra.mxu0 %v4306
    %4364 = vmatprep.subr.bf16.mxu0 %v4314
    %4365 = vmatpush1.bf16.msra.mxu0 %v4313
    %4366 = vmatprep.mubr.bf16.mxu0 %v4331
    %4367 = vmatmul.mubr.bf16.gmra.mrb[0].mxu0 %v4330
    %v4368 = vpop.f32.mrb[0].mxu0
    %v4369 = vadd.f32 0.0, %v4368
    %v4370 = vpop.f32.mrb[0].mxu0
    %v4371 = vadd.f32 0.0, %v4370
    %v4372 = vpop.f32.mrb[0].mxu0
    %v4373 = vpop.f32.mrb[0].mxu0
    %4374 = vdwg.mxu0
    %4375 = vmatprep.subr.bf16.mxu0 %v4211
    %4376 = vmatpush1.bf16.msra.mxu0 %v4210
    %4377 = vmatprep.subr.bf16.mxu0 %v4218
    %4378 = vmatpush1.bf16.msra.mxu0 %v4217
    %4379 = vmatprep.subr.bf16.mxu0 %v4225
    %4380 = vmatpush1.bf16.msra.mxu0 %v4224
    %4381 = vmatprep.subr.bf16.mxu0 %v4232
    %4382 = vmatpush1.bf16.msra.mxu0 %v4231
    %4383 = vmatprep.subr.bf16.mxu0 %v4239
    %4384 = vmatpush1.bf16.msra.mxu0 %v4238
    %4385 = vmatprep.subr.bf16.mxu0 %v4246
    %4386 = vmatpush1.bf16.msra.mxu0 %v4245
    %4387 = vmatprep.subr.bf16.mxu0 %v4253
    %4388 = vmatpush1.bf16.msra.mxu0 %v4252
    %4389 = vmatprep.subr.bf16.mxu0 %v4260
    %4390 = vmatpush1.bf16.msra.mxu0 %v4259
    %4391 = vmatprep.subr.bf16.mxu0 %v4267
    %4392 = vmatpush1.bf16.msra.mxu0 %v4266
    %4393 = vmatprep.subr.bf16.mxu0 %v4274
    %4394 = vmatpush1.bf16.msra.mxu0 %v4273
    %4395 = vmatprep.subr.bf16.mxu0 %v4281
    %4396 = vmatpush1.bf16.msra.mxu0 %v4280
    %4397 = vmatprep.subr.bf16.mxu0 %v4288
    %4398 = vmatpush1.bf16.msra.mxu0 %v4287
    %4399 = vmatprep.subr.bf16.mxu0 %v4295
    %4400 = vmatpush1.bf16.msra.mxu0 %v4294
    %4401 = vmatprep.subr.bf16.mxu0 %v4302
    %4402 = vmatpush1.bf16.msra.mxu0 %v4301
    %4403 = vmatprep.subr.bf16.mxu0 %v4309
    %4404 = vmatpush1.bf16.msra.mxu0 %v4308
    %4405 = vmatprep.subr.bf16.mxu0 %v4316
    %4406 = vmatpush1.bf16.msra.mxu0 %v4315
    %4407 = vmatprep.mubr.bf16.mxu0 %v4331
    %4408 = vmatmul.mubr.bf16.gmra.mrb[0].mxu0 %v4330
    %v4409 = vpop.f32.mrb[0].mxu0
    %v4410 = vadd.f32 0.0, %v4409
    %v4411 = vpop.f32.mrb[0].mxu0
    %v4412 = vadd.f32 0.0, %v4411
    %v4413 = vpop.f32.mrb[0].mxu0
    %v4414 = vpop.f32.mrb[0].mxu0
    %4415 = vdwg.mxu0
    %4416 = vmatprep.subr.bf16.mxu0 %v4213
    %4417 = vmatpush1.bf16.msra.mxu0 %v4212
    %4418 = vmatprep.subr.bf16.mxu0 %v4220
    %4419 = vmatpush1.bf16.msra.mxu0 %v4219
    %4420 = vmatprep.subr.bf16.mxu0 %v4227
    %4421 = vmatpush1.bf16.msra.mxu0 %v4226
    %4422 = vmatprep.subr.bf16.mxu0 %v4234
    %4423 = vmatpush1.bf16.msra.mxu0 %v4233
    %4424 = vmatprep.subr.bf16.mxu0 %v4241
    %4425 = vmatpush1.bf16.msra.mxu0 %v4240
    %4426 = vmatprep.subr.bf16.mxu0 %v4248
    %4427 = vmatpush1.bf16.msra.mxu0 %v4247
    %4428 = vmatprep.subr.bf16.mxu0 %v4255
    %4429 = vmatpush1.bf16.msra.mxu0 %v4254
    %4430 = vmatprep.subr.bf16.mxu0 %v4262
    %4431 = vmatpush1.bf16.msra.mxu0 %v4261
    %4432 = vmatprep.subr.bf16.mxu0 %v4269
    %4433 = vmatpush1.bf16.msra.mxu0 %v4268
    %4434 = vmatprep.subr.bf16.mxu0 %v4276
    %4435 = vmatpush1.bf16.msra.mxu0 %v4275
    %4436 = vmatprep.subr.bf16.mxu0 %v4283
    %4437 = vmatpush1.bf16.msra.mxu0 %v4282
    %4438 = vmatprep.subr.bf16.mxu0 %v4290
    %4439 = vmatpush1.bf16.msra.mxu0 %v4289
    %4440 = vmatprep.subr.bf16.mxu0 %v4297
    %4441 = vmatpush1.bf16.msra.mxu0 %v4296
    %4442 = vmatprep.subr.bf16.mxu0 %v4304
    %4443 = vmatpush1.bf16.msra.mxu0 %v4303
    %4444 = vmatprep.subr.bf16.mxu0 %v4311
    %4445 = vmatpush1.bf16.msra.mxu0 %v4310
    %4446 = vmatprep.subr.bf16.mxu0 %v4318
    %4447 = vmatpush1.bf16.msra.mxu0 %v4317
    %4448 = vmatprep.mubr.bf16.mxu0 %v4331
    %4449 = vmatmul.mubr.bf16.gmra.mrb[0].mxu0 %v4330
    %v4450 = vpop.f32.mrb[0].mxu0
    %v4451 = vadd.f32 0.0, %v4450
    %v4452 = vpop.f32.mrb[0].mxu0
    %v4453 = vadd.f32 0.0, %v4452
    %v4454 = vpop.f32.mrb[0].mxu0
    %v4455 = vpop.f32.mrb[0].mxu0
    %4456 = vdwg.mxu0
    %4457 = vmatprep.subr.bf16.mxu0 0
    %4458 = vmatpush1.bf16.msra.mxu0 %v4214
    %4459 = vmatprep.subr.bf16.mxu0 0
    %4460 = vmatpush1.bf16.msra.mxu0 %v4221
    %4461 = vmatprep.subr.bf16.mxu0 0
    %4462 = vmatpush1.bf16.msra.mxu0 %v4228
    %4463 = vmatprep.subr.bf16.mxu0 0
    %4464 = vmatpush1.bf16.msra.mxu0 %v4235
    %4465 = vmatprep.subr.bf16.mxu0 0
    %4466 = vmatpush1.bf16.msra.mxu0 %v4242
    %4467 = vmatprep.subr.bf16.mxu0 0
    %4468 = vmatpush1.bf16.msra.mxu0 %v4249
    %4469 = vmatprep.subr.bf16.mxu0 0
    %4470 = vmatpush1.bf16.msra.mxu0 %v4256
    %4471 = vmatprep.subr.bf16.mxu0 0
    %4472 = vmatpush1.bf16.msra.mxu0 %v4263
    %4473 = vmatprep.subr.bf16.mxu0 0
    %4474 = vmatpush1.bf16.msra.mxu0 %v4270
    %4475 = vmatprep.subr.bf16.mxu0 0
    %4476 = vmatpush1.bf16.msra.mxu0 %v4277
    %4477 = vmatprep.subr.bf16.mxu0 0
    %4478 = vmatpush1.bf16.msra.mxu0 %v4284
    %4479 = vmatprep.subr.bf16.mxu0 0
    %4480 = vmatpush1.bf16.msra.mxu0 %v4291
    %4481 = vmatprep.subr.bf16.mxu0 0
    %4482 = vmatpush1.bf16.msra.mxu0 %v4298
    %4483 = vmatprep.subr.bf16.mxu0 0
    %4484 = vmatpush1.bf16.msra.mxu0 %v4305
    %4485 = vmatprep.subr.bf16.mxu0 0
    %4486 = vmatpush1.bf16.msra.mxu0 %v4312
    %4487 = vmatprep.subr.bf16.mxu0 0
    %4488 = vmatpush1.bf16.msra.mxu0 %v4319
    %4489 = vmatprep.mubr.bf16.mxu0 %v4331
    %4490 = vmatmul.mubr.bf16.gmra.mrb[0].mxu0 %v4330
    %v4491 = vpop.f32.mrb[0].mxu0
    %v4492 = vadd.f32 0.0, %v4491
    %v4493 = vpop.f32.mrb[0].mxu0
    %v4494 = vpop.f32.mrb[0].mxu0
    %v4495 = vpop.f32.mrb[0].mxu0
    %4496 = vdwg.mxu0
    %v4497 = vadd.f32 %v4019, %v4369
    %v4498 = vadd.f32 %v4021, %v4371
    %v4499 = vadd.f32 %v4060, %v4410
    %v4500 = vadd.f32 %v4062, %v4412
    %v4501 = vadd.f32 %v4101, %v4451
    %v4502 = vadd.f32 %v4103, %v4453
    %v4503 = vadd.f32 %v4142, %v4492
    %v4504 = vpack.c.bf16 %v3294, %v3294
    %v4505 = vpack.c.bf16 %v3301, %v3301
    %v4506 = vpack.c.bf16 %v3392, %v3392
    %v4507 = vpack.c.bf16 %v3399, %v3399
    %s4508 = scalar_lea.vmem [#allocation2], 1344
    %v4509 = vld [vmem:[%s4508] sm:$0xff]
    %v4510 = vld [vmem:[%s4508 + $0x8] sm:$0xff]
    %v4511 = vld [vmem:[%s4508 + $0x10] sm:$0xff]
    %v4512 = vld [vmem:[%s4508 + $0x18] sm:$0xff]
    %v4513 = vld [vmem:[%s4508 + $0x20] sm:$0xff]
    %v4514 = vld [vmem:[%s4508 + $0x28] sm:$0xff]
    %v4515 = vld [vmem:[%s4508 + $0x30] sm:$0xff]
    %v4516 = vld [vmem:[%s4508 + $0x38] sm:$0xff]
    %v4517 = vld [vmem:[%s4508 + $0x40] sm:$0xff]
    %v4518 = vld [vmem:[%s4508 + $0x48] sm:$0xff]
    %v4519 = vld [vmem:[%s4508 + $0x50] sm:$0xff]
    %v4520 = vld [vmem:[%s4508 + $0x58] sm:$0xff]
    %v4521 = vld [vmem:[%s4508 + $0x60] sm:$0xff]
    %v4522 = vld [vmem:[%s4508 + $0x68] sm:$0xff]
    %v4523 = vld [vmem:[%s4508 + $0x70] sm:$0xff]
    %v4524 = vld [vmem:[%s4508 + $0x78] sm:$0xff]
    %v4525 = vld [vmem:[%s4508 + $0x80] sm:$0xff]
    %v4526 = vld [vmem:[%s4508 + $0x88] sm:$0xff]
    %v4527 = vld [vmem:[%s4508 + $0x90] sm:$0xff]
    %v4528 = vld [vmem:[%s4508 + $0x98] sm:$0xff]
    %v4529 = vld [vmem:[%s4508 + $0xa0] sm:$0xff]
    %v4530 = vld [vmem:[%s4508 + $0xa8] sm:$0xff]
    %v4531 = vld [vmem:[%s4508 + $0xb0] sm:$0xff]
    %v4532 = vld [vmem:[%s4508 + $0xb8] sm:$0xff]
    %v4533 = vld [vmem:[%s4508 + $0xc0] sm:$0xff]
    %v4534 = vld [vmem:[%s4508 + $0xc8] sm:$0xff]
    %v4535 = vld [vmem:[%s4508 + $0xd0] sm:$0xff]
    %v4536 = vld [vmem:[%s4508 + $0xd8] sm:$0xff]
    %v4537 = vld [vmem:[%s4508 + $0xe0] sm:$0xff]
    %v4538 = vld [vmem:[%s4508 + $0xe8] sm:$0xff]
    %v4539 = vld [vmem:[%s4508 + $0xf0] sm:$0xff]
    %v4540 = vld [vmem:[%s4508 + $0xf8] sm:$0xff]
    %v4541 = vld [vmem:[%s4508 + $0x100] sm:$0xff]
    %v4542 = vld [vmem:[%s4508 + $0x108] sm:$0xff]
    %v4543 = vld [vmem:[%s4508 + $0x110] sm:$0xff]
    %v4544 = vld [vmem:[%s4508 + $0x118] sm:$0xff]
    %v4545 = vld [vmem:[%s4508 + $0x120] sm:$0xff]
    %v4546 = vld [vmem:[%s4508 + $0x128] sm:$0xff]
    %v4547 = vld [vmem:[%s4508 + $0x130] sm:$0xff]
    %v4548 = vld [vmem:[%s4508 + $0x138] sm:$0xff]
    %v4549 = vld [vmem:[%s4508 + $0x140] sm:$0xff]
    %v4550 = vld [vmem:[%s4508 + $0x148] sm:$0xff]
    %v4551 = vld [vmem:[%s4508 + $0x150] sm:$0xff]
    %v4552 = vld [vmem:[%s4508 + $0x158] sm:$0xff]
    %v4553 = vld [vmem:[%s4508 + $0x160] sm:$0xff]
    %v4554 = vld [vmem:[%s4508 + $0x168] sm:$0xff]
    %v4555 = vld [vmem:[%s4508 + $0x170] sm:$0xff]
    %v4556 = vld [vmem:[%s4508 + $0x178] sm:$0xff]
    %v4557 = vld [vmem:[%s4508 + $0x180] sm:$0xff]
    %v4558 = vld [vmem:[%s4508 + $0x188] sm:$0xff]
    %v4559 = vld [vmem:[%s4508 + $0x190] sm:$0xff]
    %v4560 = vld [vmem:[%s4508 + $0x198] sm:$0xff]
    %v4561 = vld [vmem:[%s4508 + $0x1a0] sm:$0xff]
    %v4562 = vld [vmem:[%s4508 + $0x1a8] sm:$0xff]
    %v4563 = vld [vmem:[%s4508 + $0x1b0] sm:$0xff]
    %v4564 = vld [vmem:[%s4508 + $0x1b8] sm:$0xff]
    %v4565 = vunpack.c.l.s8.bf16 %v4509
    %v4566 = vunpack.c.l.s8.bf16 %v4510
    %v4567 = vunpack.c.l.s8.bf16 %v4511
    %v4568 = vunpack.c.l.s8.bf16 %v4512
    %v4569 = vunpack.c.l.s8.bf16 %v4513
    %v4570 = vunpack.c.l.s8.bf16 %v4514
    %v4571 = vunpack.c.l.s8.bf16 %v4515
    %v4572 = vunpack.c.h.s8.bf16 %v4509
    %v4573 = vunpack.c.h.s8.bf16 %v4510
    %v4574 = vunpack.c.h.s8.bf16 %v4511
    %v4575 = vunpack.c.h.s8.bf16 %v4512
    %v4576 = vunpack.c.h.s8.bf16 %v4513
    %v4577 = vunpack.c.h.s8.bf16 %v4514
    %v4578 = vunpack.c.h.s8.bf16 %v4515
    %v4579 = vunpack.c.l.s8.bf16 %v4516
    %v4580 = vunpack.c.l.s8.bf16 %v4517
    %v4581 = vunpack.c.l.s8.bf16 %v4518
    %v4582 = vunpack.c.l.s8.bf16 %v4519
    %v4583 = vunpack.c.l.s8.bf16 %v4520
    %v4584 = vunpack.c.l.s8.bf16 %v4521
    %v4585 = vunpack.c.l.s8.bf16 %v4522
    %v4586 = vunpack.c.h.s8.bf16 %v4516
    %v4587 = vunpack.c.h.s8.bf16 %v4517
    %v4588 = vunpack.c.h.s8.bf16 %v4518
    %v4589 = vunpack.c.h.s8.bf16 %v4519
    %v4590 = vunpack.c.h.s8.bf16 %v4520
    %v4591 = vunpack.c.h.s8.bf16 %v4521
    %v4592 = vunpack.c.h.s8.bf16 %v4522
    %v4593 = vunpack.c.l.s8.bf16 %v4523
    %v4594 = vunpack.c.l.s8.bf16 %v4524
    %v4595 = vunpack.c.l.s8.bf16 %v4525
    %v4596 = vunpack.c.l.s8.bf16 %v4526
    %v4597 = vunpack.c.l.s8.bf16 %v4527
    %v4598 = vunpack.c.l.s8.bf16 %v4528
    %v4599 = vunpack.c.l.s8.bf16 %v4529
    %v4600 = vunpack.c.h.s8.bf16 %v4523
    %v4601 = vunpack.c.h.s8.bf16 %v4524
    %v4602 = vunpack.c.h.s8.bf16 %v4525
    %v4603 = vunpack.c.h.s8.bf16 %v4526
    %v4604 = vunpack.c.h.s8.bf16 %v4527
    %v4605 = vunpack.c.h.s8.bf16 %v4528
    %v4606 = vunpack.c.h.s8.bf16 %v4529
    %v4607 = vunpack.c.l.s8.bf16 %v4530
    %v4608 = vunpack.c.l.s8.bf16 %v4531
    %v4609 = vunpack.c.l.s8.bf16 %v4532
    %v4610 = vunpack.c.l.s8.bf16 %v4533
    %v4611 = vunpack.c.l.s8.bf16 %v4534
    %v4612 = vunpack.c.l.s8.bf16 %v4535
    %v4613 = vunpack.c.l.s8.bf16 %v4536
    %v4614 = vunpack.c.h.s8.bf16 %v4530
    %v4615 = vunpack.c.h.s8.bf16 %v4531
    %v4616 = vunpack.c.h.s8.bf16 %v4532
    %v4617 = vunpack.c.h.s8.bf16 %v4533
    %v4618 = vunpack.c.h.s8.bf16 %v4534
    %v4619 = vunpack.c.h.s8.bf16 %v4535
    %v4620 = vunpack.c.h.s8.bf16 %v4536
    %v4621 = vunpack.c.l.s8.bf16 %v4537
    %v4622 = vunpack.c.l.s8.bf16 %v4538
    %v4623 = vunpack.c.l.s8.bf16 %v4539
    %v4624 = vunpack.c.l.s8.bf16 %v4540
    %v4625 = vunpack.c.l.s8.bf16 %v4541
    %v4626 = vunpack.c.l.s8.bf16 %v4542
    %v4627 = vunpack.c.l.s8.bf16 %v4543
    %v4628 = vunpack.c.h.s8.bf16 %v4537
    %v4629 = vunpack.c.h.s8.bf16 %v4538
    %v4630 = vunpack.c.h.s8.bf16 %v4539
    %v4631 = vunpack.c.h.s8.bf16 %v4540
    %v4632 = vunpack.c.h.s8.bf16 %v4541
    %v4633 = vunpack.c.h.s8.bf16 %v4542
    %v4634 = vunpack.c.h.s8.bf16 %v4543
    %v4635 = vunpack.c.l.s8.bf16 %v4544
    %v4636 = vunpack.c.l.s8.bf16 %v4545
    %v4637 = vunpack.c.l.s8.bf16 %v4546
    %v4638 = vunpack.c.l.s8.bf16 %v4547
    %v4639 = vunpack.c.l.s8.bf16 %v4548
    %v4640 = vunpack.c.l.s8.bf16 %v4549
    %v4641 = vunpack.c.l.s8.bf16 %v4550
    %v4642 = vunpack.c.h.s8.bf16 %v4544
    %v4643 = vunpack.c.h.s8.bf16 %v4545
    %v4644 = vunpack.c.h.s8.bf16 %v4546
    %v4645 = vunpack.c.h.s8.bf16 %v4547
    %v4646 = vunpack.c.h.s8.bf16 %v4548
    %v4647 = vunpack.c.h.s8.bf16 %v4549
    %v4648 = vunpack.c.h.s8.bf16 %v4550
    %v4649 = vunpack.c.l.s8.bf16 %v4551
    %v4650 = vunpack.c.l.s8.bf16 %v4552
    %v4651 = vunpack.c.l.s8.bf16 %v4553
    %v4652 = vunpack.c.l.s8.bf16 %v4554
    %v4653 = vunpack.c.l.s8.bf16 %v4555
    %v4654 = vunpack.c.l.s8.bf16 %v4556
    %v4655 = vunpack.c.l.s8.bf16 %v4557
    %v4656 = vunpack.c.h.s8.bf16 %v4551
    %v4657 = vunpack.c.h.s8.bf16 %v4552
    %v4658 = vunpack.c.h.s8.bf16 %v4553
    %v4659 = vunpack.c.h.s8.bf16 %v4554
    %v4660 = vunpack.c.h.s8.bf16 %v4555
    %v4661 = vunpack.c.h.s8.bf16 %v4556
    %v4662 = vunpack.c.h.s8.bf16 %v4557
    %v4663 = vunpack.c.l.s8.bf16 %v4558
    %v4664 = vunpack.c.l.s8.bf16 %v4559
    %v4665 = vunpack.c.l.s8.bf16 %v4560
    %v4666 = vunpack.c.l.s8.bf16 %v4561
    %v4667 = vunpack.c.l.s8.bf16 %v4562
    %v4668 = vunpack.c.l.s8.bf16 %v4563
    %v4669 = vunpack.c.l.s8.bf16 %v4564
    %v4670 = vunpack.c.h.s8.bf16 %v4558
    %v4671 = vunpack.c.h.s8.bf16 %v4559
    %v4672 = vunpack.c.h.s8.bf16 %v4560
    %v4673 = vunpack.c.h.s8.bf16 %v4561
    %v4674 = vunpack.c.h.s8.bf16 %v4562
    %v4675 = vunpack.c.h.s8.bf16 %v4563
    %v4676 = vunpack.c.h.s8.bf16 %v4564
    %v4681 = vunpack.c.l.b16 %v4504
    %v4682 = vunpack.c.l.b16 %v4505
    %v4683 = vunpack.c.l.b16 %v4506
    %v4684 = vunpack.c.l.b16 %v4507
    %v4685 = vsel %vm3800, %v4683, %v4681
    %v4686 = vsel %vm3800, %v4684, %v4682
    %v4687 = vpack.c.b16 %v4685, %v4685
    %v4688 = vpack.c.b16 %v4686, %v4686
    %4691 = vmatprep.subr.bf16.mxu0 %v4566
    %4692 = vmatpush1.bf16.msra.mxu0 %v4565
    %4693 = vmatprep.subr.bf16.mxu0 %v4573
    %4694 = vmatpush1.bf16.msra.mxu0 %v4572
    %4695 = vmatprep.subr.bf16.mxu0 %v4580
    %4696 = vmatpush1.bf16.msra.mxu0 %v4579
    %4697 = vmatprep.subr.bf16.mxu0 %v4587
    %4698 = vmatpush1.bf16.msra.mxu0 %v4586
    %4699 = vmatprep.subr.bf16.mxu0 %v4594
    %4700 = vmatpush1.bf16.msra.mxu0 %v4593
    %4701 = vmatprep.subr.bf16.mxu0 %v4601
    %4702 = vmatpush1.bf16.msra.mxu0 %v4600
    %4703 = vmatprep.subr.bf16.mxu0 %v4608
    %4704 = vmatpush1.bf16.msra.mxu0 %v4607
    %4705 = vmatprep.subr.bf16.mxu0 %v4615
    %4706 = vmatpush1.bf16.msra.mxu0 %v4614
    %4707 = vmatprep.subr.bf16.mxu0 %v4622
    %4708 = vmatpush1.bf16.msra.mxu0 %v4621
    %4709 = vmatprep.subr.bf16.mxu0 %v4629
    %4710 = vmatpush1.bf16.msra.mxu0 %v4628
    %4711 = vmatprep.subr.bf16.mxu0 %v4636
    %4712 = vmatpush1.bf16.msra.mxu0 %v4635
    %4713 = vmatprep.subr.bf16.mxu0 %v4643
    %4714 = vmatpush1.bf16.msra.mxu0 %v4642
    %4715 = vmatprep.subr.bf16.mxu0 %v4650
    %4716 = vmatpush1.bf16.msra.mxu0 %v4649
    %4717 = vmatprep.subr.bf16.mxu0 %v4657
    %4718 = vmatpush1.bf16.msra.mxu0 %v4656
    %4719 = vmatprep.subr.bf16.mxu0 %v4664
    %4720 = vmatpush1.bf16.msra.mxu0 %v4663
    %4721 = vmatprep.subr.bf16.mxu0 %v4671
    %4722 = vmatpush1.bf16.msra.mxu0 %v4670
    %4723 = vmatprep.mubr.bf16.mxu0 %v4688
    %4724 = vmatmul.mubr.bf16.gmra.mrb[0].mxu0 %v4687
    %v4725 = vpop.f32.mrb[0].mxu0
    %v4726 = vadd.f32 0.0, %v4725
    %v4727 = vpop.f32.mrb[0].mxu0
    %v4728 = vadd.f32 0.0, %v4727
    %v4729 = vpop.f32.mrb[0].mxu0
    %v4730 = vpop.f32.mrb[0].mxu0
    %4731 = vdwg.mxu0
    %4732 = vmatprep.subr.bf16.mxu0 %v4568
    %4733 = vmatpush1.bf16.msra.mxu0 %v4567
    %4734 = vmatprep.subr.bf16.mxu0 %v4575
    %4735 = vmatpush1.bf16.msra.mxu0 %v4574
    %4736 = vmatprep.subr.bf16.mxu0 %v4582
    %4737 = vmatpush1.bf16.msra.mxu0 %v4581
    %4738 = vmatprep.subr.bf16.mxu0 %v4589
    %4739 = vmatpush1.bf16.msra.mxu0 %v4588
    %4740 = vmatprep.subr.bf16.mxu0 %v4596
    %4741 = vmatpush1.bf16.msra.mxu0 %v4595
    %4742 = vmatprep.subr.bf16.mxu0 %v4603
    %4743 = vmatpush1.bf16.msra.mxu0 %v4602
    %4744 = vmatprep.subr.bf16.mxu0 %v4610
    %4745 = vmatpush1.bf16.msra.mxu0 %v4609
    %4746 = vmatprep.subr.bf16.mxu0 %v4617
    %4747 = vmatpush1.bf16.msra.mxu0 %v4616
    %4748 = vmatprep.subr.bf16.mxu0 %v4624
    %4749 = vmatpush1.bf16.msra.mxu0 %v4623
    %4750 = vmatprep.subr.bf16.mxu0 %v4631
    %4751 = vmatpush1.bf16.msra.mxu0 %v4630
    %4752 = vmatprep.subr.bf16.mxu0 %v4638
    %4753 = vmatpush1.bf16.msra.mxu0 %v4637
    %4754 = vmatprep.subr.bf16.mxu0 %v4645
    %4755 = vmatpush1.bf16.msra.mxu0 %v4644
    %4756 = vmatprep.subr.bf16.mxu0 %v4652
    %4757 = vmatpush1.bf16.msra.mxu0 %v4651
    %4758 = vmatprep.subr.bf16.mxu0 %v4659
    %4759 = vmatpush1.bf16.msra.mxu0 %v4658
    %4760 = vmatprep.subr.bf16.mxu0 %v4666
    %4761 = vmatpush1.bf16.msra.mxu0 %v4665
    %4762 = vmatprep.subr.bf16.mxu0 %v4673
    %4763 = vmatpush1.bf16.msra.mxu0 %v4672
    %4764 = vmatprep.mubr.bf16.mxu0 %v4688
    %4765 = vmatmul.mubr.bf16.gmra.mrb[0].mxu0 %v4687
    %v4766 = vpop.f32.mrb[0].mxu0
    %v4767 = vadd.f32 0.0, %v4766
    %v4768 = vpop.f32.mrb[0].mxu0
    %v4769 = vadd.f32 0.0, %v4768
    %v4770 = vpop.f32.mrb[0].mxu0
    %v4771 = vpop.f32.mrb[0].mxu0
    %4772 = vdwg.mxu0
    %4773 = vmatprep.subr.bf16.mxu0 %v4570
    %4774 = vmatpush1.bf16.msra.mxu0 %v4569
    %4775 = vmatprep.subr.bf16.mxu0 %v4577
    %4776 = vmatpush1.bf16.msra.mxu0 %v4576
    %4777 = vmatprep.subr.bf16.mxu0 %v4584
    %4778 = vmatpush1.bf16.msra.mxu0 %v4583
    %4779 = vmatprep.subr.bf16.mxu0 %v4591
    %4780 = vmatpush1.bf16.msra.mxu0 %v4590
    %4781 = vmatprep.subr.bf16.mxu0 %v4598
    %4782 = vmatpush1.bf16.msra.mxu0 %v4597
    %4783 = vmatprep.subr.bf16.mxu0 %v4605
    %4784 = vmatpush1.bf16.msra.mxu0 %v4604
    %4785 = vmatprep.subr.bf16.mxu0 %v4612
    %4786 = vmatpush1.bf16.msra.mxu0 %v4611
    %4787 = vmatprep.subr.bf16.mxu0 %v4619
    %4788 = vmatpush1.bf16.msra.mxu0 %v4618
    %4789 = vmatprep.subr.bf16.mxu0 %v4626
    %4790 = vmatpush1.bf16.msra.mxu0 %v4625
    %4791 = vmatprep.subr.bf16.mxu0 %v4633
    %4792 = vmatpush1.bf16.msra.mxu0 %v4632
    %4793 = vmatprep.subr.bf16.mxu0 %v4640
    %4794 = vmatpush1.bf16.msra.mxu0 %v4639
    %4795 = vmatprep.subr.bf16.mxu0 %v4647
    %4796 = vmatpush1.bf16.msra.mxu0 %v4646
    %4797 = vmatprep.subr.bf16.mxu0 %v4654
    %4798 = vmatpush1.bf16.msra.mxu0 %v4653
    %4799 = vmatprep.subr.bf16.mxu0 %v4661
    %4800 = vmatpush1.bf16.msra.mxu0 %v4660
    %4801 = vmatprep.subr.bf16.mxu0 %v4668
    %4802 = vmatpush1.bf16.msra.mxu0 %v4667
    %4803 = vmatprep.subr.bf16.mxu0 %v4675
    %4804 = vmatpush1.bf16.msra.mxu0 %v4674
    %4805 = vmatprep.mubr.bf16.mxu0 %v4688
    %4806 = vmatmul.mubr.bf16.gmra.mrb[0].mxu0 %v4687
    %v4807 = vpop.f32.mrb[0].mxu0
    %v4808 = vadd.f32 0.0, %v4807
    %v4809 = vpop.f32.mrb[0].mxu0
    %v4810 = vadd.f32 0.0, %v4809
    %v4811 = vpop.f32.mrb[0].mxu0
    %v4812 = vpop.f32.mrb[0].mxu0
    %4813 = vdwg.mxu0
    %4814 = vmatprep.subr.bf16.mxu0 0
    %4815 = vmatpush1.bf16.msra.mxu0 %v4571
    %4816 = vmatprep.subr.bf16.mxu0 0
    %4817 = vmatpush1.bf16.msra.mxu0 %v4578
    %4818 = vmatprep.subr.bf16.mxu0 0
    %4819 = vmatpush1.bf16.msra.mxu0 %v4585
    %4820 = vmatprep.subr.bf16.mxu0 0
    %4821 = vmatpush1.bf16.msra.mxu0 %v4592
    %4822 = vmatprep.subr.bf16.mxu0 0
    %4823 = vmatpush1.bf16.msra.mxu0 %v4599
    %4824 = vmatprep.subr.bf16.mxu0 0
    %4825 = vmatpush1.bf16.msra.mxu0 %v4606
    %4826 = vmatprep.subr.bf16.mxu0 0
    %4827 = vmatpush1.bf16.msra.mxu0 %v4613
    %4828 = vmatprep.subr.bf16.mxu0 0
    %4829 = vmatpush1.bf16.msra.mxu0 %v4620
    %4830 = vmatprep.subr.bf16.mxu0 0
    %4831 = vmatpush1.bf16.msra.mxu0 %v4627
    %4832 = vmatprep.subr.bf16.mxu0 0
    %4833 = vmatpush1.bf16.msra.mxu0 %v4634
    %4834 = vmatprep.subr.bf16.mxu0 0
    %4835 = vmatpush1.bf16.msra.mxu0 %v4641
    %4836 = vmatprep.subr.bf16.mxu0 0
    %4837 = vmatpush1.bf16.msra.mxu0 %v4648
    %4838 = vmatprep.subr.bf16.mxu0 0
    %4839 = vmatpush1.bf16.msra.mxu0 %v4655
    %4840 = vmatprep.subr.bf16.mxu0 0
    %4841 = vmatpush1.bf16.msra.mxu0 %v4662
    %4842 = vmatprep.subr.bf16.mxu0 0
    %4843 = vmatpush1.bf16.msra.mxu0 %v4669
    %4844 = vmatprep.subr.bf16.mxu0 0
    %4845 = vmatpush1.bf16.msra.mxu0 %v4676
    %4846 = vmatprep.mubr.bf16.mxu0 %v4688
    %4847 = vmatmul.mubr.bf16.gmra.mrb[0].mxu0 %v4687
    %v4848 = vpop.f32.mrb[0].mxu0
    %v4849 = vadd.f32 0.0, %v4848
    %v4850 = vpop.f32.mrb[0].mxu0
    %v4851 = vpop.f32.mrb[0].mxu0
    %v4852 = vpop.f32.mrb[0].mxu0
    %4853 = vdwg.mxu0
    %v4854 = vadd.f32 %v4497, %v4726
    %v4855 = vadd.f32 %v4498, %v4728
    %v4856 = vadd.f32 %v4499, %v4767
    %v4857 = vadd.f32 %v4500, %v4769
    %v4858 = vadd.f32 %v4501, %v4808
    %v4859 = vadd.f32 %v4502, %v4810
    %v4860 = vadd.f32 %v4503, %v4849
    %v4861 = vpack.c.bf16 %v3308, %v3308
    %v4862 = vpack.c.bf16 %v3315, %v3315
    %v4863 = vpack.c.bf16 %v3406, %v3406
    %v4864 = vpack.c.bf16 %v3413, %v3413
    %s4865 = scalar_lea.vmem [#allocation2], 1792
    %v4866 = vld [vmem:[%s4865] sm:$0xff]
    %v4867 = vld [vmem:[%s4865 + $0x8] sm:$0xff]
    %v4868 = vld [vmem:[%s4865 + $0x10] sm:$0xff]
    %v4869 = vld [vmem:[%s4865 + $0x18] sm:$0xff]
    %v4870 = vld [vmem:[%s4865 + $0x20] sm:$0xff]
    %v4871 = vld [vmem:[%s4865 + $0x28] sm:$0xff]
    %v4872 = vld [vmem:[%s4865 + $0x30] sm:$0xff]
    %v4873 = vld [vmem:[%s4865 + $0x38] sm:$0xff]
    %v4874 = vld [vmem:[%s4865 + $0x40] sm:$0xff]
    %v4875 = vld [vmem:[%s4865 + $0x48] sm:$0xff]
    %v4876 = vld [vmem:[%s4865 + $0x50] sm:$0xff]
    %v4877 = vld [vmem:[%s4865 + $0x58] sm:$0xff]
    %v4878 = vld [vmem:[%s4865 + $0x60] sm:$0xff]
    %v4879 = vld [vmem:[%s4865 + $0x68] sm:$0xff]
    %v4880 = vld [vmem:[%s4865 + $0x70] sm:$0xff]
    %v4881 = vld [vmem:[%s4865 + $0x78] sm:$0xff]
    %v4882 = vld [vmem:[%s4865 + $0x80] sm:$0xff]
    %v4883 = vld [vmem:[%s4865 + $0x88] sm:$0xff]
    %v4884 = vld [vmem:[%s4865 + $0x90] sm:$0xff]
    %v4885 = vld [vmem:[%s4865 + $0x98] sm:$0xff]
    %v4886 = vld [vmem:[%s4865 + $0xa0] sm:$0xff]
    %v4887 = vld [vmem:[%s4865 + $0xa8] sm:$0xff]
    %v4888 = vld [vmem:[%s4865 + $0xb0] sm:$0xff]
    %v4889 = vld [vmem:[%s4865 + $0xb8] sm:$0xff]
    %v4890 = vld [vmem:[%s4865 + $0xc0] sm:$0xff]
    %v4891 = vld [vmem:[%s4865 + $0xc8] sm:$0xff]
    %v4892 = vld [vmem:[%s4865 + $0xd0] sm:$0xff]
    %v4893 = vld [vmem:[%s4865 + $0xd8] sm:$0xff]
    %v4894 = vld [vmem:[%s4865 + $0xe0] sm:$0xff]
    %v4895 = vld [vmem:[%s4865 + $0xe8] sm:$0xff]
    %v4896 = vld [vmem:[%s4865 + $0xf0] sm:$0xff]
    %v4897 = vld [vmem:[%s4865 + $0xf8] sm:$0xff]
    %v4898 = vld [vmem:[%s4865 + $0x100] sm:$0xff]
    %v4899 = vld [vmem:[%s4865 + $0x108] sm:$0xff]
    %v4900 = vld [vmem:[%s4865 + $0x110] sm:$0xff]
    %v4901 = vld [vmem:[%s4865 + $0x118] sm:$0xff]
    %v4902 = vld [vmem:[%s4865 + $0x120] sm:$0xff]
    %v4903 = vld [vmem:[%s4865 + $0x128] sm:$0xff]
    %v4904 = vld [vmem:[%s4865 + $0x130] sm:$0xff]
    %v4905 = vld [vmem:[%s4865 + $0x138] sm:$0xff]
    %v4906 = vld [vmem:[%s4865 + $0x140] sm:$0xff]
    %v4907 = vld [vmem:[%s4865 + $0x148] sm:$0xff]
    %v4908 = vld [vmem:[%s4865 + $0x150] sm:$0xff]
    %v4909 = vld [vmem:[%s4865 + $0x158] sm:$0xff]
    %v4910 = vld [vmem:[%s4865 + $0x160] sm:$0xff]
    %v4911 = vld [vmem:[%s4865 + $0x168] sm:$0xff]
    %v4912 = vld [vmem:[%s4865 + $0x170] sm:$0xff]
    %v4913 = vld [vmem:[%s4865 + $0x178] sm:$0xff]
    %v4914 = vld [vmem:[%s4865 + $0x180] sm:$0xff]
    %v4915 = vld [vmem:[%s4865 + $0x188] sm:$0xff]
    %v4916 = vld [vmem:[%s4865 + $0x190] sm:$0xff]
    %v4917 = vld [vmem:[%s4865 + $0x198] sm:$0xff]
    %v4918 = vld [vmem:[%s4865 + $0x1a0] sm:$0xff]
    %v4919 = vld [vmem:[%s4865 + $0x1a8] sm:$0xff]
    %v4920 = vld [vmem:[%s4865 + $0x1b0] sm:$0xff]
    %v4921 = vld [vmem:[%s4865 + $0x1b8] sm:$0xff]
    %v4922 = vunpack.c.l.s8.bf16 %v4866
    %v4923 = vunpack.c.l.s8.bf16 %v4867
    %v4924 = vunpack.c.l.s8.bf16 %v4868
    %v4925 = vunpack.c.l.s8.bf16 %v4869
    %v4926 = vunpack.c.l.s8.bf16 %v4870
    %v4927 = vunpack.c.l.s8.bf16 %v4871
    %v4928 = vunpack.c.l.s8.bf16 %v4872
    %v4929 = vunpack.c.h.s8.bf16 %v4866
    %v4930 = vunpack.c.h.s8.bf16 %v4867
    %v4931 = vunpack.c.h.s8.bf16 %v4868
    %v4932 = vunpack.c.h.s8.bf16 %v4869
    %v4933 = vunpack.c.h.s8.bf16 %v4870
    %v4934 = vunpack.c.h.s8.bf16 %v4871
    %v4935 = vunpack.c.h.s8.bf16 %v4872
    %v4936 = vunpack.c.l.s8.bf16 %v4873
    %v4937 = vunpack.c.l.s8.bf16 %v4874
    %v4938 = vunpack.c.l.s8.bf16 %v4875
    %v4939 = vunpack.c.l.s8.bf16 %v4876
    %v4940 = vunpack.c.l.s8.bf16 %v4877
    %v4941 = vunpack.c.l.s8.bf16 %v4878
    %v4942 = vunpack.c.l.s8.bf16 %v4879
    %v4943 = vunpack.c.h.s8.bf16 %v4873
    %v4944 = vunpack.c.h.s8.bf16 %v4874
    %v4945 = vunpack.c.h.s8.bf16 %v4875
    %v4946 = vunpack.c.h.s8.bf16 %v4876
    %v4947 = vunpack.c.h.s8.bf16 %v4877
    %v4948 = vunpack.c.h.s8.bf16 %v4878
    %v4949 = vunpack.c.h.s8.bf16 %v4879
    %v4950 = vunpack.c.l.s8.bf16 %v4880
    %v4951 = vunpack.c.l.s8.bf16 %v4881
    %v4952 = vunpack.c.l.s8.bf16 %v4882
    %v4953 = vunpack.c.l.s8.bf16 %v4883
    %v4954 = vunpack.c.l.s8.bf16 %v4884
    %v4955 = vunpack.c.l.s8.bf16 %v4885
    %v4956 = vunpack.c.l.s8.bf16 %v4886
    %v4957 = vunpack.c.h.s8.bf16 %v4880
    %v4958 = vunpack.c.h.s8.bf16 %v4881
    %v4959 = vunpack.c.h.s8.bf16 %v4882
    %v4960 = vunpack.c.h.s8.bf16 %v4883
    %v4961 = vunpack.c.h.s8.bf16 %v4884
    %v4962 = vunpack.c.h.s8.bf16 %v4885
    %v4963 = vunpack.c.h.s8.bf16 %v4886
    %v4964 = vunpack.c.l.s8.bf16 %v4887
    %v4965 = vunpack.c.l.s8.bf16 %v4888
    %v4966 = vunpack.c.l.s8.bf16 %v4889
    %v4967 = vunpack.c.l.s8.bf16 %v4890
    %v4968 = vunpack.c.l.s8.bf16 %v4891
    %v4969 = vunpack.c.l.s8.bf16 %v4892
    %v4970 = vunpack.c.l.s8.bf16 %v4893
    %v4971 = vunpack.c.h.s8.bf16 %v4887
    %v4972 = vunpack.c.h.s8.bf16 %v4888
    %v4973 = vunpack.c.h.s8.bf16 %v4889
    %v4974 = vunpack.c.h.s8.bf16 %v4890
    %v4975 = vunpack.c.h.s8.bf16 %v4891
    %v4976 = vunpack.c.h.s8.bf16 %v4892
    %v4977 = vunpack.c.h.s8.bf16 %v4893
    %v4978 = vunpack.c.l.s8.bf16 %v4894
    %v4979 = vunpack.c.l.s8.bf16 %v4895
    %v4980 = vunpack.c.l.s8.bf16 %v4896
    %v4981 = vunpack.c.l.s8.bf16 %v4897
    %v4982 = vunpack.c.l.s8.bf16 %v4898
    %v4983 = vunpack.c.l.s8.bf16 %v4899
    %v4984 = vunpack.c.l.s8.bf16 %v4900
    %v4985 = vunpack.c.h.s8.bf16 %v4894
    %v4986 = vunpack.c.h.s8.bf16 %v4895
    %v4987 = vunpack.c.h.s8.bf16 %v4896
    %v4988 = vunpack.c.h.s8.bf16 %v4897
    %v4989 = vunpack.c.h.s8.bf16 %v4898
    %v4990 = vunpack.c.h.s8.bf16 %v4899
    %v4991 = vunpack.c.h.s8.bf16 %v4900
    %v4992 = vunpack.c.l.s8.bf16 %v4901
    %v4993 = vunpack.c.l.s8.bf16 %v4902
    %v4994 = vunpack.c.l.s8.bf16 %v4903
    %v4995 = vunpack.c.l.s8.bf16 %v4904
    %v4996 = vunpack.c.l.s8.bf16 %v4905
    %v4997 = vunpack.c.l.s8.bf16 %v4906
    %v4998 = vunpack.c.l.s8.bf16 %v4907
    %v4999 = vunpack.c.h.s8.bf16 %v4901
    %v5000 = vunpack.c.h.s8.bf16 %v4902
    %v5001 = vunpack.c.h.s8.bf16 %v4903
    %v5002 = vunpack.c.h.s8.bf16 %v4904
    %v5003 = vunpack.c.h.s8.bf16 %v4905
    %v5004 = vunpack.c.h.s8.bf16 %v4906
    %v5005 = vunpack.c.h.s8.bf16 %v4907
    %v5006 = vunpack.c.l.s8.bf16 %v4908
    %v5007 = vunpack.c.l.s8.bf16 %v4909
    %v5008 = vunpack.c.l.s8.bf16 %v4910
    %v5009 = vunpack.c.l.s8.bf16 %v4911
    %v5010 = vunpack.c.l.s8.bf16 %v4912
    %v5011 = vunpack.c.l.s8.bf16 %v4913
    %v5012 = vunpack.c.l.s8.bf16 %v4914
    %v5013 = vunpack.c.h.s8.bf16 %v4908
    %v5014 = vunpack.c.h.s8.bf16 %v4909
    %v5015 = vunpack.c.h.s8.bf16 %v4910
    %v5016 = vunpack.c.h.s8.bf16 %v4911
    %v5017 = vunpack.c.h.s8.bf16 %v4912
    %v5018 = vunpack.c.h.s8.bf16 %v4913
    %v5019 = vunpack.c.h.s8.bf16 %v4914
    %v5020 = vunpack.c.l.s8.bf16 %v4915
    %v5021 = vunpack.c.l.s8.bf16 %v4916
    %v5022 = vunpack.c.l.s8.bf16 %v4917
    %v5023 = vunpack.c.l.s8.bf16 %v4918
    %v5024 = vunpack.c.l.s8.bf16 %v4919
    %v5025 = vunpack.c.l.s8.bf16 %v4920
    %v5026 = vunpack.c.l.s8.bf16 %v4921
    %v5027 = vunpack.c.h.s8.bf16 %v4915
    %v5028 = vunpack.c.h.s8.bf16 %v4916
    %v5029 = vunpack.c.h.s8.bf16 %v4917
    %v5030 = vunpack.c.h.s8.bf16 %v4918
    %v5031 = vunpack.c.h.s8.bf16 %v4919
    %v5032 = vunpack.c.h.s8.bf16 %v4920
    %v5033 = vunpack.c.h.s8.bf16 %v4921
    %v5038 = vunpack.c.l.b16 %v4861
    %v5039 = vunpack.c.l.b16 %v4862
    %v5040 = vunpack.c.l.b16 %v4863
    %v5041 = vunpack.c.l.b16 %v4864
    %v5042 = vsel %vm3800, %v5040, %v5038
    %v5043 = vsel %vm3800, %v5041, %v5039
    %v5044 = vpack.c.b16 %v5042, %v5042
    %v5045 = vpack.c.b16 %v5043, %v5043
    %5048 = vmatprep.subr.bf16.mxu0 %v4923
    %5049 = vmatpush1.bf16.msra.mxu0 %v4922
    %5050 = vmatprep.subr.bf16.mxu0 %v4930
    %5051 = vmatpush1.bf16.msra.mxu0 %v4929
    %5052 = vmatprep.subr.bf16.mxu0 %v4937
    %5053 = vmatpush1.bf16.msra.mxu0 %v4936
    %5054 = vmatprep.subr.bf16.mxu0 %v4944
    %5055 = vmatpush1.bf16.msra.mxu0 %v4943
    %5056 = vmatprep.subr.bf16.mxu0 %v4951
    %5057 = vmatpush1.bf16.msra.mxu0 %v4950
    %5058 = vmatprep.subr.bf16.mxu0 %v4958
    %5059 = vmatpush1.bf16.msra.mxu0 %v4957
    %5060 = vmatprep.subr.bf16.mxu0 %v4965
    %5061 = vmatpush1.bf16.msra.mxu0 %v4964
    %5062 = vmatprep.subr.bf16.mxu0 %v4972
    %5063 = vmatpush1.bf16.msra.mxu0 %v4971
    %5064 = vmatprep.subr.bf16.mxu0 %v4979
    %5065 = vmatpush1.bf16.msra.mxu0 %v4978
    %5066 = vmatprep.subr.bf16.mxu0 %v4986
    %5067 = vmatpush1.bf16.msra.mxu0 %v4985
    %5068 = vmatprep.subr.bf16.mxu0 %v4993
    %5069 = vmatpush1.bf16.msra.mxu0 %v4992
    %5070 = vmatprep.subr.bf16.mxu0 %v5000
    %5071 = vmatpush1.bf16.msra.mxu0 %v4999
    %5072 = vmatprep.subr.bf16.mxu0 %v5007
    %5073 = vmatpush1.bf16.msra.mxu0 %v5006
    %5074 = vmatprep.subr.bf16.mxu0 %v5014
    %5075 = vmatpush1.bf16.msra.mxu0 %v5013
    %5076 = vmatprep.subr.bf16.mxu0 %v5021
    %5077 = vmatpush1.bf16.msra.mxu0 %v5020
    %5078 = vmatprep.subr.bf16.mxu0 %v5028
    %5079 = vmatpush1.bf16.msra.mxu0 %v5027
    %5080 = vmatprep.mubr.bf16.mxu0 %v5045
    %5081 = vmatmul.mubr.bf16.gmra.mrb[0].mxu0 %v5044
    %v5082 = vpop.f32.mrb[0].mxu0
    %v5083 = vadd.f32 0.0, %v5082
    %v5084 = vpop.f32.mrb[0].mxu0
    %v5085 = vadd.f32 0.0, %v5084
    %v5086 = vpop.f32.mrb[0].mxu0
    %v5087 = vpop.f32.mrb[0].mxu0
    %5088 = vdwg.mxu0
    %5089 = vmatprep.subr.bf16.mxu0 %v4925
    %5090 = vmatpush1.bf16.msra.mxu0 %v4924
    %5091 = vmatprep.subr.bf16.mxu0 %v4932
    %5092 = vmatpush1.bf16.msra.mxu0 %v4931
    %5093 = vmatprep.subr.bf16.mxu0 %v4939
    %5094 = vmatpush1.bf16.msra.mxu0 %v4938
    %5095 = vmatprep.subr.bf16.mxu0 %v4946
    %5096 = vmatpush1.bf16.msra.mxu0 %v4945
    %5097 = vmatprep.subr.bf16.mxu0 %v4953
    %5098 = vmatpush1.bf16.msra.mxu0 %v4952
    %5099 = vmatprep.subr.bf16.mxu0 %v4960
    %5100 = vmatpush1.bf16.msra.mxu0 %v4959
    %5101 = vmatprep.subr.bf16.mxu0 %v4967
    %5102 = vmatpush1.bf16.msra.mxu0 %v4966
    %5103 = vmatprep.subr.bf16.mxu0 %v4974
    %5104 = vmatpush1.bf16.msra.mxu0 %v4973
    %5105 = vmatprep.subr.bf16.mxu0 %v4981
    %5106 = vmatpush1.bf16.msra.mxu0 %v4980
    %5107 = vmatprep.subr.bf16.mxu0 %v4988
    %5108 = vmatpush1.bf16.msra.mxu0 %v4987
    %5109 = vmatprep.subr.bf16.mxu0 %v4995
    %5110 = vmatpush1.bf16.msra.mxu0 %v4994
    %5111 = vmatprep.subr.bf16.mxu0 %v5002
    %5112 = vmatpush1.bf16.msra.mxu0 %v5001
    %5113 = vmatprep.subr.bf16.mxu0 %v5009
    %5114 = vmatpush1.bf16.msra.mxu0 %v5008
    %5115 = vmatprep.subr.bf16.mxu0 %v5016
    %5116 = vmatpush1.bf16.msra.mxu0 %v5015
    %5117 = vmatprep.subr.bf16.mxu0 %v5023
    %5118 = vmatpush1.bf16.msra.mxu0 %v5022
    %5119 = vmatprep.subr.bf16.mxu0 %v5030
    %5120 = vmatpush1.bf16.msra.mxu0 %v5029
    %5121 = vmatprep.mubr.bf16.mxu0 %v5045
    %5122 = vmatmul.mubr.bf16.gmra.mrb[0].mxu0 %v5044
    %v5123 = vpop.f32.mrb[0].mxu0
    %v5124 = vadd.f32 0.0, %v5123
    %v5125 = vpop.f32.mrb[0].mxu0
    %v5126 = vadd.f32 0.0, %v5125
    %v5127 = vpop.f32.mrb[0].mxu0
    %v5128 = vpop.f32.mrb[0].mxu0
    %5129 = vdwg.mxu0
    %5130 = vmatprep.subr.bf16.mxu0 %v4927
    %5131 = vmatpush1.bf16.msra.mxu0 %v4926
    %5132 = vmatprep.subr.bf16.mxu0 %v4934
    %5133 = vmatpush1.bf16.msra.mxu0 %v4933
    %5134 = vmatprep.subr.bf16.mxu0 %v4941
    %5135 = vmatpush1.bf16.msra.mxu0 %v4940
    %5136 = vmatprep.subr.bf16.mxu0 %v4948
    %5137 = vmatpush1.bf16.msra.mxu0 %v4947
    %5138 = vmatprep.subr.bf16.mxu0 %v4955
    %5139 = vmatpush1.bf16.msra.mxu0 %v4954
    %5140 = vmatprep.subr.bf16.mxu0 %v4962
    %5141 = vmatpush1.bf16.msra.mxu0 %v4961
    %5142 = vmatprep.subr.bf16.mxu0 %v4969
    %5143 = vmatpush1.bf16.msra.mxu0 %v4968
    %5144 = vmatprep.subr.bf16.mxu0 %v4976
    %5145 = vmatpush1.bf16.msra.mxu0 %v4975
    %5146 = vmatprep.subr.bf16.mxu0 %v4983
    %5147 = vmatpush1.bf16.msra.mxu0 %v4982
    %5148 = vmatprep.subr.bf16.mxu0 %v4990
    %5149 = vmatpush1.bf16.msra.mxu0 %v4989
    %5150 = vmatprep.subr.bf16.mxu0 %v4997
    %5151 = vmatpush1.bf16.msra.mxu0 %v4996
    %5152 = vmatprep.subr.bf16.mxu0 %v5004
    %5153 = vmatpush1.bf16.msra.mxu0 %v5003
    %5154 = vmatprep.subr.bf16.mxu0 %v5011
    %5155 = vmatpush1.bf16.msra.mxu0 %v5010
    %5156 = vmatprep.subr.bf16.mxu0 %v5018
    %5157 = vmatpush1.bf16.msra.mxu0 %v5017
    %5158 = vmatprep.subr.bf16.mxu0 %v5025
    %5159 = vmatpush1.bf16.msra.mxu0 %v5024
    %5160 = vmatprep.subr.bf16.mxu0 %v5032
    %5161 = vmatpush1.bf16.msra.mxu0 %v5031
    %5162 = vmatprep.mubr.bf16.mxu0 %v5045
    %5163 = vmatmul.mubr.bf16.gmra.mrb[0].mxu0 %v5044
    %v5164 = vpop.f32.mrb[0].mxu0
    %v5165 = vadd.f32 0.0, %v5164
    %v5166 = vpop.f32.mrb[0].mxu0
    %v5167 = vadd.f32 0.0, %v5166
    %v5168 = vpop.f32.mrb[0].mxu0
    %v5169 = vpop.f32.mrb[0].mxu0
    %5170 = vdwg.mxu0
    %5171 = vmatprep.subr.bf16.mxu0 0
    %5172 = vmatpush1.bf16.msra.mxu0 %v4928
    %5173 = vmatprep.subr.bf16.mxu0 0
    %5174 = vmatpush1.bf16.msra.mxu0 %v4935
    %5175 = vmatprep.subr.bf16.mxu0 0
    %5176 = vmatpush1.bf16.msra.mxu0 %v4942
    %5177 = vmatprep.subr.bf16.mxu0 0
    %5178 = vmatpush1.bf16.msra.mxu0 %v4949
    %5179 = vmatprep.subr.bf16.mxu0 0
    %5180 = vmatpush1.bf16.msra.mxu0 %v4956
    %5181 = vmatprep.subr.bf16.mxu0 0
    %5182 = vmatpush1.bf16.msra.mxu0 %v4963
    %5183 = vmatprep.subr.bf16.mxu0 0
    %5184 = vmatpush1.bf16.msra.mxu0 %v4970
    %5185 = vmatprep.subr.bf16.mxu0 0
    %5186 = vmatpush1.bf16.msra.mxu0 %v4977
    %5187 = vmatprep.subr.bf16.mxu0 0
    %5188 = vmatpush1.bf16.msra.mxu0 %v4984
    %5189 = vmatprep.subr.bf16.mxu0 0
    %5190 = vmatpush1.bf16.msra.mxu0 %v4991
    %5191 = vmatprep.subr.bf16.mxu0 0
    %5192 = vmatpush1.bf16.msra.mxu0 %v4998
    %5193 = vmatprep.subr.bf16.mxu0 0
    %5194 = vmatpush1.bf16.msra.mxu0 %v5005
    %5195 = vmatprep.subr.bf16.mxu0 0
    %5196 = vmatpush1.bf16.msra.mxu0 %v5012
    %5197 = vmatprep.subr.bf16.mxu0 0
    %5198 = vmatpush1.bf16.msra.mxu0 %v5019
    %5199 = vmatprep.subr.bf16.mxu0 0
    %5200 = vmatpush1.bf16.msra.mxu0 %v5026
    %5201 = vmatprep.subr.bf16.mxu0 0
    %5202 = vmatpush1.bf16.msra.mxu0 %v5033
    %5203 = vmatprep.mubr.bf16.mxu0 %v5045
    %5204 = vmatmul.mubr.bf16.gmra.mrb[0].mxu0 %v5044
    %v5205 = vpop.f32.mrb[0].mxu0
    %v5206 = vadd.f32 0.0, %v5205
    %v5207 = vpop.f32.mrb[0].mxu0
    %v5208 = vpop.f32.mrb[0].mxu0
    %v5209 = vpop.f32.mrb[0].mxu0
    %5210 = vdwg.mxu0
    %v5211 = vadd.f32 %v4854, %v5083
    %v5212 = vadd.f32 %v4855, %v5085
    %v5213 = vadd.f32 %v4856, %v5124
    %v5214 = vadd.f32 %v4857, %v5126
    %v5215 = vadd.f32 %v4858, %v5165
    %v5216 = vadd.f32 %v4859, %v5167
    %v5217 = vadd.f32 %v4860, %v5206
    %v5218 = vpack.c.bf16 %v3322, %v3322
    %v5219 = vpack.c.bf16 %v3329, %v3329
    %v5220 = vpack.c.bf16 %v3420, %v3420
    %v5221 = vpack.c.bf16 %v3427, %v3427
    %s5222 = scalar_lea.vmem [#allocation2], 2240
    %v5223 = vld [vmem:[%s5222] sm:$0xff]
    %v5224 = vld [vmem:[%s5222 + $0x8] sm:$0xff]
    %v5225 = vld [vmem:[%s5222 + $0x10] sm:$0xff]
    %v5226 = vld [vmem:[%s5222 + $0x18] sm:$0xff]
    %v5227 = vld [vmem:[%s5222 + $0x20] sm:$0xff]
    %v5228 = vld [vmem:[%s5222 + $0x28] sm:$0xff]
    %v5229 = vld [vmem:[%s5222 + $0x30] sm:$0xff]
    %v5230 = vld [vmem:[%s5222 + $0x38] sm:$0xff]
    %v5231 = vld [vmem:[%s5222 + $0x40] sm:$0xff]
    %v5232 = vld [vmem:[%s5222 + $0x48] sm:$0xff]
    %v5233 = vld [vmem:[%s5222 + $0x50] sm:$0xff]
    %v5234 = vld [vmem:[%s5222 + $0x58] sm:$0xff]
    %v5235 = vld [vmem:[%s5222 + $0x60] sm:$0xff]
    %v5236 = vld [vmem:[%s5222 + $0x68] sm:$0xff]
    %v5237 = vld [vmem:[%s5222 + $0x70] sm:$0xff]
    %v5238 = vld [vmem:[%s5222 + $0x78] sm:$0xff]
    %v5239 = vld [vmem:[%s5222 + $0x80] sm:$0xff]
    %v5240 = vld [vmem:[%s5222 + $0x88] sm:$0xff]
    %v5241 = vld [vmem:[%s5222 + $0x90] sm:$0xff]
    %v5242 = vld [vmem:[%s5222 + $0x98] sm:$0xff]
    %v5243 = vld [vmem:[%s5222 + $0xa0] sm:$0xff]
    %v5244 = vld [vmem:[%s5222 + $0xa8] sm:$0xff]
    %v5245 = vld [vmem:[%s5222 + $0xb0] sm:$0xff]
    %v5246 = vld [vmem:[%s5222 + $0xb8] sm:$0xff]
    %v5247 = vld [vmem:[%s5222 + $0xc0] sm:$0xff]
    %v5248 = vld [vmem:[%s5222 + $0xc8] sm:$0xff]
    %v5249 = vld [vmem:[%s5222 + $0xd0] sm:$0xff]
    %v5250 = vld [vmem:[%s5222 + $0xd8] sm:$0xff]
    %v5251 = vld [vmem:[%s5222 + $0xe0] sm:$0xff]
    %v5252 = vld [vmem:[%s5222 + $0xe8] sm:$0xff]
    %v5253 = vld [vmem:[%s5222 + $0xf0] sm:$0xff]
    %v5254 = vld [vmem:[%s5222 + $0xf8] sm:$0xff]
    %v5255 = vld [vmem:[%s5222 + $0x100] sm:$0xff]
    %v5256 = vld [vmem:[%s5222 + $0x108] sm:$0xff]
    %v5257 = vld [vmem:[%s5222 + $0x110] sm:$0xff]
    %v5258 = vld [vmem:[%s5222 + $0x118] sm:$0xff]
    %v5259 = vld [vmem:[%s5222 + $0x120] sm:$0xff]
    %v5260 = vld [vmem:[%s5222 + $0x128] sm:$0xff]
    %v5261 = vld [vmem:[%s5222 + $0x130] sm:$0xff]
    %v5262 = vld [vmem:[%s5222 + $0x138] sm:$0xff]
    %v5263 = vld [vmem:[%s5222 + $0x140] sm:$0xff]
    %v5264 = vld [vmem:[%s5222 + $0x148] sm:$0xff]
    %v5265 = vld [vmem:[%s5222 + $0x150] sm:$0xff]
    %v5266 = vld [vmem:[%s5222 + $0x158] sm:$0xff]
    %v5267 = vld [vmem:[%s5222 + $0x160] sm:$0xff]
    %v5268 = vld [vmem:[%s5222 + $0x168] sm:$0xff]
    %v5269 = vld [vmem:[%s5222 + $0x170] sm:$0xff]
    %v5270 = vld [vmem:[%s5222 + $0x178] sm:$0xff]
    %v5271 = vld [vmem:[%s5222 + $0x180] sm:$0xff]
    %v5272 = vld [vmem:[%s5222 + $0x188] sm:$0xff]
    %v5273 = vld [vmem:[%s5222 + $0x190] sm:$0xff]
    %v5274 = vld [vmem:[%s5222 + $0x198] sm:$0xff]
    %v5275 = vld [vmem:[%s5222 + $0x1a0] sm:$0xff]
    %v5276 = vld [vmem:[%s5222 + $0x1a8] sm:$0xff]
    %v5277 = vld [vmem:[%s5222 + $0x1b0] sm:$0xff]
    %v5278 = vld [vmem:[%s5222 + $0x1b8] sm:$0xff]
    %v5279 = vunpack.c.l.s8.bf16 %v5223
    %v5280 = vunpack.c.l.s8.bf16 %v5224
    %v5281 = vunpack.c.l.s8.bf16 %v5225
    %v5282 = vunpack.c.l.s8.bf16 %v5226
    %v5283 = vunpack.c.l.s8.bf16 %v5227
    %v5284 = vunpack.c.l.s8.bf16 %v5228
    %v5285 = vunpack.c.l.s8.bf16 %v5229
    %v5286 = vunpack.c.h.s8.bf16 %v5223
    %v5287 = vunpack.c.h.s8.bf16 %v5224
    %v5288 = vunpack.c.h.s8.bf16 %v5225
    %v5289 = vunpack.c.h.s8.bf16 %v5226
    %v5290 = vunpack.c.h.s8.bf16 %v5227
    %v5291 = vunpack.c.h.s8.bf16 %v5228
    %v5292 = vunpack.c.h.s8.bf16 %v5229
    %v5293 = vunpack.c.l.s8.bf16 %v5230
    %v5294 = vunpack.c.l.s8.bf16 %v5231
    %v5295 = vunpack.c.l.s8.bf16 %v5232
    %v5296 = vunpack.c.l.s8.bf16 %v5233
    %v5297 = vunpack.c.l.s8.bf16 %v5234
    %v5298 = vunpack.c.l.s8.bf16 %v5235
    %v5299 = vunpack.c.l.s8.bf16 %v5236
    %v5300 = vunpack.c.h.s8.bf16 %v5230
    %v5301 = vunpack.c.h.s8.bf16 %v5231
    %v5302 = vunpack.c.h.s8.bf16 %v5232
    %v5303 = vunpack.c.h.s8.bf16 %v5233
    %v5304 = vunpack.c.h.s8.bf16 %v5234
    %v5305 = vunpack.c.h.s8.bf16 %v5235
    %v5306 = vunpack.c.h.s8.bf16 %v5236
    %v5307 = vunpack.c.l.s8.bf16 %v5237
    %v5308 = vunpack.c.l.s8.bf16 %v5238
    %v5309 = vunpack.c.l.s8.bf16 %v5239
    %v5310 = vunpack.c.l.s8.bf16 %v5240
    %v5311 = vunpack.c.l.s8.bf16 %v5241
    %v5312 = vunpack.c.l.s8.bf16 %v5242
    %v5313 = vunpack.c.l.s8.bf16 %v5243
    %v5314 = vunpack.c.h.s8.bf16 %v5237
    %v5315 = vunpack.c.h.s8.bf16 %v5238
    %v5316 = vunpack.c.h.s8.bf16 %v5239
    %v5317 = vunpack.c.h.s8.bf16 %v5240
    %v5318 = vunpack.c.h.s8.bf16 %v5241
    %v5319 = vunpack.c.h.s8.bf16 %v5242
    %v5320 = vunpack.c.h.s8.bf16 %v5243
    %v5321 = vunpack.c.l.s8.bf16 %v5244
    %v5322 = vunpack.c.l.s8.bf16 %v5245
    %v5323 = vunpack.c.l.s8.bf16 %v5246
    %v5324 = vunpack.c.l.s8.bf16 %v5247
    %v5325 = vunpack.c.l.s8.bf16 %v5248
    %v5326 = vunpack.c.l.s8.bf16 %v5249
    %v5327 = vunpack.c.l.s8.bf16 %v5250
    %v5328 = vunpack.c.h.s8.bf16 %v5244
    %v5329 = vunpack.c.h.s8.bf16 %v5245
    %v5330 = vunpack.c.h.s8.bf16 %v5246
    %v5331 = vunpack.c.h.s8.bf16 %v5247
    %v5332 = vunpack.c.h.s8.bf16 %v5248
    %v5333 = vunpack.c.h.s8.bf16 %v5249
    %v5334 = vunpack.c.h.s8.bf16 %v5250
    %v5335 = vunpack.c.l.s8.bf16 %v5251
    %v5336 = vunpack.c.l.s8.bf16 %v5252
    %v5337 = vunpack.c.l.s8.bf16 %v5253
    %v5338 = vunpack.c.l.s8.bf16 %v5254
    %v5339 = vunpack.c.l.s8.bf16 %v5255
    %v5340 = vunpack.c.l.s8.bf16 %v5256
    %v5341 = vunpack.c.l.s8.bf16 %v5257
    %v5342 = vunpack.c.h.s8.bf16 %v5251
    %v5343 = vunpack.c.h.s8.bf16 %v5252
    %v5344 = vunpack.c.h.s8.bf16 %v5253
    %v5345 = vunpack.c.h.s8.bf16 %v5254
    %v5346 = vunpack.c.h.s8.bf16 %v5255
    %v5347 = vunpack.c.h.s8.bf16 %v5256
    %v5348 = vunpack.c.h.s8.bf16 %v5257
    %v5349 = vunpack.c.l.s8.bf16 %v5258
    %v5350 = vunpack.c.l.s8.bf16 %v5259
    %v5351 = vunpack.c.l.s8.bf16 %v5260
    %v5352 = vunpack.c.l.s8.bf16 %v5261
    %v5353 = vunpack.c.l.s8.bf16 %v5262
    %v5354 = vunpack.c.l.s8.bf16 %v5263
    %v5355 = vunpack.c.l.s8.bf16 %v5264
    %v5356 = vunpack.c.h.s8.bf16 %v5258
    %v5357 = vunpack.c.h.s8.bf16 %v5259
    %v5358 = vunpack.c.h.s8.bf16 %v5260
    %v5359 = vunpack.c.h.s8.bf16 %v5261
    %v5360 = vunpack.c.h.s8.bf16 %v5262
    %v5361 = vunpack.c.h.s8.bf16 %v5263
    %v5362 = vunpack.c.h.s8.bf16 %v5264
    %v5363 = vunpack.c.l.s8.bf16 %v5265
    %v5364 = vunpack.c.l.s8.bf16 %v5266
    %v5365 = vunpack.c.l.s8.bf16 %v5267
    %v5366 = vunpack.c.l.s8.bf16 %v5268
    %v5367 = vunpack.c.l.s8.bf16 %v5269
    %v5368 = vunpack.c.l.s8.bf16 %v5270
    %v5369 = vunpack.c.l.s8.bf16 %v5271
    %v5370 = vunpack.c.h.s8.bf16 %v5265
    %v5371 = vunpack.c.h.s8.bf16 %v5266
    %v5372 = vunpack.c.h.s8.bf16 %v5267
    %v5373 = vunpack.c.h.s8.bf16 %v5268
    %v5374 = vunpack.c.h.s8.bf16 %v5269
    %v5375 = vunpack.c.h.s8.bf16 %v5270
    %v5376 = vunpack.c.h.s8.bf16 %v5271
    %v5377 = vunpack.c.l.s8.bf16 %v5272
    %v5378 = vunpack.c.l.s8.bf16 %v5273
    %v5379 = vunpack.c.l.s8.bf16 %v5274
    %v5380 = vunpack.c.l.s8.bf16 %v5275
    %v5381 = vunpack.c.l.s8.bf16 %v5276
    %v5382 = vunpack.c.l.s8.bf16 %v5277
    %v5383 = vunpack.c.l.s8.bf16 %v5278
    %v5384 = vunpack.c.h.s8.bf16 %v5272
    %v5385 = vunpack.c.h.s8.bf16 %v5273
    %v5386 = vunpack.c.h.s8.bf16 %v5274
    %v5387 = vunpack.c.h.s8.bf16 %v5275
    %v5388 = vunpack.c.h.s8.bf16 %v5276
    %v5389 = vunpack.c.h.s8.bf16 %v5277
    %v5390 = vunpack.c.h.s8.bf16 %v5278
    %v5395 = vunpack.c.l.b16 %v5218
    %v5396 = vunpack.c.l.b16 %v5219
    %v5397 = vunpack.c.l.b16 %v5220
    %v5398 = vunpack.c.l.b16 %v5221
    %v5399 = vsel %vm3800, %v5397, %v5395
    %v5400 = vsel %vm3800, %v5398, %v5396
    %v5401 = vpack.c.b16 %v5399, %v5399
    %v5402 = vpack.c.b16 %v5400, %v5400
    %5405 = vmatprep.subr.bf16.mxu0 %v5280
    %5406 = vmatpush1.bf16.msra.mxu0 %v5279
    %5407 = vmatprep.subr.bf16.mxu0 %v5287
    %5408 = vmatpush1.bf16.msra.mxu0 %v5286
    %5409 = vmatprep.subr.bf16.mxu0 %v5294
    %5410 = vmatpush1.bf16.msra.mxu0 %v5293
    %5411 = vmatprep.subr.bf16.mxu0 %v5301
    %5412 = vmatpush1.bf16.msra.mxu0 %v5300
    %5413 = vmatprep.subr.bf16.mxu0 %v5308
    %5414 = vmatpush1.bf16.msra.mxu0 %v5307
    %5415 = vmatprep.subr.bf16.mxu0 %v5315
    %5416 = vmatpush1.bf16.msra.mxu0 %v5314
    %5417 = vmatprep.subr.bf16.mxu0 %v5322
    %5418 = vmatpush1.bf16.msra.mxu0 %v5321
    %5419 = vmatprep.subr.bf16.mxu0 %v5329
    %5420 = vmatpush1.bf16.msra.mxu0 %v5328
    %5421 = vmatprep.subr.bf16.mxu0 %v5336
    %5422 = vmatpush1.bf16.msra.mxu0 %v5335
    %5423 = vmatprep.subr.bf16.mxu0 %v5343
    %5424 = vmatpush1.bf16.msra.mxu0 %v5342
    %5425 = vmatprep.subr.bf16.mxu0 %v5350
    %5426 = vmatpush1.bf16.msra.mxu0 %v5349
    %5427 = vmatprep.subr.bf16.mxu0 %v5357
    %5428 = vmatpush1.bf16.msra.mxu0 %v5356
    %5429 = vmatprep.subr.bf16.mxu0 %v5364
    %5430 = vmatpush1.bf16.msra.mxu0 %v5363
    %5431 = vmatprep.subr.bf16.mxu0 %v5371
    %5432 = vmatpush1.bf16.msra.mxu0 %v5370
    %5433 = vmatprep.subr.bf16.mxu0 %v5378
    %5434 = vmatpush1.bf16.msra.mxu0 %v5377
    %5435 = vmatprep.subr.bf16.mxu0 %v5385
    %5436 = vmatpush1.bf16.msra.mxu0 %v5384
    %5437 = vmatprep.mubr.bf16.mxu0 %v5402
    %5438 = vmatmul.mubr.bf16.gmra.mrb[0].mxu0 %v5401
    %v5439 = vpop.f32.mrb[0].mxu0
    %v5440 = vadd.f32 0.0, %v5439
    %v5441 = vpop.f32.mrb[0].mxu0
    %v5442 = vadd.f32 0.0, %v5441
    %v5443 = vpop.f32.mrb[0].mxu0
    %v5444 = vpop.f32.mrb[0].mxu0
    %5445 = vdwg.mxu0
    %5446 = vmatprep.subr.bf16.mxu0 %v5282
    %5447 = vmatpush1.bf16.msra.mxu0 %v5281
    %5448 = vmatprep.subr.bf16.mxu0 %v5289
    %5449 = vmatpush1.bf16.msra.mxu0 %v5288
    %5450 = vmatprep.subr.bf16.mxu0 %v5296
    %5451 = vmatpush1.bf16.msra.mxu0 %v5295
    %5452 = vmatprep.subr.bf16.mxu0 %v5303
    %5453 = vmatpush1.bf16.msra.mxu0 %v5302
    %5454 = vmatprep.subr.bf16.mxu0 %v5310
    %5455 = vmatpush1.bf16.msra.mxu0 %v5309
    %5456 = vmatprep.subr.bf16.mxu0 %v5317
    %5457 = vmatpush1.bf16.msra.mxu0 %v5316
    %5458 = vmatprep.subr.bf16.mxu0 %v5324
    %5459 = vmatpush1.bf16.msra.mxu0 %v5323
    %5460 = vmatprep.subr.bf16.mxu0 %v5331
    %5461 = vmatpush1.bf16.msra.mxu0 %v5330
    %5462 = vmatprep.subr.bf16.mxu0 %v5338
    %5463 = vmatpush1.bf16.msra.mxu0 %v5337
    %5464 = vmatprep.subr.bf16.mxu0 %v5345
    %5465 = vmatpush1.bf16.msra.mxu0 %v5344
    %5466 = vmatprep.subr.bf16.mxu0 %v5352
    %5467 = vmatpush1.bf16.msra.mxu0 %v5351
    %5468 = vmatprep.subr.bf16.mxu0 %v5359
    %5469 = vmatpush1.bf16.msra.mxu0 %v5358
    %5470 = vmatprep.subr.bf16.mxu0 %v5366
    %5471 = vmatpush1.bf16.msra.mxu0 %v5365
    %5472 = vmatprep.subr.bf16.mxu0 %v5373
    %5473 = vmatpush1.bf16.msra.mxu0 %v5372
    %5474 = vmatprep.subr.bf16.mxu0 %v5380
    %5475 = vmatpush1.bf16.msra.mxu0 %v5379
    %5476 = vmatprep.subr.bf16.mxu0 %v5387
    %5477 = vmatpush1.bf16.msra.mxu0 %v5386
    %5478 = vmatprep.mubr.bf16.mxu0 %v5402
    %5479 = vmatmul.mubr.bf16.gmra.mrb[0].mxu0 %v5401
    %v5480 = vpop.f32.mrb[0].mxu0
    %v5481 = vadd.f32 0.0, %v5480
    %v5482 = vpop.f32.mrb[0].mxu0
    %v5483 = vadd.f32 0.0, %v5482
    %v5484 = vpop.f32.mrb[0].mxu0
    %v5485 = vpop.f32.mrb[0].mxu0
    %5486 = vdwg.mxu0
    %5487 = vmatprep.subr.bf16.mxu0 %v5284
    %5488 = vmatpush1.bf16.msra.mxu0 %v5283
    %5489 = vmatprep.subr.bf16.mxu0 %v5291
    %5490 = vmatpush1.bf16.msra.mxu0 %v5290
    %5491 = vmatprep.subr.bf16.mxu0 %v5298
    %5492 = vmatpush1.bf16.msra.mxu0 %v5297
    %5493 = vmatprep.subr.bf16.mxu0 %v5305
    %5494 = vmatpush1.bf16.msra.mxu0 %v5304
    %5495 = vmatprep.subr.bf16.mxu0 %v5312
    %5496 = vmatpush1.bf16.msra.mxu0 %v5311
    %5497 = vmatprep.subr.bf16.mxu0 %v5319
    %5498 = vmatpush1.bf16.msra.mxu0 %v5318
    %5499 = vmatprep.subr.bf16.mxu0 %v5326
    %5500 = vmatpush1.bf16.msra.mxu0 %v5325
    %5501 = vmatprep.subr.bf16.mxu0 %v5333
    %5502 = vmatpush1.bf16.msra.mxu0 %v5332
    %5503 = vmatprep.subr.bf16.mxu0 %v5340
    %5504 = vmatpush1.bf16.msra.mxu0 %v5339
    %5505 = vmatprep.subr.bf16.mxu0 %v5347
    %5506 = vmatpush1.bf16.msra.mxu0 %v5346
    %5507 = vmatprep.subr.bf16.mxu0 %v5354
    %5508 = vmatpush1.bf16.msra.mxu0 %v5353
    %5509 = vmatprep.subr.bf16.mxu0 %v5361
    %5510 = vmatpush1.bf16.msra.mxu0 %v5360
    %5511 = vmatprep.subr.bf16.mxu0 %v5368
    %5512 = vmatpush1.bf16.msra.mxu0 %v5367
    %5513 = vmatprep.subr.bf16.mxu0 %v5375
    %5514 = vmatpush1.bf16.msra.mxu0 %v5374
    %5515 = vmatprep.subr.bf16.mxu0 %v5382
    %5516 = vmatpush1.bf16.msra.mxu0 %v5381
    %5517 = vmatprep.subr.bf16.mxu0 %v5389
    %5518 = vmatpush1.bf16.msra.mxu0 %v5388
    %5519 = vmatprep.mubr.bf16.mxu0 %v5402
    %5520 = vmatmul.mubr.bf16.gmra.mrb[0].mxu0 %v5401
    %v5521 = vpop.f32.mrb[0].mxu0
    %v5522 = vadd.f32 0.0, %v5521
    %v5523 = vpop.f32.mrb[0].mxu0
    %v5524 = vadd.f32 0.0, %v5523
    %v5525 = vpop.f32.mrb[0].mxu0
    %v5526 = vpop.f32.mrb[0].mxu0
    %5527 = vdwg.mxu0
    %5528 = vmatprep.subr.bf16.mxu0 0
    %5529 = vmatpush1.bf16.msra.mxu0 %v5285
    %5530 = vmatprep.subr.bf16.mxu0 0
    %5531 = vmatpush1.bf16.msra.mxu0 %v5292
    %5532 = vmatprep.subr.bf16.mxu0 0
    %5533 = vmatpush1.bf16.msra.mxu0 %v5299
    %5534 = vmatprep.subr.bf16.mxu0 0
    %5535 = vmatpush1.bf16.msra.mxu0 %v5306
    %5536 = vmatprep.subr.bf16.mxu0 0
    %5537 = vmatpush1.bf16.msra.mxu0 %v5313
    %5538 = vmatprep.subr.bf16.mxu0 0
    %5539 = vmatpush1.bf16.msra.mxu0 %v5320
    %5540 = vmatprep.subr.bf16.mxu0 0
    %5541 = vmatpush1.bf16.msra.mxu0 %v5327
    %5542 = vmatprep.subr.bf16.mxu0 0
    %5543 = vmatpush1.bf16.msra.mxu0 %v5334
    %5544 = vmatprep.subr.bf16.mxu0 0
    %5545 = vmatpush1.bf16.msra.mxu0 %v5341
    %5546 = vmatprep.subr.bf16.mxu0 0
    %5547 = vmatpush1.bf16.msra.mxu0 %v5348
    %5548 = vmatprep.subr.bf16.mxu0 0
    %5549 = vmatpush1.bf16.msra.mxu0 %v5355
    %5550 = vmatprep.subr.bf16.mxu0 0
    %5551 = vmatpush1.bf16.msra.mxu0 %v5362
    %5552 = vmatprep.subr.bf16.mxu0 0
    %5553 = vmatpush1.bf16.msra.mxu0 %v5369
    %5554 = vmatprep.subr.bf16.mxu0 0
    %5555 = vmatpush1.bf16.msra.mxu0 %v5376
    %5556 = vmatprep.subr.bf16.mxu0 0
    %5557 = vmatpush1.bf16.msra.mxu0 %v5383
    %5558 = vmatprep.subr.bf16.mxu0 0
    %5559 = vmatpush1.bf16.msra.mxu0 %v5390
    %5560 = vmatprep.mubr.bf16.mxu0 %v5402
    %5561 = vmatmul.mubr.bf16.gmra.mrb[0].mxu0 %v5401
    %v5562 = vpop.f32.mrb[0].mxu0
    %v5563 = vadd.f32 0.0, %v5562
    %v5564 = vpop.f32.mrb[0].mxu0
    %v5565 = vpop.f32.mrb[0].mxu0
    %v5566 = vpop.f32.mrb[0].mxu0
    %5567 = vdwg.mxu0
    %v5568 = vadd.f32 %v5211, %v5440
    %v5569 = vadd.f32 %v5212, %v5442
    %v5570 = vadd.f32 %v5213, %v5481
    %v5571 = vadd.f32 %v5214, %v5483
    %v5572 = vadd.f32 %v5215, %v5522
    %v5573 = vadd.f32 %v5216, %v5524
    %v5574 = vadd.f32 %v5217, %v5563
    %v5575 = vpack.c.bf16 %v3336, %v3336
    %v5576 = vpack.c.bf16 %v3343, %v3343
    %v5577 = vpack.c.bf16 %v3434, %v3434
    %v5578 = vpack.c.bf16 %v3441, %v3441
    %s5579 = scalar_lea.vmem [#allocation2], 2688
    %v5580 = vld [vmem:[%s5579] sm:$0xff]
    %v5581 = vld [vmem:[%s5579 + $0x8] sm:$0xff]
    %v5582 = vld [vmem:[%s5579 + $0x10] sm:$0xff]
    %v5583 = vld [vmem:[%s5579 + $0x18] sm:$0xff]
    %v5584 = vld [vmem:[%s5579 + $0x20] sm:$0xff]
    %v5585 = vld [vmem:[%s5579 + $0x28] sm:$0xff]
    %v5586 = vld [vmem:[%s5579 + $0x30] sm:$0xff]
    %v5587 = vld [vmem:[%s5579 + $0x38] sm:$0xff]
    %v5588 = vld [vmem:[%s5579 + $0x40] sm:$0xff]
    %v5589 = vld [vmem:[%s5579 + $0x48] sm:$0xff]
    %v5590 = vld [vmem:[%s5579 + $0x50] sm:$0xff]
    %v5591 = vld [vmem:[%s5579 + $0x58] sm:$0xff]
    %v5592 = vld [vmem:[%s5579 + $0x60] sm:$0xff]
    %v5593 = vld [vmem:[%s5579 + $0x68] sm:$0xff]
    %v5594 = vld [vmem:[%s5579 + $0x70] sm:$0xff]
    %v5595 = vld [vmem:[%s5579 + $0x78] sm:$0xff]
    %v5596 = vld [vmem:[%s5579 + $0x80] sm:$0xff]
    %v5597 = vld [vmem:[%s5579 + $0x88] sm:$0xff]
    %v5598 = vld [vmem:[%s5579 + $0x90] sm:$0xff]
    %v5599 = vld [vmem:[%s5579 + $0x98] sm:$0xff]
    %v5600 = vld [vmem:[%s5579 + $0xa0] sm:$0xff]
    %v5601 = vld [vmem:[%s5579 + $0xa8] sm:$0xff]
    %v5602 = vld [vmem:[%s5579 + $0xb0] sm:$0xff]
    %v5603 = vld [vmem:[%s5579 + $0xb8] sm:$0xff]
    %v5604 = vld [vmem:[%s5579 + $0xc0] sm:$0xff]
    %v5605 = vld [vmem:[%s5579 + $0xc8] sm:$0xff]
    %v5606 = vld [vmem:[%s5579 + $0xd0] sm:$0xff]
    %v5607 = vld [vmem:[%s5579 + $0xd8] sm:$0xff]
    %v5608 = vld [vmem:[%s5579 + $0xe0] sm:$0xff]
    %v5609 = vld [vmem:[%s5579 + $0xe8] sm:$0xff]
    %v5610 = vld [vmem:[%s5579 + $0xf0] sm:$0xff]
    %v5611 = vld [vmem:[%s5579 + $0xf8] sm:$0xff]
    %v5612 = vld [vmem:[%s5579 + $0x100] sm:$0xff]
    %v5613 = vld [vmem:[%s5579 + $0x108] sm:$0xff]
    %v5614 = vld [vmem:[%s5579 + $0x110] sm:$0xff]
    %v5615 = vld [vmem:[%s5579 + $0x118] sm:$0xff]
    %v5616 = vld [vmem:[%s5579 + $0x120] sm:$0xff]
    %v5617 = vld [vmem:[%s5579 + $0x128] sm:$0xff]
    %v5618 = vld [vmem:[%s5579 + $0x130] sm:$0xff]
    %v5619 = vld [vmem:[%s5579 + $0x138] sm:$0xff]
    %v5620 = vld [vmem:[%s5579 + $0x140] sm:$0xff]
    %v5621 = vld [vmem:[%s5579 + $0x148] sm:$0xff]
    %v5622 = vld [vmem:[%s5579 + $0x150] sm:$0xff]
    %v5623 = vld [vmem:[%s5579 + $0x158] sm:$0xff]
    %v5624 = vld [vmem:[%s5579 + $0x160] sm:$0xff]
    %v5625 = vld [vmem:[%s5579 + $0x168] sm:$0xff]
    %v5626 = vld [vmem:[%s5579 + $0x170] sm:$0xff]
    %v5627 = vld [vmem:[%s5579 + $0x178] sm:$0xff]
    %v5628 = vld [vmem:[%s5579 + $0x180] sm:$0xff]
    %v5629 = vld [vmem:[%s5579 + $0x188] sm:$0xff]
    %v5630 = vld [vmem:[%s5579 + $0x190] sm:$0xff]
    %v5631 = vld [vmem:[%s5579 + $0x198] sm:$0xff]
    %v5632 = vld [vmem:[%s5579 + $0x1a0] sm:$0xff]
    %v5633 = vld [vmem:[%s5579 + $0x1a8] sm:$0xff]
    %v5634 = vld [vmem:[%s5579 + $0x1b0] sm:$0xff]
    %v5635 = vld [vmem:[%s5579 + $0x1b8] sm:$0xff]
    %v5636 = vunpack.c.l.s8.bf16 %v5580
    %v5637 = vunpack.c.l.s8.bf16 %v5581
    %v5638 = vunpack.c.l.s8.bf16 %v5582
    %v5639 = vunpack.c.l.s8.bf16 %v5583
    %v5640 = vunpack.c.l.s8.bf16 %v5584
    %v5641 = vunpack.c.l.s8.bf16 %v5585
    %v5642 = vunpack.c.l.s8.bf16 %v5586
    %v5643 = vunpack.c.h.s8.bf16 %v5580
    %v5644 = vunpack.c.h.s8.bf16 %v5581
    %v5645 = vunpack.c.h.s8.bf16 %v5582
    %v5646 = vunpack.c.h.s8.bf16 %v5583
    %v5647 = vunpack.c.h.s8.bf16 %v5584
    %v5648 = vunpack.c.h.s8.bf16 %v5585
    %v5649 = vunpack.c.h.s8.bf16 %v5586
    %v5650 = vunpack.c.l.s8.bf16 %v5587
    %v5651 = vunpack.c.l.s8.bf16 %v5588
    %v5652 = vunpack.c.l.s8.bf16 %v5589
    %v5653 = vunpack.c.l.s8.bf16 %v5590
    %v5654 = vunpack.c.l.s8.bf16 %v5591
    %v5655 = vunpack.c.l.s8.bf16 %v5592
    %v5656 = vunpack.c.l.s8.bf16 %v5593
    %v5657 = vunpack.c.h.s8.bf16 %v5587
    %v5658 = vunpack.c.h.s8.bf16 %v5588
    %v5659 = vunpack.c.h.s8.bf16 %v5589
    %v5660 = vunpack.c.h.s8.bf16 %v5590
    %v5661 = vunpack.c.h.s8.bf16 %v5591
    %v5662 = vunpack.c.h.s8.bf16 %v5592
    %v5663 = vunpack.c.h.s8.bf16 %v5593
    %v5664 = vunpack.c.l.s8.bf16 %v5594
    %v5665 = vunpack.c.l.s8.bf16 %v5595
    %v5666 = vunpack.c.l.s8.bf16 %v5596
    %v5667 = vunpack.c.l.s8.bf16 %v5597
    %v5668 = vunpack.c.l.s8.bf16 %v5598
    %v5669 = vunpack.c.l.s8.bf16 %v5599
    %v5670 = vunpack.c.l.s8.bf16 %v5600
    %v5671 = vunpack.c.h.s8.bf16 %v5594
    %v5672 = vunpack.c.h.s8.bf16 %v5595
    %v5673 = vunpack.c.h.s8.bf16 %v5596
    %v5674 = vunpack.c.h.s8.bf16 %v5597
    %v5675 = vunpack.c.h.s8.bf16 %v5598
    %v5676 = vunpack.c.h.s8.bf16 %v5599
    %v5677 = vunpack.c.h.s8.bf16 %v5600
    %v5678 = vunpack.c.l.s8.bf16 %v5601
    %v5679 = vunpack.c.l.s8.bf16 %v5602
    %v5680 = vunpack.c.l.s8.bf16 %v5603
    %v5681 = vunpack.c.l.s8.bf16 %v5604
    %v5682 = vunpack.c.l.s8.bf16 %v5605
    %v5683 = vunpack.c.l.s8.bf16 %v5606
    %v5684 = vunpack.c.l.s8.bf16 %v5607
    %v5685 = vunpack.c.h.s8.bf16 %v5601
    %v5686 = vunpack.c.h.s8.bf16 %v5602
    %v5687 = vunpack.c.h.s8.bf16 %v5603
    %v5688 = vunpack.c.h.s8.bf16 %v5604
    %v5689 = vunpack.c.h.s8.bf16 %v5605
    %v5690 = vunpack.c.h.s8.bf16 %v5606
    %v5691 = vunpack.c.h.s8.bf16 %v5607
    %v5692 = vunpack.c.l.s8.bf16 %v5608
    %v5693 = vunpack.c.l.s8.bf16 %v5609
    %v5694 = vunpack.c.l.s8.bf16 %v5610
    %v5695 = vunpack.c.l.s8.bf16 %v5611
    %v5696 = vunpack.c.l.s8.bf16 %v5612
    %v5697 = vunpack.c.l.s8.bf16 %v5613
    %v5698 = vunpack.c.l.s8.bf16 %v5614
    %v5699 = vunpack.c.h.s8.bf16 %v5608
    %v5700 = vunpack.c.h.s8.bf16 %v5609
    %v5701 = vunpack.c.h.s8.bf16 %v5610
    %v5702 = vunpack.c.h.s8.bf16 %v5611
    %v5703 = vunpack.c.h.s8.bf16 %v5612
    %v5704 = vunpack.c.h.s8.bf16 %v5613
    %v5705 = vunpack.c.h.s8.bf16 %v5614
    %v5706 = vunpack.c.l.s8.bf16 %v5615
    %v5707 = vunpack.c.l.s8.bf16 %v5616
    %v5708 = vunpack.c.l.s8.bf16 %v5617
    %v5709 = vunpack.c.l.s8.bf16 %v5618
    %v5710 = vunpack.c.l.s8.bf16 %v5619
    %v5711 = vunpack.c.l.s8.bf16 %v5620
    %v5712 = vunpack.c.l.s8.bf16 %v5621
    %v5713 = vunpack.c.h.s8.bf16 %v5615
    %v5714 = vunpack.c.h.s8.bf16 %v5616
    %v5715 = vunpack.c.h.s8.bf16 %v5617
    %v5716 = vunpack.c.h.s8.bf16 %v5618
    %v5717 = vunpack.c.h.s8.bf16 %v5619
    %v5718 = vunpack.c.h.s8.bf16 %v5620
    %v5719 = vunpack.c.h.s8.bf16 %v5621
    %v5720 = vunpack.c.l.s8.bf16 %v5622
    %v5721 = vunpack.c.l.s8.bf16 %v5623
    %v5722 = vunpack.c.l.s8.bf16 %v5624
    %v5723 = vunpack.c.l.s8.bf16 %v5625
    %v5724 = vunpack.c.l.s8.bf16 %v5626
    %v5725 = vunpack.c.l.s8.bf16 %v5627
    %v5726 = vunpack.c.l.s8.bf16 %v5628
    %v5727 = vunpack.c.h.s8.bf16 %v5622
    %v5728 = vunpack.c.h.s8.bf16 %v5623
    %v5729 = vunpack.c.h.s8.bf16 %v5624
    %v5730 = vunpack.c.h.s8.bf16 %v5625
    %v5731 = vunpack.c.h.s8.bf16 %v5626
    %v5732 = vunpack.c.h.s8.bf16 %v5627
    %v5733 = vunpack.c.h.s8.bf16 %v5628
    %v5734 = vunpack.c.l.s8.bf16 %v5629
    %v5735 = vunpack.c.l.s8.bf16 %v5630
    %v5736 = vunpack.c.l.s8.bf16 %v5631
    %v5737 = vunpack.c.l.s8.bf16 %v5632
    %v5738 = vunpack.c.l.s8.bf16 %v5633
    %v5739 = vunpack.c.l.s8.bf16 %v5634
    %v5740 = vunpack.c.l.s8.bf16 %v5635
    %v5741 = vunpack.c.h.s8.bf16 %v5629
    %v5742 = vunpack.c.h.s8.bf16 %v5630
    %v5743 = vunpack.c.h.s8.bf16 %v5631
    %v5744 = vunpack.c.h.s8.bf16 %v5632
    %v5745 = vunpack.c.h.s8.bf16 %v5633
    %v5746 = vunpack.c.h.s8.bf16 %v5634
    %v5747 = vunpack.c.h.s8.bf16 %v5635
    %v5752 = vunpack.c.l.b16 %v5575
    %v5753 = vunpack.c.l.b16 %v5576
    %v5754 = vunpack.c.l.b16 %v5577
    %v5755 = vunpack.c.l.b16 %v5578
    %v5756 = vsel %vm3800, %v5754, %v5752
    %v5757 = vsel %vm3800, %v5755, %v5753
    %v5758 = vpack.c.b16 %v5756, %v5756
    %v5759 = vpack.c.b16 %v5757, %v5757
    %5762 = vmatprep.subr.bf16.mxu0 %v5637
    %5763 = vmatpush1.bf16.msra.mxu0 %v5636
    %5764 = vmatprep.subr.bf16.mxu0 %v5644
    %5765 = vmatpush1.bf16.msra.mxu0 %v5643
    %5766 = vmatprep.subr.bf16.mxu0 %v5651
    %5767 = vmatpush1.bf16.msra.mxu0 %v5650
    %5768 = vmatprep.subr.bf16.mxu0 %v5658
    %5769 = vmatpush1.bf16.msra.mxu0 %v5657
    %5770 = vmatprep.subr.bf16.mxu0 %v5665
    %5771 = vmatpush1.bf16.msra.mxu0 %v5664
    %5772 = vmatprep.subr.bf16.mxu0 %v5672
    %5773 = vmatpush1.bf16.msra.mxu0 %v5671
    %5774 = vmatprep.subr.bf16.mxu0 %v5679
    %5775 = vmatpush1.bf16.msra.mxu0 %v5678
    %5776 = vmatprep.subr.bf16.mxu0 %v5686
    %5777 = vmatpush1.bf16.msra.mxu0 %v5685
    %5778 = vmatprep.subr.bf16.mxu0 %v5693
    %5779 = vmatpush1.bf16.msra.mxu0 %v5692
    %5780 = vmatprep.subr.bf16.mxu0 %v5700
    %5781 = vmatpush1.bf16.msra.mxu0 %v5699
    %5782 = vmatprep.subr.bf16.mxu0 %v5707
    %5783 = vmatpush1.bf16.msra.mxu0 %v5706
    %5784 = vmatprep.subr.bf16.mxu0 %v5714
    %5785 = vmatpush1.bf16.msra.mxu0 %v5713
    %5786 = vmatprep.subr.bf16.mxu0 %v5721
    %5787 = vmatpush1.bf16.msra.mxu0 %v5720
    %5788 = vmatprep.subr.bf16.mxu0 %v5728
    %5789 = vmatpush1.bf16.msra.mxu0 %v5727
    %5790 = vmatprep.subr.bf16.mxu0 %v5735
    %5791 = vmatpush1.bf16.msra.mxu0 %v5734
    %5792 = vmatprep.subr.bf16.mxu0 %v5742
    %5793 = vmatpush1.bf16.msra.mxu0 %v5741
    %5794 = vmatprep.mubr.bf16.mxu0 %v5759
    %5795 = vmatmul.mubr.bf16.gmra.mrb[0].mxu0 %v5758
    %v5796 = vpop.f32.mrb[0].mxu0
    %v5797 = vadd.f32 0.0, %v5796
    %v5798 = vpop.f32.mrb[0].mxu0
    %v5799 = vadd.f32 0.0, %v5798
    %v5800 = vpop.f32.mrb[0].mxu0
    %v5801 = vpop.f32.mrb[0].mxu0
    %5802 = vdwg.mxu0
    %5803 = vmatprep.subr.bf16.mxu0 %v5639
    %5804 = vmatpush1.bf16.msra.mxu0 %v5638
    %5805 = vmatprep.subr.bf16.mxu0 %v5646
    %5806 = vmatpush1.bf16.msra.mxu0 %v5645
    %5807 = vmatprep.subr.bf16.mxu0 %v5653
    %5808 = vmatpush1.bf16.msra.mxu0 %v5652
    %5809 = vmatprep.subr.bf16.mxu0 %v5660
    %5810 = vmatpush1.bf16.msra.mxu0 %v5659
    %5811 = vmatprep.subr.bf16.mxu0 %v5667
    %5812 = vmatpush1.bf16.msra.mxu0 %v5666
    %5813 = vmatprep.subr.bf16.mxu0 %v5674
    %5814 = vmatpush1.bf16.msra.mxu0 %v5673
    %5815 = vmatprep.subr.bf16.mxu0 %v5681
    %5816 = vmatpush1.bf16.msra.mxu0 %v5680
    %5817 = vmatprep.subr.bf16.mxu0 %v5688
    %5818 = vmatpush1.bf16.msra.mxu0 %v5687
    %5819 = vmatprep.subr.bf16.mxu0 %v5695
    %5820 = vmatpush1.bf16.msra.mxu0 %v5694
    %5821 = vmatprep.subr.bf16.mxu0 %v5702
    %5822 = vmatpush1.bf16.msra.mxu0 %v5701
    %5823 = vmatprep.subr.bf16.mxu0 %v5709
    %5824 = vmatpush1.bf16.msra.mxu0 %v5708
    %5825 = vmatprep.subr.bf16.mxu0 %v5716
    %5826 = vmatpush1.bf16.msra.mxu0 %v5715
    %5827 = vmatprep.subr.bf16.mxu0 %v5723
    %5828 = vmatpush1.bf16.msra.mxu0 %v5722
    %5829 = vmatprep.subr.bf16.mxu0 %v5730
    %5830 = vmatpush1.bf16.msra.mxu0 %v5729
    %5831 = vmatprep.subr.bf16.mxu0 %v5737
    %5832 = vmatpush1.bf16.msra.mxu0 %v5736
    %5833 = vmatprep.subr.bf16.mxu0 %v5744
    %5834 = vmatpush1.bf16.msra.mxu0 %v5743
    %5835 = vmatprep.mubr.bf16.mxu0 %v5759
    %5836 = vmatmul.mubr.bf16.gmra.mrb[0].mxu0 %v5758
    %v5837 = vpop.f32.mrb[0].mxu0
    %v5838 = vadd.f32 0.0, %v5837
    %v5839 = vpop.f32.mrb[0].mxu0
    %v5840 = vadd.f32 0.0, %v5839
    %v5841 = vpop.f32.mrb[0].mxu0
    %v5842 = vpop.f32.mrb[0].mxu0
    %5843 = vdwg.mxu0
    %5844 = vmatprep.subr.bf16.mxu0 %v5641
    %5845 = vmatpush1.bf16.msra.mxu0 %v5640
    %5846 = vmatprep.subr.bf16.mxu0 %v5648
    %5847 = vmatpush1.bf16.msra.mxu0 %v5647
    %5848 = vmatprep.subr.bf16.mxu0 %v5655
    %5849 = vmatpush1.bf16.msra.mxu0 %v5654
    %5850 = vmatprep.subr.bf16.mxu0 %v5662
    %5851 = vmatpush1.bf16.msra.mxu0 %v5661
    %5852 = vmatprep.subr.bf16.mxu0 %v5669
    %5853 = vmatpush1.bf16.msra.mxu0 %v5668
    %5854 = vmatprep.subr.bf16.mxu0 %v5676
    %5855 = vmatpush1.bf16.msra.mxu0 %v5675
    %5856 = vmatprep.subr.bf16.mxu0 %v5683
    %5857 = vmatpush1.bf16.msra.mxu0 %v5682
    %5858 = vmatprep.subr.bf16.mxu0 %v5690
    %5859 = vmatpush1.bf16.msra.mxu0 %v5689
    %5860 = vmatprep.subr.bf16.mxu0 %v5697
    %5861 = vmatpush1.bf16.msra.mxu0 %v5696
    %5862 = vmatprep.subr.bf16.mxu0 %v5704
    %5863 = vmatpush1.bf16.msra.mxu0 %v5703
    %5864 = vmatprep.subr.bf16.mxu0 %v5711
    %5865 = vmatpush1.bf16.msra.mxu0 %v5710
    %5866 = vmatprep.subr.bf16.mxu0 %v5718
    %5867 = vmatpush1.bf16.msra.mxu0 %v5717
    %5868 = vmatprep.subr.bf16.mxu0 %v5725
    %5869 = vmatpush1.bf16.msra.mxu0 %v5724
    %5870 = vmatprep.subr.bf16.mxu0 %v5732
    %5871 = vmatpush1.bf16.msra.mxu0 %v5731
    %5872 = vmatprep.subr.bf16.mxu0 %v5739
    %5873 = vmatpush1.bf16.msra.mxu0 %v5738
    %5874 = vmatprep.subr.bf16.mxu0 %v5746
    %5875 = vmatpush1.bf16.msra.mxu0 %v5745
    %5876 = vmatprep.mubr.bf16.mxu0 %v5759
    %5877 = vmatmul.mubr.bf16.gmra.mrb[0].mxu0 %v5758
    %v5878 = vpop.f32.mrb[0].mxu0
    %v5879 = vadd.f32 0.0, %v5878
    %v5880 = vpop.f32.mrb[0].mxu0
    %v5881 = vadd.f32 0.0, %v5880
    %v5882 = vpop.f32.mrb[0].mxu0
    %v5883 = vpop.f32.mrb[0].mxu0
    %5884 = vdwg.mxu0
    %5885 = vmatprep.subr.bf16.mxu0 0
    %5886 = vmatpush1.bf16.msra.mxu0 %v5642
    %5887 = vmatprep.subr.bf16.mxu0 0
    %5888 = vmatpush1.bf16.msra.mxu0 %v5649
    %5889 = vmatprep.subr.bf16.mxu0 0
    %5890 = vmatpush1.bf16.msra.mxu0 %v5656
    %5891 = vmatprep.subr.bf16.mxu0 0
    %5892 = vmatpush1.bf16.msra.mxu0 %v5663
    %5893 = vmatprep.subr.bf16.mxu0 0
    %5894 = vmatpush1.bf16.msra.mxu0 %v5670
    %5895 = vmatprep.subr.bf16.mxu0 0
    %5896 = vmatpush1.bf16.msra.mxu0 %v5677
    %5897 = vmatprep.subr.bf16.mxu0 0
    %5898 = vmatpush1.bf16.msra.mxu0 %v5684
    %5899 = vmatprep.subr.bf16.mxu0 0
    %5900 = vmatpush1.bf16.msra.mxu0 %v5691
    %5901 = vmatprep.subr.bf16.mxu0 0
    %5902 = vmatpush1.bf16.msra.mxu0 %v5698
    %5903 = vmatprep.subr.bf16.mxu0 0
    %5904 = vmatpush1.bf16.msra.mxu0 %v5705
    %5905 = vmatprep.subr.bf16.mxu0 0
    %5906 = vmatpush1.bf16.msra.mxu0 %v5712
    %5907 = vmatprep.subr.bf16.mxu0 0
    %5908 = vmatpush1.bf16.msra.mxu0 %v5719
    %5909 = vmatprep.subr.bf16.mxu0 0
    %5910 = vmatpush1.bf16.msra.mxu0 %v5726
    %5911 = vmatprep.subr.bf16.mxu0 0
    %5912 = vmatpush1.bf16.msra.mxu0 %v5733
    %5913 = vmatprep.subr.bf16.mxu0 0
    %5914 = vmatpush1.bf16.msra.mxu0 %v5740
    %5915 = vmatprep.subr.bf16.mxu0 0
    %5916 = vmatpush1.bf16.msra.mxu0 %v5747
    %5917 = vmatprep.mubr.bf16.mxu0 %v5759
    %5918 = vmatmul.mubr.bf16.gmra.mrb[0].mxu0 %v5758
    %v5919 = vpop.f32.mrb[0].mxu0
    %v5920 = vadd.f32 0.0, %v5919
    %v5921 = vpop.f32.mrb[0].mxu0
    %v5922 = vpop.f32.mrb[0].mxu0
    %v5923 = vpop.f32.mrb[0].mxu0
    %5924 = vdwg.mxu0
    %v5925 = vadd.f32 %v5568, %v5797
    %v5926 = vadd.f32 %v5569, %v5799
    %v5927 = vadd.f32 %v5570, %v5838
    %v5928 = vadd.f32 %v5571, %v5840
    %v5929 = vadd.f32 %v5572, %v5879
    %v5930 = vadd.f32 %v5573, %v5881
    %v5931 = vadd.f32 %v5574, %v5920
    %s5932 = scalar_lea.vmem %s6, 1
    %v5933 = vld [vmem:[%s5932] ss:$2 sm:$0xff]
    %v5935 = vlaneseq
    %v5936 = vshrl.u32 %v5935, 7
    %v5937 = vsub.s32 0, %v5936
    %v5938 = vrot.slane %v5933, %v5937
    %v5939 = vlaneseq
    %v5940 = vshrl.u32 %v5939, 7
    %v5941 = vsub.s32 1, %v5940
    %v5942 = vrot.slane %v5933, %v5941
    %v5943 = vlaneseq
    %v5944 = vshrl.u32 %v5943, 7
    %v5945 = vsub.s32 2, %v5944
    %v5946 = vrot.slane %v5933, %v5945
    %v5947 = vlaneseq
    %v5948 = vshrl.u32 %v5947, 7
    %v5949 = vsub.s32 3, %v5948
    %v5950 = vrot.slane %v5933, %v5949
    %v5951 = vlaneseq
    %v5952 = vshrl.u32 %v5951, 7
    %v5953 = vsub.s32 4, %v5952
    %v5954 = vrot.slane %v5933, %v5953
    %v5955 = vlaneseq
    %v5956 = vshrl.u32 %v5955, 7
    %v5957 = vsub.s32 5, %v5956
    %v5958 = vrot.slane %v5933, %v5957
    %v5959 = vlaneseq
    %v5960 = vshrl.u32 %v5959, 7
    %v5961 = vsub.s32 6, %v5960
    %v5962 = vrot.slane %v5933, %v5961
    %v5970 = vmul.f32 %v5925, %v5938
    %v5971 = vmul.f32 %v5926, %v5942
    %v5972 = vmul.f32 %v5927, %v5946
    %v5973 = vmul.f32 %v5928, %v5950
    %v5974 = vmul.f32 %v5929, %v5954
    %v5975 = vmul.f32 %v5930, %v5958
    %v5976 = vmul.f32 %v5931, %v5962
    %v5977 = vld [vmem:[%s6] ss:$2 sm:$0xff]
    %v5979 = vlaneseq
    %v5980 = vshrl.u32 %v5979, 7
    %v5981 = vsub.s32 0, %v5980
    %v5982 = vrot.slane %v5977, %v5981
    %v5983 = vlaneseq
    %v5984 = vshrl.u32 %v5983, 7
    %v5985 = vsub.s32 1, %v5984
    %v5986 = vrot.slane %v5977, %v5985
    %v5987 = vlaneseq
    %v5988 = vshrl.u32 %v5987, 7
    %v5989 = vsub.s32 2, %v5988
    %v5990 = vrot.slane %v5977, %v5989
    %v5991 = vlaneseq
    %v5992 = vshrl.u32 %v5991, 7
    %v5993 = vsub.s32 3, %v5992
    %v5994 = vrot.slane %v5977, %v5993
    %v5995 = vlaneseq
    %v5996 = vshrl.u32 %v5995, 7
    %v5997 = vsub.s32 4, %v5996
    %v5998 = vrot.slane %v5977, %v5997
    %v5999 = vlaneseq
    %v6000 = vshrl.u32 %v5999, 7
    %v6001 = vsub.s32 5, %v6000
    %v6002 = vrot.slane %v5977, %v6001
    %v6003 = vlaneseq
    %v6004 = vshrl.u32 %v6003, 7
    %v6005 = vsub.s32 6, %v6004
    %v6006 = vrot.slane %v5977, %v6005
    %v6014 = vadd.f32 %v5970, %v5982
    %v6015 = vadd.f32 %v5971, %v5986
    %v6016 = vadd.f32 %v5972, %v5990
    %v6017 = vadd.f32 %v5973, %v5994
    %v6018 = vadd.f32 %v5974, %v5998
    %v6019 = vadd.f32 %v5975, %v6002
    %v6020 = vadd.f32 %v5976, %v6006
    %v6021 = vmax.f32 %v6014, 0.0
    %v6022 = vmax.f32 %v6015, 0.0
    %v6023 = vmax.f32 %v6016, 0.0
    %v6024 = vmax.f32 %v6017, 0.0
    %v6025 = vmax.f32 %v6018, 0.0
    %v6026 = vmax.f32 %v6019, 0.0
    %v6027 = vmax.f32 %v6020, 0.0
    %s6028 = smul.u32 2, 112
    %s6029 = smul.u32 %s6028, 7
    %s6030 = sshll.u32 %s6029, 4
    %6031 = dma.done %s898, %s6030
    %v6032 = vld [vmem:[#allocation3] sm:$0xff]
    %v6033 = vld [vmem:[#allocation3 + $0x8] sm:$0xff]
    %v6034 = vld [vmem:[#allocation3 + $0x10] sm:$0xff]
    %v6035 = vld [vmem:[#allocation3 + $0x18] sm:$0xff]
    %v6036 = vld [vmem:[#allocation3 + $0x20] sm:$0xff]
    %v6037 = vld [vmem:[#allocation3 + $0x28] sm:$0xff]
    %v6038 = vld [vmem:[#allocation3 + $0x30] sm:$0xff]
    %v6039 = vld [vmem:[#allocation3 + $0x38] sm:$0xff]
    %v6040 = vld [vmem:[#allocation3 + $0x40] sm:$0xff]
    %v6041 = vld [vmem:[#allocation3 + $0x48] sm:$0xff]
    %v6042 = vld [vmem:[#allocation3 + $0x50] sm:$0xff]
    %v6043 = vld [vmem:[#allocation3 + $0x58] sm:$0xff]
    %v6044 = vld [vmem:[#allocation3 + $0x60] sm:$0xff]
    %v6045 = vld [vmem:[#allocation3 + $0x68] sm:$0xff]
    %v6046 = vld [vmem:[#allocation3 + $0x70] sm:$0xff]
    %v6047 = vld [vmem:[#allocation3 + $0x78] sm:$0xff]
    %v6048 = vld [vmem:[#allocation3 + $0x80] sm:$0xff]
    %v6049 = vld [vmem:[#allocation3 + $0x88] sm:$0xff]
    %v6050 = vld [vmem:[#allocation3 + $0x90] sm:$0xff]
    %v6051 = vld [vmem:[#allocation3 + $0x98] sm:$0xff]
    %v6052 = vld [vmem:[#allocation3 + $0xa0] sm:$0xff]
    %v6053 = vld [vmem:[#allocation3 + $0xa8] sm:$0xff]
    %v6054 = vld [vmem:[#allocation3 + $0xb0] sm:$0xff]
    %v6055 = vld [vmem:[#allocation3 + $0xb8] sm:$0xff]
    %v6056 = vld [vmem:[#allocation3 + $0xc0] sm:$0xff]
    %v6057 = vld [vmem:[#allocation3 + $0xc8] sm:$0xff]
    %v6058 = vld [vmem:[#allocation3 + $0xd0] sm:$0xff]
    %v6059 = vld [vmem:[#allocation3 + $0xd8] sm:$0xff]
    %v6060 = vld [vmem:[#allocation3 + $0xe0] sm:$0xff]
    %v6061 = vld [vmem:[#allocation3 + $0xe8] sm:$0xff]
    %v6062 = vld [vmem:[#allocation3 + $0xf0] sm:$0xff]
    %v6063 = vld [vmem:[#allocation3 + $0xf8] sm:$0xff]
    %v6064 = vld [vmem:[#allocation3 + $0x100] sm:$0xff]
    %v6065 = vld [vmem:[#allocation3 + $0x108] sm:$0xff]
    %v6066 = vld [vmem:[#allocation3 + $0x110] sm:$0xff]
    %v6067 = vld [vmem:[#allocation3 + $0x118] sm:$0xff]
    %v6068 = vld [vmem:[#allocation3 + $0x120] sm:$0xff]
    %v6069 = vld [vmem:[#allocation3 + $0x128] sm:$0xff]
    %v6070 = vld [vmem:[#allocation3 + $0x130] sm:$0xff]
    %v6071 = vld [vmem:[#allocation3 + $0x138] sm:$0xff]
    %v6072 = vld [vmem:[#allocation3 + $0x140] sm:$0xff]
    %v6073 = vld [vmem:[#allocation3 + $0x148] sm:$0xff]
    %v6074 = vld [vmem:[#allocation3 + $0x150] sm:$0xff]
    %v6075 = vld [vmem:[#allocation3 + $0x158] sm:$0xff]
    %v6076 = vld [vmem:[#allocation3 + $0x160] sm:$0xff]
    %v6077 = vld [vmem:[#allocation3 + $0x168] sm:$0xff]
    %v6078 = vld [vmem:[#allocation3 + $0x170] sm:$0xff]
    %v6079 = vld [vmem:[#allocation3 + $0x178] sm:$0xff]
    %v6080 = vld [vmem:[#allocation3 + $0x180] sm:$0xff]
    %v6081 = vld [vmem:[#allocation3 + $0x188] sm:$0xff]
    %v6082 = vld [vmem:[#allocation3 + $0x190] sm:$0xff]
    %v6083 = vld [vmem:[#allocation3 + $0x198] sm:$0xff]
    %v6084 = vld [vmem:[#allocation3 + $0x1a0] sm:$0xff]
    %v6085 = vld [vmem:[#allocation3 + $0x1a8] sm:$0xff]
    %v6086 = vld [vmem:[#allocation3 + $0x1b0] sm:$0xff]
    %v6087 = vld [vmem:[#allocation3 + $0x1b8] sm:$0xff]
    %v6088 = vld [vmem:[#allocation3 + $0x1c0] sm:$0xff]
    %v6089 = vld [vmem:[#allocation3 + $0x1c8] sm:$0xff]
    %v6090 = vld [vmem:[#allocation3 + $0x1d0] sm:$0xff]
    %v6091 = vld [vmem:[#allocation3 + $0x1d8] sm:$0xff]
    %v6092 = vld [vmem:[#allocation3 + $0x1e0] sm:$0xff]
    %v6093 = vld [vmem:[#allocation3 + $0x1e8] sm:$0xff]
    %v6094 = vld [vmem:[#allocation3 + $0x1f0] sm:$0xff]
    %v6095 = vld [vmem:[#allocation3 + $0x1f8] sm:$0xff]
    %v6096 = vld [vmem:[#allocation3 + $0x200] sm:$0xff]
    %v6097 = vld [vmem:[#allocation3 + $0x208] sm:$0xff]
    %v6098 = vld [vmem:[#allocation3 + $0x210] sm:$0xff]
    %v6099 = vld [vmem:[#allocation3 + $0x218] sm:$0xff]
    %v6100 = vld [vmem:[#allocation3 + $0x220] sm:$0xff]
    %v6101 = vld [vmem:[#allocation3 + $0x228] sm:$0xff]
    %v6102 = vld [vmem:[#allocation3 + $0x230] sm:$0xff]
    %v6103 = vld [vmem:[#allocation3 + $0x238] sm:$0xff]
    %v6104 = vld [vmem:[#allocation3 + $0x240] sm:$0xff]
    %v6105 = vld [vmem:[#allocation3 + $0x248] sm:$0xff]
    %v6106 = vld [vmem:[#allocation3 + $0x250] sm:$0xff]
    %v6107 = vld [vmem:[#allocation3 + $0x258] sm:$0xff]
    %v6108 = vld [vmem:[#allocation3 + $0x260] sm:$0xff]
    %v6109 = vld [vmem:[#allocation3 + $0x268] sm:$0xff]
    %v6110 = vld [vmem:[#allocation3 + $0x270] sm:$0xff]
    %v6111 = vld [vmem:[#allocation3 + $0x278] sm:$0xff]
    %v6112 = vld [vmem:[#allocation3 + $0x280] sm:$0xff]
    %v6113 = vld [vmem:[#allocation3 + $0x288] sm:$0xff]
    %v6114 = vld [vmem:[#allocation3 + $0x290] sm:$0xff]
    %v6115 = vld [vmem:[#allocation3 + $0x298] sm:$0xff]
    %v6116 = vld [vmem:[#allocation3 + $0x2a0] sm:$0xff]
    %v6117 = vld [vmem:[#allocation3 + $0x2a8] sm:$0xff]
    %v6118 = vld [vmem:[#allocation3 + $0x2b0] sm:$0xff]
    %v6119 = vld [vmem:[#allocation3 + $0x2b8] sm:$0xff]
    %v6120 = vld [vmem:[#allocation3 + $0x2c0] sm:$0xff]
    %v6121 = vld [vmem:[#allocation3 + $0x2c8] sm:$0xff]
    %v6122 = vld [vmem:[#allocation3 + $0x2d0] sm:$0xff]
    %v6123 = vld [vmem:[#allocation3 + $0x2d8] sm:$0xff]
    %v6124 = vld [vmem:[#allocation3 + $0x2e0] sm:$0xff]
    %v6125 = vld [vmem:[#allocation3 + $0x2e8] sm:$0xff]
    %v6126 = vld [vmem:[#allocation3 + $0x2f0] sm:$0xff]
    %v6127 = vld [vmem:[#allocation3 + $0x2f8] sm:$0xff]
    %v6128 = vld [vmem:[#allocation3 + $0x300] sm:$0xff]
    %v6129 = vld [vmem:[#allocation3 + $0x308] sm:$0xff]
    %v6130 = vld [vmem:[#allocation3 + $0x310] sm:$0xff]
    %v6131 = vld [vmem:[#allocation3 + $0x318] sm:$0xff]
    %v6132 = vld [vmem:[#allocation3 + $0x320] sm:$0xff]
    %v6133 = vld [vmem:[#allocation3 + $0x328] sm:$0xff]
    %v6134 = vld [vmem:[#allocation3 + $0x330] sm:$0xff]
    %v6135 = vld [vmem:[#allocation3 + $0x338] sm:$0xff]
    %v6136 = vld [vmem:[#allocation3 + $0x340] sm:$0xff]
    %v6137 = vld [vmem:[#allocation3 + $0x348] sm:$0xff]
    %v6138 = vld [vmem:[#allocation3 + $0x350] sm:$0xff]
    %v6139 = vld [vmem:[#allocation3 + $0x358] sm:$0xff]
    %v6140 = vld [vmem:[#allocation3 + $0x360] sm:$0xff]
    %v6141 = vld [vmem:[#allocation3 + $0x368] sm:$0xff]
    %v6142 = vld [vmem:[#allocation3 + $0x370] sm:$0xff]
    %v6143 = vld [vmem:[#allocation3 + $0x378] sm:$0xff]
    %v6144 = vld [vmem:[#allocation3 + $0x380] sm:$0xff]
    %v6145 = vld [vmem:[#allocation3 + $0x388] sm:$0xff]
    %v6146 = vld [vmem:[#allocation3 + $0x390] sm:$0xff]
    %v6147 = vld [vmem:[#allocation3 + $0x398] sm:$0xff]
    %v6148 = vld [vmem:[#allocation3 + $0x3a0] sm:$0xff]
    %v6149 = vld [vmem:[#allocation3 + $0x3a8] sm:$0xff]
    %v6150 = vld [vmem:[#allocation3 + $0x3b0] sm:$0xff]
    %v6151 = vld [vmem:[#allocation3 + $0x3b8] sm:$0xff]
    %v6152 = vld [vmem:[#allocation3 + $0x3c0] sm:$0xff]
    %v6153 = vld [vmem:[#allocation3 + $0x3c8] sm:$0xff]
    %v6154 = vld [vmem:[#allocation3 + $0x3d0] sm:$0xff]
    %v6155 = vld [vmem:[#allocation3 + $0x3d8] sm:$0xff]
    %v6156 = vld [vmem:[#allocation3 + $0x3e0] sm:$0xff]
    %v6157 = vld [vmem:[#allocation3 + $0x3e8] sm:$0xff]
    %v6158 = vld [vmem:[#allocation3 + $0x3f0] sm:$0xff]
    %v6159 = vld [vmem:[#allocation3 + $0x3f8] sm:$0xff]
    %v6160 = vld [vmem:[#allocation3 + $0x400] sm:$0xff]
    %v6161 = vld [vmem:[#allocation3 + $0x408] sm:$0xff]
    %v6162 = vld [vmem:[#allocation3 + $0x410] sm:$0xff]
    %v6163 = vld [vmem:[#allocation3 + $0x418] sm:$0xff]
    %v6164 = vld [vmem:[#allocation3 + $0x420] sm:$0xff]
    %v6165 = vld [vmem:[#allocation3 + $0x428] sm:$0xff]
    %v6166 = vld [vmem:[#allocation3 + $0x430] sm:$0xff]
    %v6167 = vld [vmem:[#allocation3 + $0x438] sm:$0xff]
    %v6168 = vld [vmem:[#allocation3 + $0x440] sm:$0xff]
    %v6169 = vld [vmem:[#allocation3 + $0x448] sm:$0xff]
    %v6170 = vld [vmem:[#allocation3 + $0x450] sm:$0xff]
    %v6171 = vld [vmem:[#allocation3 + $0x458] sm:$0xff]
    %v6172 = vld [vmem:[#allocation3 + $0x460] sm:$0xff]
    %v6173 = vld [vmem:[#allocation3 + $0x468] sm:$0xff]
    %v6174 = vld [vmem:[#allocation3 + $0x470] sm:$0xff]
    %v6175 = vld [vmem:[#allocation3 + $0x478] sm:$0xff]
    %v6176 = vld [vmem:[#allocation3 + $0x480] sm:$0xff]
    %v6177 = vld [vmem:[#allocation3 + $0x488] sm:$0xff]
    %v6178 = vld [vmem:[#allocation3 + $0x490] sm:$0xff]
    %v6179 = vld [vmem:[#allocation3 + $0x498] sm:$0xff]
    %v6180 = vld [vmem:[#allocation3 + $0x4a0] sm:$0xff]
    %v6181 = vld [vmem:[#allocation3 + $0x4a8] sm:$0xff]
    %v6182 = vld [vmem:[#allocation3 + $0x4b0] sm:$0xff]
    %v6183 = vld [vmem:[#allocation3 + $0x4b8] sm:$0xff]
    %v6184 = vld [vmem:[#allocation3 + $0x4c0] sm:$0xff]
    %v6185 = vld [vmem:[#allocation3 + $0x4c8] sm:$0xff]
    %v6186 = vld [vmem:[#allocation3 + $0x4d0] sm:$0xff]
    %v6187 = vld [vmem:[#allocation3 + $0x4d8] sm:$0xff]
    %v6188 = vld [vmem:[#allocation3 + $0x4e0] sm:$0xff]
    %v6189 = vld [vmem:[#allocation3 + $0x4e8] sm:$0xff]
    %v6190 = vld [vmem:[#allocation3 + $0x4f0] sm:$0xff]
    %v6191 = vld [vmem:[#allocation3 + $0x4f8] sm:$0xff]
    %v6192 = vld [vmem:[#allocation3 + $0x500] sm:$0xff]
    %v6193 = vld [vmem:[#allocation3 + $0x508] sm:$0xff]
    %v6194 = vld [vmem:[#allocation3 + $0x510] sm:$0xff]
    %v6195 = vld [vmem:[#allocation3 + $0x518] sm:$0xff]
    %v6196 = vld [vmem:[#allocation3 + $0x520] sm:$0xff]
    %v6197 = vld [vmem:[#allocation3 + $0x528] sm:$0xff]
    %v6198 = vld [vmem:[#allocation3 + $0x530] sm:$0xff]
    %v6199 = vld [vmem:[#allocation3 + $0x538] sm:$0xff]
    %v6200 = vld [vmem:[#allocation3 + $0x540] sm:$0xff]
    %v6201 = vld [vmem:[#allocation3 + $0x548] sm:$0xff]
    %v6202 = vld [vmem:[#allocation3 + $0x550] sm:$0xff]
    %v6203 = vld [vmem:[#allocation3 + $0x558] sm:$0xff]
    %v6204 = vld [vmem:[#allocation3 + $0x560] sm:$0xff]
    %v6205 = vld [vmem:[#allocation3 + $0x568] sm:$0xff]
    %v6206 = vld [vmem:[#allocation3 + $0x570] sm:$0xff]
    %v6207 = vld [vmem:[#allocation3 + $0x578] sm:$0xff]
    %v6208 = vld [vmem:[#allocation3 + $0x580] sm:$0xff]
    %v6209 = vld [vmem:[#allocation3 + $0x588] sm:$0xff]
    %v6210 = vld [vmem:[#allocation3 + $0x590] sm:$0xff]
    %v6211 = vld [vmem:[#allocation3 + $0x598] sm:$0xff]
    %v6212 = vld [vmem:[#allocation3 + $0x5a0] sm:$0xff]
    %v6213 = vld [vmem:[#allocation3 + $0x5a8] sm:$0xff]
    %v6214 = vld [vmem:[#allocation3 + $0x5b0] sm:$0xff]
    %v6215 = vld [vmem:[#allocation3 + $0x5b8] sm:$0xff]
    %v6216 = vld [vmem:[#allocation3 + $0x5c0] sm:$0xff]
    %v6217 = vld [vmem:[#allocation3 + $0x5c8] sm:$0xff]
    %v6218 = vld [vmem:[#allocation3 + $0x5d0] sm:$0xff]
    %v6219 = vld [vmem:[#allocation3 + $0x5d8] sm:$0xff]
    %v6220 = vld [vmem:[#allocation3 + $0x5e0] sm:$0xff]
    %v6221 = vld [vmem:[#allocation3 + $0x5e8] sm:$0xff]
    %v6222 = vld [vmem:[#allocation3 + $0x5f0] sm:$0xff]
    %v6223 = vld [vmem:[#allocation3 + $0x5f8] sm:$0xff]
    %v6224 = vld [vmem:[#allocation3 + $0x600] sm:$0xff]
    %v6225 = vld [vmem:[#allocation3 + $0x608] sm:$0xff]
    %v6226 = vld [vmem:[#allocation3 + $0x610] sm:$0xff]
    %v6227 = vld [vmem:[#allocation3 + $0x618] sm:$0xff]
    %v6228 = vunpack.c.l.s8.bf16 %v6032
    %v6229 = vunpack.c.l.s8.bf16 %v6033
    %v6230 = vunpack.c.l.s8.bf16 %v6034
    %v6231 = vunpack.c.l.s8.bf16 %v6035
    %v6232 = vunpack.c.l.s8.bf16 %v6036
    %v6233 = vunpack.c.l.s8.bf16 %v6037
    %v6234 = vunpack.c.l.s8.bf16 %v6038
    %v6235 = vunpack.c.h.s8.bf16 %v6032
    %v6236 = vunpack.c.h.s8.bf16 %v6033
    %v6237 = vunpack.c.h.s8.bf16 %v6034
    %v6238 = vunpack.c.h.s8.bf16 %v6035
    %v6239 = vunpack.c.h.s8.bf16 %v6036
    %v6240 = vunpack.c.h.s8.bf16 %v6037
    %v6241 = vunpack.c.h.s8.bf16 %v6038
    %v6242 = vunpack.c.l.s8.bf16 %v6039
    %v6243 = vunpack.c.l.s8.bf16 %v6040
    %v6244 = vunpack.c.l.s8.bf16 %v6041
    %v6245 = vunpack.c.l.s8.bf16 %v6042
    %v6246 = vunpack.c.l.s8.bf16 %v6043
    %v6247 = vunpack.c.l.s8.bf16 %v6044
    %v6248 = vunpack.c.l.s8.bf16 %v6045
    %v6249 = vunpack.c.h.s8.bf16 %v6039
    %v6250 = vunpack.c.h.s8.bf16 %v6040
    %v6251 = vunpack.c.h.s8.bf16 %v6041
    %v6252 = vunpack.c.h.s8.bf16 %v6042
    %v6253 = vunpack.c.h.s8.bf16 %v6043
    %v6254 = vunpack.c.h.s8.bf16 %v6044
    %v6255 = vunpack.c.h.s8.bf16 %v6045
    %v6256 = vunpack.c.l.s8.bf16 %v6046
    %v6257 = vunpack.c.l.s8.bf16 %v6047
    %v6258 = vunpack.c.l.s8.bf16 %v6048
    %v6259 = vunpack.c.l.s8.bf16 %v6049
    %v6260 = vunpack.c.l.s8.bf16 %v6050
    %v6261 = vunpack.c.l.s8.bf16 %v6051
    %v6262 = vunpack.c.l.s8.bf16 %v6052
    %v6263 = vunpack.c.h.s8.bf16 %v6046
    %v6264 = vunpack.c.h.s8.bf16 %v6047
    %v6265 = vunpack.c.h.s8.bf16 %v6048
    %v6266 = vunpack.c.h.s8.bf16 %v6049
    %v6267 = vunpack.c.h.s8.bf16 %v6050
    %v6268 = vunpack.c.h.s8.bf16 %v6051
    %v6269 = vunpack.c.h.s8.bf16 %v6052
    %v6270 = vunpack.c.l.s8.bf16 %v6053
    %v6271 = vunpack.c.l.s8.bf16 %v6054
    %v6272 = vunpack.c.l.s8.bf16 %v6055
    %v6273 = vunpack.c.l.s8.bf16 %v6056
    %v6274 = vunpack.c.l.s8.bf16 %v6057
    %v6275 = vunpack.c.l.s8.bf16 %v6058
    %v6276 = vunpack.c.l.s8.bf16 %v6059
    %v6277 = vunpack.c.h.s8.bf16 %v6053
    %v6278 = vunpack.c.h.s8.bf16 %v6054
    %v6279 = vunpack.c.h.s8.bf16 %v6055
    %v6280 = vunpack.c.h.s8.bf16 %v6056
    %v6281 = vunpack.c.h.s8.bf16 %v6057
    %v6282 = vunpack.c.h.s8.bf16 %v6058
    %v6283 = vunpack.c.h.s8.bf16 %v6059
    %v6284 = vunpack.c.l.s8.bf16 %v6060
    %v6285 = vunpack.c.l.s8.bf16 %v6061
    %v6286 = vunpack.c.l.s8.bf16 %v6062
    %v6287 = vunpack.c.l.s8.bf16 %v6063
    %v6288 = vunpack.c.l.s8.bf16 %v6064
    %v6289 = vunpack.c.l.s8.bf16 %v6065
    %v6290 = vunpack.c.l.s8.bf16 %v6066
    %v6291 = vunpack.c.h.s8.bf16 %v6060
    %v6292 = vunpack.c.h.s8.bf16 %v6061
    %v6293 = vunpack.c.h.s8.bf16 %v6062
    %v6294 = vunpack.c.h.s8.bf16 %v6063
    %v6295 = vunpack.c.h.s8.bf16 %v6064
    %v6296 = vunpack.c.h.s8.bf16 %v6065
    %v6297 = vunpack.c.h.s8.bf16 %v6066
    %v6298 = vunpack.c.l.s8.bf16 %v6067
    %v6299 = vunpack.c.l.s8.bf16 %v6068
    %v6300 = vunpack.c.l.s8.bf16 %v6069
    %v6301 = vunpack.c.l.s8.bf16 %v6070
    %v6302 = vunpack.c.l.s8.bf16 %v6071
    %v6303 = vunpack.c.l.s8.bf16 %v6072
    %v6304 = vunpack.c.l.s8.bf16 %v6073
    %v6305 = vunpack.c.h.s8.bf16 %v6067
    %v6306 = vunpack.c.h.s8.bf16 %v6068
    %v6307 = vunpack.c.h.s8.bf16 %v6069
    %v6308 = vunpack.c.h.s8.bf16 %v6070
    %v6309 = vunpack.c.h.s8.bf16 %v6071
    %v6310 = vunpack.c.h.s8.bf16 %v6072
    %v6311 = vunpack.c.h.s8.bf16 %v6073
    %v6312 = vunpack.c.l.s8.bf16 %v6074
    %v6313 = vunpack.c.l.s8.bf16 %v6075
    %v6314 = vunpack.c.l.s8.bf16 %v6076
    %v6315 = vunpack.c.l.s8.bf16 %v6077
    %v6316 = vunpack.c.l.s8.bf16 %v6078
    %v6317 = vunpack.c.l.s8.bf16 %v6079
    %v6318 = vunpack.c.l.s8.bf16 %v6080
    %v6319 = vunpack.c.h.s8.bf16 %v6074
    %v6320 = vunpack.c.h.s8.bf16 %v6075
    %v6321 = vunpack.c.h.s8.bf16 %v6076
    %v6322 = vunpack.c.h.s8.bf16 %v6077
    %v6323 = vunpack.c.h.s8.bf16 %v6078
    %v6324 = vunpack.c.h.s8.bf16 %v6079
    %v6325 = vunpack.c.h.s8.bf16 %v6080
    %v6326 = vunpack.c.l.s8.bf16 %v6081
    %v6327 = vunpack.c.l.s8.bf16 %v6082
    %v6328 = vunpack.c.l.s8.bf16 %v6083
    %v6329 = vunpack.c.l.s8.bf16 %v6084
    %v6330 = vunpack.c.l.s8.bf16 %v6085
    %v6331 = vunpack.c.l.s8.bf16 %v6086
    %v6332 = vunpack.c.l.s8.bf16 %v6087
    %v6333 = vunpack.c.h.s8.bf16 %v6081
    %v6334 = vunpack.c.h.s8.bf16 %v6082
    %v6335 = vunpack.c.h.s8.bf16 %v6083
    %v6336 = vunpack.c.h.s8.bf16 %v6084
    %v6337 = vunpack.c.h.s8.bf16 %v6085
    %v6338 = vunpack.c.h.s8.bf16 %v6086
    %v6339 = vunpack.c.h.s8.bf16 %v6087
    %v6340 = vunpack.c.l.s8.bf16 %v6088
    %v6341 = vunpack.c.l.s8.bf16 %v6089
    %v6342 = vunpack.c.l.s8.bf16 %v6090
    %v6343 = vunpack.c.l.s8.bf16 %v6091
    %v6344 = vunpack.c.l.s8.bf16 %v6092
    %v6345 = vunpack.c.l.s8.bf16 %v6093
    %v6346 = vunpack.c.l.s8.bf16 %v6094
    %v6347 = vunpack.c.h.s8.bf16 %v6088
    %v6348 = vunpack.c.h.s8.bf16 %v6089
    %v6349 = vunpack.c.h.s8.bf16 %v6090
    %v6350 = vunpack.c.h.s8.bf16 %v6091
    %v6351 = vunpack.c.h.s8.bf16 %v6092
    %v6352 = vunpack.c.h.s8.bf16 %v6093
    %v6353 = vunpack.c.h.s8.bf16 %v6094
    %v6354 = vunpack.c.l.s8.bf16 %v6095
    %v6355 = vunpack.c.l.s8.bf16 %v6096
    %v6356 = vunpack.c.l.s8.bf16 %v6097
    %v6357 = vunpack.c.l.s8.bf16 %v6098
    %v6358 = vunpack.c.l.s8.bf16 %v6099
    %v6359 = vunpack.c.l.s8.bf16 %v6100
    %v6360 = vunpack.c.l.s8.bf16 %v6101
    %v6361 = vunpack.c.h.s8.bf16 %v6095
    %v6362 = vunpack.c.h.s8.bf16 %v6096
    %v6363 = vunpack.c.h.s8.bf16 %v6097
    %v6364 = vunpack.c.h.s8.bf16 %v6098
    %v6365 = vunpack.c.h.s8.bf16 %v6099
    %v6366 = vunpack.c.h.s8.bf16 %v6100
    %v6367 = vunpack.c.h.s8.bf16 %v6101
    %v6368 = vunpack.c.l.s8.bf16 %v6102
    %v6369 = vunpack.c.l.s8.bf16 %v6103
    %v6370 = vunpack.c.l.s8.bf16 %v6104
    %v6371 = vunpack.c.l.s8.bf16 %v6105
    %v6372 = vunpack.c.l.s8.bf16 %v6106
    %v6373 = vunpack.c.l.s8.bf16 %v6107
    %v6374 = vunpack.c.l.s8.bf16 %v6108
    %v6375 = vunpack.c.h.s8.bf16 %v6102
    %v6376 = vunpack.c.h.s8.bf16 %v6103
    %v6377 = vunpack.c.h.s8.bf16 %v6104
    %v6378 = vunpack.c.h.s8.bf16 %v6105
    %v6379 = vunpack.c.h.s8.bf16 %v6106
    %v6380 = vunpack.c.h.s8.bf16 %v6107
    %v6381 = vunpack.c.h.s8.bf16 %v6108
    %v6382 = vunpack.c.l.s8.bf16 %v6109
    %v6383 = vunpack.c.l.s8.bf16 %v6110
    %v6384 = vunpack.c.l.s8.bf16 %v6111
    %v6385 = vunpack.c.l.s8.bf16 %v6112
    %v6386 = vunpack.c.l.s8.bf16 %v6113
    %v6387 = vunpack.c.l.s8.bf16 %v6114
    %v6388 = vunpack.c.l.s8.bf16 %v6115
    %v6389 = vunpack.c.h.s8.bf16 %v6109
    %v6390 = vunpack.c.h.s8.bf16 %v6110
    %v6391 = vunpack.c.h.s8.bf16 %v6111
    %v6392 = vunpack.c.h.s8.bf16 %v6112
    %v6393 = vunpack.c.h.s8.bf16 %v6113
    %v6394 = vunpack.c.h.s8.bf16 %v6114
    %v6395 = vunpack.c.h.s8.bf16 %v6115
    %v6396 = vunpack.c.l.s8.bf16 %v6116
    %v6397 = vunpack.c.l.s8.bf16 %v6117
    %v6398 = vunpack.c.l.s8.bf16 %v6118
    %v6399 = vunpack.c.l.s8.bf16 %v6119
    %v6400 = vunpack.c.l.s8.bf16 %v6120
    %v6401 = vunpack.c.l.s8.bf16 %v6121
    %v6402 = vunpack.c.l.s8.bf16 %v6122
    %v6403 = vunpack.c.h.s8.bf16 %v6116
    %v6404 = vunpack.c.h.s8.bf16 %v6117
    %v6405 = vunpack.c.h.s8.bf16 %v6118
    %v6406 = vunpack.c.h.s8.bf16 %v6119
    %v6407 = vunpack.c.h.s8.bf16 %v6120
    %v6408 = vunpack.c.h.s8.bf16 %v6121
    %v6409 = vunpack.c.h.s8.bf16 %v6122
    %v6410 = vunpack.c.l.s8.bf16 %v6123
    %v6411 = vunpack.c.l.s8.bf16 %v6124
    %v6412 = vunpack.c.l.s8.bf16 %v6125
    %v6413 = vunpack.c.l.s8.bf16 %v6126
    %v6414 = vunpack.c.l.s8.bf16 %v6127
    %v6415 = vunpack.c.l.s8.bf16 %v6128
    %v6416 = vunpack.c.l.s8.bf16 %v6129
    %v6417 = vunpack.c.h.s8.bf16 %v6123
    %v6418 = vunpack.c.h.s8.bf16 %v6124
    %v6419 = vunpack.c.h.s8.bf16 %v6125
    %v6420 = vunpack.c.h.s8.bf16 %v6126
    %v6421 = vunpack.c.h.s8.bf16 %v6127
    %v6422 = vunpack.c.h.s8.bf16 %v6128
    %v6423 = vunpack.c.h.s8.bf16 %v6129
    %v6424 = vunpack.c.l.s8.bf16 %v6130
    %v6425 = vunpack.c.l.s8.bf16 %v6131
    %v6426 = vunpack.c.l.s8.bf16 %v6132
    %v6427 = vunpack.c.l.s8.bf16 %v6133
    %v6428 = vunpack.c.l.s8.bf16 %v6134
    %v6429 = vunpack.c.l.s8.bf16 %v6135
    %v6430 = vunpack.c.l.s8.bf16 %v6136
    %v6431 = vunpack.c.h.s8.bf16 %v6130
    %v6432 = vunpack.c.h.s8.bf16 %v6131
    %v6433 = vunpack.c.h.s8.bf16 %v6132
    %v6434 = vunpack.c.h.s8.bf16 %v6133
    %v6435 = vunpack.c.h.s8.bf16 %v6134
    %v6436 = vunpack.c.h.s8.bf16 %v6135
    %v6437 = vunpack.c.h.s8.bf16 %v6136
    %v6438 = vunpack.c.l.s8.bf16 %v6137
    %v6439 = vunpack.c.l.s8.bf16 %v6138
    %v6440 = vunpack.c.l.s8.bf16 %v6139
    %v6441 = vunpack.c.l.s8.bf16 %v6140
    %v6442 = vunpack.c.l.s8.bf16 %v6141
    %v6443 = vunpack.c.l.s8.bf16 %v6142
    %v6444 = vunpack.c.l.s8.bf16 %v6143
    %v6445 = vunpack.c.h.s8.bf16 %v6137
    %v6446 = vunpack.c.h.s8.bf16 %v6138
    %v6447 = vunpack.c.h.s8.bf16 %v6139
    %v6448 = vunpack.c.h.s8.bf16 %v6140
    %v6449 = vunpack.c.h.s8.bf16 %v6141
    %v6450 = vunpack.c.h.s8.bf16 %v6142
    %v6451 = vunpack.c.h.s8.bf16 %v6143
    %v6452 = vunpack.c.l.s8.bf16 %v6144
    %v6453 = vunpack.c.l.s8.bf16 %v6145
    %v6454 = vunpack.c.l.s8.bf16 %v6146
    %v6455 = vunpack.c.l.s8.bf16 %v6147
    %v6456 = vunpack.c.l.s8.bf16 %v6148
    %v6457 = vunpack.c.l.s8.bf16 %v6149
    %v6458 = vunpack.c.l.s8.bf16 %v6150
    %v6459 = vunpack.c.h.s8.bf16 %v6144
    %v6460 = vunpack.c.h.s8.bf16 %v6145
    %v6461 = vunpack.c.h.s8.bf16 %v6146
    %v6462 = vunpack.c.h.s8.bf16 %v6147
    %v6463 = vunpack.c.h.s8.bf16 %v6148
    %v6464 = vunpack.c.h.s8.bf16 %v6149
    %v6465 = vunpack.c.h.s8.bf16 %v6150
    %v6466 = vunpack.c.l.s8.bf16 %v6151
    %v6467 = vunpack.c.l.s8.bf16 %v6152
    %v6468 = vunpack.c.l.s8.bf16 %v6153
    %v6469 = vunpack.c.l.s8.bf16 %v6154
    %v6470 = vunpack.c.l.s8.bf16 %v6155
    %v6471 = vunpack.c.l.s8.bf16 %v6156
    %v6472 = vunpack.c.l.s8.bf16 %v6157
    %v6473 = vunpack.c.h.s8.bf16 %v6151
    %v6474 = vunpack.c.h.s8.bf16 %v6152
    %v6475 = vunpack.c.h.s8.bf16 %v6153
    %v6476 = vunpack.c.h.s8.bf16 %v6154
    %v6477 = vunpack.c.h.s8.bf16 %v6155
    %v6478 = vunpack.c.h.s8.bf16 %v6156
    %v6479 = vunpack.c.h.s8.bf16 %v6157
    %v6480 = vunpack.c.l.s8.bf16 %v6158
    %v6481 = vunpack.c.l.s8.bf16 %v6159
    %v6482 = vunpack.c.l.s8.bf16 %v6160
    %v6483 = vunpack.c.l.s8.bf16 %v6161
    %v6484 = vunpack.c.l.s8.bf16 %v6162
    %v6485 = vunpack.c.l.s8.bf16 %v6163
    %v6486 = vunpack.c.l.s8.bf16 %v6164
    %v6487 = vunpack.c.h.s8.bf16 %v6158
    %v6488 = vunpack.c.h.s8.bf16 %v6159
    %v6489 = vunpack.c.h.s8.bf16 %v6160
    %v6490 = vunpack.c.h.s8.bf16 %v6161
    %v6491 = vunpack.c.h.s8.bf16 %v6162
    %v6492 = vunpack.c.h.s8.bf16 %v6163
    %v6493 = vunpack.c.h.s8.bf16 %v6164
    %v6494 = vunpack.c.l.s8.bf16 %v6165
    %v6495 = vunpack.c.l.s8.bf16 %v6166
    %v6496 = vunpack.c.l.s8.bf16 %v6167
    %v6497 = vunpack.c.l.s8.bf16 %v6168
    %v6498 = vunpack.c.l.s8.bf16 %v6169
    %v6499 = vunpack.c.l.s8.bf16 %v6170
    %v6500 = vunpack.c.l.s8.bf16 %v6171
    %v6501 = vunpack.c.h.s8.bf16 %v6165
    %v6502 = vunpack.c.h.s8.bf16 %v6166
    %v6503 = vunpack.c.h.s8.bf16 %v6167
    %v6504 = vunpack.c.h.s8.bf16 %v6168
    %v6505 = vunpack.c.h.s8.bf16 %v6169
    %v6506 = vunpack.c.h.s8.bf16 %v6170
    %v6507 = vunpack.c.h.s8.bf16 %v6171
    %v6508 = vunpack.c.l.s8.bf16 %v6172
    %v6509 = vunpack.c.l.s8.bf16 %v6173
    %v6510 = vunpack.c.l.s8.bf16 %v6174
    %v6511 = vunpack.c.l.s8.bf16 %v6175
    %v6512 = vunpack.c.l.s8.bf16 %v6176
    %v6513 = vunpack.c.l.s8.bf16 %v6177
    %v6514 = vunpack.c.l.s8.bf16 %v6178
    %v6515 = vunpack.c.h.s8.bf16 %v6172
    %v6516 = vunpack.c.h.s8.bf16 %v6173
    %v6517 = vunpack.c.h.s8.bf16 %v6174
    %v6518 = vunpack.c.h.s8.bf16 %v6175
    %v6519 = vunpack.c.h.s8.bf16 %v6176
    %v6520 = vunpack.c.h.s8.bf16 %v6177
    %v6521 = vunpack.c.h.s8.bf16 %v6178
    %v6522 = vunpack.c.l.s8.bf16 %v6179
    %v6523 = vunpack.c.l.s8.bf16 %v6180
    %v6524 = vunpack.c.l.s8.bf16 %v6181
    %v6525 = vunpack.c.l.s8.bf16 %v6182
    %v6526 = vunpack.c.l.s8.bf16 %v6183
    %v6527 = vunpack.c.l.s8.bf16 %v6184
    %v6528 = vunpack.c.l.s8.bf16 %v6185
    %v6529 = vunpack.c.h.s8.bf16 %v6179
    %v6530 = vunpack.c.h.s8.bf16 %v6180
    %v6531 = vunpack.c.h.s8.bf16 %v6181
    %v6532 = vunpack.c.h.s8.bf16 %v6182
    %v6533 = vunpack.c.h.s8.bf16 %v6183
    %v6534 = vunpack.c.h.s8.bf16 %v6184
    %v6535 = vunpack.c.h.s8.bf16 %v6185
    %v6536 = vunpack.c.l.s8.bf16 %v6186
    %v6537 = vunpack.c.l.s8.bf16 %v6187
    %v6538 = vunpack.c.l.s8.bf16 %v6188
    %v6539 = vunpack.c.l.s8.bf16 %v6189
    %v6540 = vunpack.c.l.s8.bf16 %v6190
    %v6541 = vunpack.c.l.s8.bf16 %v6191
    %v6542 = vunpack.c.l.s8.bf16 %v6192
    %v6543 = vunpack.c.h.s8.bf16 %v6186
    %v6544 = vunpack.c.h.s8.bf16 %v6187
    %v6545 = vunpack.c.h.s8.bf16 %v6188
    %v6546 = vunpack.c.h.s8.bf16 %v6189
    %v6547 = vunpack.c.h.s8.bf16 %v6190
    %v6548 = vunpack.c.h.s8.bf16 %v6191
    %v6549 = vunpack.c.h.s8.bf16 %v6192
    %v6550 = vunpack.c.l.s8.bf16 %v6193
    %v6551 = vunpack.c.l.s8.bf16 %v6194
    %v6552 = vunpack.c.l.s8.bf16 %v6195
    %v6553 = vunpack.c.l.s8.bf16 %v6196
    %v6554 = vunpack.c.l.s8.bf16 %v6197
    %v6555 = vunpack.c.l.s8.bf16 %v6198
    %v6556 = vunpack.c.l.s8.bf16 %v6199
    %v6557 = vunpack.c.h.s8.bf16 %v6193
    %v6558 = vunpack.c.h.s8.bf16 %v6194
    %v6559 = vunpack.c.h.s8.bf16 %v6195
    %v6560 = vunpack.c.h.s8.bf16 %v6196
    %v6561 = vunpack.c.h.s8.bf16 %v6197
    %v6562 = vunpack.c.h.s8.bf16 %v6198
    %v6563 = vunpack.c.h.s8.bf16 %v6199
    %v6564 = vunpack.c.l.s8.bf16 %v6200
    %v6565 = vunpack.c.l.s8.bf16 %v6201
    %v6566 = vunpack.c.l.s8.bf16 %v6202
    %v6567 = vunpack.c.l.s8.bf16 %v6203
    %v6568 = vunpack.c.l.s8.bf16 %v6204
    %v6569 = vunpack.c.l.s8.bf16 %v6205
    %v6570 = vunpack.c.l.s8.bf16 %v6206
    %v6571 = vunpack.c.h.s8.bf16 %v6200
    %v6572 = vunpack.c.h.s8.bf16 %v6201
    %v6573 = vunpack.c.h.s8.bf16 %v6202
    %v6574 = vunpack.c.h.s8.bf16 %v6203
    %v6575 = vunpack.c.h.s8.bf16 %v6204
    %v6576 = vunpack.c.h.s8.bf16 %v6205
    %v6577 = vunpack.c.h.s8.bf16 %v6206
    %v6578 = vunpack.c.l.s8.bf16 %v6207
    %v6579 = vunpack.c.l.s8.bf16 %v6208
    %v6580 = vunpack.c.l.s8.bf16 %v6209
    %v6581 = vunpack.c.l.s8.bf16 %v6210
    %v6582 = vunpack.c.l.s8.bf16 %v6211
    %v6583 = vunpack.c.l.s8.bf16 %v6212
    %v6584 = vunpack.c.l.s8.bf16 %v6213
    %v6585 = vunpack.c.h.s8.bf16 %v6207
    %v6586 = vunpack.c.h.s8.bf16 %v6208
    %v6587 = vunpack.c.h.s8.bf16 %v6209
    %v6588 = vunpack.c.h.s8.bf16 %v6210
    %v6589 = vunpack.c.h.s8.bf16 %v6211
    %v6590 = vunpack.c.h.s8.bf16 %v6212
    %v6591 = vunpack.c.h.s8.bf16 %v6213
    %v6592 = vunpack.c.l.s8.bf16 %v6214
    %v6593 = vunpack.c.l.s8.bf16 %v6215
    %v6594 = vunpack.c.l.s8.bf16 %v6216
    %v6595 = vunpack.c.l.s8.bf16 %v6217
    %v6596 = vunpack.c.l.s8.bf16 %v6218
    %v6597 = vunpack.c.l.s8.bf16 %v6219
    %v6598 = vunpack.c.l.s8.bf16 %v6220
    %v6599 = vunpack.c.h.s8.bf16 %v6214
    %v6600 = vunpack.c.h.s8.bf16 %v6215
    %v6601 = vunpack.c.h.s8.bf16 %v6216
    %v6602 = vunpack.c.h.s8.bf16 %v6217
    %v6603 = vunpack.c.h.s8.bf16 %v6218
    %v6604 = vunpack.c.h.s8.bf16 %v6219
    %v6605 = vunpack.c.h.s8.bf16 %v6220
    %v6606 = vunpack.c.l.s8.bf16 %v6221
    %v6607 = vunpack.c.l.s8.bf16 %v6222
    %v6608 = vunpack.c.l.s8.bf16 %v6223
    %v6609 = vunpack.c.l.s8.bf16 %v6224
    %v6610 = vunpack.c.l.s8.bf16 %v6225
    %v6611 = vunpack.c.l.s8.bf16 %v6226
    %v6612 = vunpack.c.l.s8.bf16 %v6227
    %v6613 = vunpack.c.h.s8.bf16 %v6221
    %v6614 = vunpack.c.h.s8.bf16 %v6222
    %v6615 = vunpack.c.h.s8.bf16 %v6223
    %v6616 = vunpack.c.h.s8.bf16 %v6224
    %v6617 = vunpack.c.h.s8.bf16 %v6225
    %v6618 = vunpack.c.h.s8.bf16 %v6226
    %v6619 = vunpack.c.h.s8.bf16 %v6227
    %v6620 = vpack.c.bf16 %v6021, %v6021
    %v6621 = vpack.c.bf16 %v6022, %v6022
    %v6622 = vpack.c.bf16 %v6023, %v6023
    %v6623 = vpack.c.bf16 %v6024, %v6024
    %v6624 = vpack.c.bf16 %v6025, %v6025
    %v6625 = vpack.c.bf16 %v6026, %v6026
    %v6626 = vpack.c.bf16 %v6027, %v6027
    %6627 = vmatprep.subr.bf16.mxu0 %v6229
    %6628 = vmatpush1.bf16.msra.mxu0 %v6228
    %6629 = vmatprep.subr.bf16.mxu0 %v6236
    %6630 = vmatpush1.bf16.msra.mxu0 %v6235
    %6631 = vmatprep.subr.bf16.mxu0 %v6243
    %6632 = vmatpush1.bf16.msra.mxu0 %v6242
    %6633 = vmatprep.subr.bf16.mxu0 %v6250
    %6634 = vmatpush1.bf16.msra.mxu0 %v6249
    %6635 = vmatprep.subr.bf16.mxu0 %v6257
    %6636 = vmatpush1.bf16.msra.mxu0 %v6256
    %6637 = vmatprep.subr.bf16.mxu0 %v6264
    %6638 = vmatpush1.bf16.msra.mxu0 %v6263
    %6639 = vmatprep.subr.bf16.mxu0 %v6271
    %6640 = vmatpush1.bf16.msra.mxu0 %v6270
    %6641 = vmatprep.subr.bf16.mxu0 %v6278
    %6642 = vmatpush1.bf16.msra.mxu0 %v6277
    %6643 = vmatprep.subr.bf16.mxu0 %v6285
    %6644 = vmatpush1.bf16.msra.mxu0 %v6284
    %6645 = vmatprep.subr.bf16.mxu0 %v6292
    %6646 = vmatpush1.bf16.msra.mxu0 %v6291
    %6647 = vmatprep.subr.bf16.mxu0 %v6299
    %6648 = vmatpush1.bf16.msra.mxu0 %v6298
    %6649 = vmatprep.subr.bf16.mxu0 %v6306
    %6650 = vmatpush1.bf16.msra.mxu0 %v6305
    %6651 = vmatprep.subr.bf16.mxu0 %v6313
    %6652 = vmatpush1.bf16.msra.mxu0 %v6312
    %6653 = vmatprep.subr.bf16.mxu0 %v6320
    %6654 = vmatpush1.bf16.msra.mxu0 %v6319
    %6655 = vmatprep.subr.bf16.mxu0 %v6327
    %6656 = vmatpush1.bf16.msra.mxu0 %v6326
    %6657 = vmatprep.subr.bf16.mxu0 %v6334
    %6658 = vmatpush1.bf16.msra.mxu0 %v6333
    %6659 = vmatprep.mubr.bf16.mxu0 %v6621
    %6660 = vmatmul.mubr.bf16.gmra.mrb[0].mxu0 %v6620
    %v6661 = vpop.f32.mrb[0].mxu0
    %v6662 = vadd.f32 0.0, %v6661
    %v6663 = vpop.f32.mrb[0].mxu0
    %v6664 = vadd.f32 0.0, %v6663
    %v6665 = vpop.f32.mrb[0].mxu0
    %v6666 = vpop.f32.mrb[0].mxu0
    %6667 = vdwg.mxu0
    %6668 = vmatprep.subr.bf16.mxu0 %v6341
    %6669 = vmatpush1.bf16.msra.mxu0 %v6340
    %6670 = vmatprep.subr.bf16.mxu0 %v6348
    %6671 = vmatpush1.bf16.msra.mxu0 %v6347
    %6672 = vmatprep.subr.bf16.mxu0 %v6355
    %6673 = vmatpush1.bf16.msra.mxu0 %v6354
    %6674 = vmatprep.subr.bf16.mxu0 %v6362
    %6675 = vmatpush1.bf16.msra.mxu0 %v6361
    %6676 = vmatprep.subr.bf16.mxu0 %v6369
    %6677 = vmatpush1.bf16.msra.mxu0 %v6368
    %6678 = vmatprep.subr.bf16.mxu0 %v6376
    %6679 = vmatpush1.bf16.msra.mxu0 %v6375
    %6680 = vmatprep.subr.bf16.mxu0 %v6383
    %6681 = vmatpush1.bf16.msra.mxu0 %v6382
    %6682 = vmatprep.subr.bf16.mxu0 %v6390
    %6683 = vmatpush1.bf16.msra.mxu0 %v6389
    %6684 = vmatprep.subr.bf16.mxu0 %v6397
    %6685 = vmatpush1.bf16.msra.mxu0 %v6396
    %6686 = vmatprep.subr.bf16.mxu0 %v6404
    %6687 = vmatpush1.bf16.msra.mxu0 %v6403
    %6688 = vmatprep.subr.bf16.mxu0 %v6411
    %6689 = vmatpush1.bf16.msra.mxu0 %v6410
    %6690 = vmatprep.subr.bf16.mxu0 %v6418
    %6691 = vmatpush1.bf16.msra.mxu0 %v6417
    %6692 = vmatprep.subr.bf16.mxu0 %v6425
    %6693 = vmatpush1.bf16.msra.mxu0 %v6424
    %6694 = vmatprep.subr.bf16.mxu0 %v6432
    %6695 = vmatpush1.bf16.msra.mxu0 %v6431
    %6696 = vmatprep.subr.bf16.mxu0 %v6439
    %6697 = vmatpush1.bf16.msra.mxu0 %v6438
    %6698 = vmatprep.subr.bf16.mxu0 %v6446
    %6699 = vmatpush1.bf16.msra.mxu0 %v6445
    %6700 = vmatprep.mubr.bf16.mxu0 %v6623
    %6701 = vmatmul.mubr.bf16.gmra.mrb[0].mxu0 %v6622
    %v6702 = vpop.f32.mrb[0].mxu0
    %v6703 = vadd.f32 %v6662, %v6702
    %v6704 = vpop.f32.mrb[0].mxu0
    %v6705 = vadd.f32 %v6664, %v6704
    %v6706 = vpop.f32.mrb[0].mxu0
    %v6707 = vpop.f32.mrb[0].mxu0
    %6708 = vdwg.mxu0
    %6709 = vmatprep.subr.bf16.mxu0 %v6453
    %6710 = vmatpush1.bf16.msra.mxu0 %v6452
    %6711 = vmatprep.subr.bf16.mxu0 %v6460
    %6712 = vmatpush1.bf16.msra.mxu0 %v6459
    %6713 = vmatprep.subr.bf16.mxu0 %v6467
    %6714 = vmatpush1.bf16.msra.mxu0 %v6466
    %6715 = vmatprep.subr.bf16.mxu0 %v6474
    %6716 = vmatpush1.bf16.msra.mxu0 %v6473
    %6717 = vmatprep.subr.bf16.mxu0 %v6481
    %6718 = vmatpush1.bf16.msra.mxu0 %v6480
    %6719 = vmatprep.subr.bf16.mxu0 %v6488
    %6720 = vmatpush1.bf16.msra.mxu0 %v6487
    %6721 = vmatprep.subr.bf16.mxu0 %v6495
    %6722 = vmatpush1.bf16.msra.mxu0 %v6494
    %6723 = vmatprep.subr.bf16.mxu0 %v6502
    %6724 = vmatpush1.bf16.msra.mxu0 %v6501
    %6725 = vmatprep.subr.bf16.mxu0 %v6509
    %6726 = vmatpush1.bf16.msra.mxu0 %v6508
    %6727 = vmatprep.subr.bf16.mxu0 %v6516
    %6728 = vmatpush1.bf16.msra.mxu0 %v6515
    %6729 = vmatprep.subr.bf16.mxu0 %v6523
    %6730 = vmatpush1.bf16.msra.mxu0 %v6522
    %6731 = vmatprep.subr.bf16.mxu0 %v6530
    %6732 = vmatpush1.bf16.msra.mxu0 %v6529
    %6733 = vmatprep.subr.bf16.mxu0 %v6537
    %6734 = vmatpush1.bf16.msra.mxu0 %v6536
    %6735 = vmatprep.subr.bf16.mxu0 %v6544
    %6736 = vmatpush1.bf16.msra.mxu0 %v6543
    %6737 = vmatprep.subr.bf16.mxu0 %v6551
    %6738 = vmatpush1.bf16.msra.mxu0 %v6550
    %6739 = vmatprep.subr.bf16.mxu0 %v6558
    %6740 = vmatpush1.bf16.msra.mxu0 %v6557
    %6741 = vmatprep.mubr.bf16.mxu0 %v6625
    %6742 = vmatmul.mubr.bf16.gmra.mrb[0].mxu0 %v6624
    %v6743 = vpop.f32.mrb[0].mxu0
    %v6744 = vadd.f32 %v6703, %v6743
    %v6745 = vpop.f32.mrb[0].mxu0
    %v6746 = vadd.f32 %v6705, %v6745
    %v6747 = vpop.f32.mrb[0].mxu0
    %v6748 = vpop.f32.mrb[0].mxu0
    %6749 = vdwg.mxu0
    %6750 = vmatprep.subr.bf16.mxu0 %v6565
    %6751 = vmatpush1.bf16.msra.mxu0 %v6564
    %6752 = vmatprep.subr.bf16.mxu0 %v6572
    %6753 = vmatpush1.bf16.msra.mxu0 %v6571
    %6754 = vmatprep.subr.bf16.mxu0 %v6579
    %6755 = vmatpush1.bf16.msra.mxu0 %v6578
    %6756 = vmatprep.subr.bf16.mxu0 %v6586
    %6757 = vmatpush1.bf16.msra.mxu0 %v6585
    %6758 = vmatprep.subr.bf16.mxu0 %v6593
    %6759 = vmatpush1.bf16.msra.mxu0 %v6592
    %6760 = vmatprep.subr.bf16.mxu0 %v6600
    %6761 = vmatpush1.bf16.msra.mxu0 %v6599
    %6762 = vmatprep.subr.bf16.mxu0 %v6607
    %6763 = vmatpush1.bf16.msra.mxu0 %v6606
    %6764 = vmatprep.subr.bf16.mxu0 %v6614
    %6765 = vmatpush1.bf16.msra.mxu0 %v6613
    %6766 = vmatprep.subr.bf16.mxu0 0
    %6767 = vmatpush1.bf16.msra.mxu0 0
    %6768 = vmatprep.subr.bf16.mxu0 0
    %6769 = vmatpush1.bf16.msra.mxu0 0
    %6770 = vmatprep.subr.bf16.mxu0 0
    %6771 = vmatpush1.bf16.msra.mxu0 0
    %6772 = vmatprep.subr.bf16.mxu0 0
    %6773 = vmatpush1.bf16.msra.mxu0 0
    %6774 = vmatprep.subr.bf16.mxu0 0
    %6775 = vmatpush1.bf16.msra.mxu0 0
    %6776 = vmatprep.subr.bf16.mxu0 0
    %6777 = vmatpush1.bf16.msra.mxu0 0
    %6778 = vmatprep.subr.bf16.mxu0 0
    %6779 = vmatpush1.bf16.msra.mxu0 0
    %6780 = vmatprep.subr.bf16.mxu0 0
    %6781 = vmatpush1.bf16.msra.mxu0 0
    %6782 = vmatprep.mubr.bf16.mxu0 0
    %6783 = vmatmul.mubr.bf16.gmra.mrb[0].mxu0 %v6626
    %v6784 = vpop.f32.mrb[0].mxu0
    %v6785 = vadd.f32 %v6744, %v6784
    %v6786 = vpop.f32.mrb[0].mxu0
    %v6787 = vadd.f32 %v6746, %v6786
    %v6788 = vpop.f32.mrb[0].mxu0
    %v6789 = vpop.f32.mrb[0].mxu0
    %6790 = vdwg.mxu0
    %6791 = vmatprep.subr.bf16.mxu0 %v6231
    %6792 = vmatpush1.bf16.msra.mxu0 %v6230
    %6793 = vmatprep.subr.bf16.mxu0 %v6238
    %6794 = vmatpush1.bf16.msra.mxu0 %v6237
    %6795 = vmatprep.subr.bf16.mxu0 %v6245
    %6796 = vmatpush1.bf16.msra.mxu0 %v6244
    %6797 = vmatprep.subr.bf16.mxu0 %v6252
    %6798 = vmatpush1.bf16.msra.mxu0 %v6251
    %6799 = vmatprep.subr.bf16.mxu0 %v6259
    %6800 = vmatpush1.bf16.msra.mxu0 %v6258
    %6801 = vmatprep.subr.bf16.mxu0 %v6266
    %6802 = vmatpush1.bf16.msra.mxu0 %v6265
    %6803 = vmatprep.subr.bf16.mxu0 %v6273
    %6804 = vmatpush1.bf16.msra.mxu0 %v6272
    %6805 = vmatprep.subr.bf16.mxu0 %v6280
    %6806 = vmatpush1.bf16.msra.mxu0 %v6279
    %6807 = vmatprep.subr.bf16.mxu0 %v6287
    %6808 = vmatpush1.bf16.msra.mxu0 %v6286
    %6809 = vmatprep.subr.bf16.mxu0 %v6294
    %6810 = vmatpush1.bf16.msra.mxu0 %v6293
    %6811 = vmatprep.subr.bf16.mxu0 %v6301
    %6812 = vmatpush1.bf16.msra.mxu0 %v6300
    %6813 = vmatprep.subr.bf16.mxu0 %v6308
    %6814 = vmatpush1.bf16.msra.mxu0 %v6307
    %6815 = vmatprep.subr.bf16.mxu0 %v6315
    %6816 = vmatpush1.bf16.msra.mxu0 %v6314
    %6817 = vmatprep.subr.bf16.mxu0 %v6322
    %6818 = vmatpush1.bf16.msra.mxu0 %v6321
    %6819 = vmatprep.subr.bf16.mxu0 %v6329
    %6820 = vmatpush1.bf16.msra.mxu0 %v6328
    %6821 = vmatprep.subr.bf16.mxu0 %v6336
    %6822 = vmatpush1.bf16.msra.mxu0 %v6335
    %6823 = vmatprep.mubr.bf16.mxu0 %v6621
    %6824 = vmatmul.mubr.bf16.gmra.mrb[0].mxu0 %v6620
    %v6825 = vpop.f32.mrb[0].mxu0
    %v6826 = vadd.f32 0.0, %v6825
    %v6827 = vpop.f32.mrb[0].mxu0
    %v6828 = vadd.f32 0.0, %v6827
    %v6829 = vpop.f32.mrb[0].mxu0
    %v6830 = vpop.f32.mrb[0].mxu0
    %6831 = vdwg.mxu0
    %6832 = vmatprep.subr.bf16.mxu0 %v6343
    %6833 = vmatpush1.bf16.msra.mxu0 %v6342
    %6834 = vmatprep.subr.bf16.mxu0 %v6350
    %6835 = vmatpush1.bf16.msra.mxu0 %v6349
    %6836 = vmatprep.subr.bf16.mxu0 %v6357
    %6837 = vmatpush1.bf16.msra.mxu0 %v6356
    %6838 = vmatprep.subr.bf16.mxu0 %v6364
    %6839 = vmatpush1.bf16.msra.mxu0 %v6363
    %6840 = vmatprep.subr.bf16.mxu0 %v6371
    %6841 = vmatpush1.bf16.msra.mxu0 %v6370
    %6842 = vmatprep.subr.bf16.mxu0 %v6378
    %6843 = vmatpush1.bf16.msra.mxu0 %v6377
    %6844 = vmatprep.subr.bf16.mxu0 %v6385
    %6845 = vmatpush1.bf16.msra.mxu0 %v6384
    %6846 = vmatprep.subr.bf16.mxu0 %v6392
    %6847 = vmatpush1.bf16.msra.mxu0 %v6391
    %6848 = vmatprep.subr.bf16.mxu0 %v6399
    %6849 = vmatpush1.bf16.msra.mxu0 %v6398
    %6850 = vmatprep.subr.bf16.mxu0 %v6406
    %6851 = vmatpush1.bf16.msra.mxu0 %v6405
    %6852 = vmatprep.subr.bf16.mxu0 %v6413
    %6853 = vmatpush1.bf16.msra.mxu0 %v6412
    %6854 = vmatprep.subr.bf16.mxu0 %v6420
    %6855 = vmatpush1.bf16.msra.mxu0 %v6419
    %6856 = vmatprep.subr.bf16.mxu0 %v6427
    %6857 = vmatpush1.bf16.msra.mxu0 %v6426
    %6858 = vmatprep.subr.bf16.mxu0 %v6434
    %6859 = vmatpush1.bf16.msra.mxu0 %v6433
    %6860 = vmatprep.subr.bf16.mxu0 %v6441
    %6861 = vmatpush1.bf16.msra.mxu0 %v6440
    %6862 = vmatprep.subr.bf16.mxu0 %v6448
    %6863 = vmatpush1.bf16.msra.mxu0 %v6447
    %6864 = vmatprep.mubr.bf16.mxu0 %v6623
    %6865 = vmatmul.mubr.bf16.gmra.mrb[0].mxu0 %v6622
    %v6866 = vpop.f32.mrb[0].mxu0
    %v6867 = vadd.f32 %v6826, %v6866
    %v6868 = vpop.f32.mrb[0].mxu0
    %v6869 = vadd.f32 %v6828, %v6868
    %v6870 = vpop.f32.mrb[0].mxu0
    %v6871 = vpop.f32.mrb[0].mxu0
    %6872 = vdwg.mxu0
    %6873 = vmatprep.subr.bf16.mxu0 %v6455
    %6874 = vmatpush1.bf16.msra.mxu0 %v6454
    %6875 = vmatprep.subr.bf16.mxu0 %v6462
    %6876 = vmatpush1.bf16.msra.mxu0 %v6461
    %6877 = vmatprep.subr.bf16.mxu0 %v6469
    %6878 = vmatpush1.bf16.msra.mxu0 %v6468
    %6879 = vmatprep.subr.bf16.mxu0 %v6476
    %6880 = vmatpush1.bf16.msra.mxu0 %v6475
    %6881 = vmatprep.subr.bf16.mxu0 %v6483
    %6882 = vmatpush1.bf16.msra.mxu0 %v6482
    %6883 = vmatprep.subr.bf16.mxu0 %v6490
    %6884 = vmatpush1.bf16.msra.mxu0 %v6489
    %6885 = vmatprep.subr.bf16.mxu0 %v6497
    %6886 = vmatpush1.bf16.msra.mxu0 %v6496
    %6887 = vmatprep.subr.bf16.mxu0 %v6504
    %6888 = vmatpush1.bf16.msra.mxu0 %v6503
    %6889 = vmatprep.subr.bf16.mxu0 %v6511
    %6890 = vmatpush1.bf16.msra.mxu0 %v6510
    %6891 = vmatprep.subr.bf16.mxu0 %v6518
    %6892 = vmatpush1.bf16.msra.mxu0 %v6517
    %6893 = vmatprep.subr.bf16.mxu0 %v6525
    %6894 = vmatpush1.bf16.msra.mxu0 %v6524
    %6895 = vmatprep.subr.bf16.mxu0 %v6532
    %6896 = vmatpush1.bf16.msra.mxu0 %v6531
    %6897 = vmatprep.subr.bf16.mxu0 %v6539
    %6898 = vmatpush1.bf16.msra.mxu0 %v6538
    %6899 = vmatprep.subr.bf16.mxu0 %v6546
    %6900 = vmatpush1.bf16.msra.mxu0 %v6545
    %6901 = vmatprep.subr.bf16.mxu0 %v6553
    %6902 = vmatpush1.bf16.msra.mxu0 %v6552
    %6903 = vmatprep.subr.bf16.mxu0 %v6560
    %6904 = vmatpush1.bf16.msra.mxu0 %v6559
    %6905 = vmatprep.mubr.bf16.mxu0 %v6625
    %6906 = vmatmul.mubr.bf16.gmra.mrb[0].mxu0 %v6624
    %v6907 = vpop.f32.mrb[0].mxu0
    %v6908 = vadd.f32 %v6867, %v6907
    %v6909 = vpop.f32.mrb[0].mxu0
    %v6910 = vadd.f32 %v6869, %v6909
    %v6911 = vpop.f32.mrb[0].mxu0
    %v6912 = vpop.f32.mrb[0].mxu0
    %6913 = vdwg.mxu0
    %6914 = vmatprep.subr.bf16.mxu0 %v6567
    %6915 = vmatpush1.bf16.msra.mxu0 %v6566
    %6916 = vmatprep.subr.bf16.mxu0 %v6574
    %6917 = vmatpush1.bf16.msra.mxu0 %v6573
    %6918 = vmatprep.subr.bf16.mxu0 %v6581
    %6919 = vmatpush1.bf16.msra.mxu0 %v6580
    %6920 = vmatprep.subr.bf16.mxu0 %v6588
    %6921 = vmatpush1.bf16.msra.mxu0 %v6587
    %6922 = vmatprep.subr.bf16.mxu0 %v6595
    %6923 = vmatpush1.bf16.msra.mxu0 %v6594
    %6924 = vmatprep.subr.bf16.mxu0 %v6602
    %6925 = vmatpush1.bf16.msra.mxu0 %v6601
    %6926 = vmatprep.subr.bf16.mxu0 %v6609
    %6927 = vmatpush1.bf16.msra.mxu0 %v6608
    %6928 = vmatprep.subr.bf16.mxu0 %v6616
    %6929 = vmatpush1.bf16.msra.mxu0 %v6615
    %6930 = vmatprep.subr.bf16.mxu0 0
    %6931 = vmatpush1.bf16.msra.mxu0 0
    %6932 = vmatprep.subr.bf16.mxu0 0
    %6933 = vmatpush1.bf16.msra.mxu0 0
    %6934 = vmatprep.subr.bf16.mxu0 0
    %6935 = vmatpush1.bf16.msra.mxu0 0
    %6936 = vmatprep.subr.bf16.mxu0 0
    %6937 = vmatpush1.bf16.msra.mxu0 0
    %6938 = vmatprep.subr.bf16.mxu0 0
    %6939 = vmatpush1.bf16.msra.mxu0 0
    %6940 = vmatprep.subr.bf16.mxu0 0
    %6941 = vmatpush1.bf16.msra.mxu0 0
    %6942 = vmatprep.subr.bf16.mxu0 0
    %6943 = vmatpush1.bf16.msra.mxu0 0
    %6944 = vmatprep.subr.bf16.mxu0 0
    %6945 = vmatpush1.bf16.msra.mxu0 0
    %6946 = vmatprep.mubr.bf16.mxu0 0
    %6947 = vmatmul.mubr.bf16.gmra.mrb[0].mxu0 %v6626
    %v6948 = vpop.f32.mrb[0].mxu0
    %v6949 = vadd.f32 %v6908, %v6948
    %v6950 = vpop.f32.mrb[0].mxu0
    %v6951 = vadd.f32 %v6910, %v6950
    %v6952 = vpop.f32.mrb[0].mxu0
    %v6953 = vpop.f32.mrb[0].mxu0
    %6954 = vdwg.mxu0
    %6955 = vmatprep.subr.bf16.mxu0 %v6233
    %6956 = vmatpush1.bf16.msra.mxu0 %v6232
    %6957 = vmatprep.subr.bf16.mxu0 %v6240
    %6958 = vmatpush1.bf16.msra.mxu0 %v6239
    %6959 = vmatprep.subr.bf16.mxu0 %v6247
    %6960 = vmatpush1.bf16.msra.mxu0 %v6246
    %6961 = vmatprep.subr.bf16.mxu0 %v6254
    %6962 = vmatpush1.bf16.msra.mxu0 %v6253
    %6963 = vmatprep.subr.bf16.mxu0 %v6261
    %6964 = vmatpush1.bf16.msra.mxu0 %v6260
    %6965 = vmatprep.subr.bf16.mxu0 %v6268
    %6966 = vmatpush1.bf16.msra.mxu0 %v6267
    %6967 = vmatprep.subr.bf16.mxu0 %v6275
    %6968 = vmatpush1.bf16.msra.mxu0 %v6274
    %6969 = vmatprep.subr.bf16.mxu0 %v6282
    %6970 = vmatpush1.bf16.msra.mxu0 %v6281
    %6971 = vmatprep.subr.bf16.mxu0 %v6289
    %6972 = vmatpush1.bf16.msra.mxu0 %v6288
    %6973 = vmatprep.subr.bf16.mxu0 %v6296
    %6974 = vmatpush1.bf16.msra.mxu0 %v6295
    %6975 = vmatprep.subr.bf16.mxu0 %v6303
    %6976 = vmatpush1.bf16.msra.mxu0 %v6302
    %6977 = vmatprep.subr.bf16.mxu0 %v6310
    %6978 = vmatpush1.bf16.msra.mxu0 %v6309
    %6979 = vmatprep.subr.bf16.mxu0 %v6317
    %6980 = vmatpush1.bf16.msra.mxu0 %v6316
    %6981 = vmatprep.subr.bf16.mxu0 %v6324
    %6982 = vmatpush1.bf16.msra.mxu0 %v6323
    %6983 = vmatprep.subr.bf16.mxu0 %v6331
    %6984 = vmatpush1.bf16.msra.mxu0 %v6330
    %6985 = vmatprep.subr.bf16.mxu0 %v6338
    %6986 = vmatpush1.bf16.msra.mxu0 %v6337
    %6987 = vmatprep.mubr.bf16.mxu0 %v6621
    %6988 = vmatmul.mubr.bf16.gmra.mrb[0].mxu0 %v6620
    %v6989 = vpop.f32.mrb[0].mxu0
    %v6990 = vadd.f32 0.0, %v6989
    %v6991 = vpop.f32.mrb[0].mxu0
    %v6992 = vadd.f32 0.0, %v6991
    %v6993 = vpop.f32.mrb[0].mxu0
    %v6994 = vpop.f32.mrb[0].mxu0
    %6995 = vdwg.mxu0
    %6996 = vmatprep.subr.bf16.mxu0 %v6345
    %6997 = vmatpush1.bf16.msra.mxu0 %v6344
    %6998 = vmatprep.subr.bf16.mxu0 %v6352
    %6999 = vmatpush1.bf16.msra.mxu0 %v6351
    %7000 = vmatprep.subr.bf16.mxu0 %v6359
    %7001 = vmatpush1.bf16.msra.mxu0 %v6358
    %7002 = vmatprep.subr.bf16.mxu0 %v6366
    %7003 = vmatpush1.bf16.msra.mxu0 %v6365
    %7004 = vmatprep.subr.bf16.mxu0 %v6373
    %7005 = vmatpush1.bf16.msra.mxu0 %v6372
    %7006 = vmatprep.subr.bf16.mxu0 %v6380
    %7007 = vmatpush1.bf16.msra.mxu0 %v6379
    %7008 = vmatprep.subr.bf16.mxu0 %v6387
    %7009 = vmatpush1.bf16.msra.mxu0 %v6386
    %7010 = vmatprep.subr.bf16.mxu0 %v6394
    %7011 = vmatpush1.bf16.msra.mxu0 %v6393
    %7012 = vmatprep.subr.bf16.mxu0 %v6401
    %7013 = vmatpush1.bf16.msra.mxu0 %v6400
    %7014 = vmatprep.subr.bf16.mxu0 %v6408
    %7015 = vmatpush1.bf16.msra.mxu0 %v6407
    %7016 = vmatprep.subr.bf16.mxu0 %v6415
    %7017 = vmatpush1.bf16.msra.mxu0 %v6414
    %7018 = vmatprep.subr.bf16.mxu0 %v6422
    %7019 = vmatpush1.bf16.msra.mxu0 %v6421
    %7020 = vmatprep.subr.bf16.mxu0 %v6429
    %7021 = vmatpush1.bf16.msra.mxu0 %v6428
    %7022 = vmatprep.subr.bf16.mxu0 %v6436
    %7023 = vmatpush1.bf16.msra.mxu0 %v6435
    %7024 = vmatprep.subr.bf16.mxu0 %v6443
    %7025 = vmatpush1.bf16.msra.mxu0 %v6442
    %7026 = vmatprep.subr.bf16.mxu0 %v6450
    %7027 = vmatpush1.bf16.msra.mxu0 %v6449
    %7028 = vmatprep.mubr.bf16.mxu0 %v6623
    %7029 = vmatmul.mubr.bf16.gmra.mrb[0].mxu0 %v6622
    %v7030 = vpop.f32.mrb[0].mxu0
    %v7031 = vadd.f32 %v6990, %v7030
    %v7032 = vpop.f32.mrb[0].mxu0
    %v7033 = vadd.f32 %v6992, %v7032
    %v7034 = vpop.f32.mrb[0].mxu0
    %v7035 = vpop.f32.mrb[0].mxu0
    %7036 = vdwg.mxu0
    %7037 = vmatprep.subr.bf16.mxu0 %v6457
    %7038 = vmatpush1.bf16.msra.mxu0 %v6456
    %7039 = vmatprep.subr.bf16.mxu0 %v6464
    %7040 = vmatpush1.bf16.msra.mxu0 %v6463
    %7041 = vmatprep.subr.bf16.mxu0 %v6471
    %7042 = vmatpush1.bf16.msra.mxu0 %v6470
    %7043 = vmatprep.subr.bf16.mxu0 %v6478
    %7044 = vmatpush1.bf16.msra.mxu0 %v6477
    %7045 = vmatprep.subr.bf16.mxu0 %v6485
    %7046 = vmatpush1.bf16.msra.mxu0 %v6484
    %7047 = vmatprep.subr.bf16.mxu0 %v6492
    %7048 = vmatpush1.bf16.msra.mxu0 %v6491
    %7049 = vmatprep.subr.bf16.mxu0 %v6499
    %7050 = vmatpush1.bf16.msra.mxu0 %v6498
    %7051 = vmatprep.subr.bf16.mxu0 %v6506
    %7052 = vmatpush1.bf16.msra.mxu0 %v6505
    %7053 = vmatprep.subr.bf16.mxu0 %v6513
    %7054 = vmatpush1.bf16.msra.mxu0 %v6512
    %7055 = vmatprep.subr.bf16.mxu0 %v6520
    %7056 = vmatpush1.bf16.msra.mxu0 %v6519
    %7057 = vmatprep.subr.bf16.mxu0 %v6527
    %7058 = vmatpush1.bf16.msra.mxu0 %v6526
    %7059 = vmatprep.subr.bf16.mxu0 %v6534
    %7060 = vmatpush1.bf16.msra.mxu0 %v6533
    %7061 = vmatprep.subr.bf16.mxu0 %v6541
    %7062 = vmatpush1.bf16.msra.mxu0 %v6540
    %7063 = vmatprep.subr.bf16.mxu0 %v6548
    %7064 = vmatpush1.bf16.msra.mxu0 %v6547
    %7065 = vmatprep.subr.bf16.mxu0 %v6555
    %7066 = vmatpush1.bf16.msra.mxu0 %v6554
    %7067 = vmatprep.subr.bf16.mxu0 %v6562
    %7068 = vmatpush1.bf16.msra.mxu0 %v6561
    %7069 = vmatprep.mubr.bf16.mxu0 %v6625
    %7070 = vmatmul.mubr.bf16.gmra.mrb[0].mxu0 %v6624
    %v7071 = vpop.f32.mrb[0].mxu0
    %v7072 = vadd.f32 %v7031, %v7071
    %v7073 = vpop.f32.mrb[0].mxu0
    %v7074 = vadd.f32 %v7033, %v7073
    %v7075 = vpop.f32.mrb[0].mxu0
    %v7076 = vpop.f32.mrb[0].mxu0
    %7077 = vdwg.mxu0
    %7078 = vmatprep.subr.bf16.mxu0 %v6569
    %7079 = vmatpush1.bf16.msra.mxu0 %v6568
    %7080 = vmatprep.subr.bf16.mxu0 %v6576
    %7081 = vmatpush1.bf16.msra.mxu0 %v6575
    %7082 = vmatprep.subr.bf16.mxu0 %v6583
    %7083 = vmatpush1.bf16.msra.mxu0 %v6582
    %7084 = vmatprep.subr.bf16.mxu0 %v6590
    %7085 = vmatpush1.bf16.msra.mxu0 %v6589
    %7086 = vmatprep.subr.bf16.mxu0 %v6597
    %7087 = vmatpush1.bf16.msra.mxu0 %v6596
    %7088 = vmatprep.subr.bf16.mxu0 %v6604
    %7089 = vmatpush1.bf16.msra.mxu0 %v6603
    %7090 = vmatprep.subr.bf16.mxu0 %v6611
    %7091 = vmatpush1.bf16.msra.mxu0 %v6610
    %7092 = vmatprep.subr.bf16.mxu0 %v6618
    %7093 = vmatpush1.bf16.msra.mxu0 %v6617
    %7094 = vmatprep.subr.bf16.mxu0 0
    %7095 = vmatpush1.bf16.msra.mxu0 0
    %7096 = vmatprep.subr.bf16.mxu0 0
    %7097 = vmatpush1.bf16.msra.mxu0 0
    %7098 = vmatprep.subr.bf16.mxu0 0
    %7099 = vmatpush1.bf16.msra.mxu0 0
    %7100 = vmatprep.subr.bf16.mxu0 0
    %7101 = vmatpush1.bf16.msra.mxu0 0
    %7102 = vmatprep.subr.bf16.mxu0 0
    %7103 = vmatpush1.bf16.msra.mxu0 0
    %7104 = vmatprep.subr.bf16.mxu0 0
    %7105 = vmatpush1.bf16.msra.mxu0 0
    %7106 = vmatprep.subr.bf16.mxu0 0
    %7107 = vmatpush1.bf16.msra.mxu0 0
    %7108 = vmatprep.subr.bf16.mxu0 0
    %7109 = vmatpush1.bf16.msra.mxu0 0
    %7110 = vmatprep.mubr.bf16.mxu0 0
    %7111 = vmatmul.mubr.bf16.gmra.mrb[0].mxu0 %v6626
    %v7112 = vpop.f32.mrb[0].mxu0
    %v7113 = vadd.f32 %v7072, %v7112
    %v7114 = vpop.f32.mrb[0].mxu0
    %v7115 = vadd.f32 %v7074, %v7114
    %v7116 = vpop.f32.mrb[0].mxu0
    %v7117 = vpop.f32.mrb[0].mxu0
    %7118 = vdwg.mxu0
    %7119 = vmatprep.subr.bf16.mxu0 0
    %7120 = vmatpush1.bf16.msra.mxu0 %v6234
    %7121 = vmatprep.subr.bf16.mxu0 0
    %7122 = vmatpush1.bf16.msra.mxu0 %v6241
    %7123 = vmatprep.subr.bf16.mxu0 0
    %7124 = vmatpush1.bf16.msra.mxu0 %v6248
    %7125 = vmatprep.subr.bf16.mxu0 0
    %7126 = vmatpush1.bf16.msra.mxu0 %v6255
    %7127 = vmatprep.subr.bf16.mxu0 0
    %7128 = vmatpush1.bf16.msra.mxu0 %v6262
    %7129 = vmatprep.subr.bf16.mxu0 0
    %7130 = vmatpush1.bf16.msra.mxu0 %v6269
    %7131 = vmatprep.subr.bf16.mxu0 0
    %7132 = vmatpush1.bf16.msra.mxu0 %v6276
    %7133 = vmatprep.subr.bf16.mxu0 0
    %7134 = vmatpush1.bf16.msra.mxu0 %v6283
    %7135 = vmatprep.subr.bf16.mxu0 0
    %7136 = vmatpush1.bf16.msra.mxu0 %v6290
    %7137 = vmatprep.subr.bf16.mxu0 0
    %7138 = vmatpush1.bf16.msra.mxu0 %v6297
    %7139 = vmatprep.subr.bf16.mxu0 0
    %7140 = vmatpush1.bf16.msra.mxu0 %v6304
    %7141 = vmatprep.subr.bf16.mxu0 0
    %7142 = vmatpush1.bf16.msra.mxu0 %v6311
    %7143 = vmatprep.subr.bf16.mxu0 0
    %7144 = vmatpush1.bf16.msra.mxu0 %v6318
    %7145 = vmatprep.subr.bf16.mxu0 0
    %7146 = vmatpush1.bf16.msra.mxu0 %v6325
    %7147 = vmatprep.subr.bf16.mxu0 0
    %7148 = vmatpush1.bf16.msra.mxu0 %v6332
    %7149 = vmatprep.subr.bf16.mxu0 0
    %7150 = vmatpush1.bf16.msra.mxu0 %v6339
    %7151 = vmatprep.mubr.bf16.mxu0 %v6621
    %7152 = vmatmul.mubr.bf16.gmra.mrb[0].mxu0 %v6620
    %v7153 = vpop.f32.mrb[0].mxu0
    %v7154 = vadd.f32 0.0, %v7153
    %v7155 = vpop.f32.mrb[0].mxu0
    %v7156 = vpop.f32.mrb[0].mxu0
    %v7157 = vpop.f32.mrb[0].mxu0
    %7158 = vdwg.mxu0
    %7159 = vmatprep.subr.bf16.mxu0 0
    %7160 = vmatpush1.bf16.msra.mxu0 %v6346
    %7161 = vmatprep.subr.bf16.mxu0 0
    %7162 = vmatpush1.bf16.msra.mxu0 %v6353
    %7163 = vmatprep.subr.bf16.mxu0 0
    %7164 = vmatpush1.bf16.msra.mxu0 %v6360
    %7165 = vmatprep.subr.bf16.mxu0 0
    %7166 = vmatpush1.bf16.msra.mxu0 %v6367
    %7167 = vmatprep.subr.bf16.mxu0 0
    %7168 = vmatpush1.bf16.msra.mxu0 %v6374
    %7169 = vmatprep.subr.bf16.mxu0 0
    %7170 = vmatpush1.bf16.msra.mxu0 %v6381
    %7171 = vmatprep.subr.bf16.mxu0 0
    %7172 = vmatpush1.bf16.msra.mxu0 %v6388
    %7173 = vmatprep.subr.bf16.mxu0 0
    %7174 = vmatpush1.bf16.msra.mxu0 %v6395
    %7175 = vmatprep.subr.bf16.mxu0 0
    %7176 = vmatpush1.bf16.msra.mxu0 %v6402
    %7177 = vmatprep.subr.bf16.mxu0 0
    %7178 = vmatpush1.bf16.msra.mxu0 %v6409
    %7179 = vmatprep.subr.bf16.mxu0 0
    %7180 = vmatpush1.bf16.msra.mxu0 %v6416
    %7181 = vmatprep.subr.bf16.mxu0 0
    %7182 = vmatpush1.bf16.msra.mxu0 %v6423
    %7183 = vmatprep.subr.bf16.mxu0 0
    %7184 = vmatpush1.bf16.msra.mxu0 %v6430
    %7185 = vmatprep.subr.bf16.mxu0 0
    %7186 = vmatpush1.bf16.msra.mxu0 %v6437
    %7187 = vmatprep.subr.bf16.mxu0 0
    %7188 = vmatpush1.bf16.msra.mxu0 %v6444
    %7189 = vmatprep.subr.bf16.mxu0 0
    %7190 = vmatpush1.bf16.msra.mxu0 %v6451
    %7191 = vmatprep.mubr.bf16.mxu0 %v6623
    %7192 = vmatmul.mubr.bf16.gmra.mrb[0].mxu0 %v6622
    %v7193 = vpop.f32.mrb[0].mxu0
    %v7194 = vadd.f32 %v7154, %v7193
    %v7195 = vpop.f32.mrb[0].mxu0
    %v7196 = vpop.f32.mrb[0].mxu0
    %v7197 = vpop.f32.mrb[0].mxu0
    %7198 = vdwg.mxu0
    %7199 = vmatprep.subr.bf16.mxu0 0
    %7200 = vmatpush1.bf16.msra.mxu0 %v6458
    %7201 = vmatprep.subr.bf16.mxu0 0
    %7202 = vmatpush1.bf16.msra.mxu0 %v6465
    %7203 = vmatprep.subr.bf16.mxu0 0
    %7204 = vmatpush1.bf16.msra.mxu0 %v6472
    %7205 = vmatprep.subr.bf16.mxu0 0
    %7206 = vmatpush1.bf16.msra.mxu0 %v6479
    %7207 = vmatprep.subr.bf16.mxu0 0
    %7208 = vmatpush1.bf16.msra.mxu0 %v6486
    %7209 = vmatprep.subr.bf16.mxu0 0
    %7210 = vmatpush1.bf16.msra.mxu0 %v6493
    %7211 = vmatprep.subr.bf16.mxu0 0
    %7212 = vmatpush1.bf16.msra.mxu0 %v6500
    %7213 = vmatprep.subr.bf16.mxu0 0
    %7214 = vmatpush1.bf16.msra.mxu0 %v6507
    %7215 = vmatprep.subr.bf16.mxu0 0
    %7216 = vmatpush1.bf16.msra.mxu0 %v6514
    %7217 = vmatprep.subr.bf16.mxu0 0
    %7218 = vmatpush1.bf16.msra.mxu0 %v6521
    %7219 = vmatprep.subr.bf16.mxu0 0
    %7220 = vmatpush1.bf16.msra.mxu0 %v6528
    %7221 = vmatprep.subr.bf16.mxu0 0
    %7222 = vmatpush1.bf16.msra.mxu0 %v6535
    %7223 = vmatprep.subr.bf16.mxu0 0
    %7224 = vmatpush1.bf16.msra.mxu0 %v6542
    %7225 = vmatprep.subr.bf16.mxu0 0
    %7226 = vmatpush1.bf16.msra.mxu0 %v6549
    %7227 = vmatprep.subr.bf16.mxu0 0
    %7228 = vmatpush1.bf16.msra.mxu0 %v6556
    %7229 = vmatprep.subr.bf16.mxu0 0
    %7230 = vmatpush1.bf16.msra.mxu0 %v6563
    %7231 = vmatprep.mubr.bf16.mxu0 %v6625
    %7232 = vmatmul.mubr.bf16.gmra.mrb[0].mxu0 %v6624
    %v7233 = vpop.f32.mrb[0].mxu0
    %v7234 = vadd.f32 %v7194, %v7233
    %v7235 = vpop.f32.mrb[0].mxu0
    %v7236 = vpop.f32.mrb[0].mxu0
    %v7237 = vpop.f32.mrb[0].mxu0
    %7238 = vdwg.mxu0
    %7239 = vmatprep.subr.bf16.mxu0 0
    %7240 = vmatpush1.bf16.msra.mxu0 %v6570
    %7241 = vmatprep.subr.bf16.mxu0 0
    %7242 = vmatpush1.bf16.msra.mxu0 %v6577
    %7243 = vmatprep.subr.bf16.mxu0 0
    %7244 = vmatpush1.bf16.msra.mxu0 %v6584
    %7245 = vmatprep.subr.bf16.mxu0 0
    %7246 = vmatpush1.bf16.msra.mxu0 %v6591
    %7247 = vmatprep.subr.bf16.mxu0 0
    %7248 = vmatpush1.bf16.msra.mxu0 %v6598
    %7249 = vmatprep.subr.bf16.mxu0 0
    %7250 = vmatpush1.bf16.msra.mxu0 %v6605
    %7251 = vmatprep.subr.bf16.mxu0 0
    %7252 = vmatpush1.bf16.msra.mxu0 %v6612
    %7253 = vmatprep.subr.bf16.mxu0 0
    %7254 = vmatpush1.bf16.msra.mxu0 %v6619
    %7255 = vmatprep.subr.bf16.mxu0 0
    %7256 = vmatpush1.bf16.msra.mxu0 0
    %7257 = vmatprep.subr.bf16.mxu0 0
    %7258 = vmatpush1.bf16.msra.mxu0 0
    %7259 = vmatprep.subr.bf16.mxu0 0
    %7260 = vmatpush1.bf16.msra.mxu0 0
    %7261 = vmatprep.subr.bf16.mxu0 0
    %7262 = vmatpush1.bf16.msra.mxu0 0
    %7263 = vmatprep.subr.bf16.mxu0 0
    %7264 = vmatpush1.bf16.msra.mxu0 0
    %7265 = vmatprep.subr.bf16.mxu0 0
    %7266 = vmatpush1.bf16.msra.mxu0 0
    %7267 = vmatprep.subr.bf16.mxu0 0
    %7268 = vmatpush1.bf16.msra.mxu0 0
    %7269 = vmatprep.subr.bf16.mxu0 0
    %7270 = vmatpush1.bf16.msra.mxu0 0
    %7271 = vmatprep.mubr.bf16.mxu0 0
    %7272 = vmatmul.mubr.bf16.gmra.mrb[0].mxu0 %v6626
    %v7273 = vpop.f32.mrb[0].mxu0
    %v7274 = vadd.f32 %v7234, %v7273
    %v7275 = vpop.f32.mrb[0].mxu0
    %v7276 = vpop.f32.mrb[0].mxu0
    %v7277 = vpop.f32.mrb[0].mxu0
    %7278 = vdwg.mxu0
    %s7279 = scalar_lea.vmem %s6, 14
    %s7280 = scalar_lea.vmem %s7279, 1
    %v7281 = vld [vmem:[%s7280] ss:$2 sm:$0x7f]
    %v7283 = vlaneseq
    %v7284 = vshrl.u32 %v7283, 7
    %v7285 = vsub.s32 0, %v7284
    %v7286 = vrot.slane %v7281, %v7285
    %v7287 = vlaneseq
    %v7288 = vshrl.u32 %v7287, 7
    %v7289 = vsub.s32 1, %v7288
    %v7290 = vrot.slane %v7281, %v7289
    %v7291 = vlaneseq
    %v7292 = vshrl.u32 %v7291, 7
    %v7293 = vsub.s32 2, %v7292
    %v7294 = vrot.slane %v7281, %v7293
    %v7295 = vlaneseq
    %v7296 = vshrl.u32 %v7295, 7
    %v7297 = vsub.s32 3, %v7296
    %v7298 = vrot.slane %v7281, %v7297
    %v7299 = vlaneseq
    %v7300 = vshrl.u32 %v7299, 7
    %v7301 = vsub.s32 4, %v7300
    %v7302 = vrot.slane %v7281, %v7301
    %v7303 = vlaneseq
    %v7304 = vshrl.u32 %v7303, 7
    %v7305 = vsub.s32 5, %v7304
    %v7306 = vrot.slane %v7281, %v7305
    %v7307 = vlaneseq
    %v7308 = vshrl.u32 %v7307, 7
    %v7309 = vsub.s32 6, %v7308
    %v7310 = vrot.slane %v7281, %v7309
    %v7318 = vmul.f32 %v6785, %v7286
    %v7319 = vmul.f32 %v6787, %v7290
    %v7320 = vmul.f32 %v6949, %v7294
    %v7321 = vmul.f32 %v6951, %v7298
    %v7322 = vmul.f32 %v7113, %v7302
    %v7323 = vmul.f32 %v7115, %v7306
    %v7324 = vmul.f32 %v7274, %v7310
    %v7325 = vld [vmem:[%s7279] ss:$2 sm:$0x7f]
    %v7327 = vlaneseq
    %v7328 = vshrl.u32 %v7327, 7
    %v7329 = vsub.s32 0, %v7328
    %v7330 = vrot.slane %v7325, %v7329
    %v7331 = vlaneseq
    %v7332 = vshrl.u32 %v7331, 7
    %v7333 = vsub.s32 1, %v7332
    %v7334 = vrot.slane %v7325, %v7333
    %v7335 = vlaneseq
    %v7336 = vshrl.u32 %v7335, 7
    %v7337 = vsub.s32 2, %v7336
    %v7338 = vrot.slane %v7325, %v7337
    %v7339 = vlaneseq
    %v7340 = vshrl.u32 %v7339, 7
    %v7341 = vsub.s32 3, %v7340
    %v7342 = vrot.slane %v7325, %v7341
    %v7343 = vlaneseq
    %v7344 = vshrl.u32 %v7343, 7
    %v7345 = vsub.s32 4, %v7344
    %v7346 = vrot.slane %v7325, %v7345
    %v7347 = vlaneseq
    %v7348 = vshrl.u32 %v7347, 7
    %v7349 = vsub.s32 5, %v7348
    %v7350 = vrot.slane %v7325, %v7349
    %v7351 = vlaneseq
    %v7352 = vshrl.u32 %v7351, 7
    %v7353 = vsub.s32 6, %v7352
    %v7354 = vrot.slane %v7325, %v7353
    %v7362 = vadd.f32 %v7318, %v7330
    %v7363 = vadd.f32 %v7319, %v7334
    %v7364 = vadd.f32 %v7320, %v7338
    %v7365 = vadd.f32 %v7321, %v7342
    %v7366 = vadd.f32 %v7322, %v7346
    %v7367 = vadd.f32 %v7323, %v7350
    %v7368 = vadd.f32 %v7324, %v7354
    %v7369 = vmax.f32 %v7362, 0.0
    %v7370 = vmax.f32 %v7363, 0.0
    %v7371 = vmax.f32 %v7364, 0.0
    %v7372 = vmax.f32 %v7365, 0.0
    %v7373 = vmax.f32 %v7366, 0.0
    %v7374 = vmax.f32 %v7367, 0.0
    %v7375 = vmax.f32 %v7368, 0.0
    %s7376 = smul.u32 2, 97
    %s7377 = smul.u32 %s7376, 4
    %s7378 = sshll.u32 %s7377, 4
    %7379 = dma.done %s1331, %s7378
    %v7380 = vld [vmem:[#allocation4] sm:$0xff]
    %v7381 = vld [vmem:[#allocation4 + $0x8] sm:$0xff]
    %v7382 = vld [vmem:[#allocation4 + $0x10] sm:$0xff]
    %v7383 = vld [vmem:[#allocation4 + $0x18] sm:$0xff]
    %v7384 = vld [vmem:[#allocation4 + $0x20] sm:$0xff]
    %v7385 = vld [vmem:[#allocation4 + $0x28] sm:$0xff]
    %v7386 = vld [vmem:[#allocation4 + $0x30] sm:$0xff]
    %v7387 = vld [vmem:[#allocation4 + $0x38] sm:$0xff]
    %v7388 = vld [vmem:[#allocation4 + $0x40] sm:$0xff]
    %v7389 = vld [vmem:[#allocation4 + $0x48] sm:$0xff]
    %v7390 = vld [vmem:[#allocation4 + $0x50] sm:$0xff]
    %v7391 = vld [vmem:[#allocation4 + $0x58] sm:$0xff]
    %v7392 = vld [vmem:[#allocation4 + $0x60] sm:$0xff]
    %v7393 = vld [vmem:[#allocation4 + $0x68] sm:$0xff]
    %v7394 = vld [vmem:[#allocation4 + $0x70] sm:$0xff]
    %v7395 = vld [vmem:[#allocation4 + $0x78] sm:$0xff]
    %v7396 = vld [vmem:[#allocation4 + $0x80] sm:$0xff]
    %v7397 = vld [vmem:[#allocation4 + $0x88] sm:$0xff]
    %v7398 = vld [vmem:[#allocation4 + $0x90] sm:$0xff]
    %v7399 = vld [vmem:[#allocation4 + $0x98] sm:$0xff]
    %v7400 = vld [vmem:[#allocation4 + $0xa0] sm:$0xff]
    %v7401 = vld [vmem:[#allocation4 + $0xa8] sm:$0xff]
    %v7402 = vld [vmem:[#allocation4 + $0xb0] sm:$0xff]
    %v7403 = vld [vmem:[#allocation4 + $0xb8] sm:$0xff]
    %v7404 = vld [vmem:[#allocation4 + $0xc0] sm:$0xff]
    %v7405 = vld [vmem:[#allocation4 + $0xc8] sm:$0xff]
    %v7406 = vld [vmem:[#allocation4 + $0xd0] sm:$0xff]
    %v7407 = vld [vmem:[#allocation4 + $0xd8] sm:$0xff]
    %v7408 = vld [vmem:[#allocation4 + $0xe0] sm:$0xff]
    %v7409 = vld [vmem:[#allocation4 + $0xe8] sm:$0xff]
    %v7410 = vld [vmem:[#allocation4 + $0xf0] sm:$0xff]
    %v7411 = vld [vmem:[#allocation4 + $0xf8] sm:$0xff]
    %v7412 = vld [vmem:[#allocation4 + $0x100] sm:$0xff]
    %v7413 = vld [vmem:[#allocation4 + $0x108] sm:$0xff]
    %v7414 = vld [vmem:[#allocation4 + $0x110] sm:$0xff]
    %v7415 = vld [vmem:[#allocation4 + $0x118] sm:$0xff]
    %v7416 = vld [vmem:[#allocation4 + $0x120] sm:$0xff]
    %v7417 = vld [vmem:[#allocation4 + $0x128] sm:$0xff]
    %v7418 = vld [vmem:[#allocation4 + $0x130] sm:$0xff]
    %v7419 = vld [vmem:[#allocation4 + $0x138] sm:$0xff]
    %v7420 = vld [vmem:[#allocation4 + $0x140] sm:$0xff]
    %v7421 = vld [vmem:[#allocation4 + $0x148] sm:$0xff]
    %v7422 = vld [vmem:[#allocation4 + $0x150] sm:$0xff]
    %v7423 = vld [vmem:[#allocation4 + $0x158] sm:$0xff]
    %v7424 = vld [vmem:[#allocation4 + $0x160] sm:$0xff]
    %v7425 = vld [vmem:[#allocation4 + $0x168] sm:$0xff]
    %v7426 = vld [vmem:[#allocation4 + $0x170] sm:$0xff]
    %v7427 = vld [vmem:[#allocation4 + $0x178] sm:$0xff]
    %v7428 = vld [vmem:[#allocation4 + $0x180] sm:$0xff]
    %v7429 = vld [vmem:[#allocation4 + $0x188] sm:$0xff]
    %v7430 = vld [vmem:[#allocation4 + $0x190] sm:$0xff]
    %v7431 = vld [vmem:[#allocation4 + $0x198] sm:$0xff]
    %v7432 = vld [vmem:[#allocation4 + $0x1a0] sm:$0xff]
    %v7433 = vld [vmem:[#allocation4 + $0x1a8] sm:$0xff]
    %v7434 = vld [vmem:[#allocation4 + $0x1b0] sm:$0xff]
    %v7435 = vld [vmem:[#allocation4 + $0x1b8] sm:$0xff]
    %v7436 = vld [vmem:[#allocation4 + $0x1c0] sm:$0xff]
    %v7437 = vld [vmem:[#allocation4 + $0x1c8] sm:$0xff]
    %v7438 = vld [vmem:[#allocation4 + $0x1d0] sm:$0xff]
    %v7439 = vld [vmem:[#allocation4 + $0x1d8] sm:$0xff]
    %v7440 = vld [vmem:[#allocation4 + $0x1e0] sm:$0xff]
    %v7441 = vld [vmem:[#allocation4 + $0x1e8] sm:$0xff]
    %v7442 = vld [vmem:[#allocation4 + $0x1f0] sm:$0xff]
    %v7443 = vld [vmem:[#allocation4 + $0x1f8] sm:$0xff]
    %v7444 = vld [vmem:[#allocation4 + $0x200] sm:$0xff]
    %v7445 = vld [vmem:[#allocation4 + $0x208] sm:$0xff]
    %v7446 = vld [vmem:[#allocation4 + $0x210] sm:$0xff]
    %v7447 = vld [vmem:[#allocation4 + $0x218] sm:$0xff]
    %v7448 = vld [vmem:[#allocation4 + $0x220] sm:$0xff]
    %v7449 = vld [vmem:[#allocation4 + $0x228] sm:$0xff]
    %v7450 = vld [vmem:[#allocation4 + $0x230] sm:$0xff]
    %v7451 = vld [vmem:[#allocation4 + $0x238] sm:$0xff]
    %v7452 = vld [vmem:[#allocation4 + $0x240] sm:$0xff]
    %v7453 = vld [vmem:[#allocation4 + $0x248] sm:$0xff]
    %v7454 = vld [vmem:[#allocation4 + $0x250] sm:$0xff]
    %v7455 = vld [vmem:[#allocation4 + $0x258] sm:$0xff]
    %v7456 = vld [vmem:[#allocation4 + $0x260] sm:$0xff]
    %v7457 = vld [vmem:[#allocation4 + $0x268] sm:$0xff]
    %v7458 = vld [vmem:[#allocation4 + $0x270] sm:$0xff]
    %v7459 = vld [vmem:[#allocation4 + $0x278] sm:$0xff]
    %v7460 = vld [vmem:[#allocation4 + $0x280] sm:$0xff]
    %v7461 = vld [vmem:[#allocation4 + $0x288] sm:$0xff]
    %v7462 = vld [vmem:[#allocation4 + $0x290] sm:$0xff]
    %v7463 = vld [vmem:[#allocation4 + $0x298] sm:$0xff]
    %v7464 = vld [vmem:[#allocation4 + $0x2a0] sm:$0xff]
    %v7465 = vld [vmem:[#allocation4 + $0x2a8] sm:$0xff]
    %v7466 = vld [vmem:[#allocation4 + $0x2b0] sm:$0xff]
    %v7467 = vld [vmem:[#allocation4 + $0x2b8] sm:$0xff]
    %v7468 = vld [vmem:[#allocation4 + $0x2c0] sm:$0xff]
    %v7469 = vld [vmem:[#allocation4 + $0x2c8] sm:$0xff]
    %v7470 = vld [vmem:[#allocation4 + $0x2d0] sm:$0xff]
    %v7471 = vld [vmem:[#allocation4 + $0x2d8] sm:$0xff]
    %v7472 = vld [vmem:[#allocation4 + $0x2e0] sm:$0xff]
    %v7473 = vld [vmem:[#allocation4 + $0x2e8] sm:$0xff]
    %v7474 = vld [vmem:[#allocation4 + $0x2f0] sm:$0xff]
    %v7475 = vld [vmem:[#allocation4 + $0x2f8] sm:$0xff]
    %v7476 = vld [vmem:[#allocation4 + $0x300] sm:$0x55]
    %v7477 = vunpack.c.l.s8.bf16 %v7380
    %v7478 = vunpack.c.h.s8.bf16 %v7380
    %v7479 = vunpack.c.l.s8.bf16 %v7381
    %v7480 = vunpack.c.h.s8.bf16 %v7381
    %v7481 = vunpack.c.l.s8.bf16 %v7382
    %v7482 = vunpack.c.h.s8.bf16 %v7382
    %v7483 = vunpack.c.l.s8.bf16 %v7383
    %v7484 = vunpack.c.h.s8.bf16 %v7383
    %v7485 = vunpack.c.l.s8.bf16 %v7384
    %v7486 = vunpack.c.h.s8.bf16 %v7384
    %v7487 = vunpack.c.l.s8.bf16 %v7385
    %v7488 = vunpack.c.h.s8.bf16 %v7385
    %v7489 = vunpack.c.l.s8.bf16 %v7386
    %v7490 = vunpack.c.h.s8.bf16 %v7386
    %v7491 = vunpack.c.l.s8.bf16 %v7387
    %v7492 = vunpack.c.h.s8.bf16 %v7387
    %v7493 = vunpack.c.l.s8.bf16 %v7388
    %v7494 = vunpack.c.h.s8.bf16 %v7388
    %v7495 = vunpack.c.l.s8.bf16 %v7389
    %v7496 = vunpack.c.h.s8.bf16 %v7389
    %v7497 = vunpack.c.l.s8.bf16 %v7390
    %v7498 = vunpack.c.h.s8.bf16 %v7390
    %v7499 = vunpack.c.l.s8.bf16 %v7391
    %v7500 = vunpack.c.h.s8.bf16 %v7391
    %v7501 = vunpack.c.l.s8.bf16 %v7392
    %v7502 = vunpack.c.h.s8.bf16 %v7392
    %v7503 = vunpack.c.l.s8.bf16 %v7393
    %v7504 = vunpack.c.h.s8.bf16 %v7393
    %v7505 = vunpack.c.l.s8.bf16 %v7394
    %v7506 = vunpack.c.h.s8.bf16 %v7394
    %v7507 = vunpack.c.l.s8.bf16 %v7395
    %v7508 = vunpack.c.h.s8.bf16 %v7395
    %v7509 = vunpack.c.l.s8.bf16 %v7396
    %v7510 = vunpack.c.h.s8.bf16 %v7396
    %v7511 = vunpack.c.l.s8.bf16 %v7397
    %v7512 = vunpack.c.h.s8.bf16 %v7397
    %v7513 = vunpack.c.l.s8.bf16 %v7398
    %v7514 = vunpack.c.h.s8.bf16 %v7398
    %v7515 = vunpack.c.l.s8.bf16 %v7399
    %v7516 = vunpack.c.h.s8.bf16 %v7399
    %v7517 = vunpack.c.l.s8.bf16 %v7400
    %v7518 = vunpack.c.h.s8.bf16 %v7400
    %v7519 = vunpack.c.l.s8.bf16 %v7401
    %v7520 = vunpack.c.h.s8.bf16 %v7401
    %v7521 = vunpack.c.l.s8.bf16 %v7402
    %v7522 = vunpack.c.h.s8.bf16 %v7402
    %v7523 = vunpack.c.l.s8.bf16 %v7403
    %v7524 = vunpack.c.h.s8.bf16 %v7403
    %v7525 = vunpack.c.l.s8.bf16 %v7404
    %v7526 = vunpack.c.h.s8.bf16 %v7404
    %v7527 = vunpack.c.l.s8.bf16 %v7405
    %v7528 = vunpack.c.h.s8.bf16 %v7405
    %v7529 = vunpack.c.l.s8.bf16 %v7406
    %v7530 = vunpack.c.h.s8.bf16 %v7406
    %v7531 = vunpack.c.l.s8.bf16 %v7407
    %v7532 = vunpack.c.h.s8.bf16 %v7407
    %v7533 = vunpack.c.l.s8.bf16 %v7408
    %v7534 = vunpack.c.h.s8.bf16 %v7408
    %v7535 = vunpack.c.l.s8.bf16 %v7409
    %v7536 = vunpack.c.h.s8.bf16 %v7409
    %v7537 = vunpack.c.l.s8.bf16 %v7410
    %v7538 = vunpack.c.h.s8.bf16 %v7410
    %v7539 = vunpack.c.l.s8.bf16 %v7411
    %v7540 = vunpack.c.h.s8.bf16 %v7411
    %v7541 = vunpack.c.l.s8.bf16 %v7412
    %v7542 = vunpack.c.h.s8.bf16 %v7412
    %v7543 = vunpack.c.l.s8.bf16 %v7413
    %v7544 = vunpack.c.h.s8.bf16 %v7413
    %v7545 = vunpack.c.l.s8.bf16 %v7414
    %v7546 = vunpack.c.h.s8.bf16 %v7414
    %v7547 = vunpack.c.l.s8.bf16 %v7415
    %v7548 = vunpack.c.h.s8.bf16 %v7415
    %v7549 = vunpack.c.l.s8.bf16 %v7416
    %v7550 = vunpack.c.h.s8.bf16 %v7416
    %v7551 = vunpack.c.l.s8.bf16 %v7417
    %v7552 = vunpack.c.h.s8.bf16 %v7417
    %v7553 = vunpack.c.l.s8.bf16 %v7418
    %v7554 = vunpack.c.h.s8.bf16 %v7418
    %v7555 = vunpack.c.l.s8.bf16 %v7419
    %v7556 = vunpack.c.h.s8.bf16 %v7419
    %v7557 = vunpack.c.l.s8.bf16 %v7420
    %v7558 = vunpack.c.h.s8.bf16 %v7420
    %v7559 = vunpack.c.l.s8.bf16 %v7421
    %v7560 = vunpack.c.h.s8.bf16 %v7421
    %v7561 = vunpack.c.l.s8.bf16 %v7422
    %v7562 = vunpack.c.h.s8.bf16 %v7422
    %v7563 = vunpack.c.l.s8.bf16 %v7423
    %v7564 = vunpack.c.h.s8.bf16 %v7423
    %v7565 = vunpack.c.l.s8.bf16 %v7424
    %v7566 = vunpack.c.h.s8.bf16 %v7424
    %v7567 = vunpack.c.l.s8.bf16 %v7425
    %v7568 = vunpack.c.h.s8.bf16 %v7425
    %v7569 = vunpack.c.l.s8.bf16 %v7426
    %v7570 = vunpack.c.h.s8.bf16 %v7426
    %v7571 = vunpack.c.l.s8.bf16 %v7427
    %v7572 = vunpack.c.h.s8.bf16 %v7427
    %v7573 = vunpack.c.l.s8.bf16 %v7428
    %v7574 = vunpack.c.h.s8.bf16 %v7428
    %v7575 = vunpack.c.l.s8.bf16 %v7429
    %v7576 = vunpack.c.h.s8.bf16 %v7429
    %v7577 = vunpack.c.l.s8.bf16 %v7430
    %v7578 = vunpack.c.h.s8.bf16 %v7430
    %v7579 = vunpack.c.l.s8.bf16 %v7431
    %v7580 = vunpack.c.h.s8.bf16 %v7431
    %v7581 = vunpack.c.l.s8.bf16 %v7432
    %v7582 = vunpack.c.h.s8.bf16 %v7432
    %v7583 = vunpack.c.l.s8.bf16 %v7433
    %v7584 = vunpack.c.h.s8.bf16 %v7433
    %v7585 = vunpack.c.l.s8.bf16 %v7434
    %v7586 = vunpack.c.h.s8.bf16 %v7434
    %v7587 = vunpack.c.l.s8.bf16 %v7435
    %v7588 = vunpack.c.h.s8.bf16 %v7435
    %v7589 = vunpack.c.l.s8.bf16 %v7436
    %v7590 = vunpack.c.h.s8.bf16 %v7436
    %v7591 = vunpack.c.l.s8.bf16 %v7437
    %v7592 = vunpack.c.h.s8.bf16 %v7437
    %v7593 = vunpack.c.l.s8.bf16 %v7438
    %v7594 = vunpack.c.h.s8.bf16 %v7438
    %v7595 = vunpack.c.l.s8.bf16 %v7439
    %v7596 = vunpack.c.h.s8.bf16 %v7439
    %v7597 = vunpack.c.l.s8.bf16 %v7440
    %v7598 = vunpack.c.h.s8.bf16 %v7440
    %v7599 = vunpack.c.l.s8.bf16 %v7441
    %v7600 = vunpack.c.h.s8.bf16 %v7441
    %v7601 = vunpack.c.l.s8.bf16 %v7442
    %v7602 = vunpack.c.h.s8.bf16 %v7442
    %v7603 = vunpack.c.l.s8.bf16 %v7443
    %v7604 = vunpack.c.h.s8.bf16 %v7443
    %v7605 = vunpack.c.l.s8.bf16 %v7444
    %v7606 = vunpack.c.h.s8.bf16 %v7444
    %v7607 = vunpack.c.l.s8.bf16 %v7445
    %v7608 = vunpack.c.h.s8.bf16 %v7445
    %v7609 = vunpack.c.l.s8.bf16 %v7446
    %v7610 = vunpack.c.h.s8.bf16 %v7446
    %v7611 = vunpack.c.l.s8.bf16 %v7447
    %v7612 = vunpack.c.h.s8.bf16 %v7447
    %v7613 = vunpack.c.l.s8.bf16 %v7448
    %v7614 = vunpack.c.h.s8.bf16 %v7448
    %v7615 = vunpack.c.l.s8.bf16 %v7449
    %v7616 = vunpack.c.h.s8.bf16 %v7449
    %v7617 = vunpack.c.l.s8.bf16 %v7450
    %v7618 = vunpack.c.h.s8.bf16 %v7450
    %v7619 = vunpack.c.l.s8.bf16 %v7451
    %v7620 = vunpack.c.h.s8.bf16 %v7451
    %v7621 = vunpack.c.l.s8.bf16 %v7452
    %v7622 = vunpack.c.h.s8.bf16 %v7452
    %v7623 = vunpack.c.l.s8.bf16 %v7453
    %v7624 = vunpack.c.h.s8.bf16 %v7453
    %v7625 = vunpack.c.l.s8.bf16 %v7454
    %v7626 = vunpack.c.h.s8.bf16 %v7454
    %v7627 = vunpack.c.l.s8.bf16 %v7455
    %v7628 = vunpack.c.h.s8.bf16 %v7455
    %v7629 = vunpack.c.l.s8.bf16 %v7456
    %v7630 = vunpack.c.h.s8.bf16 %v7456
    %v7631 = vunpack.c.l.s8.bf16 %v7457
    %v7632 = vunpack.c.h.s8.bf16 %v7457
    %v7633 = vunpack.c.l.s8.bf16 %v7458
    %v7634 = vunpack.c.h.s8.bf16 %v7458
    %v7635 = vunpack.c.l.s8.bf16 %v7459
    %v7636 = vunpack.c.h.s8.bf16 %v7459
    %v7637 = vunpack.c.l.s8.bf16 %v7460
    %v7638 = vunpack.c.h.s8.bf16 %v7460
    %v7639 = vunpack.c.l.s8.bf16 %v7461
    %v7640 = vunpack.c.h.s8.bf16 %v7461
    %v7641 = vunpack.c.l.s8.bf16 %v7462
    %v7642 = vunpack.c.h.s8.bf16 %v7462
    %v7643 = vunpack.c.l.s8.bf16 %v7463
    %v7644 = vunpack.c.h.s8.bf16 %v7463
    %v7645 = vunpack.c.l.s8.bf16 %v7464
    %v7646 = vunpack.c.h.s8.bf16 %v7464
    %v7647 = vunpack.c.l.s8.bf16 %v7465
    %v7648 = vunpack.c.h.s8.bf16 %v7465
    %v7649 = vunpack.c.l.s8.bf16 %v7466
    %v7650 = vunpack.c.h.s8.bf16 %v7466
    %v7651 = vunpack.c.l.s8.bf16 %v7467
    %v7652 = vunpack.c.h.s8.bf16 %v7467
    %v7653 = vunpack.c.l.s8.bf16 %v7468
    %v7654 = vunpack.c.h.s8.bf16 %v7468
    %v7655 = vunpack.c.l.s8.bf16 %v7469
    %v7656 = vunpack.c.h.s8.bf16 %v7469
    %v7657 = vunpack.c.l.s8.bf16 %v7470
    %v7658 = vunpack.c.h.s8.bf16 %v7470
    %v7659 = vunpack.c.l.s8.bf16 %v7471
    %v7660 = vunpack.c.h.s8.bf16 %v7471
    %v7661 = vunpack.c.l.s8.bf16 %v7472
    %v7662 = vunpack.c.h.s8.bf16 %v7472
    %v7663 = vunpack.c.l.s8.bf16 %v7473
    %v7664 = vunpack.c.h.s8.bf16 %v7473
    %v7665 = vunpack.c.l.s8.bf16 %v7474
    %v7666 = vunpack.c.h.s8.bf16 %v7474
    %v7667 = vunpack.c.l.s8.bf16 %v7475
    %v7668 = vunpack.c.h.s8.bf16 %v7475
    %v7669 = vunpack.c.l.s8.bf16 %v7476
    %v7670 = vunpack.c.h.s8.bf16 %v7476
    %v7671 = vpack.c.bf16 %v7369, %v7369
    %v7672 = vpack.c.bf16 %v7370, %v7370
    %v7673 = vpack.c.bf16 %v7371, %v7371
    %v7674 = vpack.c.bf16 %v7372, %v7372
    %v7675 = vpack.c.bf16 %v7373, %v7373
    %v7676 = vpack.c.bf16 %v7374, %v7374
    %v7677 = vpack.c.bf16 %v7375, %v7375
    %v7872 = vunpack.c.l.b16 %v7477
    %v7873 = vunpack.c.h.b16 %v7477
    %v7874 = vunpack.c.l.b16 %v7478
    %v7875 = vunpack.c.h.b16 %v7478
    %v7876 = vunpack.c.l.b16 %v7479
    %v7877 = vunpack.c.h.b16 %v7479
    %v7878 = vunpack.c.l.b16 %v7480
    %v7879 = vunpack.c.h.b16 %v7480
    %v7880 = vunpack.c.l.b16 %v7481
    %v7881 = vunpack.c.h.b16 %v7481
    %v7882 = vunpack.c.l.b16 %v7482
    %v7883 = vunpack.c.h.b16 %v7482
    %v7884 = vunpack.c.l.b16 %v7483
    %v7885 = vunpack.c.h.b16 %v7483
    %v7886 = vunpack.c.l.b16 %v7484
    %v7887 = vunpack.c.h.b16 %v7484
    %v7888 = vunpack.c.l.b16 %v7485
    %v7889 = vunpack.c.h.b16 %v7485
    %v7890 = vunpack.c.l.b16 %v7486
    %v7891 = vunpack.c.h.b16 %v7486
    %v7892 = vunpack.c.l.b16 %v7487
    %v7893 = vunpack.c.h.b16 %v7487
    %v7894 = vunpack.c.l.b16 %v7488
    %v7895 = vunpack.c.h.b16 %v7488
    %v7896 = vunpack.c.l.b16 %v7489
    %v7897 = vunpack.c.h.b16 %v7489
    %v7898 = vunpack.c.l.b16 %v7490
    %v7899 = vunpack.c.h.b16 %v7490
    %v7900 = vunpack.c.l.b16 %v7491
    %v7901 = vunpack.c.h.b16 %v7491
    %v7902 = vunpack.c.l.b16 %v7492
    %v7903 = vunpack.c.h.b16 %v7492
    %v7904 = vunpack.c.l.b16 %v7493
    %v7905 = vunpack.c.h.b16 %v7493
    %v7906 = vunpack.c.l.b16 %v7494
    %v7907 = vunpack.c.h.b16 %v7494
    %v7908 = vunpack.c.l.b16 %v7495
    %v7909 = vunpack.c.h.b16 %v7495
    %v7910 = vunpack.c.l.b16 %v7496
    %v7911 = vunpack.c.h.b16 %v7496
    %v7912 = vunpack.c.l.b16 %v7497
    %v7913 = vunpack.c.h.b16 %v7497
    %v7914 = vunpack.c.l.b16 %v7498
    %v7915 = vunpack.c.h.b16 %v7498
    %v7916 = vunpack.c.l.b16 %v7499
    %v7917 = vunpack.c.h.b16 %v7499
    %v7918 = vunpack.c.l.b16 %v7500
    %v7919 = vunpack.c.h.b16 %v7500
    %v7920 = vunpack.c.l.b16 %v7501
    %v7921 = vunpack.c.h.b16 %v7501
    %v7922 = vunpack.c.l.b16 %v7502
    %v7923 = vunpack.c.h.b16 %v7502
    %v7924 = vunpack.c.l.b16 %v7503
    %v7925 = vunpack.c.h.b16 %v7503
    %v7926 = vunpack.c.l.b16 %v7504
    %v7927 = vunpack.c.h.b16 %v7504
    %v7928 = vunpack.c.l.b16 %v7505
    %v7929 = vunpack.c.h.b16 %v7505
    %v7930 = vunpack.c.l.b16 %v7506
    %v7931 = vunpack.c.h.b16 %v7506
    %v7932 = vunpack.c.l.b16 %v7507
    %v7933 = vunpack.c.h.b16 %v7507
    %v7934 = vunpack.c.l.b16 %v7508
    %v7935 = vunpack.c.h.b16 %v7508
    %v7936 = vunpack.c.l.b16 %v7509
    %v7937 = vunpack.c.h.b16 %v7509
    %v7938 = vunpack.c.l.b16 %v7510
    %v7939 = vunpack.c.h.b16 %v7510
    %v7940 = vunpack.c.l.b16 %v7511
    %v7941 = vunpack.c.h.b16 %v7511
    %v7942 = vunpack.c.l.b16 %v7512
    %v7943 = vunpack.c.h.b16 %v7512
    %v7944 = vunpack.c.l.b16 %v7513
    %v7945 = vunpack.c.h.b16 %v7513
    %v7946 = vunpack.c.l.b16 %v7514
    %v7947 = vunpack.c.h.b16 %v7514
    %v7948 = vunpack.c.l.b16 %v7515
    %v7949 = vunpack.c.h.b16 %v7515
    %v7950 = vunpack.c.l.b16 %v7516
    %v7951 = vunpack.c.h.b16 %v7516
    %v7952 = vunpack.c.l.b16 %v7517
    %v7953 = vunpack.c.h.b16 %v7517
    %v7954 = vunpack.c.l.b16 %v7518
    %v7955 = vunpack.c.h.b16 %v7518
    %v7956 = vunpack.c.l.b16 %v7519
    %v7957 = vunpack.c.h.b16 %v7519
    %v7958 = vunpack.c.l.b16 %v7520
    %v7959 = vunpack.c.h.b16 %v7520
    %v7960 = vunpack.c.l.b16 %v7521
    %v7961 = vunpack.c.h.b16 %v7521
    %v7962 = vunpack.c.l.b16 %v7522
    %v7963 = vunpack.c.h.b16 %v7522
    %v7964 = vunpack.c.l.b16 %v7523
    %v7965 = vunpack.c.h.b16 %v7523
    %v7966 = vunpack.c.l.b16 %v7524
    %v7967 = vunpack.c.h.b16 %v7524
    %v7968 = vunpack.c.l.b16 %v7525
    %v7969 = vunpack.c.h.b16 %v7525
    %v7970 = vunpack.c.l.b16 %v7526
    %v7971 = vunpack.c.h.b16 %v7526
    %v7972 = vunpack.c.l.b16 %v7527
    %v7973 = vunpack.c.h.b16 %v7527
    %v7974 = vunpack.c.l.b16 %v7528
    %v7975 = vunpack.c.h.b16 %v7528
    %v7976 = vunpack.c.l.b16 %v7529
    %v7977 = vunpack.c.h.b16 %v7529
    %v7978 = vunpack.c.l.b16 %v7530
    %v7979 = vunpack.c.h.b16 %v7530
    %v7980 = vunpack.c.l.b16 %v7531
    %v7981 = vunpack.c.h.b16 %v7531
    %v7982 = vunpack.c.l.b16 %v7532
    %v7983 = vunpack.c.h.b16 %v7532
    %v7984 = vunpack.c.l.b16 %v7533
    %v7985 = vunpack.c.h.b16 %v7533
    %v7986 = vunpack.c.l.b16 %v7534
    %v7987 = vunpack.c.h.b16 %v7534
    %v7988 = vunpack.c.l.b16 %v7535
    %v7989 = vunpack.c.h.b16 %v7535
    %v7990 = vunpack.c.l.b16 %v7536
    %v7991 = vunpack.c.h.b16 %v7536
    %v7992 = vunpack.c.l.b16 %v7537
    %v7993 = vunpack.c.h.b16 %v7537
    %v7994 = vunpack.c.l.b16 %v7538
    %v7995 = vunpack.c.h.b16 %v7538
    %v7996 = vunpack.c.l.b16 %v7539
    %v7997 = vunpack.c.h.b16 %v7539
    %v7998 = vunpack.c.l.b16 %v7540
    %v7999 = vunpack.c.h.b16 %v7540
    %v8000 = vunpack.c.l.b16 %v7541
    %v8001 = vunpack.c.h.b16 %v7541
    %v8002 = vunpack.c.l.b16 %v7542
    %v8003 = vunpack.c.h.b16 %v7542
    %v8004 = vunpack.c.l.b16 %v7543
    %v8005 = vunpack.c.h.b16 %v7543
    %v8006 = vunpack.c.l.b16 %v7544
    %v8007 = vunpack.c.h.b16 %v7544
    %v8008 = vunpack.c.l.b16 %v7545
    %v8009 = vunpack.c.h.b16 %v7545
    %v8010 = vunpack.c.l.b16 %v7546
    %v8011 = vunpack.c.h.b16 %v7546
    %v8012 = vunpack.c.l.b16 %v7547
    %v8013 = vunpack.c.h.b16 %v7547
    %v8014 = vunpack.c.l.b16 %v7548
    %v8015 = vunpack.c.h.b16 %v7548
    %v8016 = vunpack.c.l.b16 %v7549
    %v8017 = vunpack.c.h.b16 %v7549
    %v8018 = vunpack.c.l.b16 %v7550
    %v8019 = vunpack.c.h.b16 %v7550
    %v8020 = vunpack.c.l.b16 %v7551
    %v8021 = vunpack.c.h.b16 %v7551
    %v8022 = vunpack.c.l.b16 %v7552
    %v8023 = vunpack.c.h.b16 %v7552
    %v8024 = vunpack.c.l.b16 %v7553
    %v8025 = vunpack.c.h.b16 %v7553
    %v8026 = vunpack.c.l.b16 %v7554
    %v8027 = vunpack.c.h.b16 %v7554
    %v8028 = vunpack.c.l.b16 %v7555
    %v8029 = vunpack.c.h.b16 %v7555
    %v8030 = vunpack.c.l.b16 %v7556
    %v8031 = vunpack.c.h.b16 %v7556
    %v8032 = vunpack.c.l.b16 %v7557
    %v8033 = vunpack.c.h.b16 %v7557
    %v8034 = vunpack.c.l.b16 %v7558
    %v8035 = vunpack.c.h.b16 %v7558
    %v8036 = vunpack.c.l.b16 %v7559
    %v8037 = vunpack.c.h.b16 %v7559
    %v8038 = vunpack.c.l.b16 %v7560
    %v8039 = vunpack.c.h.b16 %v7560
    %v8040 = vunpack.c.l.b16 %v7561
    %v8041 = vunpack.c.h.b16 %v7561
    %v8042 = vunpack.c.l.b16 %v7562
    %v8043 = vunpack.c.h.b16 %v7562
    %v8044 = vunpack.c.l.b16 %v7563
    %v8045 = vunpack.c.h.b16 %v7563
    %v8046 = vunpack.c.l.b16 %v7564
    %v8047 = vunpack.c.h.b16 %v7564
    %v8048 = vunpack.c.l.b16 %v7565
    %v8049 = vunpack.c.h.b16 %v7565
    %v8050 = vunpack.c.l.b16 %v7566
    %v8051 = vunpack.c.h.b16 %v7566
    %v8052 = vunpack.c.l.b16 %v7567
    %v8053 = vunpack.c.h.b16 %v7567
    %v8054 = vunpack.c.l.b16 %v7568
    %v8055 = vunpack.c.h.b16 %v7568
    %v8056 = vunpack.c.l.b16 %v7569
    %v8057 = vunpack.c.h.b16 %v7569
    %v8058 = vunpack.c.l.b16 %v7570
    %v8059 = vunpack.c.h.b16 %v7570
    %v8060 = vunpack.c.l.b16 %v7571
    %v8061 = vunpack.c.h.b16 %v7571
    %v8062 = vunpack.c.l.b16 %v7572
    %v8063 = vunpack.c.h.b16 %v7572
    %v8064 = vunpack.c.l.b16 %v7573
    %v8065 = vunpack.c.h.b16 %v7573
    %v8066 = vunpack.c.l.b16 %v7574
    %v8067 = vunpack.c.h.b16 %v7574
    %v8068 = vunpack.c.l.b16 %v7575
    %v8069 = vunpack.c.h.b16 %v7575
    %v8070 = vunpack.c.l.b16 %v7576
    %v8071 = vunpack.c.h.b16 %v7576
    %v8072 = vunpack.c.l.b16 %v7577
    %v8073 = vunpack.c.h.b16 %v7577
    %v8074 = vunpack.c.l.b16 %v7578
    %v8075 = vunpack.c.h.b16 %v7578
    %v8076 = vunpack.c.l.b16 %v7579
    %v8077 = vunpack.c.h.b16 %v7579
    %v8078 = vunpack.c.l.b16 %v7580
    %v8079 = vunpack.c.h.b16 %v7580
    %v8080 = vunpack.c.l.b16 %v7581
    %v8081 = vunpack.c.h.b16 %v7581
    %v8082 = vunpack.c.l.b16 %v7582
    %v8083 = vunpack.c.h.b16 %v7582
    %v8084 = vunpack.c.l.b16 %v7583
    %v8085 = vunpack.c.h.b16 %v7583
    %v8086 = vunpack.c.l.b16 %v7584
    %v8087 = vunpack.c.h.b16 %v7584
    %v8088 = vunpack.c.l.b16 %v7585
    %v8089 = vunpack.c.h.b16 %v7585
    %v8090 = vunpack.c.l.b16 %v7586
    %v8091 = vunpack.c.h.b16 %v7586
    %v8092 = vunpack.c.l.b16 %v7587
    %v8093 = vunpack.c.h.b16 %v7587
    %v8094 = vunpack.c.l.b16 %v7588
    %v8095 = vunpack.c.h.b16 %v7588
    %v8096 = vunpack.c.l.b16 %v7589
    %v8097 = vunpack.c.h.b16 %v7589
    %v8098 = vunpack.c.l.b16 %v7590
    %v8099 = vunpack.c.h.b16 %v7590
    %v8100 = vunpack.c.l.b16 %v7591
    %v8101 = vunpack.c.h.b16 %v7591
    %v8102 = vunpack.c.l.b16 %v7592
    %v8103 = vunpack.c.h.b16 %v7592
    %v8104 = vunpack.c.l.b16 %v7593
    %v8105 = vunpack.c.h.b16 %v7593
    %v8106 = vunpack.c.l.b16 %v7594
    %v8107 = vunpack.c.h.b16 %v7594
    %v8108 = vunpack.c.l.b16 %v7595
    %v8109 = vunpack.c.h.b16 %v7595
    %v8110 = vunpack.c.l.b16 %v7596
    %v8111 = vunpack.c.h.b16 %v7596
    %v8112 = vunpack.c.l.b16 %v7597
    %v8113 = vunpack.c.h.b16 %v7597
    %v8114 = vunpack.c.l.b16 %v7598
    %v8115 = vunpack.c.h.b16 %v7598
    %v8116 = vunpack.c.l.b16 %v7599
    %v8117 = vunpack.c.h.b16 %v7599
    %v8118 = vunpack.c.l.b16 %v7600
    %v8119 = vunpack.c.h.b16 %v7600
    %v8120 = vunpack.c.l.b16 %v7601
    %v8121 = vunpack.c.h.b16 %v7601
    %v8122 = vunpack.c.l.b16 %v7602
    %v8123 = vunpack.c.h.b16 %v7602
    %v8124 = vunpack.c.l.b16 %v7603
    %v8125 = vunpack.c.h.b16 %v7603
    %v8126 = vunpack.c.l.b16 %v7604
    %v8127 = vunpack.c.h.b16 %v7604
    %v8128 = vunpack.c.l.b16 %v7605
    %v8129 = vunpack.c.h.b16 %v7605
    %v8130 = vunpack.c.l.b16 %v7606
    %v8131 = vunpack.c.h.b16 %v7606
    %v8132 = vunpack.c.l.b16 %v7607
    %v8133 = vunpack.c.h.b16 %v7607
    %v8134 = vunpack.c.l.b16 %v7608
    %v8135 = vunpack.c.h.b16 %v7608
    %v8136 = vunpack.c.l.b16 %v7609
    %v8137 = vunpack.c.h.b16 %v7609
    %v8138 = vunpack.c.l.b16 %v7610
    %v8139 = vunpack.c.h.b16 %v7610
    %v8140 = vunpack.c.l.b16 %v7611
    %v8141 = vunpack.c.h.b16 %v7611
    %v8142 = vunpack.c.l.b16 %v7612
    %v8143 = vunpack.c.h.b16 %v7612
    %v8144 = vunpack.c.l.b16 %v7613
    %v8145 = vunpack.c.h.b16 %v7613
    %v8146 = vunpack.c.l.b16 %v7614
    %v8147 = vunpack.c.h.b16 %v7614
    %v8148 = vunpack.c.l.b16 %v7615
    %v8149 = vunpack.c.h.b16 %v7615
    %v8150 = vunpack.c.l.b16 %v7616
    %v8151 = vunpack.c.h.b16 %v7616
    %v8152 = vunpack.c.l.b16 %v7617
    %v8153 = vunpack.c.h.b16 %v7617
    %v8154 = vunpack.c.l.b16 %v7618
    %v8155 = vunpack.c.h.b16 %v7618
    %v8156 = vunpack.c.l.b16 %v7619
    %v8157 = vunpack.c.h.b16 %v7619
    %v8158 = vunpack.c.l.b16 %v7620
    %v8159 = vunpack.c.h.b16 %v7620
    %v8160 = vunpack.c.l.b16 %v7621
    %v8161 = vunpack.c.h.b16 %v7621
    %v8162 = vunpack.c.l.b16 %v7622
    %v8163 = vunpack.c.h.b16 %v7622
    %v8164 = vunpack.c.l.b16 %v7623
    %v8165 = vunpack.c.h.b16 %v7623
    %v8166 = vunpack.c.l.b16 %v7624
    %v8167 = vunpack.c.h.b16 %v7624
    %v8168 = vunpack.c.l.b16 %v7625
    %v8169 = vunpack.c.h.b16 %v7625
    %v8170 = vunpack.c.l.b16 %v7626
    %v8171 = vunpack.c.h.b16 %v7626
    %v8172 = vunpack.c.l.b16 %v7627
    %v8173 = vunpack.c.h.b16 %v7627
    %v8174 = vunpack.c.l.b16 %v7628
    %v8175 = vunpack.c.h.b16 %v7628
    %v8176 = vunpack.c.l.b16 %v7629
    %v8177 = vunpack.c.h.b16 %v7629
    %v8178 = vunpack.c.l.b16 %v7630
    %v8179 = vunpack.c.h.b16 %v7630
    %v8180 = vunpack.c.l.b16 %v7631
    %v8181 = vunpack.c.h.b16 %v7631
    %v8182 = vunpack.c.l.b16 %v7632
    %v8183 = vunpack.c.h.b16 %v7632
    %v8184 = vunpack.c.l.b16 %v7633
    %v8185 = vunpack.c.h.b16 %v7633
    %v8186 = vunpack.c.l.b16 %v7634
    %v8187 = vunpack.c.h.b16 %v7634
    %v8188 = vunpack.c.l.b16 %v7635
    %v8189 = vunpack.c.h.b16 %v7635
    %v8190 = vunpack.c.l.b16 %v7636
    %v8191 = vunpack.c.h.b16 %v7636
    %v8192 = vunpack.c.l.b16 %v7637
    %v8193 = vunpack.c.h.b16 %v7637
    %v8194 = vunpack.c.l.b16 %v7638
    %v8195 = vunpack.c.h.b16 %v7638
    %v8196 = vunpack.c.l.b16 %v7639
    %v8197 = vunpack.c.h.b16 %v7639
    %v8198 = vunpack.c.l.b16 %v7640
    %v8199 = vunpack.c.h.b16 %v7640
    %v8200 = vunpack.c.l.b16 %v7641
    %v8201 = vunpack.c.h.b16 %v7641
    %v8202 = vunpack.c.l.b16 %v7642
    %v8203 = vunpack.c.h.b16 %v7642
    %v8204 = vunpack.c.l.b16 %v7643
    %v8205 = vunpack.c.h.b16 %v7643
    %v8206 = vunpack.c.l.b16 %v7644
    %v8207 = vunpack.c.h.b16 %v7644
    %v8208 = vunpack.c.l.b16 %v7645
    %v8209 = vunpack.c.h.b16 %v7645
    %v8210 = vunpack.c.l.b16 %v7646
    %v8211 = vunpack.c.h.b16 %v7646
    %v8212 = vunpack.c.l.b16 %v7647
    %v8213 = vunpack.c.h.b16 %v7647
    %v8214 = vunpack.c.l.b16 %v7648
    %v8215 = vunpack.c.h.b16 %v7648
    %v8216 = vunpack.c.l.b16 %v7649
    %v8217 = vunpack.c.h.b16 %v7649
    %v8218 = vunpack.c.l.b16 %v7650
    %v8219 = vunpack.c.h.b16 %v7650
    %v8220 = vunpack.c.l.b16 %v7651
    %v8221 = vunpack.c.h.b16 %v7651
    %v8222 = vunpack.c.l.b16 %v7652
    %v8223 = vunpack.c.h.b16 %v7652
    %v8224 = vunpack.c.l.b16 %v7653
    %v8225 = vunpack.c.h.b16 %v7653
    %v8226 = vunpack.c.l.b16 %v7654
    %v8227 = vunpack.c.h.b16 %v7654
    %v8228 = vunpack.c.l.b16 %v7655
    %v8229 = vunpack.c.h.b16 %v7655
    %v8230 = vunpack.c.l.b16 %v7656
    %v8231 = vunpack.c.h.b16 %v7656
    %v8232 = vunpack.c.l.b16 %v7657
    %v8233 = vunpack.c.h.b16 %v7657
    %v8234 = vunpack.c.l.b16 %v7658
    %v8235 = vunpack.c.h.b16 %v7658
    %v8236 = vunpack.c.l.b16 %v7659
    %v8237 = vunpack.c.h.b16 %v7659
    %v8238 = vunpack.c.l.b16 %v7660
    %v8239 = vunpack.c.h.b16 %v7660
    %v8240 = vunpack.c.l.b16 %v7661
    %v8241 = vunpack.c.h.b16 %v7661
    %v8242 = vunpack.c.l.b16 %v7662
    %v8243 = vunpack.c.h.b16 %v7662
    %v8244 = vunpack.c.l.b16 %v7663
    %v8245 = vunpack.c.h.b16 %v7663
    %v8246 = vunpack.c.l.b16 %v7664
    %v8247 = vunpack.c.h.b16 %v7664
    %v8248 = vunpack.c.l.b16 %v7665
    %v8249 = vunpack.c.h.b16 %v7665
    %v8250 = vunpack.c.l.b16 %v7666
    %v8251 = vunpack.c.h.b16 %v7666
    %v8252 = vunpack.c.l.b16 %v7667
    %v8253 = vunpack.c.h.b16 %v7667
    %v8254 = vunpack.c.l.b16 %v7668
    %v8255 = vunpack.c.h.b16 %v7668
    %v8256 = vunpack.c.l.b16 %v7669
    %v8257 = vunpack.c.h.b16 %v7669
    %v8258 = vunpack.c.l.b16 %v7670
    %v8259 = vunpack.c.h.b16 %v7670
    %v8260 = vpack.c.b16 %v7876, %v7872
    %v8261 = vpack.c.b16 %v7877, %v7873
    %v8262 = vpack.c.b16 %v7878, %v7874
    %v8263 = vpack.c.b16 %v7879, %v7875
    %v8264 = vpack.c.b16 %v7884, %v7880
    %v8265 = vpack.c.b16 %v7885, %v7881
    %v8266 = vpack.c.b16 %v7886, %v7882
    %v8267 = vpack.c.b16 %v7887, %v7883
    %v8268 = vpack.c.b16 %v7892, %v7888
    %v8269 = vpack.c.b16 %v7893, %v7889
    %v8270 = vpack.c.b16 %v7894, %v7890
    %v8271 = vpack.c.b16 %v7895, %v7891
    %v8272 = vpack.c.b16 %v7900, %v7896
    %v8273 = vpack.c.b16 %v7901, %v7897
    %v8274 = vpack.c.b16 %v7902, %v7898
    %v8275 = vpack.c.b16 %v7903, %v7899
    %v8276 = vpack.c.b16 %v7908, %v7904
    %v8277 = vpack.c.b16 %v7909, %v7905
    %v8278 = vpack.c.b16 %v7910, %v7906
    %v8279 = vpack.c.b16 %v7911, %v7907
    %v8280 = vpack.c.b16 %v7916, %v7912
    %v8281 = vpack.c.b16 %v7917, %v7913
    %v8282 = vpack.c.b16 %v7918, %v7914
    %v8283 = vpack.c.b16 %v7919, %v7915
    %v8284 = vpack.c.b16 %v7924, %v7920
    %v8285 = vpack.c.b16 %v7925, %v7921
    %v8286 = vpack.c.b16 %v7926, %v7922
    %v8287 = vpack.c.b16 %v7927, %v7923
    %v8288 = vpack.c.b16 %v7932, %v7928
    %v8289 = vpack.c.b16 %v7933, %v7929
    %v8290 = vpack.c.b16 %v7934, %v7930
    %v8291 = vpack.c.b16 %v7935, %v7931
    %v8292 = vpack.c.b16 %v7940, %v7936
    %v8293 = vpack.c.b16 %v7941, %v7937
    %v8294 = vpack.c.b16 %v7942, %v7938
    %v8295 = vpack.c.b16 %v7943, %v7939
    %v8296 = vpack.c.b16 %v7948, %v7944
    %v8297 = vpack.c.b16 %v7949, %v7945
    %v8298 = vpack.c.b16 %v7950, %v7946
    %v8299 = vpack.c.b16 %v7951, %v7947
    %v8300 = vpack.c.b16 %v7956, %v7952
    %v8301 = vpack.c.b16 %v7957, %v7953
    %v8302 = vpack.c.b16 %v7958, %v7954
    %v8303 = vpack.c.b16 %v7959, %v7955
    %v8304 = vpack.c.b16 %v7964, %v7960
    %v8305 = vpack.c.b16 %v7965, %v7961
    %v8306 = vpack.c.b16 %v7966, %v7962
    %v8307 = vpack.c.b16 %v7967, %v7963
    %v8308 = vpack.c.b16 %v7972, %v7968
    %v8309 = vpack.c.b16 %v7973, %v7969
    %v8310 = vpack.c.b16 %v7974, %v7970
    %v8311 = vpack.c.b16 %v7975, %v7971
    %v8312 = vpack.c.b16 %v7980, %v7976
    %v8313 = vpack.c.b16 %v7981, %v7977
    %v8314 = vpack.c.b16 %v7982, %v7978
    %v8315 = vpack.c.b16 %v7983, %v7979
    %v8316 = vpack.c.b16 %v7988, %v7984
    %v8317 = vpack.c.b16 %v7989, %v7985
    %v8318 = vpack.c.b16 %v7990, %v7986
    %v8319 = vpack.c.b16 %v7991, %v7987
    %v8320 = vpack.c.b16 %v7996, %v7992
    %v8321 = vpack.c.b16 %v7997, %v7993
    %v8322 = vpack.c.b16 %v7998, %v7994
    %v8323 = vpack.c.b16 %v7999, %v7995
    %v8324 = vpack.c.b16 %v8004, %v8000
    %v8325 = vpack.c.b16 %v8005, %v8001
    %v8326 = vpack.c.b16 %v8006, %v8002
    %v8327 = vpack.c.b16 %v8007, %v8003
    %v8328 = vpack.c.b16 %v8012, %v8008
    %v8329 = vpack.c.b16 %v8013, %v8009
    %v8330 = vpack.c.b16 %v8014, %v8010
    %v8331 = vpack.c.b16 %v8015, %v8011
    %v8332 = vpack.c.b16 %v8020, %v8016
    %v8333 = vpack.c.b16 %v8021, %v8017
    %v8334 = vpack.c.b16 %v8022, %v8018
    %v8335 = vpack.c.b16 %v8023, %v8019
    %v8336 = vpack.c.b16 %v8028, %v8024
    %v8337 = vpack.c.b16 %v8029, %v8025
    %v8338 = vpack.c.b16 %v8030, %v8026
    %v8339 = vpack.c.b16 %v8031, %v8027
    %v8340 = vpack.c.b16 %v8036, %v8032
    %v8341 = vpack.c.b16 %v8037, %v8033
    %v8342 = vpack.c.b16 %v8038, %v8034
    %v8343 = vpack.c.b16 %v8039, %v8035
    %v8344 = vpack.c.b16 %v8044, %v8040
    %v8345 = vpack.c.b16 %v8045, %v8041
    %v8346 = vpack.c.b16 %v8046, %v8042
    %v8347 = vpack.c.b16 %v8047, %v8043
    %v8348 = vpack.c.b16 %v8052, %v8048
    %v8349 = vpack.c.b16 %v8053, %v8049
    %v8350 = vpack.c.b16 %v8054, %v8050
    %v8351 = vpack.c.b16 %v8055, %v8051
    %v8352 = vpack.c.b16 %v8060, %v8056
    %v8353 = vpack.c.b16 %v8061, %v8057
    %v8354 = vpack.c.b16 %v8062, %v8058
    %v8355 = vpack.c.b16 %v8063, %v8059
    %v8356 = vpack.c.b16 %v8068, %v8064
    %v8357 = vpack.c.b16 %v8069, %v8065
    %v8358 = vpack.c.b16 %v8070, %v8066
    %v8359 = vpack.c.b16 %v8071, %v8067
    %v8360 = vpack.c.b16 %v8076, %v8072
    %v8361 = vpack.c.b16 %v8077, %v8073
    %v8362 = vpack.c.b16 %v8078, %v8074
    %v8363 = vpack.c.b16 %v8079, %v8075
    %v8364 = vpack.c.b16 %v8084, %v8080
    %v8365 = vpack.c.b16 %v8085, %v8081
    %v8366 = vpack.c.b16 %v8086, %v8082
    %v8367 = vpack.c.b16 %v8087, %v8083
    %v8368 = vpack.c.b16 %v8092, %v8088
    %v8369 = vpack.c.b16 %v8093, %v8089
    %v8370 = vpack.c.b16 %v8094, %v8090
    %v8371 = vpack.c.b16 %v8095, %v8091
    %v8372 = vpack.c.b16 %v8100, %v8096
    %v8373 = vpack.c.b16 %v8101, %v8097
    %v8374 = vpack.c.b16 %v8102, %v8098
    %v8375 = vpack.c.b16 %v8103, %v8099
    %v8376 = vpack.c.b16 %v8108, %v8104
    %v8377 = vpack.c.b16 %v8109, %v8105
    %v8378 = vpack.c.b16 %v8110, %v8106
    %v8379 = vpack.c.b16 %v8111, %v8107
    %v8380 = vpack.c.b16 %v8116, %v8112
    %v8381 = vpack.c.b16 %v8117, %v8113
    %v8382 = vpack.c.b16 %v8118, %v8114
    %v8383 = vpack.c.b16 %v8119, %v8115
    %v8384 = vpack.c.b16 %v8124, %v8120
    %v8385 = vpack.c.b16 %v8125, %v8121
    %v8386 = vpack.c.b16 %v8126, %v8122
    %v8387 = vpack.c.b16 %v8127, %v8123
    %v8388 = vpack.c.b16 %v8132, %v8128
    %v8389 = vpack.c.b16 %v8133, %v8129
    %v8390 = vpack.c.b16 %v8134, %v8130
    %v8391 = vpack.c.b16 %v8135, %v8131
    %v8392 = vpack.c.b16 %v8140, %v8136
    %v8393 = vpack.c.b16 %v8141, %v8137
    %v8394 = vpack.c.b16 %v8142, %v8138
    %v8395 = vpack.c.b16 %v8143, %v8139
    %v8396 = vpack.c.b16 %v8148, %v8144
    %v8397 = vpack.c.b16 %v8149, %v8145
    %v8398 = vpack.c.b16 %v8150, %v8146
    %v8399 = vpack.c.b16 %v8151, %v8147
    %v8400 = vpack.c.b16 %v8156, %v8152
    %v8401 = vpack.c.b16 %v8157, %v8153
    %v8402 = vpack.c.b16 %v8158, %v8154
    %v8403 = vpack.c.b16 %v8159, %v8155
    %v8404 = vpack.c.b16 %v8164, %v8160
    %v8405 = vpack.c.b16 %v8165, %v8161
    %v8406 = vpack.c.b16 %v8166, %v8162
    %v8407 = vpack.c.b16 %v8167, %v8163
    %v8408 = vpack.c.b16 %v8172, %v8168
    %v8409 = vpack.c.b16 %v8173, %v8169
    %v8410 = vpack.c.b16 %v8174, %v8170
    %v8411 = vpack.c.b16 %v8175, %v8171
    %v8412 = vpack.c.b16 %v8180, %v8176
    %v8413 = vpack.c.b16 %v8181, %v8177
    %v8414 = vpack.c.b16 %v8182, %v8178
    %v8415 = vpack.c.b16 %v8183, %v8179
    %v8416 = vpack.c.b16 %v8188, %v8184
    %v8417 = vpack.c.b16 %v8189, %v8185
    %v8418 = vpack.c.b16 %v8190, %v8186
    %v8419 = vpack.c.b16 %v8191, %v8187
    %v8420 = vpack.c.b16 %v8196, %v8192
    %v8421 = vpack.c.b16 %v8197, %v8193
    %v8422 = vpack.c.b16 %v8198, %v8194
    %v8423 = vpack.c.b16 %v8199, %v8195
    %v8424 = vpack.c.b16 %v8204, %v8200
    %v8425 = vpack.c.b16 %v8205, %v8201
    %v8426 = vpack.c.b16 %v8206, %v8202
    %v8427 = vpack.c.b16 %v8207, %v8203
    %v8428 = vpack.c.b16 %v8212, %v8208
    %v8429 = vpack.c.b16 %v8213, %v8209
    %v8430 = vpack.c.b16 %v8214, %v8210
    %v8431 = vpack.c.b16 %v8215, %v8211
    %v8432 = vpack.c.b16 %v8220, %v8216
    %v8433 = vpack.c.b16 %v8221, %v8217
    %v8434 = vpack.c.b16 %v8222, %v8218
    %v8435 = vpack.c.b16 %v8223, %v8219
    %v8436 = vpack.c.b16 %v8228, %v8224
    %v8437 = vpack.c.b16 %v8229, %v8225
    %v8438 = vpack.c.b16 %v8230, %v8226
    %v8439 = vpack.c.b16 %v8231, %v8227
    %v8440 = vpack.c.b16 %v8236, %v8232
    %v8441 = vpack.c.b16 %v8237, %v8233
    %v8442 = vpack.c.b16 %v8238, %v8234
    %v8443 = vpack.c.b16 %v8239, %v8235
    %v8444 = vpack.c.b16 %v8244, %v8240
    %v8445 = vpack.c.b16 %v8245, %v8241
    %v8446 = vpack.c.b16 %v8246, %v8242
    %v8447 = vpack.c.b16 %v8247, %v8243
    %v8448 = vpack.c.b16 %v8252, %v8248
    %v8449 = vpack.c.b16 %v8253, %v8249
    %v8450 = vpack.c.b16 %v8254, %v8250
    %v8451 = vpack.c.b16 %v8255, %v8251
    %v8452 = vpack.c.b16 %v8256, %v8256
    %v8453 = vpack.c.b16 %v8257, %v8257
    %v8454 = vpack.c.b16 %v8258, %v8258
    %v8455 = vpack.c.b16 %v8259, %v8259
    %vm8648 = vcmask 31744
    %v8650 = vsel %vm8648, %v7677, 0
    %v8653 = vsel %vm3245, %v8452, 0
    %v8656 = vsel %vm3245, %v8453, 0
    %v8659 = vsel %vm3245, %v8454, 0
    %v8662 = vsel %vm3245, %v8455, 0
    %8664 = vmatprep.subr.bf16.mxu0 %v8261
    %8665 = vmatpush1.bf16.msra.mxu0 %v8260
    %8666 = vmatprep.subr.bf16.mxu0 %v8265
    %8667 = vmatpush1.bf16.msra.mxu0 %v8264
    %8668 = vmatprep.subr.bf16.mxu0 %v8269
    %8669 = vmatpush1.bf16.msra.mxu0 %v8268
    %8670 = vmatprep.subr.bf16.mxu0 %v8273
    %8671 = vmatpush1.bf16.msra.mxu0 %v8272
    %8672 = vmatprep.subr.bf16.mxu0 %v8277
    %8673 = vmatpush1.bf16.msra.mxu0 %v8276
    %8674 = vmatprep.subr.bf16.mxu0 %v8281
    %8675 = vmatpush1.bf16.msra.mxu0 %v8280
    %8676 = vmatprep.subr.bf16.mxu0 %v8285
    %8677 = vmatpush1.bf16.msra.mxu0 %v8284
    %8678 = vmatprep.subr.bf16.mxu0 %v8289
    %8679 = vmatpush1.bf16.msra.mxu0 %v8288
    %8680 = vmatprep.subr.bf16.mxu0 %v8293
    %8681 = vmatpush1.bf16.msra.mxu0 %v8292
    %8682 = vmatprep.subr.bf16.mxu0 %v8297
    %8683 = vmatpush1.bf16.msra.mxu0 %v8296
    %8684 = vmatprep.subr.bf16.mxu0 %v8301
    %8685 = vmatpush1.bf16.msra.mxu0 %v8300
    %8686 = vmatprep.subr.bf16.mxu0 %v8305
    %8687 = vmatpush1.bf16.msra.mxu0 %v8304
    %8688 = vmatprep.subr.bf16.mxu0 %v8309
    %8689 = vmatpush1.bf16.msra.mxu0 %v8308
    %8690 = vmatprep.subr.bf16.mxu0 %v8313
    %8691 = vmatpush1.bf16.msra.mxu0 %v8312
    %8692 = vmatprep.subr.bf16.mxu0 %v8317
    %8693 = vmatpush1.bf16.msra.mxu0 %v8316
    %8694 = vmatprep.subr.bf16.mxu0 %v8321
    %8695 = vmatpush1.bf16.msra.mxu0 %v8320
    %8696 = vmatprep.mubr.bf16.mxu0 %v7672
    %8697 = vmatmul.mubr.bf16.gmra.mrb[0].mxu0 %v7671
    %v8698 = vpop.f32.mrb[0].mxu0
    %v8699 = vadd.f32 0.0, %v8698
    %v8700 = vpop.f32.mrb[0].mxu0
    %v8701 = vadd.f32 0.0, %v8700
    %v8702 = vpop.f32.mrb[0].mxu0
    %v8703 = vpop.f32.mrb[0].mxu0
    %8704 = vdwg.mxu0
    %8705 = vmatprep.subr.bf16.mxu0 %v8325
    %8706 = vmatpush1.bf16.msra.mxu0 %v8324
    %8707 = vmatprep.subr.bf16.mxu0 %v8329
    %8708 = vmatpush1.bf16.msra.mxu0 %v8328
    %8709 = vmatprep.subr.bf16.mxu0 %v8333
    %8710 = vmatpush1.bf16.msra.mxu0 %v8332
    %8711 = vmatprep.subr.bf16.mxu0 %v8337
    %8712 = vmatpush1.bf16.msra.mxu0 %v8336
    %8713 = vmatprep.subr.bf16.mxu0 %v8341
    %8714 = vmatpush1.bf16.msra.mxu0 %v8340
    %8715 = vmatprep.subr.bf16.mxu0 %v8345
    %8716 = vmatpush1.bf16.msra.mxu0 %v8344
    %8717 = vmatprep.subr.bf16.mxu0 %v8349
    %8718 = vmatpush1.bf16.msra.mxu0 %v8348
    %8719 = vmatprep.subr.bf16.mxu0 %v8353
    %8720 = vmatpush1.bf16.msra.mxu0 %v8352
    %8721 = vmatprep.subr.bf16.mxu0 %v8357
    %8722 = vmatpush1.bf16.msra.mxu0 %v8356
    %8723 = vmatprep.subr.bf16.mxu0 %v8361
    %8724 = vmatpush1.bf16.msra.mxu0 %v8360
    %8725 = vmatprep.subr.bf16.mxu0 %v8365
    %8726 = vmatpush1.bf16.msra.mxu0 %v8364
    %8727 = vmatprep.subr.bf16.mxu0 %v8369
    %8728 = vmatpush1.bf16.msra.mxu0 %v8368
    %8729 = vmatprep.subr.bf16.mxu0 %v8373
    %8730 = vmatpush1.bf16.msra.mxu0 %v8372
    %8731 = vmatprep.subr.bf16.mxu0 %v8377
    %8732 = vmatpush1.bf16.msra.mxu0 %v8376
    %8733 = vmatprep.subr.bf16.mxu0 %v8381
    %8734 = vmatpush1.bf16.msra.mxu0 %v8380
    %8735 = vmatprep.subr.bf16.mxu0 %v8385
    %8736 = vmatpush1.bf16.msra.mxu0 %v8384
    %8737 = vmatprep.mubr.bf16.mxu0 %v7674
    %8738 = vmatmul.mubr.bf16.gmra.mrb[0].mxu0 %v7673
    %v8739 = vpop.f32.mrb[0].mxu0
    %v8740 = vadd.f32 %v8699, %v8739
    %v8741 = vpop.f32.mrb[0].mxu0
    %v8742 = vadd.f32 %v8701, %v8741
    %v8743 = vpop.f32.mrb[0].mxu0
    %v8744 = vpop.f32.mrb[0].mxu0
    %8745 = vdwg.mxu0
    %8746 = vmatprep.subr.bf16.mxu0 %v8389
    %8747 = vmatpush1.bf16.msra.mxu0 %v8388
    %8748 = vmatprep.subr.bf16.mxu0 %v8393
    %8749 = vmatpush1.bf16.msra.mxu0 %v8392
    %8750 = vmatprep.subr.bf16.mxu0 %v8397
    %8751 = vmatpush1.bf16.msra.mxu0 %v8396
    %8752 = vmatprep.subr.bf16.mxu0 %v8401
    %8753 = vmatpush1.bf16.msra.mxu0 %v8400
    %8754 = vmatprep.subr.bf16.mxu0 %v8405
    %8755 = vmatpush1.bf16.msra.mxu0 %v8404
    %8756 = vmatprep.subr.bf16.mxu0 %v8409
    %8757 = vmatpush1.bf16.msra.mxu0 %v8408
    %8758 = vmatprep.subr.bf16.mxu0 %v8413
    %8759 = vmatpush1.bf16.msra.mxu0 %v8412
    %8760 = vmatprep.subr.bf16.mxu0 %v8417
    %8761 = vmatpush1.bf16.msra.mxu0 %v8416
    %8762 = vmatprep.subr.bf16.mxu0 %v8421
    %8763 = vmatpush1.bf16.msra.mxu0 %v8420
    %8764 = vmatprep.subr.bf16.mxu0 %v8425
    %8765 = vmatpush1.bf16.msra.mxu0 %v8424
    %8766 = vmatprep.subr.bf16.mxu0 %v8429
    %8767 = vmatpush1.bf16.msra.mxu0 %v8428
    %8768 = vmatprep.subr.bf16.mxu0 %v8433
    %8769 = vmatpush1.bf16.msra.mxu0 %v8432
    %8770 = vmatprep.subr.bf16.mxu0 %v8437
    %8771 = vmatpush1.bf16.msra.mxu0 %v8436
    %8772 = vmatprep.subr.bf16.mxu0 %v8441
    %8773 = vmatpush1.bf16.msra.mxu0 %v8440
    %8774 = vmatprep.subr.bf16.mxu0 %v8445
    %8775 = vmatpush1.bf16.msra.mxu0 %v8444
    %8776 = vmatprep.subr.bf16.mxu0 %v8449
    %8777 = vmatpush1.bf16.msra.mxu0 %v8448
    %8778 = vmatprep.mubr.bf16.mxu0 %v7676
    %8779 = vmatmul.mubr.bf16.gmra.mrb[0].mxu0 %v7675
    %v8780 = vpop.f32.mrb[0].mxu0
    %v8781 = vadd.f32 %v8740, %v8780
    %v8782 = vpop.f32.mrb[0].mxu0
    %v8783 = vadd.f32 %v8742, %v8782
    %v8784 = vpop.f32.mrb[0].mxu0
    %v8785 = vpop.f32.mrb[0].mxu0
    %8786 = vdwg.mxu0
    %8787 = vmatprep.subr.bf16.mxu0 %v8656
    %8788 = vmatpush1.bf16.msra.mxu0 %v8653
    %8789 = vmatprep.subr.bf16.mxu0 0
    %8790 = vmatpush1.bf16.msra.mxu0 0
    %8791 = vmatprep.subr.bf16.mxu0 0
    %8792 = vmatpush1.bf16.msra.mxu0 0
    %8793 = vmatprep.subr.bf16.mxu0 0
    %8794 = vmatpush1.bf16.msra.mxu0 0
    %8795 = vmatprep.subr.bf16.mxu0 0
    %8796 = vmatpush1.bf16.msra.mxu0 0
    %8797 = vmatprep.subr.bf16.mxu0 0
    %8798 = vmatpush1.bf16.msra.mxu0 0
    %8799 = vmatprep.subr.bf16.mxu0 0
    %8800 = vmatpush1.bf16.msra.mxu0 0
    %8801 = vmatprep.subr.bf16.mxu0 0
    %8802 = vmatpush1.bf16.msra.mxu0 0
    %8803 = vmatprep.subr.bf16.mxu0 0
    %8804 = vmatpush1.bf16.msra.mxu0 0
    %8805 = vmatprep.subr.bf16.mxu0 0
    %8806 = vmatpush1.bf16.msra.mxu0 0
    %8807 = vmatprep.subr.bf16.mxu0 0
    %8808 = vmatpush1.bf16.msra.mxu0 0
    %8809 = vmatprep.subr.bf16.mxu0 0
    %8810 = vmatpush1.bf16.msra.mxu0 0
    %8811 = vmatprep.subr.bf16.mxu0 0
    %8812 = vmatpush1.bf16.msra.mxu0 0
    %8813 = vmatprep.subr.bf16.mxu0 0
    %8814 = vmatpush1.bf16.msra.mxu0 0
    %8815 = vmatprep.subr.bf16.mxu0 0
    %8816 = vmatpush1.bf16.msra.mxu0 0
    %8817 = vmatprep.subr.bf16.mxu0 0
    %8818 = vmatpush1.bf16.msra.mxu0 0
    %8819 = vmatprep.mubr.bf16.mxu0 0
    %8820 = vmatmul.mubr.bf16.gmra.mrb[0].mxu0 %v8650
    %v8821 = vpop.f32.mrb[0].mxu0
    %v8822 = vadd.f32 %v8781, %v8821
    %v8823 = vpop.f32.mrb[0].mxu0
    %v8824 = vadd.f32 %v8783, %v8823
    %v8825 = vpop.f32.mrb[0].mxu0
    %v8826 = vpop.f32.mrb[0].mxu0
    %8827 = vdwg.mxu0
    %8828 = vmatprep.subr.bf16.mxu0 %v8263
    %8829 = vmatpush1.bf16.msra.mxu0 %v8262
    %8830 = vmatprep.subr.bf16.mxu0 %v8267
    %8831 = vmatpush1.bf16.msra.mxu0 %v8266
    %8832 = vmatprep.subr.bf16.mxu0 %v8271
    %8833 = vmatpush1.bf16.msra.mxu0 %v8270
    %8834 = vmatprep.subr.bf16.mxu0 %v8275
    %8835 = vmatpush1.bf16.msra.mxu0 %v8274
    %8836 = vmatprep.subr.bf16.mxu0 %v8279
    %8837 = vmatpush1.bf16.msra.mxu0 %v8278
    %8838 = vmatprep.subr.bf16.mxu0 %v8283
    %8839 = vmatpush1.bf16.msra.mxu0 %v8282
    %8840 = vmatprep.subr.bf16.mxu0 %v8287
    %8841 = vmatpush1.bf16.msra.mxu0 %v8286
    %8842 = vmatprep.subr.bf16.mxu0 %v8291
    %8843 = vmatpush1.bf16.msra.mxu0 %v8290
    %8844 = vmatprep.subr.bf16.mxu0 %v8295
    %8845 = vmatpush1.bf16.msra.mxu0 %v8294
    %8846 = vmatprep.subr.bf16.mxu0 %v8299
    %8847 = vmatpush1.bf16.msra.mxu0 %v8298
    %8848 = vmatprep.subr.bf16.mxu0 %v8303
    %8849 = vmatpush1.bf16.msra.mxu0 %v8302
    %8850 = vmatprep.subr.bf16.mxu0 %v8307
    %8851 = vmatpush1.bf16.msra.mxu0 %v8306
    %8852 = vmatprep.subr.bf16.mxu0 %v8311
    %8853 = vmatpush1.bf16.msra.mxu0 %v8310
    %8854 = vmatprep.subr.bf16.mxu0 %v8315
    %8855 = vmatpush1.bf16.msra.mxu0 %v8314
    %8856 = vmatprep.subr.bf16.mxu0 %v8319
    %8857 = vmatpush1.bf16.msra.mxu0 %v8318
    %8858 = vmatprep.subr.bf16.mxu0 %v8323
    %8859 = vmatpush1.bf16.msra.mxu0 %v8322
    %8860 = vmatprep.mubr.bf16.mxu0 %v7672
    %8861 = vmatmul.mubr.bf16.gmra.mrb[0].mxu0 %v7671
    %v8862 = vpop.f32.mrb[0].mxu0
    %v8863 = vadd.f32 0.0, %v8862
    %v8864 = vpop.f32.mrb[0].mxu0
    %v8865 = vadd.f32 0.0, %v8864
    %v8866 = vpop.f32.mrb[0].mxu0
    %v8867 = vpop.f32.mrb[0].mxu0
    %8868 = vdwg.mxu0
    %8869 = vmatprep.subr.bf16.mxu0 %v8327
    %8870 = vmatpush1.bf16.msra.mxu0 %v8326
    %8871 = vmatprep.subr.bf16.mxu0 %v8331
    %8872 = vmatpush1.bf16.msra.mxu0 %v8330
    %8873 = vmatprep.subr.bf16.mxu0 %v8335
    %8874 = vmatpush1.bf16.msra.mxu0 %v8334
    %8875 = vmatprep.subr.bf16.mxu0 %v8339
    %8876 = vmatpush1.bf16.msra.mxu0 %v8338
    %8877 = vmatprep.subr.bf16.mxu0 %v8343
    %8878 = vmatpush1.bf16.msra.mxu0 %v8342
    %8879 = vmatprep.subr.bf16.mxu0 %v8347
    %8880 = vmatpush1.bf16.msra.mxu0 %v8346
    %8881 = vmatprep.subr.bf16.mxu0 %v8351
    %8882 = vmatpush1.bf16.msra.mxu0 %v8350
    %8883 = vmatprep.subr.bf16.mxu0 %v8355
    %8884 = vmatpush1.bf16.msra.mxu0 %v8354
    %8885 = vmatprep.subr.bf16.mxu0 %v8359
    %8886 = vmatpush1.bf16.msra.mxu0 %v8358
    %8887 = vmatprep.subr.bf16.mxu0 %v8363
    %8888 = vmatpush1.bf16.msra.mxu0 %v8362
    %8889 = vmatprep.subr.bf16.mxu0 %v8367
    %8890 = vmatpush1.bf16.msra.mxu0 %v8366
    %8891 = vmatprep.subr.bf16.mxu0 %v8371
    %8892 = vmatpush1.bf16.msra.mxu0 %v8370
    %8893 = vmatprep.subr.bf16.mxu0 %v8375
    %8894 = vmatpush1.bf16.msra.mxu0 %v8374
    %8895 = vmatprep.subr.bf16.mxu0 %v8379
    %8896 = vmatpush1.bf16.msra.mxu0 %v8378
    %8897 = vmatprep.subr.bf16.mxu0 %v8383
    %8898 = vmatpush1.bf16.msra.mxu0 %v8382
    %8899 = vmatprep.subr.bf16.mxu0 %v8387
    %8900 = vmatpush1.bf16.msra.mxu0 %v8386
    %8901 = vmatprep.mubr.bf16.mxu0 %v7674
    %8902 = vmatmul.mubr.bf16.gmra.mrb[0].mxu0 %v7673
    %v8903 = vpop.f32.mrb[0].mxu0
    %v8904 = vadd.f32 %v8863, %v8903
    %v8905 = vpop.f32.mrb[0].mxu0
    %v8906 = vadd.f32 %v8865, %v8905
    %v8907 = vpop.f32.mrb[0].mxu0
    %v8908 = vpop.f32.mrb[0].mxu0
    %8909 = vdwg.mxu0
    %8910 = vmatprep.subr.bf16.mxu0 %v8391
    %8911 = vmatpush1.bf16.msra.mxu0 %v8390
    %8912 = vmatprep.subr.bf16.mxu0 %v8395
    %8913 = vmatpush1.bf16.msra.mxu0 %v8394
    %8914 = vmatprep.subr.bf16.mxu0 %v8399
    %8915 = vmatpush1.bf16.msra.mxu0 %v8398
    %8916 = vmatprep.subr.bf16.mxu0 %v8403
    %8917 = vmatpush1.bf16.msra.mxu0 %v8402
    %8918 = vmatprep.subr.bf16.mxu0 %v8407
    %8919 = vmatpush1.bf16.msra.mxu0 %v8406
    %8920 = vmatprep.subr.bf16.mxu0 %v8411
    %8921 = vmatpush1.bf16.msra.mxu0 %v8410
    %8922 = vmatprep.subr.bf16.mxu0 %v8415
    %8923 = vmatpush1.bf16.msra.mxu0 %v8414
    %8924 = vmatprep.subr.bf16.mxu0 %v8419
    %8925 = vmatpush1.bf16.msra.mxu0 %v8418
    %8926 = vmatprep.subr.bf16.mxu0 %v8423
    %8927 = vmatpush1.bf16.msra.mxu0 %v8422
    %8928 = vmatprep.subr.bf16.mxu0 %v8427
    %8929 = vmatpush1.bf16.msra.mxu0 %v8426
    %8930 = vmatprep.subr.bf16.mxu0 %v8431
    %8931 = vmatpush1.bf16.msra.mxu0 %v8430
    %8932 = vmatprep.subr.bf16.mxu0 %v8435
    %8933 = vmatpush1.bf16.msra.mxu0 %v8434
    %8934 = vmatprep.subr.bf16.mxu0 %v8439
    %8935 = vmatpush1.bf16.msra.mxu0 %v8438
    %8936 = vmatprep.subr.bf16.mxu0 %v8443
    %8937 = vmatpush1.bf16.msra.mxu0 %v8442
    %8938 = vmatprep.subr.bf16.mxu0 %v8447
    %8939 = vmatpush1.bf16.msra.mxu0 %v8446
    %8940 = vmatprep.subr.bf16.mxu0 %v8451
    %8941 = vmatpush1.bf16.msra.mxu0 %v8450
    %8942 = vmatprep.mubr.bf16.mxu0 %v7676
    %8943 = vmatmul.mubr.bf16.gmra.mrb[0].mxu0 %v7675
    %v8944 = vpop.f32.mrb[0].mxu0
    %v8945 = vadd.f32 %v8904, %v8944
    %v8946 = vpop.f32.mrb[0].mxu0
    %v8947 = vadd.f32 %v8906, %v8946
    %v8948 = vpop.f32.mrb[0].mxu0
    %v8949 = vpop.f32.mrb[0].mxu0
    %8950 = vdwg.mxu0
    %8951 = vmatprep.subr.bf16.mxu0 %v8662
    %8952 = vmatpush1.bf16.msra.mxu0 %v8659
    %8953 = vmatprep.subr.bf16.mxu0 0
    %8954 = vmatpush1.bf16.msra.mxu0 0
    %8955 = vmatprep.subr.bf16.mxu0 0
    %8956 = vmatpush1.bf16.msra.mxu0 0
    %8957 = vmatprep.subr.bf16.mxu0 0
    %8958 = vmatpush1.bf16.msra.mxu0 0
    %8959 = vmatprep.subr.bf16.mxu0 0
    %8960 = vmatpush1.bf16.msra.mxu0 0
    %8961 = vmatprep.subr.bf16.mxu0 0
    %8962 = vmatpush1.bf16.msra.mxu0 0
    %8963 = vmatprep.subr.bf16.mxu0 0
    %8964 = vmatpush1.bf16.msra.mxu0 0
    %8965 = vmatprep.subr.bf16.mxu0 0
    %8966 = vmatpush1.bf16.msra.mxu0 0
    %8967 = vmatprep.subr.bf16.mxu0 0
    %8968 = vmatpush1.bf16.msra.mxu0 0
    %8969 = vmatprep.subr.bf16.mxu0 0
    %8970 = vmatpush1.bf16.msra.mxu0 0
    %8971 = vmatprep.subr.bf16.mxu0 0
    %8972 = vmatpush1.bf16.msra.mxu0 0
    %8973 = vmatprep.subr.bf16.mxu0 0
    %8974 = vmatpush1.bf16.msra.mxu0 0
    %8975 = vmatprep.subr.bf16.mxu0 0
    %8976 = vmatpush1.bf16.msra.mxu0 0
    %8977 = vmatprep.subr.bf16.mxu0 0
    %8978 = vmatpush1.bf16.msra.mxu0 0
    %8979 = vmatprep.subr.bf16.mxu0 0
    %8980 = vmatpush1.bf16.msra.mxu0 0
    %8981 = vmatprep.subr.bf16.mxu0 0
    %8982 = vmatpush1.bf16.msra.mxu0 0
    %8983 = vmatprep.mubr.bf16.mxu0 0
    %8984 = vmatmul.mubr.bf16.gmra.mrb[0].mxu0 %v8650
    %v8985 = vpop.f32.mrb[0].mxu0
    %v8986 = vadd.f32 %v8945, %v8985
    %v8987 = vpop.f32.mrb[0].mxu0
    %v8988 = vadd.f32 %v8947, %v8987
    %v8989 = vpop.f32.mrb[0].mxu0
    %v8990 = vpop.f32.mrb[0].mxu0
    %8991 = vdwg.mxu0
    %s8992 = scalar_lea.vmem %s6, 28
    %s8993 = scalar_lea.vmem %s8992, 1
    %v8994 = vld [vmem:[%s8993] ss:$2 sm:$0xf]
    %v8996 = vlaneseq
    %v8997 = vshrl.u32 %v8996, 7
    %v8998 = vsub.s32 0, %v8997
    %v8999 = vrot.slane %v8994, %v8998
    %v9000 = vlaneseq
    %v9001 = vshrl.u32 %v9000, 7
    %v9002 = vsub.s32 1, %v9001
    %v9003 = vrot.slane %v8994, %v9002
    %v9004 = vlaneseq
    %v9005 = vshrl.u32 %v9004, 7
    %v9006 = vsub.s32 2, %v9005
    %v9007 = vrot.slane %v8994, %v9006
    %v9008 = vlaneseq
    %v9009 = vshrl.u32 %v9008, 7
    %v9010 = vsub.s32 3, %v9009
    %v9011 = vrot.slane %v8994, %v9010
    %v9016 = vmul.f32 %v8822, %v8999
    %v9017 = vmul.f32 %v8824, %v9003
    %v9018 = vmul.f32 %v8986, %v9007
    %v9019 = vmul.f32 %v8988, %v9011
    %v9020 = vld [vmem:[%s8992] ss:$2 sm:$0xf]
    %v9022 = vlaneseq
    %v9023 = vshrl.u32 %v9022, 7
    %v9024 = vsub.s32 0, %v9023
    %v9025 = vrot.slane %v9020, %v9024
    %v9026 = vlaneseq
    %v9027 = vshrl.u32 %v9026, 7
    %v9028 = vsub.s32 1, %v9027
    %v9029 = vrot.slane %v9020, %v9028
    %v9030 = vlaneseq
    %v9031 = vshrl.u32 %v9030, 7
    %v9032 = vsub.s32 2, %v9031
    %v9033 = vrot.slane %v9020, %v9032
    %v9034 = vlaneseq
    %v9035 = vshrl.u32 %v9034, 7
    %v9036 = vsub.s32 3, %v9035
    %v9037 = vrot.slane %v9020, %v9036
    %v9042 = vadd.f32 %v9016, %v9025
    %v9043 = vadd.f32 %v9017, %v9029
    %v9044 = vadd.f32 %v9018, %v9033
    %v9045 = vadd.f32 %v9019, %v9037
    %v9046 = vmax.f32 %v9042, 0.0
    %v9047 = vmax.f32 %v9043, 0.0
    %v9048 = vmax.f32 %v9044, 0.0
    %v9049 = vmax.f32 %v9045, 0.0
    %s9050 = smul.u32 4, 56
    %s9051 = smul.u32 %s9050, 3
    %s9052 = sshll.u32 %s9051, 4
    %9053 = dma.done %s1343, %s9052
    %v9054 = vld [vmem:[#allocation5] sm:$0xff]
    %v9055 = vld [vmem:[#allocation5 + $0x8] sm:$0xff]
    %v9056 = vld [vmem:[#allocation5 + $0x10] sm:$0xff]
    %v9057 = vld [vmem:[#allocation5 + $0x18] sm:$0xff]
    %v9058 = vld [vmem:[#allocation5 + $0x20] sm:$0xff]
    %v9059 = vld [vmem:[#allocation5 + $0x28] sm:$0xff]
    %v9060 = vld [vmem:[#allocation5 + $0x30] sm:$0xff]
    %v9061 = vld [vmem:[#allocation5 + $0x38] sm:$0xff]
    %v9062 = vld [vmem:[#allocation5 + $0x40] sm:$0xff]
    %v9063 = vld [vmem:[#allocation5 + $0x48] sm:$0xff]
    %v9064 = vld [vmem:[#allocation5 + $0x50] sm:$0xff]
    %v9065 = vld [vmem:[#allocation5 + $0x58] sm:$0xff]
    %v9066 = vld [vmem:[#allocation5 + $0x60] sm:$0xff]
    %v9067 = vld [vmem:[#allocation5 + $0x68] sm:$0xff]
    %v9068 = vld [vmem:[#allocation5 + $0x70] sm:$0xff]
    %v9069 = vld [vmem:[#allocation5 + $0x78] sm:$0xff]
    %v9070 = vld [vmem:[#allocation5 + $0x80] sm:$0xff]
    %v9071 = vld [vmem:[#allocation5 + $0x88] sm:$0xff]
    %v9072 = vld [vmem:[#allocation5 + $0x90] sm:$0xff]
    %v9073 = vld [vmem:[#allocation5 + $0x98] sm:$0xff]
    %v9074 = vld [vmem:[#allocation5 + $0xa0] sm:$0xff]
    %v9075 = vld [vmem:[#allocation5 + $0xa8] sm:$0xff]
    %v9076 = vld [vmem:[#allocation5 + $0xb0] sm:$0xff]
    %v9077 = vld [vmem:[#allocation5 + $0xb8] sm:$0xff]
    %v9078 = vld [vmem:[#allocation5 + $0xc0] sm:$0xff]
    %v9079 = vld [vmem:[#allocation5 + $0xc8] sm:$0xff]
    %v9080 = vld [vmem:[#allocation5 + $0xd0] sm:$0xff]
    %v9081 = vld [vmem:[#allocation5 + $0xd8] sm:$0xff]
    %v9082 = vld [vmem:[#allocation5 + $0xe0] sm:$0xff]
    %v9083 = vld [vmem:[#allocation5 + $0xe8] sm:$0xff]
    %v9084 = vld [vmem:[#allocation5 + $0xf0] sm:$0xff]
    %v9085 = vld [vmem:[#allocation5 + $0xf8] sm:$0xff]
    %v9086 = vld [vmem:[#allocation5 + $0x100] sm:$0xff]
    %v9087 = vld [vmem:[#allocation5 + $0x108] sm:$0xff]
    %v9088 = vld [vmem:[#allocation5 + $0x110] sm:$0xff]
    %v9089 = vld [vmem:[#allocation5 + $0x118] sm:$0xff]
    %v9090 = vld [vmem:[#allocation5 + $0x120] sm:$0xff]
    %v9091 = vld [vmem:[#allocation5 + $0x128] sm:$0xff]
    %v9092 = vld [vmem:[#allocation5 + $0x130] sm:$0xff]
    %v9093 = vld [vmem:[#allocation5 + $0x138] sm:$0xff]
    %v9094 = vld [vmem:[#allocation5 + $0x140] sm:$0xff]
    %v9095 = vld [vmem:[#allocation5 + $0x148] sm:$0xff]
    %v9096 = vld [vmem:[#allocation5 + $0x150] sm:$0xff]
    %v9097 = vld [vmem:[#allocation5 + $0x158] sm:$0xff]
    %v9098 = vld [vmem:[#allocation5 + $0x160] sm:$0xff]
    %v9099 = vld [vmem:[#allocation5 + $0x168] sm:$0xff]
    %v9100 = vld [vmem:[#allocation5 + $0x170] sm:$0xff]
    %v9101 = vld [vmem:[#allocation5 + $0x178] sm:$0xff]
    %v9102 = vld [vmem:[#allocation5 + $0x180] sm:$0xff]
    %v9103 = vld [vmem:[#allocation5 + $0x188] sm:$0xff]
    %v9104 = vld [vmem:[#allocation5 + $0x190] sm:$0xff]
    %v9105 = vld [vmem:[#allocation5 + $0x198] sm:$0xff]
    %v9106 = vld [vmem:[#allocation5 + $0x1a0] sm:$0xff]
    %v9107 = vld [vmem:[#allocation5 + $0x1a8] sm:$0xff]
    %v9108 = vld [vmem:[#allocation5 + $0x1b0] sm:$0xff]
    %v9109 = vld [vmem:[#allocation5 + $0x1b8] sm:$0xff]
    %v9110 = vld [vmem:[#allocation5 + $0x1c0] sm:$0xff]
    %v9111 = vld [vmem:[#allocation5 + $0x1c8] sm:$0xff]
    %v9112 = vld [vmem:[#allocation5 + $0x1d0] sm:$0xff]
    %v9113 = vld [vmem:[#allocation5 + $0x1d8] sm:$0xff]
    %v9114 = vld [vmem:[#allocation5 + $0x1e0] sm:$0xff]
    %v9115 = vld [vmem:[#allocation5 + $0x1e8] sm:$0xff]
    %v9116 = vld [vmem:[#allocation5 + $0x1f0] sm:$0xff]
    %v9117 = vld [vmem:[#allocation5 + $0x1f8] sm:$0xff]
    %v9118 = vld [vmem:[#allocation5 + $0x200] sm:$0xff]
    %v9119 = vld [vmem:[#allocation5 + $0x208] sm:$0xff]
    %v9120 = vld [vmem:[#allocation5 + $0x210] sm:$0xff]
    %v9121 = vld [vmem:[#allocation5 + $0x218] sm:$0xff]
    %v9122 = vld [vmem:[#allocation5 + $0x220] sm:$0xff]
    %v9123 = vld [vmem:[#allocation5 + $0x228] sm:$0xff]
    %v9124 = vld [vmem:[#allocation5 + $0x230] sm:$0xff]
    %v9125 = vld [vmem:[#allocation5 + $0x238] sm:$0xff]
    %v9126 = vld [vmem:[#allocation5 + $0x240] sm:$0xff]
    %v9127 = vld [vmem:[#allocation5 + $0x248] sm:$0xff]
    %v9128 = vld [vmem:[#allocation5 + $0x250] sm:$0xff]
    %v9129 = vld [vmem:[#allocation5 + $0x258] sm:$0xff]
    %v9130 = vld [vmem:[#allocation5 + $0x260] sm:$0xff]
    %v9131 = vld [vmem:[#allocation5 + $0x268] sm:$0xff]
    %v9132 = vld [vmem:[#allocation5 + $0x270] sm:$0xff]
    %v9133 = vld [vmem:[#allocation5 + $0x278] sm:$0xff]
    %v9134 = vld [vmem:[#allocation5 + $0x280] sm:$0xff]
    %v9135 = vld [vmem:[#allocation5 + $0x288] sm:$0xff]
    %v9136 = vld [vmem:[#allocation5 + $0x290] sm:$0xff]
    %v9137 = vld [vmem:[#allocation5 + $0x298] sm:$0xff]
    %v9138 = vpack.c.bf16 %v9046, %v9046
    %v9139 = vpack.c.bf16 %v9047, %v9047
    %v9140 = vpack.c.bf16 %v9048, %v9048
    %v9141 = vpack.c.bf16 %v9049, %v9049
    %s9142 = scalar_lea.vmem %s6, 42
    %v9143 = vld [vmem:[%s9142] ss:$2 sm:$0x7]
    %v9145 = vlaneseq
    %v9146 = vshrl.u32 %v9145, 7
    %v9147 = vsub.s32 0, %v9146
    %v9148 = vrot.slane %v9143, %v9147
    %v9149 = vlaneseq
    %v9150 = vshrl.u32 %v9149, 7
    %v9151 = vsub.s32 1, %v9150
    %v9152 = vrot.slane %v9143, %v9151
    %v9153 = vlaneseq
    %v9154 = vshrl.u32 %v9153, 7
    %v9155 = vsub.s32 2, %v9154
    %v9156 = vrot.slane %v9143, %v9155
    %v9161 = vsel %vm2206, %v9141, 0
    %9163 = vmatprep.subr.bf16.mxu0 %v9055
    %9164 = vmatpush1.bf16.msra.mxu0 %v9054
    %9165 = vmatprep.subr.bf16.mxu0 %v9058
    %9166 = vmatpush1.bf16.msra.mxu0 %v9057
    %9167 = vmatprep.subr.bf16.mxu0 %v9061
    %9168 = vmatpush1.bf16.msra.mxu0 %v9060
    %9169 = vmatprep.subr.bf16.mxu0 %v9064
    %9170 = vmatpush1.bf16.msra.mxu0 %v9063
    %9171 = vmatprep.subr.bf16.mxu0 %v9067
    %9172 = vmatpush1.bf16.msra.mxu0 %v9066
    %9173 = vmatprep.subr.bf16.mxu0 %v9070
    %9174 = vmatpush1.bf16.msra.mxu0 %v9069
    %9175 = vmatprep.subr.bf16.mxu0 %v9073
    %9176 = vmatpush1.bf16.msra.mxu0 %v9072
    %9177 = vmatprep.subr.bf16.mxu0 %v9076
    %9178 = vmatpush1.bf16.msra.mxu0 %v9075
    %9179 = vmatprep.subr.bf16.mxu0 %v9079
    %9180 = vmatpush1.bf16.msra.mxu0 %v9078
    %9181 = vmatprep.subr.bf16.mxu0 %v9082
    %9182 = vmatpush1.bf16.msra.mxu0 %v9081
    %9183 = vmatprep.subr.bf16.mxu0 %v9085
    %9184 = vmatpush1.bf16.msra.mxu0 %v9084
    %9185 = vmatprep.subr.bf16.mxu0 %v9088
    %9186 = vmatpush1.bf16.msra.mxu0 %v9087
    %9187 = vmatprep.subr.bf16.mxu0 %v9091
    %9188 = vmatpush1.bf16.msra.mxu0 %v9090
    %9189 = vmatprep.subr.bf16.mxu0 %v9094
    %9190 = vmatpush1.bf16.msra.mxu0 %v9093
    %9191 = vmatprep.subr.bf16.mxu0 %v9097
    %9192 = vmatpush1.bf16.msra.mxu0 %v9096
    %9193 = vmatprep.subr.bf16.mxu0 %v9100
    %9194 = vmatpush1.bf16.msra.mxu0 %v9099
    %9195 = vmatprep.mubr.bf16.mxu0 %v9139
    %9196 = vmatmul.mubr.bf16.gmra.mrb[0].mxu0 %v9138
    %v9197 = vpop.f32.mrb[0].mxu0
    %v9198 = vadd.f32 %v9148, %v9197
    %v9199 = vpop.f32.mrb[0].mxu0
    %v9200 = vadd.f32 %v9152, %v9199
    %v9201 = vpop.f32.mrb[0].mxu0
    %v9202 = vpop.f32.mrb[0].mxu0
    %9203 = vdwg.mxu0
    %9204 = vmatprep.subr.bf16.mxu0 %v9103
    %9205 = vmatpush1.bf16.msra.mxu0 %v9102
    %9206 = vmatprep.subr.bf16.mxu0 %v9106
    %9207 = vmatpush1.bf16.msra.mxu0 %v9105
    %9208 = vmatprep.subr.bf16.mxu0 %v9109
    %9209 = vmatpush1.bf16.msra.mxu0 %v9108
    %9210 = vmatprep.subr.bf16.mxu0 %v9112
    %9211 = vmatpush1.bf16.msra.mxu0 %v9111
    %9212 = vmatprep.subr.bf16.mxu0 %v9115
    %9213 = vmatpush1.bf16.msra.mxu0 %v9114
    %9214 = vmatprep.subr.bf16.mxu0 %v9118
    %9215 = vmatpush1.bf16.msra.mxu0 %v9117
    %9216 = vmatprep.subr.bf16.mxu0 %v9121
    %9217 = vmatpush1.bf16.msra.mxu0 %v9120
    %9218 = vmatprep.subr.bf16.mxu0 %v9124
    %9219 = vmatpush1.bf16.msra.mxu0 %v9123
    %9220 = vmatprep.subr.bf16.mxu0 %v9127
    %9221 = vmatpush1.bf16.msra.mxu0 %v9126
    %9222 = vmatprep.subr.bf16.mxu0 %v9130
    %9223 = vmatpush1.bf16.msra.mxu0 %v9129
    %9224 = vmatprep.subr.bf16.mxu0 %v9133
    %9225 = vmatpush1.bf16.msra.mxu0 %v9132
    %9226 = vmatprep.subr.bf16.mxu0 %v9136
    %9227 = vmatpush1.bf16.msra.mxu0 %v9135
    %9228 = vmatprep.subr.bf16.mxu0 0
    %9229 = vmatpush1.bf16.msra.mxu0 0
    %9230 = vmatprep.subr.bf16.mxu0 0
    %9231 = vmatpush1.bf16.msra.mxu0 0
    %9232 = vmatprep.subr.bf16.mxu0 0
    %9233 = vmatpush1.bf16.msra.mxu0 0
    %9234 = vmatprep.subr.bf16.mxu0 0
    %9235 = vmatpush1.bf16.msra.mxu0 0
    %9236 = vmatprep.mubr.bf16.mxu0 %v9161
    %9237 = vmatmul.mubr.bf16.gmra.mrb[0].mxu0 %v9140
    %v9238 = vpop.f32.mrb[0].mxu0
    %v9239 = vadd.f32 %v9198, %v9238
    %v9240 = vpop.f32.mrb[0].mxu0
    %v9241 = vadd.f32 %v9200, %v9240
    %v9242 = vpop.f32.mrb[0].mxu0
    %v9243 = vpop.f32.mrb[0].mxu0
    %9244 = vdwg.mxu0
    %9245 = vmatprep.subr.bf16.mxu0 0
    %9246 = vmatpush1.bf16.msra.mxu0 %v9056
    %9247 = vmatprep.subr.bf16.mxu0 0
    %9248 = vmatpush1.bf16.msra.mxu0 %v9059
    %9249 = vmatprep.subr.bf16.mxu0 0
    %9250 = vmatpush1.bf16.msra.mxu0 %v9062
    %9251 = vmatprep.subr.bf16.mxu0 0
    %9252 = vmatpush1.bf16.msra.mxu0 %v9065
    %9253 = vmatprep.subr.bf16.mxu0 0
    %9254 = vmatpush1.bf16.msra.mxu0 %v9068
    %9255 = vmatprep.subr.bf16.mxu0 0
    %9256 = vmatpush1.bf16.msra.mxu0 %v9071
    %9257 = vmatprep.subr.bf16.mxu0 0
    %9258 = vmatpush1.bf16.msra.mxu0 %v9074
    %9259 = vmatprep.subr.bf16.mxu0 0
    %9260 = vmatpush1.bf16.msra.mxu0 %v9077
    %9261 = vmatprep.subr.bf16.mxu0 0
    %9262 = vmatpush1.bf16.msra.mxu0 %v9080
    %9263 = vmatprep.subr.bf16.mxu0 0
    %9264 = vmatpush1.bf16.msra.mxu0 %v9083
    %9265 = vmatprep.subr.bf16.mxu0 0
    %9266 = vmatpush1.bf16.msra.mxu0 %v9086
    %9267 = vmatprep.subr.bf16.mxu0 0
    %9268 = vmatpush1.bf16.msra.mxu0 %v9089
    %9269 = vmatprep.subr.bf16.mxu0 0
    %9270 = vmatpush1.bf16.msra.mxu0 %v9092
    %9271 = vmatprep.subr.bf16.mxu0 0
    %9272 = vmatpush1.bf16.msra.mxu0 %v9095
    %9273 = vmatprep.subr.bf16.mxu0 0
    %9274 = vmatpush1.bf16.msra.mxu0 %v9098
    %9275 = vmatprep.subr.bf16.mxu0 0
    %9276 = vmatpush1.bf16.msra.mxu0 %v9101
    %9277 = vmatprep.mubr.bf16.mxu0 %v9139
    %9278 = vmatmul.mubr.bf16.gmra.mrb[0].mxu0 %v9138
    %v9279 = vpop.f32.mrb[0].mxu0
    %v9280 = vadd.f32 %v9156, %v9279
    %v9281 = vpop.f32.mrb[0].mxu0
    %v9282 = vpop.f32.mrb[0].mxu0
    %v9283 = vpop.f32.mrb[0].mxu0
    %9284 = vdwg.mxu0
    %9285 = vmatprep.subr.bf16.mxu0 0
    %9286 = vmatpush1.bf16.msra.mxu0 %v9104
    %9287 = vmatprep.subr.bf16.mxu0 0
    %9288 = vmatpush1.bf16.msra.mxu0 %v9107
    %9289 = vmatprep.subr.bf16.mxu0 0
    %9290 = vmatpush1.bf16.msra.mxu0 %v9110
    %9291 = vmatprep.subr.bf16.mxu0 0
    %9292 = vmatpush1.bf16.msra.mxu0 %v9113
    %9293 = vmatprep.subr.bf16.mxu0 0
    %9294 = vmatpush1.bf16.msra.mxu0 %v9116
    %9295 = vmatprep.subr.bf16.mxu0 0
    %9296 = vmatpush1.bf16.msra.mxu0 %v9119
    %9297 = vmatprep.subr.bf16.mxu0 0
    %9298 = vmatpush1.bf16.msra.mxu0 %v9122
    %9299 = vmatprep.subr.bf16.mxu0 0
    %9300 = vmatpush1.bf16.msra.mxu0 %v9125
    %9301 = vmatprep.subr.bf16.mxu0 0
    %9302 = vmatpush1.bf16.msra.mxu0 %v9128
    %9303 = vmatprep.subr.bf16.mxu0 0
    %9304 = vmatpush1.bf16.msra.mxu0 %v9131
    %9305 = vmatprep.subr.bf16.mxu0 0
    %9306 = vmatpush1.bf16.msra.mxu0 %v9134
    %9307 = vmatprep.subr.bf16.mxu0 0
    %9308 = vmatpush1.bf16.msra.mxu0 %v9137
    %9309 = vmatprep.subr.bf16.mxu0 0
    %9310 = vmatpush1.bf16.msra.mxu0 0
    %9311 = vmatprep.subr.bf16.mxu0 0
    %9312 = vmatpush1.bf16.msra.mxu0 0
    %9313 = vmatprep.subr.bf16.mxu0 0
    %9314 = vmatpush1.bf16.msra.mxu0 0
    %9315 = vmatprep.subr.bf16.mxu0 0
    %9316 = vmatpush1.bf16.msra.mxu0 0
    %9317 = vmatprep.mubr.bf16.mxu0 %v9161
    %9318 = vmatmul.mubr.bf16.gmra.mrb[0].mxu0 %v9140
    %v9319 = vpop.f32.mrb[0].mxu0
    %v9320 = vadd.f32 %v9280, %v9319
    %v9321 = vpop.f32.mrb[0].mxu0
    %v9322 = vpop.f32.mrb[0].mxu0
    %v9323 = vpop.f32.mrb[0].mxu0
    %9324 = vdwg.mxu0
    %v9325 = vmax.f32 %v9239, 0.0
    %v9326 = vmax.f32 %v9241, 0.0
    %v9327 = vmax.f32 %v9320, 0.0
    %s9328 = smul.u32 4, 42
    %s9329 = smul.u32 %s9328, 2
    %s9330 = sshll.u32 %s9329, 4
    %9331 = dma.done %s1379, %s9330
    %v9332 = vld [vmem:[#allocation6] sm:$0xff]
    %v9333 = vld [vmem:[#allocation6 + $0x8] sm:$0xff]
    %v9334 = vld [vmem:[#allocation6 + $0x10] sm:$0xff]
    %v9335 = vld [vmem:[#allocation6 + $0x18] sm:$0xff]
    %v9336 = vld [vmem:[#allocation6 + $0x20] sm:$0xff]
    %v9337 = vld [vmem:[#allocation6 + $0x28] sm:$0xff]
    %v9338 = vld [vmem:[#allocation6 + $0x30] sm:$0xff]
    %v9339 = vld [vmem:[#allocation6 + $0x38] sm:$0xff]
    %v9340 = vld [vmem:[#allocation6 + $0x40] sm:$0xff]
    %v9341 = vld [vmem:[#allocation6 + $0x48] sm:$0xff]
    %v9342 = vld [vmem:[#allocation6 + $0x50] sm:$0xff]
    %v9343 = vld [vmem:[#allocation6 + $0x58] sm:$0xff]
    %v9344 = vld [vmem:[#allocation6 + $0x60] sm:$0xff]
    %v9345 = vld [vmem:[#allocation6 + $0x68] sm:$0xff]
    %v9346 = vld [vmem:[#allocation6 + $0x70] sm:$0xff]
    %v9347 = vld [vmem:[#allocation6 + $0x78] sm:$0xff]
    %v9348 = vld [vmem:[#allocation6 + $0x80] sm:$0xff]
    %v9349 = vld [vmem:[#allocation6 + $0x88] sm:$0xff]
    %v9350 = vld [vmem:[#allocation6 + $0x90] sm:$0xff]
    %v9351 = vld [vmem:[#allocation6 + $0x98] sm:$0xff]
    %v9352 = vld [vmem:[#allocation6 + $0xa0] sm:$0xff]
    %v9353 = vld [vmem:[#allocation6 + $0xa8] sm:$0xff]
    %v9354 = vld [vmem:[#allocation6 + $0xb0] sm:$0xff]
    %v9355 = vld [vmem:[#allocation6 + $0xb8] sm:$0xff]
    %v9356 = vld [vmem:[#allocation6 + $0xc0] sm:$0xff]
    %v9357 = vld [vmem:[#allocation6 + $0xc8] sm:$0xff]
    %v9358 = vld [vmem:[#allocation6 + $0xd0] sm:$0xff]
    %v9359 = vld [vmem:[#allocation6 + $0xd8] sm:$0xff]
    %v9360 = vld [vmem:[#allocation6 + $0xe0] sm:$0xff]
    %v9361 = vld [vmem:[#allocation6 + $0xe8] sm:$0xff]
    %v9362 = vld [vmem:[#allocation6 + $0xf0] sm:$0xff]
    %v9363 = vld [vmem:[#allocation6 + $0xf8] sm:$0xff]
    %v9364 = vld [vmem:[#allocation6 + $0x100] sm:$0xff]
    %v9365 = vld [vmem:[#allocation6 + $0x108] sm:$0xff]
    %v9366 = vld [vmem:[#allocation6 + $0x110] sm:$0xff]
    %v9367 = vld [vmem:[#allocation6 + $0x118] sm:$0xff]
    %v9368 = vld [vmem:[#allocation6 + $0x120] sm:$0xff]
    %v9369 = vld [vmem:[#allocation6 + $0x128] sm:$0xff]
    %v9370 = vld [vmem:[#allocation6 + $0x130] sm:$0xff]
    %v9371 = vld [vmem:[#allocation6 + $0x138] sm:$0xff]
    %v9372 = vld [vmem:[#allocation6 + $0x140] sm:$0xff]
    %v9373 = vld [vmem:[#allocation6 + $0x148] sm:$0xff]
    %v9374 = vpack.c.bf16 %v9325, %v9325
    %v9375 = vpack.c.bf16 %v9326, %v9326
    %v9376 = vpack.c.bf16 %v9327, %v9327
    %s9377 = scalar_lea.vmem %s6, 56
    %v9378 = vld [vmem:[%s9377] ss:$2 sm:$0x3]
    %v9380 = vlaneseq
    %v9381 = vshrl.u32 %v9380, 7
    %v9382 = vsub.s32 0, %v9381
    %v9383 = vrot.slane %v9378, %v9382
    %v9384 = vlaneseq
    %v9385 = vshrl.u32 %v9384, 7
    %v9386 = vsub.s32 1, %v9385
    %v9387 = vrot.slane %v9378, %v9386
    %vm9390 = vcmask 654336
    %v9392 = vsel %vm9390, %v9376, 0
    %9394 = vmatprep.subr.bf16.mxu0 %v9333
    %9395 = vmatpush1.bf16.msra.mxu0 %v9332
    %9396 = vmatprep.subr.bf16.mxu0 %v9335
    %9397 = vmatpush1.bf16.msra.mxu0 %v9334
    %9398 = vmatprep.subr.bf16.mxu0 %v9337
    %9399 = vmatpush1.bf16.msra.mxu0 %v9336
    %9400 = vmatprep.subr.bf16.mxu0 %v9339
    %9401 = vmatpush1.bf16.msra.mxu0 %v9338
    %9402 = vmatprep.subr.bf16.mxu0 %v9341
    %9403 = vmatpush1.bf16.msra.mxu0 %v9340
    %9404 = vmatprep.subr.bf16.mxu0 %v9343
    %9405 = vmatpush1.bf16.msra.mxu0 %v9342
    %9406 = vmatprep.subr.bf16.mxu0 %v9345
    %9407 = vmatpush1.bf16.msra.mxu0 %v9344
    %9408 = vmatprep.subr.bf16.mxu0 %v9347
    %9409 = vmatpush1.bf16.msra.mxu0 %v9346
    %9410 = vmatprep.subr.bf16.mxu0 %v9349
    %9411 = vmatpush1.bf16.msra.mxu0 %v9348
    %9412 = vmatprep.subr.bf16.mxu0 %v9351
    %9413 = vmatpush1.bf16.msra.mxu0 %v9350
    %9414 = vmatprep.subr.bf16.mxu0 %v9353
    %9415 = vmatpush1.bf16.msra.mxu0 %v9352
    %9416 = vmatprep.subr.bf16.mxu0 %v9355
    %9417 = vmatpush1.bf16.msra.mxu0 %v9354
    %9418 = vmatprep.subr.bf16.mxu0 %v9357
    %9419 = vmatpush1.bf16.msra.mxu0 %v9356
    %9420 = vmatprep.subr.bf16.mxu0 %v9359
    %9421 = vmatpush1.bf16.msra.mxu0 %v9358
    %9422 = vmatprep.subr.bf16.mxu0 %v9361
    %9423 = vmatpush1.bf16.msra.mxu0 %v9360
    %9424 = vmatprep.subr.bf16.mxu0 %v9363
    %9425 = vmatpush1.bf16.msra.mxu0 %v9362
    %9426 = vmatprep.mubr.bf16.mxu0 %v9375
    %9427 = vmatmul.mubr.bf16.gmra.mrb[0].mxu0 %v9374
    %v9428 = vpop.f32.mrb[0].mxu0
    %v9429 = vadd.f32 %v9383, %v9428
    %v9430 = vpop.f32.mrb[0].mxu0
    %v9431 = vadd.f32 %v9387, %v9430
    %v9432 = vpop.f32.mrb[0].mxu0
    %v9433 = vpop.f32.mrb[0].mxu0
    %9434 = vdwg.mxu0
    %9435 = vmatprep.subr.bf16.mxu0 %v9365
    %9436 = vmatpush1.bf16.msra.mxu0 %v9364
    %9437 = vmatprep.subr.bf16.mxu0 %v9367
    %9438 = vmatpush1.bf16.msra.mxu0 %v9366
    %9439 = vmatprep.subr.bf16.mxu0 %v9369
    %9440 = vmatpush1.bf16.msra.mxu0 %v9368
    %9441 = vmatprep.subr.bf16.mxu0 %v9371
    %9442 = vmatpush1.bf16.msra.mxu0 %v9370
    %9443 = vmatprep.subr.bf16.mxu0 %v9373
    %9444 = vmatpush1.bf16.msra.mxu0 %v9372
    %9445 = vmatprep.subr.bf16.mxu0 0
    %9446 = vmatpush1.bf16.msra.mxu0 0
    %9447 = vmatprep.subr.bf16.mxu0 0
    %9448 = vmatpush1.bf16.msra.mxu0 0
    %9449 = vmatprep.subr.bf16.mxu0 0
    %9450 = vmatpush1.bf16.msra.mxu0 0
    %9451 = vmatprep.subr.bf16.mxu0 0
    %9452 = vmatpush1.bf16.msra.mxu0 0
    %9453 = vmatprep.subr.bf16.mxu0 0
    %9454 = vmatpush1.bf16.msra.mxu0 0
    %9455 = vmatprep.subr.bf16.mxu0 0
    %9456 = vmatpush1.bf16.msra.mxu0 0
    %9457 = vmatprep.subr.bf16.mxu0 0
    %9458 = vmatpush1.bf16.msra.mxu0 0
    %9459 = vmatprep.subr.bf16.mxu0 0
    %9460 = vmatpush1.bf16.msra.mxu0 0
    %9461 = vmatprep.subr.bf16.mxu0 0
    %9462 = vmatpush1.bf16.msra.mxu0 0
    %9463 = vmatprep.subr.bf16.mxu0 0
    %9464 = vmatpush1.bf16.msra.mxu0 0
    %9465 = vmatprep.subr.bf16.mxu0 0
    %9466 = vmatpush1.bf16.msra.mxu0 0
    %9467 = vmatprep.mubr.bf16.mxu0 0
    %9468 = vmatmul.mubr.bf16.gmra.mrb[0].mxu0 %v9392
    %v9469 = vpop.f32.mrb[0].mxu0
    %v9470 = vadd.f32 %v9429, %v9469
    %v9471 = vpop.f32.mrb[0].mxu0
    %v9472 = vadd.f32 %v9431, %v9471
    %v9473 = vpop.f32.mrb[0].mxu0
    %v9474 = vpop.f32.mrb[0].mxu0
    %9475 = vdwg.mxu0
    %v9476 = vmax.f32 %v9470, 0.0
    %v9477 = vmax.f32 %v9472, 0.0
    %s9478 = smul.u32 4, 28
    %s9479 = smul.u32 %s9478, 2
    %s9480 = sshll.u32 %s9479, 4
    %9481 = dma.done %s1414, %s9480
    %v9482 = vld [vmem:[#allocation7] sm:$0xff]
    %v9483 = vld [vmem:[#allocation7 + $0x8] sm:$0xff]
    %v9484 = vld [vmem:[#allocation7 + $0x10] sm:$0xff]
    %v9485 = vld [vmem:[#allocation7 + $0x18] sm:$0xff]
    %v9486 = vld [vmem:[#allocation7 + $0x20] sm:$0xff]
    %v9487 = vld [vmem:[#allocation7 + $0x28] sm:$0xff]
    %v9488 = vld [vmem:[#allocation7 + $0x30] sm:$0xff]
    %v9489 = vld [vmem:[#allocation7 + $0x38] sm:$0xff]
    %v9490 = vld [vmem:[#allocation7 + $0x40] sm:$0xff]
    %v9491 = vld [vmem:[#allocation7 + $0x48] sm:$0xff]
    %v9492 = vld [vmem:[#allocation7 + $0x50] sm:$0xff]
    %v9493 = vld [vmem:[#allocation7 + $0x58] sm:$0xff]
    %v9494 = vld [vmem:[#allocation7 + $0x60] sm:$0xff]
    %v9495 = vld [vmem:[#allocation7 + $0x68] sm:$0xff]
    %v9496 = vld [vmem:[#allocation7 + $0x70] sm:$0xff]
    %v9497 = vld [vmem:[#allocation7 + $0x78] sm:$0xff]
    %v9498 = vld [vmem:[#allocation7 + $0x80] sm:$0xff]
    %v9499 = vld [vmem:[#allocation7 + $0x88] sm:$0xff]
    %v9500 = vld [vmem:[#allocation7 + $0x90] sm:$0xff]
    %v9501 = vld [vmem:[#allocation7 + $0x98] sm:$0xff]
    %v9502 = vld [vmem:[#allocation7 + $0xa0] sm:$0xff]
    %v9503 = vld [vmem:[#allocation7 + $0xa8] sm:$0xff]
    %v9504 = vld [vmem:[#allocation7 + $0xb0] sm:$0xff]
    %v9505 = vld [vmem:[#allocation7 + $0xb8] sm:$0xff]
    %v9506 = vld [vmem:[#allocation7 + $0xc0] sm:$0xff]
    %v9507 = vld [vmem:[#allocation7 + $0xc8] sm:$0xff]
    %v9508 = vld [vmem:[#allocation7 + $0xd0] sm:$0xff]
    %v9509 = vld [vmem:[#allocation7 + $0xd8] sm:$0xff]
    %v9510 = vpack.c.bf16 %v9476, %v9476
    %v9511 = vpack.c.bf16 %v9477, %v9477
    %s9512 = scalar_lea.vmem %s6, 70
    %v9513 = vld [vmem:[%s9512] ss:$2 sm:$0x3]
    %v9515 = vlaneseq
    %v9516 = vshrl.u32 %v9515, 7
    %v9517 = vsub.s32 0, %v9516
    %v9518 = vrot.slane %v9513, %v9517
    %v9519 = vlaneseq
    %v9520 = vshrl.u32 %v9519, 7
    %v9521 = vsub.s32 1, %v9520
    %v9522 = vrot.slane %v9513, %v9521
    %vm9525 = vcmask 785408
    %v9527 = vsel %vm9525, %v9511, 0
    %9529 = vmatprep.subr.bf16.mxu0 %v9483
    %9530 = vmatpush1.bf16.msra.mxu0 %v9482
    %9531 = vmatprep.subr.bf16.mxu0 %v9485
    %9532 = vmatpush1.bf16.msra.mxu0 %v9484
    %9533 = vmatprep.subr.bf16.mxu0 %v9487
    %9534 = vmatpush1.bf16.msra.mxu0 %v9486
    %9535 = vmatprep.subr.bf16.mxu0 %v9489
    %9536 = vmatpush1.bf16.msra.mxu0 %v9488
    %9537 = vmatprep.subr.bf16.mxu0 %v9491
    %9538 = vmatpush1.bf16.msra.mxu0 %v9490
    %9539 = vmatprep.subr.bf16.mxu0 %v9493
    %9540 = vmatpush1.bf16.msra.mxu0 %v9492
    %9541 = vmatprep.subr.bf16.mxu0 %v9495
    %9542 = vmatpush1.bf16.msra.mxu0 %v9494
    %9543 = vmatprep.subr.bf16.mxu0 %v9497
    %9544 = vmatpush1.bf16.msra.mxu0 %v9496
    %9545 = vmatprep.subr.bf16.mxu0 %v9499
    %9546 = vmatpush1.bf16.msra.mxu0 %v9498
    %9547 = vmatprep.subr.bf16.mxu0 %v9501
    %9548 = vmatpush1.bf16.msra.mxu0 %v9500
    %9549 = vmatprep.subr.bf16.mxu0 %v9503
    %9550 = vmatpush1.bf16.msra.mxu0 %v9502
    %9551 = vmatprep.subr.bf16.mxu0 %v9505
    %9552 = vmatpush1.bf16.msra.mxu0 %v9504
    %9553 = vmatprep.subr.bf16.mxu0 %v9507
    %9554 = vmatpush1.bf16.msra.mxu0 %v9506
    %9555 = vmatprep.subr.bf16.mxu0 %v9509
    %9556 = vmatpush1.bf16.msra.mxu0 %v9508
    %9557 = vmatprep.subr.bf16.mxu0 0
    %9558 = vmatpush1.bf16.msra.mxu0 0
    %9559 = vmatprep.subr.bf16.mxu0 0
    %9560 = vmatpush1.bf16.msra.mxu0 0
    %9561 = vmatprep.mubr.bf16.mxu0 %v9527
    %9562 = vmatmul.mubr.bf16.gmra.mrb[0].mxu0 %v9510
    %v9563 = vpop.f32.mrb[0].mxu0
    %v9564 = vadd.f32 %v9518, %v9563
    %v9565 = vpop.f32.mrb[0].mxu0
    %v9566 = vadd.f32 %v9522, %v9565
    %v9567 = vpop.f32.mrb[0].mxu0
    %v9568 = vpop.f32.mrb[0].mxu0
    %9569 = vdwg.mxu0
    %v9570 = vmax.f32 %v9564, 0.0
    %v9571 = vmax.f32 %v9566, 0.0
    %s9572 = smul.u32 4, 21
    %s9573 = smul.u32 %s9572, 1
    %s9574 = sshll.u32 %s9573, 4
    %9575 = dma.done %s1687, %s9574
    %v9576 = vld [vmem:[#allocation8] sm:$0xf]
    %v9577 = vld [vmem:[#allocation8 + $0x4] sm:$0xf]
    %v9578 = vld [vmem:[#allocation8 + $0x8] sm:$0xf]
    %v9579 = vld [vmem:[#allocation8 + $0xc] sm:$0xf]
    %v9580 = vld [vmem:[#allocation8 + $0x10] sm:$0xf]
    %v9581 = vld [vmem:[#allocation8 + $0x14] sm:$0xf]
    %v9582 = vld [vmem:[#allocation8 + $0x18] sm:$0xf]
    %v9583 = vld [vmem:[#allocation8 + $0x1c] sm:$0xf]
    %v9584 = vld [vmem:[#allocation8 + $0x20] sm:$0xf]
    %v9585 = vld [vmem:[#allocation8 + $0x24] sm:$0xf]
    %v9586 = vld [vmem:[#allocation8 + $0x28] sm:$0xf]
    %v9587 = vld [vmem:[#allocation8 + $0x2c] sm:$0xf]
    %v9588 = vld [vmem:[#allocation8 + $0x30] sm:$0xf]
    %v9589 = vld [vmem:[#allocation8 + $0x34] sm:$0xf]
    %v9590 = vld [vmem:[#allocation8 + $0x38] sm:$0xf]
    %v9591 = vld [vmem:[#allocation8 + $0x3c] sm:$0xf]
    %v9592 = vld [vmem:[#allocation8 + $0x40] sm:$0xf]
    %v9593 = vld [vmem:[#allocation8 + $0x44] sm:$0xf]
    %v9594 = vld [vmem:[#allocation8 + $0x48] sm:$0xf]
    %v9595 = vld [vmem:[#allocation8 + $0x4c] sm:$0xf]
    %v9596 = vld [vmem:[#allocation8 + $0x50] sm:$0x1]
    %v9597 = vpack.c.bf16 %v9570, %v9570
    %v9598 = vpack.c.bf16 %v9571, %v9571
    %s9599 = scalar_lea.vmem %s6, 84
    %v9600 = vld [vmem:[%s9599] sm:$0x1]
    %v9601 = vlaneseq
    %v9602 = vshrl.u32 %v9601, 7
    %v9603 = vsub.s32 0, %v9602
    %v9604 = vrot.slane %v9600, %v9603
    %v9626 = vunpack.c.l.b16 %v9576
    %v9627 = vunpack.c.l.b16 %v9577
    %v9628 = vunpack.c.l.b16 %v9578
    %v9629 = vunpack.c.l.b16 %v9579
    %v9630 = vunpack.c.l.b16 %v9580
    %v9631 = vunpack.c.l.b16 %v9581
    %v9632 = vunpack.c.l.b16 %v9582
    %v9633 = vunpack.c.l.b16 %v9583
    %v9634 = vunpack.c.l.b16 %v9584
    %v9635 = vunpack.c.l.b16 %v9585
    %v9636 = vunpack.c.l.b16 %v9586
    %v9637 = vunpack.c.l.b16 %v9587
    %v9638 = vunpack.c.l.b16 %v9588
    %v9639 = vunpack.c.l.b16 %v9589
    %v9640 = vunpack.c.l.b16 %v9590
    %v9641 = vunpack.c.l.b16 %v9591
    %v9642 = vunpack.c.l.b16 %v9592
    %v9643 = vunpack.c.l.b16 %v9593
    %v9644 = vunpack.c.l.b16 %v9594
    %v9645 = vunpack.c.l.b16 %v9595
    %v9646 = vunpack.c.l.b16 %v9596
    %v9647 = vpack.c.b16 %v9627, %v9626
    %v9648 = vpack.c.b16 %v9629, %v9628
    %v9649 = vpack.c.b16 %v9631, %v9630
    %v9650 = vpack.c.b16 %v9633, %v9632
    %v9651 = vpack.c.b16 %v9635, %v9634
    %v9652 = vpack.c.b16 %v9637, %v9636
    %v9653 = vpack.c.b16 %v9639, %v9638
    %v9654 = vpack.c.b16 %v9641, %v9640
    %v9655 = vpack.c.b16 %v9643, %v9642
    %v9656 = vpack.c.b16 %v9645, %v9644
    %v9657 = vpack.c.b16 %v9646, %v9646
    %vm9668 = vcmask 269312
    %v9670 = vsel %vm9668, %v9598, 0
    %v9672 = vsel 0, 4294967295, 65535
    %v9673 = vsel %vm1707, %v9672, 0
    %v9675 = vand.u32 %v9657, %v9673
    %9677 = vmatprep.subr.bf16.mxu0 0
    %9678 = vmatpush1.bf16.msra.mxu0 %v9647
    %9679 = vmatprep.subr.bf16.mxu0 0
    %9680 = vmatpush1.bf16.msra.mxu0 %v9648
    %9681 = vmatprep.subr.bf16.mxu0 0
    %9682 = vmatpush1.bf16.msra.mxu0 %v9649
    %9683 = vmatprep.subr.bf16.mxu0 0
    %9684 = vmatpush1.bf16.msra.mxu0 %v9650
    %9685 = vmatprep.subr.bf16.mxu0 0
    %9686 = vmatpush1.bf16.msra.mxu0 %v9651
    %9687 = vmatprep.subr.bf16.mxu0 0
    %9688 = vmatpush1.bf16.msra.mxu0 %v9652
    %9689 = vmatprep.subr.bf16.mxu0 0
    %9690 = vmatpush1.bf16.msra.mxu0 %v9653
    %9691 = vmatprep.subr.bf16.mxu0 0
    %9692 = vmatpush1.bf16.msra.mxu0 %v9654
    %9693 = vmatprep.subr.bf16.mxu0 0
    %9694 = vmatpush1.bf16.msra.mxu0 %v9655
    %9695 = vmatprep.subr.bf16.mxu0 0
    %9696 = vmatpush1.bf16.msra.mxu0 %v9656
    %9697 = vmatprep.subr.bf16.mxu0 0
    %9698 = vmatpush1.bf16.msra.mxu0 %v9675
    %9699 = vmatprep.subr.bf16.mxu0 0
    %9700 = vmatpush1.bf16.msra.mxu0 0
    %9701 = vmatprep.subr.bf16.mxu0 0
    %9702 = vmatpush1.bf16.msra.mxu0 0
    %9703 = vmatprep.subr.bf16.mxu0 0
    %9704 = vmatpush1.bf16.msra.mxu0 0
    %9705 = vmatprep.subr.bf16.mxu0 0
    %9706 = vmatpush1.bf16.msra.mxu0 0
    %9707 = vmatprep.subr.bf16.mxu0 0
    %9708 = vmatpush1.bf16.msra.mxu0 0
    %9709 = vmatprep.mubr.bf16.mxu0 %v9670
    %9710 = vmatmul.mubr.bf16.gmra.mrb[0].mxu0 %v9597
    %v9711 = vpop.f32.mrb[0].mxu0
    %v9712 = vadd.f32 %v9604, %v9711
    %v9713 = vpop.f32.mrb[0].mxu0
    %v9714 = vpop.f32.mrb[0].mxu0
    %v9715 = vpop.f32.mrb[0].mxu0
    %9716 = vdwg.mxu0
    %v9717 = vmax.f32 %v9712, 0.0
    %vm9718 = vcmask 787456
    %9719 = vst.msk [vmem:[#allocation16] sm:$0x3] %vm9718, %v9717
    // Predicated region
    $region155: #{tpu_custom_call.1} parent=1 // pred_check
      _
    $region156: #{tpu_custom_call.1} parent=1 // pred_check_branch
      %9721 = sbr.rel (0) target = $region158
    $region157: #{tpu_custom_call.1} parent=1 // pred_region
      %s9723 = ssub.s32 32, 32
      %9724 = vsyncadd [#allocation12], %s9723
      %s9726 = sshll.u32 [#allocation16], 4
      %s9727 = int_to_ptr.vmem [resolvable:$true] %s9726
      %9729 = dma.vmem_to_hbm [thread:$0]  %s9727, 32, %s14, [#allocation12]
    $region158: #{tpu_custom_call.1} parent=1 // pred_fallthru
      _
    // Predicated region
    $region159: #{tpu_custom_call.1} parent=1 // pred_check
      _
    $region160: #{tpu_custom_call.1} parent=1 // pred_check_branch
      %9731 = sbr.rel (0) target = $region162
    $region161: #{tpu_custom_call.1} parent=1 // pred_region
      %9732 = dma.done [#allocation12], 32
    $region162: #{tpu_custom_call.1} parent=1 // pred_fallthru
      _
    %9733 = vsyncpa [#allocation11], 1
    %9734 = vsyncpa [#allocation14], 1
    %9735 = vsyncpa [#allocation12], 1
  %9736 = vsyncmov [#allocation9]
  %s9737 = vpop.sfrf %9736
  %p9738 = scmp.eq.s32.totalorder %s9737, 0
  %p9739 = pneg %p9738
  %9741 = shalt.err (%p9739)
  %s9742 = scalar_lea.sflag [#allocation9], 1
  %9743 = vsyncmov %s9742
  %s9744 = vpop.sfrf %9743
  %p9745 = scmp.eq.s32.totalorder %s9744, 0
  %p9746 = pneg %p9745
  %9748 = shalt.err (%p9746)
  %s9749 = scalar_lea.sflag [#allocation9], 2
  %9750 = vsyncmov %s9749
  %s9751 = vpop.sfrf %9750
  %p9752 = scmp.eq.s32.totalorder %s9751, 0
  %p9753 = pneg %p9752
  %9755 = shalt.err (%p9753)
  %s9756 = scalar_lea.sflag [#allocation9], 3
  %9757 = vsyncmov %s9756
  %s9758 = vpop.sfrf %9757
  %p9759 = scmp.eq.s32.totalorder %s9758, 0
  %p9760 = pneg %p9759
  %9762 = shalt.err (%p9760)
  %s9763 = scalar_lea.sflag [#allocation9], 4
  %9764 = vsyncmov %s9763
  %s9765 = vpop.sfrf %9764
  %p9766 = scmp.eq.s32.totalorder %s9765, 0
  %p9767 = pneg %p9766
  %9769 = shalt.err (%p9767)
  %s9770 = scalar_lea.sflag [#allocation9], 5
  %9771 = vsyncmov %s9770
  %s9772 = vpop.sfrf %9771
  %p9773 = scmp.eq.s32.totalorder %s9772, 0
  %p9774 = pneg %p9773
  %9776 = shalt.err (%p9774)
  %s9777 = scalar_lea.sflag [#allocation9], 6
  %9778 = vsyncmov %s9777
  %s9779 = vpop.sfrf %9778
  %p9780 = scmp.eq.s32.totalorder %s9779, 0
  %p9781 = pneg %p9780
  %9783 = shalt.err (%p9781)

</llo_original>
